<compile_context>
chip_gen: v6e
topology: v6e:2x2x1
jax: 0.10.0
libtpu: 0.0.40
codegen_flags: <defaults>
</compile_context>

<pallas_src>
import functools

import jax
import jax.numpy as jnp
from jax.experimental import pallas as pl
from jax.experimental.pallas import tpu as pltpu

_LPAD = 8   # left/right pad width of the VMEM scratches (sublane aligned);
            # only column _LPAD-1 (left) and column W+_LPAD (right) are read.


def _basic_block_kernel(x_ref, w1_ref, w2_ref, *rest, stride, h, w, h_out,
                        w_out, c_in, c_out, strip, identity):
    """Fused BasicBlock forward for one batch element (NHWC, bf16 operands).

    x_ref  : (H, W, Cin)          unpadded input, bf16
    w1_ref : (3, 3, Cin,  Cout)   first 3x3 conv weight,  HWIO, bf16
    w2_ref : (3, 3, Cout, Cout)   second 3x3 conv weight, HWIO, bf16
    wsc_ref: (Cin, Cout)          1x1 projection weight (absent when identity)
    out_ref: (Hout, Wout, Cout)   float32 output
    xp_ref : VMEM (H+2,    W+2L,    Cin )  bf16  zero-bordered staging of x
    y1p_ref: VMEM (Hout+2, Wout+2L, Cout)  bf16  zero-bordered conv1 output
    """
    if identity:
        out_ref, xp_ref, y1p_ref = rest
        wsc_ref = None
    else:
        wsc_ref, out_ref, xp_ref, y1p_ref = rest

    bf16 = jnp.bfloat16
    f32 = jnp.float32
    L = _LPAD

    # ---- refresh only the zero borders of the scratches (cheap). ----
    # Done every step: with a "parallel" batch grid each TensorCore owns its
    # own scratch, so a one-time `pl.program_id(0)==0` init is not safe.
    xp_ref[0, :, :] = jnp.zeros((w + 2 * L, c_in), bf16)
    xp_ref[h + 1, :, :] = jnp.zeros((w + 2 * L, c_in), bf16)
    xp_ref[:, 0:L, :] = jnp.zeros((h + 2, L, c_in), bf16)
    xp_ref[:, w + L:w + 2 * L, :] = jnp.zeros((h + 2, L, c_in), bf16)
    y1p_ref[0, :, :] = jnp.zeros((w_out + 2 * L, c_out), bf16)
    y1p_ref[h_out + 1, :, :] = jnp.zeros((w_out + 2 * L, c_out), bf16)
    y1p_ref[:, 0:L, :] = jnp.zeros((h_out + 2, L, c_out), bf16)
    y1p_ref[:, w_out + L:w_out + 2 * L, :] = jnp.zeros((h_out + 2, L, c_out),
                                                       bf16)

    # ---- stage the input into the padded scratch (interior write is sublane
    #      aligned because the interior starts at column L = 8). ----
    xp_ref[1:h + 1, L:L + w, :] = x_ref[...]

    # ---- conv1: 3x3, stride=s, pad=1, bias=False, then ReLU ----
    # Strip-mined over output rows so each accumulator is only (S*Wout, Cout).
    for r0 in range(0, h_out, strip):
        S = min(strip, h_out - r0)
        acc = jnp.zeros((S * w_out, c_out), f32)
        for dh in range(3):
            for dw in range(3):
                blk = xp_ref[r0 * stride + dh:(r0 + S - 1) * stride + dh + 1,
                             L - 1 + dw:L - 1 + dw + (w_out - 1) * stride + 1,
                             :]
                patch = blk if stride == 1 else blk[::stride, ::stride, :]
                acc = acc + jnp.dot(patch.reshape(S * w_out, c_in),
                                    w1_ref[dh, dw],
                                    preferred_element_type=f32)
        y1 = jnp.maximum(acc, 0.0).astype(bf16).reshape(S, w_out, c_out)
        y1p_ref[1 + r0:1 + r0 + S, L:L + w_out, :] = y1

    # ---- conv2: 3x3, stride 1, pad=1  +  shortcut  +  final ReLU ----
    for r0 in range(0, h_out, strip):
        S = min(strip, h_out - r0)
        acc = jnp.zeros((S * w_out, c_out), f32)
        for dh in range(3):
            for dw in range(3):
                patch = y1p_ref[r0 + dh:r0 + dh + S,
                                L - 1 + dw:L - 1 + dw + w_out, :]
                acc = acc + jnp.dot(patch.reshape(S * w_out, c_out),
                                    w2_ref[dh, dw],
                                    preferred_element_type=f32)

        # shortcut (identity path skips the matmul entirely)
        if stride == 1:
            xs = x_ref[r0:r0 + S, :, :]
        else:
            xs = x_ref[r0 * stride:(r0 + S - 1) * stride + 1,
                       0:(w_out - 1) * stride + 1, :][::stride, ::stride, :]
        if identity:
            sc = xs.astype(f32).reshape(S * w_out, c_out)
        else:
            sc = jnp.dot(xs.reshape(S * w_out, c_in), wsc_ref[...],
                         preferred_element_type=f32)

        out = jnp.maximum(acc + sc, 0.0).reshape(S, w_out, c_out)
        out_ref[r0:r0 + S, :, :] = out.astype(out_ref.dtype)


def basic_block_pallas(x_nchw, w1_oihw, w2_oihw, wsc_io=None, *, stride=1,
                       row_strip=8):
    """ResNet BasicBlock forward.

    x_nchw : (N, Cin, H, W), PyTorch layout
    w1_oihw: (Cout, Cin, 3, 3)   conv1 weight
    w2_oihw: (Cout, Cout, 3, 3)  conv2 weight
    wsc_io : (Cin, Cout) 1x1 projection-shortcut weight, or None for the
             identity shortcut (requires stride == 1 and Cin == Cout).
    """
    n, c_in, h, w = x_nchw.shape
    c_out = w1_oihw.shape[0]
    h_out = (h - 1) // stride + 1
    w_out = (w - 1) // stride + 1
    identity = wsc_io is None
    if identity and not (stride == 1 and c_in == c_out):
        raise ValueError("identity shortcut requires stride=1 and c_in==c_out")

    # NHWC + bf16 MXU operands; the cast is fused into the layout transpose so
    # the kernel DMAs half the bytes and there is no separate padding pass.
    x = jnp.transpose(x_nchw, (0, 2, 3, 1)).astype(jnp.bfloat16)
    w1 = jnp.transpose(w1_oihw, (2, 3, 1, 0)).astype(jnp.bfloat16)   # HWIO
    w2 = jnp.transpose(w2_oihw, (2, 3, 1, 0)).astype(jnp.bfloat16)

    inputs = [x, w1, w2]
    in_specs = [
        pl.BlockSpec((None, h, w, c_in), lambda b: (b, 0, 0, 0)),
        pl.BlockSpec((3, 3, c_in, c_out), lambda b: (0, 0, 0, 0)),
        pl.BlockSpec((3, 3, c_out, c_out), lambda b: (0, 0, 0, 0)),
    ]
    if not identity:
        inputs.append(wsc_io.astype(jnp.bfloat16))
        in_specs.append(pl.BlockSpec((c_in, c_out), lambda b: (0, 0)))

    strip = max(1, min(row_strip, h_out))
    kernel = functools.partial(
        _basic_block_kernel, stride=stride, h=h, w=w, h_out=h_out, w_out=w_out,
        c_in=c_in, c_out=c_out, strip=strip, identity=identity)

    out_nhwc = pl.pallas_call(
        kernel,
        out_shape=jax.ShapeDtypeStruct((n, h_out, w_out, c_out), jnp.float32),
        grid_spec=pltpu.PrefetchScalarGridSpec(
            num_scalar_prefetch=0,
            grid=(n,),
            in_specs=in_specs,
            out_specs=pl.BlockSpec((None, h_out, w_out, c_out),
                                   lambda b: (b, 0, 0, 0)),
            scratch_shapes=[
                pltpu.VMEM((h + 2, w + 2 * _LPAD, c_in), jnp.bfloat16),
                pltpu.VMEM((h_out + 2, w_out + 2 * _LPAD, c_out),
                           jnp.bfloat16),
            ]),
        compiler_params=pltpu.CompilerParams(
            dimension_semantics=("parallel",)),
    )(*inputs)

    return jnp.transpose(out_nhwc, (0, 3, 1, 2))                     # NCHW


def _reference(x_nchw, w1_oihw, w2_oihw, wsc_io, stride, identity, bf16_ops):
    """Pure-XLA reference of the PyTorch forward.  bf16_ops=True casts conv
    operands to bfloat16 (float32 accumulation), matching the kernel numerics."""
    dn = ("NCHW", "OIHW", "NCHW")
    f32 = jnp.float32
    if bf16_ops:
        cast = lambda a: a.astype(jnp.bfloat16)
    else:
        cast = lambda a: a.astype(f32)
    y = jax.lax.conv_general_dilated(cast(x_nchw), cast(w1_oihw),
                                     (stride, stride), ((1, 1), (1, 1)),
                                     dimension_numbers=dn,
                                     preferred_element_type=f32)
    y = jnp.maximum(y, 0.0)
    y = jax.lax.conv_general_dilated(cast(y), cast(w2_oihw), (1, 1),
                                     ((1, 1), (1, 1)), dimension_numbers=dn,
                                     preferred_element_type=f32)
    if identity:
        sc = cast(x_nchw).astype(f32)
    else:
        wsc_oihw = jnp.transpose(wsc_io)[:, :, None, None]   # (Cout, Cin, 1, 1)
        sc = jax.lax.conv_general_dilated(cast(x_nchw), cast(wsc_oihw),
                                          (stride, stride), ((0, 0), (0, 0)),
                                          dimension_numbers=dn,
                                          preferred_element_type=f32)
    return jnp.maximum(y + sc, 0.0)


if __name__ == "__main__":
    key = jax.random.PRNGKey(0)
    k1, k2, k3, k4, k5, k6 = jax.random.split(key, 6)

    # --- config 1: projection shortcut (Cin != Cout), stride 1 ----------------
    n, c_in, sp, c_out, stride = 2, 4, 16, 8, 1
    x = jax.random.normal(k1, (n, c_in, sp, sp), jnp.float32)
    w1 = jax.random.normal(k2, (c_out, c_in, 3, 3), jnp.float32) * 0.1
    w2 = jax.random.normal(k3, (c_out, c_out, 3, 3), jnp.float32) * 0.1
    wsc = jax.random.normal(k4, (c_in, c_out), jnp.float32) * 0.1

    out = jax.block_until_ready(
        basic_block_pallas(x, w1, w2, wsc, stride=stride))
    ref_bf16 = _reference(x, w1, w2, wsc, stride, identity=False, bf16_ops=True)
    ref_f32 = _reference(x, w1, w2, wsc, stride, identity=False, bf16_ops=False)
    assert out.shape == ref_f32.shape
    assert jnp.allclose(out, ref_bf16, atol=2e-2, rtol=2e-2), \
        float(jnp.max(jnp.abs(out - ref_bf16)))
    assert jnp.allclose(out, ref_f32, atol=1e-1, rtol=1e-1), \
        float(jnp.max(jnp.abs(out - ref_f32)))

    # --- config 2: identity shortcut (Cin == Cout), stride 1 ------------------
    c = 8
    x2 = jax.random.normal(k5, (n, c, sp, sp), jnp.float32)
    w1b = jax.random.normal(k6, (c, c, 3, 3), jnp.float32) * 0.1
    w2b = jax.random.normal(k2, (c, c, 3, 3), jnp.float32) * 0.1
    out2 = jax.block_until_ready(
        basic_block_pallas(x2, w1b, w2b, None, stride=1))
    ref2 = _reference(x2, w1b, w2b, None, 1, identity=True, bf16_ops=True)
    assert jnp.allclose(out2, ref2, atol=2e-2, rtol=2e-2), \
        float(jnp.max(jnp.abs(out2 - ref2)))

    print("KERNEL_OK")
</pallas_src>

<mosaic_0001>
module attributes {stable_mosaic.version = 11 : i64} {
  func.func @_basic_block_kernel(%arg0: i32, %arg1: memref<1x16x16x4xbf16, #tpu.memory_space<vmem>>, %arg2: memref<3x3x4x8xbf16, #tpu.memory_space<vmem>>, %arg3: memref<3x3x8x8xbf16, #tpu.memory_space<vmem>>, %arg4: memref<4x8xbf16, #tpu.memory_space<vmem>>, %arg5: memref<1x16x16x8xf32, #tpu.memory_space<vmem>>, %arg6: memref<18x32x4xbf16, #tpu.memory_space<vmem>>, %arg7: memref<18x32x8xbf16, #tpu.memory_space<vmem>>) attributes {dimension_semantics = [#tpu.dimension_semantics<parallel>], iteration_bounds = array<i64: 2>, scalar_prefetch = 0 : i64, scratch_operands = 2 : i64, tpu.core_type = #tpu.core_type<tc>, window_params = [{transform_indices = @transform_0, window_bounds = array<i64: 1, 16, 16, 4>}, {pipeline_mode = #tpu.pipeline_mode<synchronous>, transform_indices = @transform_1, window_bounds = array<i64: 3, 3, 4, 8>}, {pipeline_mode = #tpu.pipeline_mode<synchronous>, transform_indices = @transform_2, window_bounds = array<i64: 3, 3, 8, 8>}, {pipeline_mode = #tpu.pipeline_mode<synchronous>, transform_indices = @transform_3, window_bounds = array<i64: 4, 8>}, {transform_indices = @transform_4, window_bounds = array<i64: 1, 16, 16, 8>}]} {
    %cst = arith.constant 0.000000e+00 : bf16
    %0 = vector.broadcast %cst : bf16 to vector<32x4xbf16>
    %c0 = arith.constant 0 : index
    %c0_0 = arith.constant 0 : index
    %c0_1 = arith.constant 0 : index
    %1 = vector.load %arg6[%c0, %c0_0, %c0_1] : memref<18x32x4xbf16, #tpu.memory_space<vmem>>, vector<1x32x4xbf16>
    %2 = vector.shape_cast %1 : vector<1x32x4xbf16> to vector<32x4xbf16>
    %3 = vector.shape_cast %0 : vector<32x4xbf16> to vector<1x32x4xbf16>
    tpu.vector_store %arg6[%c0, %c0_0, %c0_1], %3 {strides = array<i32>} : memref<18x32x4xbf16, #tpu.memory_space<vmem>>, vector<1x32x4xbf16>,
    %cst_2 = arith.constant 0.000000e+00 : bf16
    %4 = vector.broadcast %cst_2 : bf16 to vector<32x4xbf16>
    %c17 = arith.constant 17 : index
    %c0_3 = arith.constant 0 : index
    %c0_4 = arith.constant 0 : index
    %5 = vector.load %arg6[%c17, %c0_3, %c0_4] : memref<18x32x4xbf16, #tpu.memory_space<vmem>>, vector<1x32x4xbf16>
    %6 = vector.shape_cast %5 : vector<1x32x4xbf16> to vector<32x4xbf16>
    %7 = vector.shape_cast %4 : vector<32x4xbf16> to vector<1x32x4xbf16>
    tpu.vector_store %arg6[%c17, %c0_3, %c0_4], %7 {strides = array<i32>} : memref<18x32x4xbf16, #tpu.memory_space<vmem>>, vector<1x32x4xbf16>,
    %cst_5 = arith.constant 0.000000e+00 : bf16
    %8 = vector.broadcast %cst_5 : bf16 to vector<18x8x4xbf16>
    %c0_6 = arith.constant 0 : index
    %c0_7 = arith.constant 0 : index
    %c0_8 = arith.constant 0 : index
    %9 = vector.load %arg6[%c0_6, %c0_7, %c0_8] : memref<18x32x4xbf16, #tpu.memory_space<vmem>>, vector<18x8x4xbf16>
    tpu.vector_store %arg6[%c0_6, %c0_7, %c0_8], %8 {strides = array<i32>} : memref<18x32x4xbf16, #tpu.memory_space<vmem>>, vector<18x8x4xbf16>,
    %cst_9 = arith.constant 0.000000e+00 : bf16
    %10 = vector.broadcast %cst_9 : bf16 to vector<18x8x4xbf16>
    %c0_10 = arith.constant 0 : index
    %c24 = arith.constant 24 : index
    %c0_11 = arith.constant 0 : index
    %11 = vector.load %arg6[%c0_10, %c24, %c0_11] : memref<18x32x4xbf16, #tpu.memory_space<vmem>>, vector<18x8x4xbf16>
    tpu.vector_store %arg6[%c0_10, %c24, %c0_11], %10 {strides = array<i32>} : memref<18x32x4xbf16, #tpu.memory_space<vmem>>, vector<18x8x4xbf16>,
    %cst_12 = arith.constant 0.000000e+00 : bf16
    %12 = vector.broadcast %cst_12 : bf16 to vector<32x8xbf16>
    %c0_13 = arith.constant 0 : index
    %c0_14 = arith.constant 0 : index
    %c0_15 = arith.constant 0 : index
    %13 = vector.load %arg7[%c0_13, %c0_14, %c0_15] : memref<18x32x8xbf16, #tpu.memory_space<vmem>>, vector<1x32x8xbf16>
    %14 = vector.shape_cast %13 : vector<1x32x8xbf16> to vector<32x8xbf16>
    %15 = vector.shape_cast %12 : vector<32x8xbf16> to vector<1x32x8xbf16>
    tpu.vector_store %arg7[%c0_13, %c0_14, %c0_15], %15 {strides = array<i32>} : memref<18x32x8xbf16, #tpu.memory_space<vmem>>, vector<1x32x8xbf16>,
    %cst_16 = arith.constant 0.000000e+00 : bf16
    %16 = vector.broadcast %cst_16 : bf16 to vector<32x8xbf16>
    %c17_17 = arith.constant 17 : index
    %c0_18 = arith.constant 0 : index
    %c0_19 = arith.constant 0 : index
    %17 = vector.load %arg7[%c17_17, %c0_18, %c0_19] : memref<18x32x8xbf16, #tpu.memory_space<vmem>>, vector<1x32x8xbf16>
    %18 = vector.shape_cast %17 : vector<1x32x8xbf16> to vector<32x8xbf16>
    %19 = vector.shape_cast %16 : vector<32x8xbf16> to vector<1x32x8xbf16>
    tpu.vector_store %arg7[%c17_17, %c0_18, %c0_19], %19 {strides = array<i32>} : memref<18x32x8xbf16, #tpu.memory_space<vmem>>, vector<1x32x8xbf16>,
    %cst_20 = arith.constant 0.000000e+00 : bf16
    %20 = vector.broadcast %cst_20 : bf16 to vector<18x8x8xbf16>
    %c0_21 = arith.constant 0 : index
    %c0_22 = arith.constant 0 : index
    %c0_23 = arith.constant 0 : index
    %21 = vector.load %arg7[%c0_21, %c0_22, %c0_23] : memref<18x32x8xbf16, #tpu.memory_space<vmem>>, vector<18x8x8xbf16>
    tpu.vector_store %arg7[%c0_21, %c0_22, %c0_23], %20 {strides = array<i32>} : memref<18x32x8xbf16, #tpu.memory_space<vmem>>, vector<18x8x8xbf16>,
    %cst_24 = arith.constant 0.000000e+00 : bf16
    %22 = vector.broadcast %cst_24 : bf16 to vector<18x8x8xbf16>
    %c0_25 = arith.constant 0 : index
    %c24_26 = arith.constant 24 : index
    %c0_27 = arith.constant 0 : index
    %23 = vector.load %arg7[%c0_25, %c24_26, %c0_27] : memref<18x32x8xbf16, #tpu.memory_space<vmem>>, vector<18x8x8xbf16>
    tpu.vector_store %arg7[%c0_25, %c24_26, %c0_27], %22 {strides = array<i32>} : memref<18x32x8xbf16, #tpu.memory_space<vmem>>, vector<18x8x8xbf16>,
    %c0_28 = arith.constant 0 : index
    %c0_29 = arith.constant 0 : index
    %c0_30 = arith.constant 0 : index
    %c0_31 = arith.constant 0 : index
    %24 = vector.load %arg1[%c0_28, %c0_29, %c0_30, %c0_31] : memref<1x16x16x4xbf16, #tpu.memory_space<vmem>>, vector<1x16x16x4xbf16>
    %25 = vector.shape_cast %24 : vector<1x16x16x4xbf16> to vector<16x16x4xbf16>
    %c1 = arith.constant 1 : index
    %c8 = arith.constant 8 : index
    %c0_32 = arith.constant 0 : index
    %26 = vector.load %arg6[%c1, %c8, %c0_32] : memref<18x32x4xbf16, #tpu.memory_space<vmem>>, vector<16x16x4xbf16>
    tpu.vector_store %arg6[%c1, %c8, %c0_32], %25 {strides = array<i32>} : memref<18x32x4xbf16, #tpu.memory_space<vmem>>, vector<16x16x4xbf16>,
    %cst_33 = arith.constant 0.000000e+00 : f32
    %27 = vector.broadcast %cst_33 : f32 to vector<128x8xf32>
    %c0_34 = arith.constant 0 : index
    %c7 = arith.constant 7 : index
    %c0_35 = arith.constant 0 : index
    %28 = vector.load %arg6[%c0_34, %c7, %c0_35] : memref<18x32x4xbf16, #tpu.memory_space<vmem>>, vector<8x16x4xbf16>
    %29 = vector.shape_cast %28 : vector<8x16x4xbf16> to vector<128x4xbf16>
    %c0_36 = arith.constant 0 : index
    %c0_37 = arith.constant 0 : index
    %c0_38 = arith.constant 0 : index
    %c0_39 = arith.constant 0 : index
    %30 = vector.load %arg2[%c0_36, %c0_37, %c0_38, %c0_39] : memref<3x3x4x8xbf16, #tpu.memory_space<vmem>>, vector<1x1x4x8xbf16>
    %31 = vector.shape_cast %30 : vector<1x1x4x8xbf16> to vector<4x8xbf16>
    %cst_40 = arith.constant dense<0.000000e+00> : vector<128x8xf32>
    %32 = tpu.matmul %29, %31, %cst_40 {dimension_numbers = #tpu.dot_dimension_numbers<[1], [0], [0], [1], [0, 0, 1, 1], [], []>} : vector<128x4xbf16>, vector<4x8xbf16>, vector<128x8xf32> -> vector<128x8xf32>
    %33 = arith.addf %27, %32 : vector<128x8xf32>
    %c0_41 = arith.constant 0 : index
    %c8_42 = arith.constant 8 : index
    %c0_43 = arith.constant 0 : index
    %34 = vector.load %arg6[%c0_41, %c8_42, %c0_43] : memref<18x32x4xbf16, #tpu.memory_space<vmem>>, vector<8x16x4xbf16>
    %35 = vector.shape_cast %34 : vector<8x16x4xbf16> to vector<128x4xbf16>
    %c0_44 = arith.constant 0 : index
    %c1_45 = arith.constant 1 : index
    %c0_46 = arith.constant 0 : index
    %c0_47 = arith.constant 0 : index
    %36 = vector.load %arg2[%c0_44, %c1_45, %c0_46, %c0_47] : memref<3x3x4x8xbf16, #tpu.memory_space<vmem>>, vector<1x1x4x8xbf16>
    %37 = vector.shape_cast %36 : vector<1x1x4x8xbf16> to vector<4x8xbf16>
    %cst_48 = arith.constant dense<0.000000e+00> : vector<128x8xf32>
    %38 = tpu.matmul %35, %37, %cst_48 {dimension_numbers = #tpu.dot_dimension_numbers<[1], [0], [0], [1], [0, 0, 1, 1], [], []>} : vector<128x4xbf16>, vector<4x8xbf16>, vector<128x8xf32> -> vector<128x8xf32>
    %39 = arith.addf %33, %38 : vector<128x8xf32>
    %c0_49 = arith.constant 0 : index
    %c9 = arith.constant 9 : index
    %c0_50 = arith.constant 0 : index
    %40 = vector.load %arg6[%c0_49, %c9, %c0_50] : memref<18x32x4xbf16, #tpu.memory_space<vmem>>, vector<8x16x4xbf16>
    %41 = vector.shape_cast %40 : vector<8x16x4xbf16> to vector<128x4xbf16>
    %c0_51 = arith.constant 0 : index
    %c2 = arith.constant 2 : index
    %c0_52 = arith.constant 0 : index
    %c0_53 = arith.constant 0 : index
    %42 = vector.load %arg2[%c0_51, %c2, %c0_52, %c0_53] : memref<3x3x4x8xbf16, #tpu.memory_space<vmem>>, vector<1x1x4x8xbf16>
    %43 = vector.shape_cast %42 : vector<1x1x4x8xbf16> to vector<4x8xbf16>
    %cst_54 = arith.constant dense<0.000000e+00> : vector<128x8xf32>
    %44 = tpu.matmul %41, %43, %cst_54 {dimension_numbers = #tpu.dot_dimension_numbers<[1], [0], [0], [1], [0, 0, 1, 1], [], []>} : vector<128x4xbf16>, vector<4x8xbf16>, vector<128x8xf32> -> vector<128x8xf32>
    %45 = arith.addf %39, %44 : vector<128x8xf32>
    %c1_55 = arith.constant 1 : index
    %c7_56 = arith.constant 7 : index
    %c0_57 = arith.constant 0 : index
    %46 = vector.load %arg6[%c1_55, %c7_56, %c0_57] : memref<18x32x4xbf16, #tpu.memory_space<vmem>>, vector<8x16x4xbf16>
    %47 = vector.shape_cast %46 : vector<8x16x4xbf16> to vector<128x4xbf16>
    %c1_58 = arith.constant 1 : index
    %c0_59 = arith.constant 0 : index
    %c0_60 = arith.constant 0 : index
    %c0_61 = arith.constant 0 : index
    %48 = vector.load %arg2[%c1_58, %c0_59, %c0_60, %c0_61] : memref<3x3x4x8xbf16, #tpu.memory_space<vmem>>, vector<1x1x4x8xbf16>
    %49 = vector.shape_cast %48 : vector<1x1x4x8xbf16> to vector<4x8xbf16>
    %cst_62 = arith.constant dense<0.000000e+00> : vector<128x8xf32>
    %50 = tpu.matmul %47, %49, %cst_62 {dimension_numbers = #tpu.dot_dimension_numbers<[1], [0], [0], [1], [0, 0, 1, 1], [], []>} : vector<128x4xbf16>, vector<4x8xbf16>, vector<128x8xf32> -> vector<128x8xf32>
    %51 = arith.addf %45, %50 : vector<128x8xf32>
    %c1_63 = arith.constant 1 : index
    %c8_64 = arith.constant 8 : index
    %c0_65 = arith.constant 0 : index
    %52 = vector.load %arg6[%c1_63, %c8_64, %c0_65] : memref<18x32x4xbf16, #tpu.memory_space<vmem>>, vector<8x16x4xbf16>
    %53 = vector.shape_cast %52 : vector<8x16x4xbf16> to vector<128x4xbf16>
    %c1_66 = arith.constant 1 : index
    %c1_67 = arith.constant 1 : index
    %c0_68 = arith.constant 0 : index
    %c0_69 = arith.constant 0 : index
    %54 = vector.load %arg2[%c1_66, %c1_67, %c0_68, %c0_69] : memref<3x3x4x8xbf16, #tpu.memory_space<vmem>>, vector<1x1x4x8xbf16>
    %55 = vector.shape_cast %54 : vector<1x1x4x8xbf16> to vector<4x8xbf16>
    %cst_70 = arith.constant dense<0.000000e+00> : vector<128x8xf32>
    %56 = tpu.matmul %53, %55, %cst_70 {dimension_numbers = #tpu.dot_dimension_numbers<[1], [0], [0], [1], [0, 0, 1, 1], [], []>} : vector<128x4xbf16>, vector<4x8xbf16>, vector<128x8xf32> -> vector<128x8xf32>
    %57 = arith.addf %51, %56 : vector<128x8xf32>
    %c1_71 = arith.constant 1 : index
    %c9_72 = arith.constant 9 : index
    %c0_73 = arith.constant 0 : index
    %58 = vector.load %arg6[%c1_71, %c9_72, %c0_73] : memref<18x32x4xbf16, #tpu.memory_space<vmem>>, vector<8x16x4xbf16>
    %59 = vector.shape_cast %58 : vector<8x16x4xbf16> to vector<128x4xbf16>
    %c1_74 = arith.constant 1 : index
    %c2_75 = arith.constant 2 : index
    %c0_76 = arith.constant 0 : index
    %c0_77 = arith.constant 0 : index
    %60 = vector.load %arg2[%c1_74, %c2_75, %c0_76, %c0_77] : memref<3x3x4x8xbf16, #tpu.memory_space<vmem>>, vector<1x1x4x8xbf16>
    %61 = vector.shape_cast %60 : vector<1x1x4x8xbf16> to vector<4x8xbf16>
    %cst_78 = arith.constant dense<0.000000e+00> : vector<128x8xf32>
    %62 = tpu.matmul %59, %61, %cst_78 {dimension_numbers = #tpu.dot_dimension_numbers<[1], [0], [0], [1], [0, 0, 1, 1], [], []>} : vector<128x4xbf16>, vector<4x8xbf16>, vector<128x8xf32> -> vector<128x8xf32>
    %63 = arith.addf %57, %62 : vector<128x8xf32>
    %c2_79 = arith.constant 2 : index
    %c7_80 = arith.constant 7 : index
    %c0_81 = arith.constant 0 : index
    %64 = vector.load %arg6[%c2_79, %c7_80, %c0_81] : memref<18x32x4xbf16, #tpu.memory_space<vmem>>, vector<8x16x4xbf16>
    %65 = vector.shape_cast %64 : vector<8x16x4xbf16> to vector<128x4xbf16>
    %c2_82 = arith.constant 2 : index
    %c0_83 = arith.constant 0 : index
    %c0_84 = arith.constant 0 : index
    %c0_85 = arith.constant 0 : index
    %66 = vector.load %arg2[%c2_82, %c0_83, %c0_84, %c0_85] : memref<3x3x4x8xbf16, #tpu.memory_space<vmem>>, vector<1x1x4x8xbf16>
    %67 = vector.shape_cast %66 : vector<1x1x4x8xbf16> to vector<4x8xbf16>
    %cst_86 = arith.constant dense<0.000000e+00> : vector<128x8xf32>
    %68 = tpu.matmul %65, %67, %cst_86 {dimension_numbers = #tpu.dot_dimension_numbers<[1], [0], [0], [1], [0, 0, 1, 1], [], []>} : vector<128x4xbf16>, vector<4x8xbf16>, vector<128x8xf32> -> vector<128x8xf32>
    %69 = arith.addf %63, %68 : vector<128x8xf32>
    %c2_87 = arith.constant 2 : index
    %c8_88 = arith.constant 8 : index
    %c0_89 = arith.constant 0 : index
    %70 = vector.load %arg6[%c2_87, %c8_88, %c0_89] : memref<18x32x4xbf16, #tpu.memory_space<vmem>>, vector<8x16x4xbf16>
    %71 = vector.shape_cast %70 : vector<8x16x4xbf16> to vector<128x4xbf16>
    %c2_90 = arith.constant 2 : index
    %c1_91 = arith.constant 1 : index
    %c0_92 = arith.constant 0 : index
    %c0_93 = arith.constant 0 : index
    %72 = vector.load %arg2[%c2_90, %c1_91, %c0_92, %c0_93] : memref<3x3x4x8xbf16, #tpu.memory_space<vmem>>, vector<1x1x4x8xbf16>
    %73 = vector.shape_cast %72 : vector<1x1x4x8xbf16> to vector<4x8xbf16>
    %cst_94 = arith.constant dense<0.000000e+00> : vector<128x8xf32>
    %74 = tpu.matmul %71, %73, %cst_94 {dimension_numbers = #tpu.dot_dimension_numbers<[1], [0], [0], [1], [0, 0, 1, 1], [], []>} : vector<128x4xbf16>, vector<4x8xbf16>, vector<128x8xf32> -> vector<128x8xf32>
    %75 = arith.addf %69, %74 : vector<128x8xf32>
    %c2_95 = arith.constant 2 : index
    %c9_96 = arith.constant 9 : index
    %c0_97 = arith.constant 0 : index
    %76 = vector.load %arg6[%c2_95, %c9_96, %c0_97] : memref<18x32x4xbf16, #tpu.memory_space<vmem>>, vector<8x16x4xbf16>
    %77 = vector.shape_cast %76 : vector<8x16x4xbf16> to vector<128x4xbf16>
    %c2_98 = arith.constant 2 : index
    %c2_99 = arith.constant 2 : index
    %c0_100 = arith.constant 0 : index
    %c0_101 = arith.constant 0 : index
    %78 = vector.load %arg2[%c2_98, %c2_99, %c0_100, %c0_101] : memref<3x3x4x8xbf16, #tpu.memory_space<vmem>>, vector<1x1x4x8xbf16>
    %79 = vector.shape_cast %78 : vector<1x1x4x8xbf16> to vector<4x8xbf16>
    %cst_102 = arith.constant dense<0.000000e+00> : vector<128x8xf32>
    %80 = tpu.matmul %77, %79, %cst_102 {dimension_numbers = #tpu.dot_dimension_numbers<[1], [0], [0], [1], [0, 0, 1, 1], [], []>} : vector<128x4xbf16>, vector<4x8xbf16>, vector<128x8xf32> -> vector<128x8xf32>
    %81 = arith.addf %75, %80 : vector<128x8xf32>
    %cst_103 = arith.constant 0.000000e+00 : f32
    %82 = vector.broadcast %cst_103 : f32 to vector<128x8xf32>
    %83 = arith.maximumf %81, %82 : vector<128x8xf32>
    %84 = arith.truncf %83 : vector<128x8xf32> to vector<128x8xbf16>
    %85 = vector.shape_cast %84 : vector<128x8xbf16> to vector<8x16x8xbf16>
    %c1_104 = arith.constant 1 : index
    %c8_105 = arith.constant 8 : index
    %c0_106 = arith.constant 0 : index
    %86 = vector.load %arg7[%c1_104, %c8_105, %c0_106] : memref<18x32x8xbf16, #tpu.memory_space<vmem>>, vector<8x16x8xbf16>
    tpu.vector_store %arg7[%c1_104, %c8_105, %c0_106], %85 {strides = array<i32>} : memref<18x32x8xbf16, #tpu.memory_space<vmem>>, vector<8x16x8xbf16>,
    %cst_107 = arith.constant 0.000000e+00 : f32
    %87 = vector.broadcast %cst_107 : f32 to vector<128x8xf32>
    %c8_108 = arith.constant 8 : index
    %c7_109 = arith.constant 7 : index
    %c0_110 = arith.constant 0 : index
    %88 = vector.load %arg6[%c8_108, %c7_109, %c0_110] : memref<18x32x4xbf16, #tpu.memory_space<vmem>>, vector<8x16x4xbf16>
    %89 = vector.shape_cast %88 : vector<8x16x4xbf16> to vector<128x4xbf16>
    %c0_111 = arith.constant 0 : index
    %c0_112 = arith.constant 0 : index
    %c0_113 = arith.constant 0 : index
    %c0_114 = arith.constant 0 : index
    %90 = vector.load %arg2[%c0_111, %c0_112, %c0_113, %c0_114] : memref<3x3x4x8xbf16, #tpu.memory_space<vmem>>, vector<1x1x4x8xbf16>
    %91 = vector.shape_cast %90 : vector<1x1x4x8xbf16> to vector<4x8xbf16>
    %cst_115 = arith.constant dense<0.000000e+00> : vector<128x8xf32>
    %92 = tpu.matmul %89, %91, %cst_115 {dimension_numbers = #tpu.dot_dimension_numbers<[1], [0], [0], [1], [0, 0, 1, 1], [], []>} : vector<128x4xbf16>, vector<4x8xbf16>, vector<128x8xf32> -> vector<128x8xf32>
    %93 = arith.addf %87, %92 : vector<128x8xf32>
    %c8_116 = arith.constant 8 : index
    %c8_117 = arith.constant 8 : index
    %c0_118 = arith.constant 0 : index
    %94 = vector.load %arg6[%c8_116, %c8_117, %c0_118] : memref<18x32x4xbf16, #tpu.memory_space<vmem>>, vector<8x16x4xbf16>
    %95 = vector.shape_cast %94 : vector<8x16x4xbf16> to vector<128x4xbf16>
    %c0_119 = arith.constant 0 : index
    %c1_120 = arith.constant 1 : index
    %c0_121 = arith.constant 0 : index
    %c0_122 = arith.constant 0 : index
    %96 = vector.load %arg2[%c0_119, %c1_120, %c0_121, %c0_122] : memref<3x3x4x8xbf16, #tpu.memory_space<vmem>>, vector<1x1x4x8xbf16>
    %97 = vector.shape_cast %96 : vector<1x1x4x8xbf16> to vector<4x8xbf16>
    %cst_123 = arith.constant dense<0.000000e+00> : vector<128x8xf32>
    %98 = tpu.matmul %95, %97, %cst_123 {dimension_numbers = #tpu.dot_dimension_numbers<[1], [0], [0], [1], [0, 0, 1, 1], [], []>} : vector<128x4xbf16>, vector<4x8xbf16>, vector<128x8xf32> -> vector<128x8xf32>
    %99 = arith.addf %93, %98 : vector<128x8xf32>
    %c8_124 = arith.constant 8 : index
    %c9_125 = arith.constant 9 : index
    %c0_126 = arith.constant 0 : index
    %100 = vector.load %arg6[%c8_124, %c9_125, %c0_126] : memref<18x32x4xbf16, #tpu.memory_space<vmem>>, vector<8x16x4xbf16>
    %101 = vector.shape_cast %100 : vector<8x16x4xbf16> to vector<128x4xbf16>
    %c0_127 = arith.constant 0 : index
    %c2_128 = arith.constant 2 : index
    %c0_129 = arith.constant 0 : index
    %c0_130 = arith.constant 0 : index
    %102 = vector.load %arg2[%c0_127, %c2_128, %c0_129, %c0_130] : memref<3x3x4x8xbf16, #tpu.memory_space<vmem>>, vector<1x1x4x8xbf16>
    %103 = vector.shape_cast %102 : vector<1x1x4x8xbf16> to vector<4x8xbf16>
    %cst_131 = arith.constant dense<0.000000e+00> : vector<128x8xf32>
    %104 = tpu.matmul %101, %103, %cst_131 {dimension_numbers = #tpu.dot_dimension_numbers<[1], [0], [0], [1], [0, 0, 1, 1], [], []>} : vector<128x4xbf16>, vector<4x8xbf16>, vector<128x8xf32> -> vector<128x8xf32>
    %105 = arith.addf %99, %104 : vector<128x8xf32>
    %c9_132 = arith.constant 9 : index
    %c7_133 = arith.constant 7 : index
    %c0_134 = arith.constant 0 : index
    %106 = vector.load %arg6[%c9_132, %c7_133, %c0_134] : memref<18x32x4xbf16, #tpu.memory_space<vmem>>, vector<8x16x4xbf16>
    %107 = vector.shape_cast %106 : vector<8x16x4xbf16> to vector<128x4xbf16>
    %c1_135 = arith.constant 1 : index
    %c0_136 = arith.constant 0 : index
    %c0_137 = arith.constant 0 : index
    %c0_138 = arith.constant 0 : index
    %108 = vector.load %arg2[%c1_135, %c0_136, %c0_137, %c0_138] : memref<3x3x4x8xbf16, #tpu.memory_space<vmem>>, vector<1x1x4x8xbf16>
    %109 = vector.shape_cast %108 : vector<1x1x4x8xbf16> to vector<4x8xbf16>
    %cst_139 = arith.constant dense<0.000000e+00> : vector<128x8xf32>
    %110 = tpu.matmul %107, %109, %cst_139 {dimension_numbers = #tpu.dot_dimension_numbers<[1], [0], [0], [1], [0, 0, 1, 1], [], []>} : vector<128x4xbf16>, vector<4x8xbf16>, vector<128x8xf32> -> vector<128x8xf32>
    %111 = arith.addf %105, %110 : vector<128x8xf32>
    %c9_140 = arith.constant 9 : index
    %c8_141 = arith.constant 8 : index
    %c0_142 = arith.constant 0 : index
    %112 = vector.load %arg6[%c9_140, %c8_141, %c0_142] : memref<18x32x4xbf16, #tpu.memory_space<vmem>>, vector<8x16x4xbf16>
    %113 = vector.shape_cast %112 : vector<8x16x4xbf16> to vector<128x4xbf16>
    %c1_143 = arith.constant 1 : index
    %c1_144 = arith.constant 1 : index
    %c0_145 = arith.constant 0 : index
    %c0_146 = arith.constant 0 : index
    %114 = vector.load %arg2[%c1_143, %c1_144, %c0_145, %c0_146] : memref<3x3x4x8xbf16, #tpu.memory_space<vmem>>, vector<1x1x4x8xbf16>
    %115 = vector.shape_cast %114 : vector<1x1x4x8xbf16> to vector<4x8xbf16>
    %cst_147 = arith.constant dense<0.000000e+00> : vector<128x8xf32>
    %116 = tpu.matmul %113, %115, %cst_147 {dimension_numbers = #tpu.dot_dimension_numbers<[1], [0], [0], [1], [0, 0, 1, 1], [], []>} : vector<128x4xbf16>, vector<4x8xbf16>, vector<128x8xf32> -> vector<128x8xf32>
    %117 = arith.addf %111, %116 : vector<128x8xf32>
    %c9_148 = arith.constant 9 : index
    %c9_149 = arith.constant 9 : index
    %c0_150 = arith.constant 0 : index
    %118 = vector.load %arg6[%c9_148, %c9_149, %c0_150] : memref<18x32x4xbf16, #tpu.memory_space<vmem>>, vector<8x16x4xbf16>
    %119 = vector.shape_cast %118 : vector<8x16x4xbf16> to vector<128x4xbf16>
    %c1_151 = arith.constant 1 : index
    %c2_152 = arith.constant 2 : index
    %c0_153 = arith.constant 0 : index
    %c0_154 = arith.constant 0 : index
    %120 = vector.load %arg2[%c1_151, %c2_152, %c0_153, %c0_154] : memref<3x3x4x8xbf16, #tpu.memory_space<vmem>>, vector<1x1x4x8xbf16>
    %121 = vector.shape_cast %120 : vector<1x1x4x8xbf16> to vector<4x8xbf16>
    %cst_155 = arith.constant dense<0.000000e+00> : vector<128x8xf32>
    %122 = tpu.matmul %119, %121, %cst_155 {dimension_numbers = #tpu.dot_dimension_numbers<[1], [0], [0], [1], [0, 0, 1, 1], [], []>} : vector<128x4xbf16>, vector<4x8xbf16>, vector<128x8xf32> -> vector<128x8xf32>
    %123 = arith.addf %117, %122 : vector<128x8xf32>
    %c10 = arith.constant 10 : index
    %c7_156 = arith.constant 7 : index
    %c0_157 = arith.constant 0 : index
    %124 = vector.load %arg6[%c10, %c7_156, %c0_157] : memref<18x32x4xbf16, #tpu.memory_space<vmem>>, vector<8x16x4xbf16>
    %125 = vector.shape_cast %124 : vector<8x16x4xbf16> to vector<128x4xbf16>
    %c2_158 = arith.constant 2 : index
    %c0_159 = arith.constant 0 : index
    %c0_160 = arith.constant 0 : index
    %c0_161 = arith.constant 0 : index
    %126 = vector.load %arg2[%c2_158, %c0_159, %c0_160, %c0_161] : memref<3x3x4x8xbf16, #tpu.memory_space<vmem>>, vector<1x1x4x8xbf16>
    %127 = vector.shape_cast %126 : vector<1x1x4x8xbf16> to vector<4x8xbf16>
    %cst_162 = arith.constant dense<0.000000e+00> : vector<128x8xf32>
    %128 = tpu.matmul %125, %127, %cst_162 {dimension_numbers = #tpu.dot_dimension_numbers<[1], [0], [0], [1], [0, 0, 1, 1], [], []>} : vector<128x4xbf16>, vector<4x8xbf16>, vector<128x8xf32> -> vector<128x8xf32>
    %129 = arith.addf %123, %128 : vector<128x8xf32>
    %c10_163 = arith.constant 10 : index
    %c8_164 = arith.constant 8 : index
    %c0_165 = arith.constant 0 : index
    %130 = vector.load %arg6[%c10_163, %c8_164, %c0_165] : memref<18x32x4xbf16, #tpu.memory_space<vmem>>, vector<8x16x4xbf16>
    %131 = vector.shape_cast %130 : vector<8x16x4xbf16> to vector<128x4xbf16>
    %c2_166 = arith.constant 2 : index
    %c1_167 = arith.constant 1 : index
    %c0_168 = arith.constant 0 : index
    %c0_169 = arith.constant 0 : index
    %132 = vector.load %arg2[%c2_166, %c1_167, %c0_168, %c0_169] : memref<3x3x4x8xbf16, #tpu.memory_space<vmem>>, vector<1x1x4x8xbf16>
    %133 = vector.shape_cast %132 : vector<1x1x4x8xbf16> to vector<4x8xbf16>
    %cst_170 = arith.constant dense<0.000000e+00> : vector<128x8xf32>
    %134 = tpu.matmul %131, %133, %cst_170 {dimension_numbers = #tpu.dot_dimension_numbers<[1], [0], [0], [1], [0, 0, 1, 1], [], []>} : vector<128x4xbf16>, vector<4x8xbf16>, vector<128x8xf32> -> vector<128x8xf32>
    %135 = arith.addf %129, %134 : vector<128x8xf32>
    %c10_171 = arith.constant 10 : index
    %c9_172 = arith.constant 9 : index
    %c0_173 = arith.constant 0 : index
    %136 = vector.load %arg6[%c10_171, %c9_172, %c0_173] : memref<18x32x4xbf16, #tpu.memory_space<vmem>>, vector<8x16x4xbf16>
    %137 = vector.shape_cast %136 : vector<8x16x4xbf16> to vector<128x4xbf16>
    %c2_174 = arith.constant 2 : index
    %c2_175 = arith.constant 2 : index
    %c0_176 = arith.constant 0 : index
    %c0_177 = arith.constant 0 : index
    %138 = vector.load %arg2[%c2_174, %c2_175, %c0_176, %c0_177] : memref<3x3x4x8xbf16, #tpu.memory_space<vmem>>, vector<1x1x4x8xbf16>
    %139 = vector.shape_cast %138 : vector<1x1x4x8xbf16> to vector<4x8xbf16>
    %cst_178 = arith.constant dense<0.000000e+00> : vector<128x8xf32>
    %140 = tpu.matmul %137, %139, %cst_178 {dimension_numbers = #tpu.dot_dimension_numbers<[1], [0], [0], [1], [0, 0, 1, 1], [], []>} : vector<128x4xbf16>, vector<4x8xbf16>, vector<128x8xf32> -> vector<128x8xf32>
    %141 = arith.addf %135, %140 : vector<128x8xf32>
    %cst_179 = arith.constant 0.000000e+00 : f32
    %142 = vector.broadcast %cst_179 : f32 to vector<128x8xf32>
    %143 = arith.maximumf %141, %142 : vector<128x8xf32>
    %144 = arith.truncf %143 : vector<128x8xf32> to vector<128x8xbf16>
    %145 = vector.shape_cast %144 : vector<128x8xbf16> to vector<8x16x8xbf16>
    %c9_180 = arith.constant 9 : index
    %c8_181 = arith.constant 8 : index
    %c0_182 = arith.constant 0 : index
    %146 = vector.load %arg7[%c9_180, %c8_181, %c0_182] : memref<18x32x8xbf16, #tpu.memory_space<vmem>>, vector<8x16x8xbf16>
    tpu.vector_store %arg7[%c9_180, %c8_181, %c0_182], %145 {strides = array<i32>} : memref<18x32x8xbf16, #tpu.memory_space<vmem>>, vector<8x16x8xbf16>,
    %cst_183 = arith.constant 0.000000e+00 : f32
    %147 = vector.broadcast %cst_183 : f32 to vector<128x8xf32>
    %c0_184 = arith.constant 0 : index
    %c7_185 = arith.constant 7 : index
    %c0_186 = arith.constant 0 : index
    %148 = vector.load %arg7[%c0_184, %c7_185, %c0_186] : memref<18x32x8xbf16, #tpu.memory_space<vmem>>, vector<8x16x8xbf16>
    %149 = vector.shape_cast %148 : vector<8x16x8xbf16> to vector<128x8xbf16>
    %c0_187 = arith.constant 0 : index
    %c0_188 = arith.constant 0 : index
    %c0_189 = arith.constant 0 : index
    %c0_190 = arith.constant 0 : index
    %150 = vector.load %arg3[%c0_187, %c0_188, %c0_189, %c0_190] : memref<3x3x8x8xbf16, #tpu.memory_space<vmem>>, vector<1x1x8x8xbf16>
    %151 = vector.shape_cast %150 : vector<1x1x8x8xbf16> to vector<8x8xbf16>
    %cst_191 = arith.constant dense<0.000000e+00> : vector<128x8xf32>
    %152 = tpu.matmul %149, %151, %cst_191 {dimension_numbers = #tpu.dot_dimension_numbers<[1], [0], [0], [1], [0, 0, 1, 1], [], []>} : vector<128x8xbf16>, vector<8x8xbf16>, vector<128x8xf32> -> vector<128x8xf32>
    %153 = arith.addf %147, %152 : vector<128x8xf32>
    %c0_192 = arith.constant 0 : index
    %c8_193 = arith.constant 8 : index
    %c0_194 = arith.constant 0 : index
    %154 = vector.load %arg7[%c0_192, %c8_193, %c0_194] : memref<18x32x8xbf16, #tpu.memory_space<vmem>>, vector<8x16x8xbf16>
    %155 = vector.shape_cast %154 : vector<8x16x8xbf16> to vector<128x8xbf16>
    %c0_195 = arith.constant 0 : index
    %c1_196 = arith.constant 1 : index
    %c0_197 = arith.constant 0 : index
    %c0_198 = arith.constant 0 : index
    %156 = vector.load %arg3[%c0_195, %c1_196, %c0_197, %c0_198] : memref<3x3x8x8xbf16, #tpu.memory_space<vmem>>, vector<1x1x8x8xbf16>
    %157 = vector.shape_cast %156 : vector<1x1x8x8xbf16> to vector<8x8xbf16>
    %cst_199 = arith.constant dense<0.000000e+00> : vector<128x8xf32>
    %158 = tpu.matmul %155, %157, %cst_199 {dimension_numbers = #tpu.dot_dimension_numbers<[1], [0], [0], [1], [0, 0, 1, 1], [], []>} : vector<128x8xbf16>, vector<8x8xbf16>, vector<128x8xf32> -> vector<128x8xf32>
    %159 = arith.addf %153, %158 : vector<128x8xf32>
    %c0_200 = arith.constant 0 : index
    %c9_201 = arith.constant 9 : index
    %c0_202 = arith.constant 0 : index
    %160 = vector.load %arg7[%c0_200, %c9_201, %c0_202] : memref<18x32x8xbf16, #tpu.memory_space<vmem>>, vector<8x16x8xbf16>
    %161 = vector.shape_cast %160 : vector<8x16x8xbf16> to vector<128x8xbf16>
    %c0_203 = arith.constant 0 : index
    %c2_204 = arith.constant 2 : index
    %c0_205 = arith.constant 0 : index
    %c0_206 = arith.constant 0 : index
    %162 = vector.load %arg3[%c0_203, %c2_204, %c0_205, %c0_206] : memref<3x3x8x8xbf16, #tpu.memory_space<vmem>>, vector<1x1x8x8xbf16>
    %163 = vector.shape_cast %162 : vector<1x1x8x8xbf16> to vector<8x8xbf16>
    %cst_207 = arith.constant dense<0.000000e+00> : vector<128x8xf32>
    %164 = tpu.matmul %161, %163, %cst_207 {dimension_numbers = #tpu.dot_dimension_numbers<[1], [0], [0], [1], [0, 0, 1, 1], [], []>} : vector<128x8xbf16>, vector<8x8xbf16>, vector<128x8xf32> -> vector<128x8xf32>
    %165 = arith.addf %159, %164 : vector<128x8xf32>
    %c1_208 = arith.constant 1 : index
    %c7_209 = arith.constant 7 : index
    %c0_210 = arith.constant 0 : index
    %166 = vector.load %arg7[%c1_208, %c7_209, %c0_210] : memref<18x32x8xbf16, #tpu.memory_space<vmem>>, vector<8x16x8xbf16>
    %167 = vector.shape_cast %166 : vector<8x16x8xbf16> to vector<128x8xbf16>
    %c1_211 = arith.constant 1 : index
    %c0_212 = arith.constant 0 : index
    %c0_213 = arith.constant 0 : index
    %c0_214 = arith.constant 0 : index
    %168 = vector.load %arg3[%c1_211, %c0_212, %c0_213, %c0_214] : memref<3x3x8x8xbf16, #tpu.memory_space<vmem>>, vector<1x1x8x8xbf16>
    %169 = vector.shape_cast %168 : vector<1x1x8x8xbf16> to vector<8x8xbf16>
    %cst_215 = arith.constant dense<0.000000e+00> : vector<128x8xf32>
    %170 = tpu.matmul %167, %169, %cst_215 {dimension_numbers = #tpu.dot_dimension_numbers<[1], [0], [0], [1], [0, 0, 1, 1], [], []>} : vector<128x8xbf16>, vector<8x8xbf16>, vector<128x8xf32> -> vector<128x8xf32>
    %171 = arith.addf %165, %170 : vector<128x8xf32>
    %c1_216 = arith.constant 1 : index
    %c8_217 = arith.constant 8 : index
    %c0_218 = arith.constant 0 : index
    %172 = vector.load %arg7[%c1_216, %c8_217, %c0_218] : memref<18x32x8xbf16, #tpu.memory_space<vmem>>, vector<8x16x8xbf16>
    %173 = vector.shape_cast %172 : vector<8x16x8xbf16> to vector<128x8xbf16>
    %c1_219 = arith.constant 1 : index
    %c1_220 = arith.constant 1 : index
    %c0_221 = arith.constant 0 : index
    %c0_222 = arith.constant 0 : index
    %174 = vector.load %arg3[%c1_219, %c1_220, %c0_221, %c0_222] : memref<3x3x8x8xbf16, #tpu.memory_space<vmem>>, vector<1x1x8x8xbf16>
    %175 = vector.shape_cast %174 : vector<1x1x8x8xbf16> to vector<8x8xbf16>
    %cst_223 = arith.constant dense<0.000000e+00> : vector<128x8xf32>
    %176 = tpu.matmul %173, %175, %cst_223 {dimension_numbers = #tpu.dot_dimension_numbers<[1], [0], [0], [1], [0, 0, 1, 1], [], []>} : vector<128x8xbf16>, vector<8x8xbf16>, vector<128x8xf32> -> vector<128x8xf32>
    %177 = arith.addf %171, %176 : vector<128x8xf32>
    %c1_224 = arith.constant 1 : index
    %c9_225 = arith.constant 9 : index
    %c0_226 = arith.constant 0 : index
    %178 = vector.load %arg7[%c1_224, %c9_225, %c0_226] : memref<18x32x8xbf16, #tpu.memory_space<vmem>>, vector<8x16x8xbf16>
    %179 = vector.shape_cast %178 : vector<8x16x8xbf16> to vector<128x8xbf16>
    %c1_227 = arith.constant 1 : index
    %c2_228 = arith.constant 2 : index
    %c0_229 = arith.constant 0 : index
    %c0_230 = arith.constant 0 : index
    %180 = vector.load %arg3[%c1_227, %c2_228, %c0_229, %c0_230] : memref<3x3x8x8xbf16, #tpu.memory_space<vmem>>, vector<1x1x8x8xbf16>
    %181 = vector.shape_cast %180 : vector<1x1x8x8xbf16> to vector<8x8xbf16>
    %cst_231 = arith.constant dense<0.000000e+00> : vector<128x8xf32>
    %182 = tpu.matmul %179, %181, %cst_231 {dimension_numbers = #tpu.dot_dimension_numbers<[1], [0], [0], [1], [0, 0, 1, 1], [], []>} : vector<128x8xbf16>, vector<8x8xbf16>, vector<128x8xf32> -> vector<128x8xf32>
    %183 = arith.addf %177, %182 : vector<128x8xf32>
    %c2_232 = arith.constant 2 : index
    %c7_233 = arith.constant 7 : index
    %c0_234 = arith.constant 0 : index
    %184 = vector.load %arg7[%c2_232, %c7_233, %c0_234] : memref<18x32x8xbf16, #tpu.memory_space<vmem>>, vector<8x16x8xbf16>
    %185 = vector.shape_cast %184 : vector<8x16x8xbf16> to vector<128x8xbf16>
    %c2_235 = arith.constant 2 : index
    %c0_236 = arith.constant 0 : index
    %c0_237 = arith.constant 0 : index
    %c0_238 = arith.constant 0 : index
    %186 = vector.load %arg3[%c2_235, %c0_236, %c0_237, %c0_238] : memref<3x3x8x8xbf16, #tpu.memory_space<vmem>>, vector<1x1x8x8xbf16>
    %187 = vector.shape_cast %186 : vector<1x1x8x8xbf16> to vector<8x8xbf16>
    %cst_239 = arith.constant dense<0.000000e+00> : vector<128x8xf32>
    %188 = tpu.matmul %185, %187, %cst_239 {dimension_numbers = #tpu.dot_dimension_numbers<[1], [0], [0], [1], [0, 0, 1, 1], [], []>} : vector<128x8xbf16>, vector<8x8xbf16>, vector<128x8xf32> -> vector<128x8xf32>
    %189 = arith.addf %183, %188 : vector<128x8xf32>
    %c2_240 = arith.constant 2 : index
    %c8_241 = arith.constant 8 : index
    %c0_242 = arith.constant 0 : index
    %190 = vector.load %arg7[%c2_240, %c8_241, %c0_242] : memref<18x32x8xbf16, #tpu.memory_space<vmem>>, vector<8x16x8xbf16>
    %191 = vector.shape_cast %190 : vector<8x16x8xbf16> to vector<128x8xbf16>
    %c2_243 = arith.constant 2 : index
    %c1_244 = arith.constant 1 : index
    %c0_245 = arith.constant 0 : index
    %c0_246 = arith.constant 0 : index
    %192 = vector.load %arg3[%c2_243, %c1_244, %c0_245, %c0_246] : memref<3x3x8x8xbf16, #tpu.memory_space<vmem>>, vector<1x1x8x8xbf16>
    %193 = vector.shape_cast %192 : vector<1x1x8x8xbf16> to vector<8x8xbf16>
    %cst_247 = arith.constant dense<0.000000e+00> : vector<128x8xf32>
    %194 = tpu.matmul %191, %193, %cst_247 {dimension_numbers = #tpu.dot_dimension_numbers<[1], [0], [0], [1], [0, 0, 1, 1], [], []>} : vector<128x8xbf16>, vector<8x8xbf16>, vector<128x8xf32> -> vector<128x8xf32>
    %195 = arith.addf %189, %194 : vector<128x8xf32>
    %c2_248 = arith.constant 2 : index
    %c9_249 = arith.constant 9 : index
    %c0_250 = arith.constant 0 : index
    %196 = vector.load %arg7[%c2_248, %c9_249, %c0_250] : memref<18x32x8xbf16, #tpu.memory_space<vmem>>, vector<8x16x8xbf16>
    %197 = vector.shape_cast %196 : vector<8x16x8xbf16> to vector<128x8xbf16>
    %c2_251 = arith.constant 2 : index
    %c2_252 = arith.constant 2 : index
    %c0_253 = arith.constant 0 : index
    %c0_254 = arith.constant 0 : index
    %198 = vector.load %arg3[%c2_251, %c2_252, %c0_253, %c0_254] : memref<3x3x8x8xbf16, #tpu.memory_space<vmem>>, vector<1x1x8x8xbf16>
    %199 = vector.shape_cast %198 : vector<1x1x8x8xbf16> to vector<8x8xbf16>
    %cst_255 = arith.constant dense<0.000000e+00> : vector<128x8xf32>
    %200 = tpu.matmul %197, %199, %cst_255 {dimension_numbers = #tpu.dot_dimension_numbers<[1], [0], [0], [1], [0, 0, 1, 1], [], []>} : vector<128x8xbf16>, vector<8x8xbf16>, vector<128x8xf32> -> vector<128x8xf32>
    %201 = arith.addf %195, %200 : vector<128x8xf32>
    %c0_256 = arith.constant 0 : index
    %c0_257 = arith.constant 0 : index
    %c0_258 = arith.constant 0 : index
    %c0_259 = arith.constant 0 : index
    %202 = vector.load %arg1[%c0_256, %c0_257, %c0_258, %c0_259] : memref<1x16x16x4xbf16, #tpu.memory_space<vmem>>, vector<1x8x16x4xbf16>
    %203 = vector.shape_cast %202 : vector<1x8x16x4xbf16> to vector<8x16x4xbf16>
    %204 = vector.shape_cast %203 : vector<8x16x4xbf16> to vector<128x4xbf16>
    %c0_260 = arith.constant 0 : index
    %c0_261 = arith.constant 0 : index
    %205 = vector.load %arg4[%c0_260, %c0_261] : memref<4x8xbf16, #tpu.memory_space<vmem>>, vector<4x8xbf16>
    %cst_262 = arith.constant dense<0.000000e+00> : vector<128x8xf32>
    %206 = tpu.matmul %204, %205, %cst_262 {dimension_numbers = #tpu.dot_dimension_numbers<[1], [0], [0], [1], [0, 0, 1, 1], [], []>} : vector<128x4xbf16>, vector<4x8xbf16>, vector<128x8xf32> -> vector<128x8xf32>
    %207 = arith.addf %201, %206 : vector<128x8xf32>
    %cst_263 = arith.constant 0.000000e+00 : f32
    %208 = vector.broadcast %cst_263 : f32 to vector<128x8xf32>
    %209 = arith.maximumf %207, %208 : vector<128x8xf32>
    %210 = vector.shape_cast %209 : vector<128x8xf32> to vector<8x16x8xf32>
    %c0_264 = arith.constant 0 : index
    %c0_265 = arith.constant 0 : index
    %c0_266 = arith.constant 0 : index
    %c0_267 = arith.constant 0 : index
    %211 = vector.load %arg5[%c0_264, %c0_265, %c0_266, %c0_267] : memref<1x16x16x8xf32, #tpu.memory_space<vmem>>, vector<1x8x16x8xf32>
    %212 = vector.shape_cast %211 : vector<1x8x16x8xf32> to vector<8x16x8xf32>
    %213 = vector.shape_cast %210 : vector<8x16x8xf32> to vector<1x8x16x8xf32>
    tpu.vector_store %arg5[%c0_264, %c0_265, %c0_266, %c0_267], %213 {strides = array<i32>} : memref<1x16x16x8xf32, #tpu.memory_space<vmem>>, vector<1x8x16x8xf32>,
    %cst_268 = arith.constant 0.000000e+00 : f32
    %214 = vector.broadcast %cst_268 : f32 to vector<128x8xf32>
    %c8_269 = arith.constant 8 : index
    %c7_270 = arith.constant 7 : index
    %c0_271 = arith.constant 0 : index
    %215 = vector.load %arg7[%c8_269, %c7_270, %c0_271] : memref<18x32x8xbf16, #tpu.memory_space<vmem>>, vector<8x16x8xbf16>
    %216 = vector.shape_cast %215 : vector<8x16x8xbf16> to vector<128x8xbf16>
    %c0_272 = arith.constant 0 : index
    %c0_273 = arith.constant 0 : index
    %c0_274 = arith.constant 0 : index
    %c0_275 = arith.constant 0 : index
    %217 = vector.load %arg3[%c0_272, %c0_273, %c0_274, %c0_275] : memref<3x3x8x8xbf16, #tpu.memory_space<vmem>>, vector<1x1x8x8xbf16>
    %218 = vector.shape_cast %217 : vector<1x1x8x8xbf16> to vector<8x8xbf16>
    %cst_276 = arith.constant dense<0.000000e+00> : vector<128x8xf32>
    %219 = tpu.matmul %216, %218, %cst_276 {dimension_numbers = #tpu.dot_dimension_numbers<[1], [0], [0], [1], [0, 0, 1, 1], [], []>} : vector<128x8xbf16>, vector<8x8xbf16>, vector<128x8xf32> -> vector<128x8xf32>
    %220 = arith.addf %214, %219 : vector<128x8xf32>
    %c8_277 = arith.constant 8 : index
    %c8_278 = arith.constant 8 : index
    %c0_279 = arith.constant 0 : index
    %221 = vector.load %arg7[%c8_277, %c8_278, %c0_279] : memref<18x32x8xbf16, #tpu.memory_space<vmem>>, vector<8x16x8xbf16>
    %222 = vector.shape_cast %221 : vector<8x16x8xbf16> to vector<128x8xbf16>
    %c0_280 = arith.constant 0 : index
    %c1_281 = arith.constant 1 : index
    %c0_282 = arith.constant 0 : index
    %c0_283 = arith.constant 0 : index
    %223 = vector.load %arg3[%c0_280, %c1_281, %c0_282, %c0_283] : memref<3x3x8x8xbf16, #tpu.memory_space<vmem>>, vector<1x1x8x8xbf16>
    %224 = vector.shape_cast %223 : vector<1x1x8x8xbf16> to vector<8x8xbf16>
    %cst_284 = arith.constant dense<0.000000e+00> : vector<128x8xf32>
    %225 = tpu.matmul %222, %224, %cst_284 {dimension_numbers = #tpu.dot_dimension_numbers<[1], [0], [0], [1], [0, 0, 1, 1], [], []>} : vector<128x8xbf16>, vector<8x8xbf16>, vector<128x8xf32> -> vector<128x8xf32>
    %226 = arith.addf %220, %225 : vector<128x8xf32>
    %c8_285 = arith.constant 8 : index
    %c9_286 = arith.constant 9 : index
    %c0_287 = arith.constant 0 : index
    %227 = vector.load %arg7[%c8_285, %c9_286, %c0_287] : memref<18x32x8xbf16, #tpu.memory_space<vmem>>, vector<8x16x8xbf16>
    %228 = vector.shape_cast %227 : vector<8x16x8xbf16> to vector<128x8xbf16>
    %c0_288 = arith.constant 0 : index
    %c2_289 = arith.constant 2 : index
    %c0_290 = arith.constant 0 : index
    %c0_291 = arith.constant 0 : index
    %229 = vector.load %arg3[%c0_288, %c2_289, %c0_290, %c0_291] : memref<3x3x8x8xbf16, #tpu.memory_space<vmem>>, vector<1x1x8x8xbf16>
    %230 = vector.shape_cast %229 : vector<1x1x8x8xbf16> to vector<8x8xbf16>
    %cst_292 = arith.constant dense<0.000000e+00> : vector<128x8xf32>
    %231 = tpu.matmul %228, %230, %cst_292 {dimension_numbers = #tpu.dot_dimension_numbers<[1], [0], [0], [1], [0, 0, 1, 1], [], []>} : vector<128x8xbf16>, vector<8x8xbf16>, vector<128x8xf32> -> vector<128x8xf32>
    %232 = arith.addf %226, %231 : vector<128x8xf32>
    %c9_293 = arith.constant 9 : index
    %c7_294 = arith.constant 7 : index
    %c0_295 = arith.constant 0 : index
    %233 = vector.load %arg7[%c9_293, %c7_294, %c0_295] : memref<18x32x8xbf16, #tpu.memory_space<vmem>>, vector<8x16x8xbf16>
    %234 = vector.shape_cast %233 : vector<8x16x8xbf16> to vector<128x8xbf16>
    %c1_296 = arith.constant 1 : index
    %c0_297 = arith.constant 0 : index
    %c0_298 = arith.constant 0 : index
    %c0_299 = arith.constant 0 : index
    %235 = vector.load %arg3[%c1_296, %c0_297, %c0_298, %c0_299] : memref<3x3x8x8xbf16, #tpu.memory_space<vmem>>, vector<1x1x8x8xbf16>
    %236 = vector.shape_cast %235 : vector<1x1x8x8xbf16> to vector<8x8xbf16>
    %cst_300 = arith.constant dense<0.000000e+00> : vector<128x8xf32>
    %237 = tpu.matmul %234, %236, %cst_300 {dimension_numbers = #tpu.dot_dimension_numbers<[1], [0], [0], [1], [0, 0, 1, 1], [], []>} : vector<128x8xbf16>, vector<8x8xbf16>, vector<128x8xf32> -> vector<128x8xf32>
    %238 = arith.addf %232, %237 : vector<128x8xf32>
    %c9_301 = arith.constant 9 : index
    %c8_302 = arith.constant 8 : index
    %c0_303 = arith.constant 0 : index
    %239 = vector.load %arg7[%c9_301, %c8_302, %c0_303] : memref<18x32x8xbf16, #tpu.memory_space<vmem>>, vector<8x16x8xbf16>
    %240 = vector.shape_cast %239 : vector<8x16x8xbf16> to vector<128x8xbf16>
    %c1_304 = arith.constant 1 : index
    %c1_305 = arith.constant 1 : index
    %c0_306 = arith.constant 0 : index
    %c0_307 = arith.constant 0 : index
    %241 = vector.load %arg3[%c1_304, %c1_305, %c0_306, %c0_307] : memref<3x3x8x8xbf16, #tpu.memory_space<vmem>>, vector<1x1x8x8xbf16>
    %242 = vector.shape_cast %241 : vector<1x1x8x8xbf16> to vector<8x8xbf16>
    %cst_308 = arith.constant dense<0.000000e+00> : vector<128x8xf32>
    %243 = tpu.matmul %240, %242, %cst_308 {dimension_numbers = #tpu.dot_dimension_numbers<[1], [0], [0], [1], [0, 0, 1, 1], [], []>} : vector<128x8xbf16>, vector<8x8xbf16>, vector<128x8xf32> -> vector<128x8xf32>
    %244 = arith.addf %238, %243 : vector<128x8xf32>
    %c9_309 = arith.constant 9 : index
    %c9_310 = arith.constant 9 : index
    %c0_311 = arith.constant 0 : index
    %245 = vector.load %arg7[%c9_309, %c9_310, %c0_311] : memref<18x32x8xbf16, #tpu.memory_space<vmem>>, vector<8x16x8xbf16>
    %246 = vector.shape_cast %245 : vector<8x16x8xbf16> to vector<128x8xbf16>
    %c1_312 = arith.constant 1 : index
    %c2_313 = arith.constant 2 : index
    %c0_314 = arith.constant 0 : index
    %c0_315 = arith.constant 0 : index
    %247 = vector.load %arg3[%c1_312, %c2_313, %c0_314, %c0_315] : memref<3x3x8x8xbf16, #tpu.memory_space<vmem>>, vector<1x1x8x8xbf16>
    %248 = vector.shape_cast %247 : vector<1x1x8x8xbf16> to vector<8x8xbf16>
    %cst_316 = arith.constant dense<0.000000e+00> : vector<128x8xf32>
    %249 = tpu.matmul %246, %248, %cst_316 {dimension_numbers = #tpu.dot_dimension_numbers<[1], [0], [0], [1], [0, 0, 1, 1], [], []>} : vector<128x8xbf16>, vector<8x8xbf16>, vector<128x8xf32> -> vector<128x8xf32>
    %250 = arith.addf %244, %249 : vector<128x8xf32>
    %c10_317 = arith.constant 10 : index
    %c7_318 = arith.constant 7 : index
    %c0_319 = arith.constant 0 : index
    %251 = vector.load %arg7[%c10_317, %c7_318, %c0_319] : memref<18x32x8xbf16, #tpu.memory_space<vmem>>, vector<8x16x8xbf16>
    %252 = vector.shape_cast %251 : vector<8x16x8xbf16> to vector<128x8xbf16>
    %c2_320 = arith.constant 2 : index
    %c0_321 = arith.constant 0 : index
    %c0_322 = arith.constant 0 : index
    %c0_323 = arith.constant 0 : index
    %253 = vector.load %arg3[%c2_320, %c0_321, %c0_322, %c0_323] : memref<3x3x8x8xbf16, #tpu.memory_space<vmem>>, vector<1x1x8x8xbf16>
    %254 = vector.shape_cast %253 : vector<1x1x8x8xbf16> to vector<8x8xbf16>
    %cst_324 = arith.constant dense<0.000000e+00> : vector<128x8xf32>
    %255 = tpu.matmul %252, %254, %cst_324 {dimension_numbers = #tpu.dot_dimension_numbers<[1], [0], [0], [1], [0, 0, 1, 1], [], []>} : vector<128x8xbf16>, vector<8x8xbf16>, vector<128x8xf32> -> vector<128x8xf32>
    %256 = arith.addf %250, %255 : vector<128x8xf32>
    %c10_325 = arith.constant 10 : index
    %c8_326 = arith.constant 8 : index
    %c0_327 = arith.constant 0 : index
    %257 = vector.load %arg7[%c10_325, %c8_326, %c0_327] : memref<18x32x8xbf16, #tpu.memory_space<vmem>>, vector<8x16x8xbf16>
    %258 = vector.shape_cast %257 : vector<8x16x8xbf16> to vector<128x8xbf16>
    %c2_328 = arith.constant 2 : index
    %c1_329 = arith.constant 1 : index
    %c0_330 = arith.constant 0 : index
    %c0_331 = arith.constant 0 : index
    %259 = vector.load %arg3[%c2_328, %c1_329, %c0_330, %c0_331] : memref<3x3x8x8xbf16, #tpu.memory_space<vmem>>, vector<1x1x8x8xbf16>
    %260 = vector.shape_cast %259 : vector<1x1x8x8xbf16> to vector<8x8xbf16>
    %cst_332 = arith.constant dense<0.000000e+00> : vector<128x8xf32>
    %261 = tpu.matmul %258, %260, %cst_332 {dimension_numbers = #tpu.dot_dimension_numbers<[1], [0], [0], [1], [0, 0, 1, 1], [], []>} : vector<128x8xbf16>, vector<8x8xbf16>, vector<128x8xf32> -> vector<128x8xf32>
    %262 = arith.addf %256, %261 : vector<128x8xf32>
    %c10_333 = arith.constant 10 : index
    %c9_334 = arith.constant 9 : index
    %c0_335 = arith.constant 0 : index
    %263 = vector.load %arg7[%c10_333, %c9_334, %c0_335] : memref<18x32x8xbf16, #tpu.memory_space<vmem>>, vector<8x16x8xbf16>
    %264 = vector.shape_cast %263 : vector<8x16x8xbf16> to vector<128x8xbf16>
    %c2_336 = arith.constant 2 : index
    %c2_337 = arith.constant 2 : index
    %c0_338 = arith.constant 0 : index
    %c0_339 = arith.constant 0 : index
    %265 = vector.load %arg3[%c2_336, %c2_337, %c0_338, %c0_339] : memref<3x3x8x8xbf16, #tpu.memory_space<vmem>>, vector<1x1x8x8xbf16>
    %266 = vector.shape_cast %265 : vector<1x1x8x8xbf16> to vector<8x8xbf16>
    %cst_340 = arith.constant dense<0.000000e+00> : vector<128x8xf32>
    %267 = tpu.matmul %264, %266, %cst_340 {dimension_numbers = #tpu.dot_dimension_numbers<[1], [0], [0], [1], [0, 0, 1, 1], [], []>} : vector<128x8xbf16>, vector<8x8xbf16>, vector<128x8xf32> -> vector<128x8xf32>
    %268 = arith.addf %262, %267 : vector<128x8xf32>
    %c0_341 = arith.constant 0 : index
    %c8_342 = arith.constant 8 : index
    %c0_343 = arith.constant 0 : index
    %c0_344 = arith.constant 0 : index
    %269 = vector.load %arg1[%c0_341, %c8_342, %c0_343, %c0_344] : memref<1x16x16x4xbf16, #tpu.memory_space<vmem>>, vector<1x8x16x4xbf16>
    %270 = vector.shape_cast %269 : vector<1x8x16x4xbf16> to vector<8x16x4xbf16>
    %271 = vector.shape_cast %270 : vector<8x16x4xbf16> to vector<128x4xbf16>
    %c0_345 = arith.constant 0 : index
    %c0_346 = arith.constant 0 : index
    %272 = vector.load %arg4[%c0_345, %c0_346] : memref<4x8xbf16, #tpu.memory_space<vmem>>, vector<4x8xbf16>
    %cst_347 = arith.constant dense<0.000000e+00> : vector<128x8xf32>
    %273 = tpu.matmul %271, %272, %cst_347 {dimension_numbers = #tpu.dot_dimension_numbers<[1], [0], [0], [1], [0, 0, 1, 1], [], []>} : vector<128x4xbf16>, vector<4x8xbf16>, vector<128x8xf32> -> vector<128x8xf32>
    %274 = arith.addf %268, %273 : vector<128x8xf32>
    %cst_348 = arith.constant 0.000000e+00 : f32
    %275 = vector.broadcast %cst_348 : f32 to vector<128x8xf32>
    %276 = arith.maximumf %274, %275 : vector<128x8xf32>
    %277 = vector.shape_cast %276 : vector<128x8xf32> to vector<8x16x8xf32>
    %c0_349 = arith.constant 0 : index
    %c8_350 = arith.constant 8 : index
    %c0_351 = arith.constant 0 : index
    %c0_352 = arith.constant 0 : index
    %278 = vector.load %arg5[%c0_349, %c8_350, %c0_351, %c0_352] : memref<1x16x16x8xf32, #tpu.memory_space<vmem>>, vector<1x8x16x8xf32>
    %279 = vector.shape_cast %278 : vector<1x8x16x8xf32> to vector<8x16x8xf32>
    %280 = vector.shape_cast %277 : vector<8x16x8xf32> to vector<1x8x16x8xf32>
    tpu.vector_store %arg5[%c0_349, %c8_350, %c0_351, %c0_352], %280 {strides = array<i32>} : memref<1x16x16x8xf32, #tpu.memory_space<vmem>>, vector<1x8x16x8xf32>,
    return
  }
  func.func @transform_0(%arg0: i32) -> (i32, i32, i32, i32) {
    %c0_i32 = arith.constant 0 : i32
    %c0_i32_0 = arith.constant 0 : i32
    %c0_i32_1 = arith.constant 0 : i32
    %c0_i32_2 = arith.constant 0 : i32
    return %arg0, %c0_i32, %c0_i32_0, %c0_i32_1 : i32, i32, i32, i32
  }
  func.func @transform_1(%arg0: i32) -> (i32, i32, i32, i32) {
    %c0_i32 = arith.constant 0 : i32
    %c0_i32_0 = arith.constant 0 : i32
    %c0_i32_1 = arith.constant 0 : i32
    %c0_i32_2 = arith.constant 0 : i32
    %c0_i32_3 = arith.constant 0 : i32
    return %c0_i32, %c0_i32_0, %c0_i32_1, %c0_i32_2 : i32, i32, i32, i32
  }
  func.func @transform_2(%arg0: i32) -> (i32, i32, i32, i32) {
    %c0_i32 = arith.constant 0 : i32
    %c0_i32_0 = arith.constant 0 : i32
    %c0_i32_1 = arith.constant 0 : i32
    %c0_i32_2 = arith.constant 0 : i32
    %c0_i32_3 = arith.constant 0 : i32
    return %c0_i32, %c0_i32_0, %c0_i32_1, %c0_i32_2 : i32, i32, i32, i32
  }
  func.func @transform_3(%arg0: i32) -> (i32, i32) {
    %c0_i32 = arith.constant 0 : i32
    %c0_i32_0 = arith.constant 0 : i32
    %c0_i32_1 = arith.constant 0 : i32
    return %c0_i32, %c0_i32_0 : i32, i32
  }
  func.func @transform_4(%arg0: i32) -> (i32, i32, i32, i32) {
    %c0_i32 = arith.constant 0 : i32
    %c0_i32_0 = arith.constant 0 : i32
    %c0_i32_1 = arith.constant 0 : i32
    %c0_i32_2 = arith.constant 0 : i32
    return %arg0, %c0_i32, %c0_i32_0, %c0_i32_1 : i32, i32, i32, i32
  }
}

</mosaic_0001>

<llo_original>
// kernel: tpu_custom_call.1
$region0: #{tpu_custom_call.1}
  #allocation0 [shape = 'u32[]', space=smem, size = 0x4, offset = 0x4, fixed_abs, tag = 'smem constant byte address 0x4 - core index']
  #allocation1 [shape = 'u32[144,128]{1,0:T(1,128)}', space=vmem, size = 0x12000, scoped, tag = 'internal scratch']
  #allocation2 [shape = 'bf16[18,32,4]{2,1,0:T(8,128)(2,1)}', space=vmem, size = 0x24000, scoped, tag = 'scratch operand']
  #allocation3 [shape = 'bf16[18,32,8]{2,1,0:T(8,128)(2,1)}', space=vmem, size = 0x24000, scoped, tag = 'scratch operand']
  %s0 = inlined_call_operand.vmem [shape: bf16[2,16,16,4], index: 0, kind: input, shape index: {}]
  %s1 = inlined_call_operand.vmem [shape: bf16[3,3,4,8], index: 1, kind: input, shape index: {}]
  %s2 = inlined_call_operand.vmem [shape: bf16[3,3,8,8], index: 2, kind: input, shape index: {}]
  %s3 = inlined_call_operand.vmem [shape: bf16[4,8], index: 3, kind: input, shape index: {}]
  %s4 = inlined_call_operand.vmem [shape: f32[2,16,16,8], index: 4, kind: output, shape index: {}]
  %s5 = sld [smem:[#allocation0]]
  $region49: #{tpu_custom_call.1} parent=0
    _
  %s7 = ssub.s32 1, %s5
  %s8 = scalar_select 0, %s7, %s5
  loop: start=0, step=1, limit=4
  $region2: #{tpu_custom_call.1} parent=0 // loop_pre_header
    _
  $region3: #{tpu_custom_call.1} parent=0 // loop_header
    %s10 = sphi 0, %s14
    %p11 = scmp.ge.s32.totalorder %s10, 4
    %s20 = sphi 0, %s22
    %s23 = sphi 0, %s20
    %s24 = sphi 0, %s23
    %s40 = sphi 0, %s24
    %s44 = sphi 0, %s44
    %s46 = sphi 0, %s44
    %s47 = sphi 0, %s46
    %s61 = sphi 0, %s47
    %s65 = sphi 0, %s65
    %s67 = sphi 0, %s65
    %s68 = sphi 0, %s67
    %s82 = sphi 0, %s68
    %s86 = sphi 0, %s86
    %s88 = sphi 0, %s86
    %s89 = sphi 0, %s88
    %s103 = sphi 0, %s89
    %s109 = sphi 0, %s111
    %s112 = sphi 0, %s109
    %s113 = sphi 0, %s112
    %s129 = sphi 0, %s113
  $region4: #{tpu_custom_call.1} parent=0 // loop_header_branch
    %13 = sbr.rel (%p11) target = $region8
  $region5: #{tpu_custom_call.1} parent=0 // loop_body
    %s15 = ssub.s32 %s10, 1
    %s16 = ssub.s32 %s10, 2
    %s17 = sadd.s32 %s10, 1
    %s18 = ssub.s32 %s10, %s17
    %p19 = scmp.eq.s32.totalorder %s18, 0
    %s21 = sadd.s32 %s20, 1
    %s22 = scalar_select %p19, %s20, %s21
    %p25 = pneg %p19
    %p26 = scmp.eq.s32.totalorder %s10, 1
    %p27 = por %p25, %p26
    %p28 = scmp.ne.s32.totalorder %s20, %s23
    %p29 = scmp.eq.s32.totalorder %s10, 0
    %p30 = por %p28, %p29
    %p31 = scmp.ne.s32.totalorder %s20, %s23
    %p32 = scmp.eq.s32.totalorder %s15, 1
    %p33 = por %p31, %p32
    %p34 = scmp.ne.s32.totalorder %s23, %s24
    %p35 = scmp.eq.s32.totalorder %s15, 0
    %p36 = por %p34, %p35
    %p37 = scmp.ne.s32.totalorder %s23, %s24
    %p38 = scmp.eq.s32.totalorder %s16, 1
    %p39 = por %p37, %p38
    %p41 = scmp.ne.s32.totalorder %s24, %s40
    %p42 = scmp.eq.s32.totalorder %s16, 0
    %p43 = por %p41, %p42
    %s45 = sadd.s32 %s44, 1
    %p48 = scmp.eq.s32.totalorder %s10, 1
    %p49 = scmp.ne.s32.totalorder %s44, %s46
    %p50 = scmp.eq.s32.totalorder %s10, 0
    %p51 = por %p49, %p50
    %p52 = scmp.ne.s32.totalorder %s44, %s46
    %p53 = scmp.eq.s32.totalorder %s15, 1
    %p54 = por %p52, %p53
    %p55 = scmp.ne.s32.totalorder %s46, %s47
    %p56 = scmp.eq.s32.totalorder %s15, 0
    %p57 = por %p55, %p56
    %p58 = scmp.ne.s32.totalorder %s46, %s47
    %p59 = scmp.eq.s32.totalorder %s16, 1
    %p60 = por %p58, %p59
    %p62 = scmp.ne.s32.totalorder %s47, %s61
    %p63 = scmp.eq.s32.totalorder %s16, 0
    %p64 = por %p62, %p63
    %s66 = sadd.s32 %s65, 1
    %p69 = scmp.eq.s32.totalorder %s10, 1
    %p70 = scmp.ne.s32.totalorder %s65, %s67
    %p71 = scmp.eq.s32.totalorder %s10, 0
    %p72 = por %p70, %p71
    %p73 = scmp.ne.s32.totalorder %s65, %s67
    %p74 = scmp.eq.s32.totalorder %s15, 1
    %p75 = por %p73, %p74
    %p76 = scmp.ne.s32.totalorder %s67, %s68
    %p77 = scmp.eq.s32.totalorder %s15, 0
    %p78 = por %p76, %p77
    %p79 = scmp.ne.s32.totalorder %s67, %s68
    %p80 = scmp.eq.s32.totalorder %s16, 1
    %p81 = por %p79, %p80
    %p83 = scmp.ne.s32.totalorder %s68, %s82
    %p84 = scmp.eq.s32.totalorder %s16, 0
    %p85 = por %p83, %p84
    %s87 = sadd.s32 %s86, 1
    %p90 = scmp.eq.s32.totalorder %s10, 1
    %p91 = scmp.ne.s32.totalorder %s86, %s88
    %p92 = scmp.eq.s32.totalorder %s10, 0
    %p93 = por %p91, %p92
    %p94 = scmp.ne.s32.totalorder %s86, %s88
    %p95 = scmp.eq.s32.totalorder %s15, 1
    %p96 = por %p94, %p95
    %p97 = scmp.ne.s32.totalorder %s88, %s89
    %p98 = scmp.eq.s32.totalorder %s15, 0
    %p99 = por %p97, %p98
    %p100 = scmp.ne.s32.totalorder %s88, %s89
    %p101 = scmp.eq.s32.totalorder %s16, 1
    %p102 = por %p100, %p101
    %p104 = scmp.ne.s32.totalorder %s89, %s103
    %p105 = scmp.eq.s32.totalorder %s16, 0
    %p106 = por %p104, %p105
    %s107 = ssub.s32 %s10, %s17
    %p108 = scmp.eq.s32.totalorder %s107, 0
    %s110 = sadd.s32 %s109, 1
    %s111 = scalar_select %p108, %s109, %s110
    %p114 = pneg %p108
    %p115 = scmp.eq.s32.totalorder %s10, 1
    %p116 = por %p114, %p115
    %p117 = scmp.ne.s32.totalorder %s109, %s112
    %p118 = scmp.eq.s32.totalorder %s10, 0
    %p119 = por %p117, %p118
    %p120 = scmp.ne.s32.totalorder %s109, %s112
    %p121 = scmp.eq.s32.totalorder %s15, 1
    %p122 = por %p120, %p121
    %p123 = scmp.ne.s32.totalorder %s112, %s113
    %p124 = scmp.eq.s32.totalorder %s15, 0
    %p125 = por %p123, %p124
    %p126 = scmp.ne.s32.totalorder %s112, %s113
    %p127 = scmp.eq.s32.totalorder %s16, 1
    %p128 = por %p126, %p127
    %p130 = scmp.ne.s32.totalorder %s113, %s129
    %p131 = scmp.eq.s32.totalorder %s16, 0
    %p132 = por %p130, %p131
    %p133 = scmp.le.s32.totalorder 1, %s10
    %p134 = scmp.lt.s32.totalorder %s10, 3
    %p135 = pnand %p133, %p134
    %p136 = pneg %p135
    // Predicated region
    $region9: #{tpu_custom_call.1} parent=5 // pred_check
      _
    $region10: #{tpu_custom_call.1} parent=5 // pred_check_branch
      %138 = sbr.rel (%p135) target = $region12
    $region11: #{tpu_custom_call.1} parent=5 // pred_region
      %s139 = ssub.s32 %s10, 1
      // Predicated region
      $region13: #{tpu_custom_call.1} parent=11 // pred_check
        %p140 = pneg %p57
      $region14: #{tpu_custom_call.1} parent=11 // pred_check_branch
        %142 = sbr.rel (%p140) target = $region16
      $region15: #{tpu_custom_call.1} parent=11 // pred_region
        _
      $region16: #{tpu_custom_call.1} parent=11 // pred_fallthru
        _
      // Predicated region
      $region17: #{tpu_custom_call.1} parent=11 // pred_check
        %p143 = pneg %p78
      $region18: #{tpu_custom_call.1} parent=11 // pred_check_branch
        %145 = sbr.rel (%p143) target = $region20
      $region19: #{tpu_custom_call.1} parent=11 // pred_region
        _
      $region20: #{tpu_custom_call.1} parent=11 // pred_fallthru
        _
      // Predicated region
      $region21: #{tpu_custom_call.1} parent=11 // pred_check
        %p146 = pneg %p99
      $region22: #{tpu_custom_call.1} parent=11 // pred_check_branch
        %148 = sbr.rel (%p146) target = $region24
      $region23: #{tpu_custom_call.1} parent=11 // pred_region
        _
      $region24: #{tpu_custom_call.1} parent=11 // pred_fallthru
        _
    $region12: #{tpu_custom_call.1} parent=5 // pred_fallthru
      _
    %p149 = scmp.lt.s32.totalorder %s10, 2
    // Predicated region
    $region25: #{tpu_custom_call.1} parent=5 // pred_check
      %p150 = pneg %p149
    $region26: #{tpu_custom_call.1} parent=5 // pred_check_branch
      %152 = sbr.rel (%p150) target = $region28
    $region27: #{tpu_custom_call.1} parent=5 // pred_region
      // Predicated region
      $region29: #{tpu_custom_call.1} parent=27 // pred_check
        %p153 = pneg %p30
      $region30: #{tpu_custom_call.1} parent=27 // pred_check_branch
        %155 = sbr.rel (%p153) target = $region32
      $region31: #{tpu_custom_call.1} parent=27 // pred_region
        %p156 = scmp.lt.s32.totalorder %s10, 1
        %s157 = scalar_select %p156, %s10, 1
        %s158 = smul.addr %s157, 32
        %s159 = smul.addr %s158, 4
        %s160 = scalar_lea.vmem %s0, %s159
      $region32: #{tpu_custom_call.1} parent=27 // pred_fallthru
        _
    $region28: #{tpu_custom_call.1} parent=5 // pred_fallthru
      _
    %p161 = scmp.le.s32.totalorder 1, %s10
    %p162 = scmp.lt.s32.totalorder %s10, 3
    %p163 = pnand %p161, %p162
    %p164 = pneg %p163
    // Predicated region
    $region33: #{tpu_custom_call.1} parent=5 // pred_check
      _
    $region34: #{tpu_custom_call.1} parent=5 // pred_check_branch
      %166 = sbr.rel (%p163) target = $region36
    $region35: #{tpu_custom_call.1} parent=5 // pred_region
      %s167 = ssub.s32 %s10, 1
      %p168 = scmp.lt.s32.totalorder %s15, 1
      %s169 = scalar_select %p168, %s15, 1
      %s170 = smul.addr %s169, 32
      %s171 = smul.addr %s170, 4
      %s172 = scalar_lea.vmem %s0, %s171
      %p173 = pneg %p36
      %p174 = pneg %p33
      %p175 = pneg %p57
      %p176 = pneg %p54
      %p177 = pneg %p78
      %p178 = pneg %p75
      %p179 = pneg %p99
      %p180 = pneg %p96
      %p181 = pneg %p125
      %p182 = pneg %p122
      %p183 = scmp.lt.s32.totalorder %s15, 1
      %s184 = scalar_select %p183, %s15, 1
      %s185 = smul.addr %s184, 32
      %s186 = smul.addr %s185, 8
      %s187 = scalar_lea.vmem %s4, %s186
      %p188 = scmp.lt.s32.totalorder %s15, 1
      %s189 = scalar_select %p188, %s15, 1
      %s190 = smul.addr %s189, 32
      %s191 = smul.addr %s190, 4
      %s192 = scalar_lea.vmem %s0, %s191
      %p193 = scmp.lt.s32.totalorder %s15, 1
      %s194 = scalar_select %p193, %s15, 1
      %s195 = smul.addr %s194, 32
      %s196 = smul.addr %s195, 8
      %s197 = scalar_lea.vmem %s4, %s196
      %vm199 = vcmask 27648
      %200 = vst.msk [vmem:[#allocation2] sm:$0xf] %vm199, 0
      %201 = vst.msk [vmem:[#allocation2 + $0x4] sm:$0xf] %vm199, 0
      %202 = vst.msk [vmem:[#allocation2 + $0x8] sm:$0xf] %vm199, 0
      %203 = vst.msk [vmem:[#allocation2 + $0xc] sm:$0xf] %vm199, 0
      %s204 = scalar_lea.vmem [#allocation2], 272
      %205 = vst.msk [vmem:[%s204] sm:$0xf] %vm199, 0
      %206 = vst.msk [vmem:[%s204 + $0x4] sm:$0xf] %vm199, 0
      %207 = vst.msk [vmem:[%s204 + $0x8] sm:$0xf] %vm199, 0
      %208 = vst.msk [vmem:[%s204 + $0xc] sm:$0xf] %vm199, 0
      %209 = vst.msk [vmem:[#allocation2] sm:$0xf] %vm199, 0
      %210 = vst.msk [vmem:[#allocation2 + $0x10] sm:$0xf] %vm199, 0
      %211 = vst.msk [vmem:[#allocation2 + $0x20] sm:$0xf] %vm199, 0
      %212 = vst.msk [vmem:[#allocation2 + $0x30] sm:$0xf] %vm199, 0
      %213 = vst.msk [vmem:[#allocation2 + $0x40] sm:$0xf] %vm199, 0
      %214 = vst.msk [vmem:[#allocation2 + $0x50] sm:$0xf] %vm199, 0
      %215 = vst.msk [vmem:[#allocation2 + $0x60] sm:$0xf] %vm199, 0
      %216 = vst.msk [vmem:[#allocation2 + $0x70] sm:$0xf] %vm199, 0
      %217 = vst.msk [vmem:[#allocation2 + $0x80] sm:$0xf] %vm199, 0
      %218 = vst.msk [vmem:[#allocation2 + $0x90] sm:$0xf] %vm199, 0
      %219 = vst.msk [vmem:[#allocation2 + $0xa0] sm:$0xf] %vm199, 0
      %220 = vst.msk [vmem:[#allocation2 + $0xb0] sm:$0xf] %vm199, 0
      %221 = vst.msk [vmem:[#allocation2 + $0xc0] sm:$0xf] %vm199, 0
      %222 = vst.msk [vmem:[#allocation2 + $0xd0] sm:$0xf] %vm199, 0
      %223 = vst.msk [vmem:[#allocation2 + $0xe0] sm:$0xf] %vm199, 0
      %224 = vst.msk [vmem:[#allocation2 + $0xf0] sm:$0xf] %vm199, 0
      %225 = vst.msk [vmem:[#allocation2 + $0x100] sm:$0xf] %vm199, 0
      %226 = vst.msk [vmem:[#allocation2 + $0x110] sm:$0xf] %vm199, 0
      %227 = vst.msk [vmem:[#allocation2 + $0xc] sm:$0xf] %vm199, 0
      %228 = vst.msk [vmem:[#allocation2 + $0x1c] sm:$0xf] %vm199, 0
      %229 = vst.msk [vmem:[#allocation2 + $0x2c] sm:$0xf] %vm199, 0
      %230 = vst.msk [vmem:[#allocation2 + $0x3c] sm:$0xf] %vm199, 0
      %231 = vst.msk [vmem:[#allocation2 + $0x4c] sm:$0xf] %vm199, 0
      %232 = vst.msk [vmem:[#allocation2 + $0x5c] sm:$0xf] %vm199, 0
      %233 = vst.msk [vmem:[#allocation2 + $0x6c] sm:$0xf] %vm199, 0
      %234 = vst.msk [vmem:[#allocation2 + $0x7c] sm:$0xf] %vm199, 0
      %235 = vst.msk [vmem:[#allocation2 + $0x8c] sm:$0xf] %vm199, 0
      %236 = vst.msk [vmem:[#allocation2 + $0x9c] sm:$0xf] %vm199, 0
      %237 = vst.msk [vmem:[#allocation2 + $0xac] sm:$0xf] %vm199, 0
      %238 = vst.msk [vmem:[#allocation2 + $0xbc] sm:$0xf] %vm199, 0
      %239 = vst.msk [vmem:[#allocation2 + $0xcc] sm:$0xf] %vm199, 0
      %240 = vst.msk [vmem:[#allocation2 + $0xdc] sm:$0xf] %vm199, 0
      %241 = vst.msk [vmem:[#allocation2 + $0xec] sm:$0xf] %vm199, 0
      %242 = vst.msk [vmem:[#allocation2 + $0xfc] sm:$0xf] %vm199, 0
      %243 = vst.msk [vmem:[#allocation2 + $0x10c] sm:$0xf] %vm199, 0
      %244 = vst.msk [vmem:[#allocation2 + $0x11c] sm:$0xf] %vm199, 0
      %vm245 = vcmask 60416
      %246 = vst.msk [vmem:[#allocation3] sm:$0xf] %vm245, 0
      %247 = vst.msk [vmem:[#allocation3 + $0x4] sm:$0xf] %vm245, 0
      %248 = vst.msk [vmem:[#allocation3 + $0x8] sm:$0xf] %vm245, 0
      %249 = vst.msk [vmem:[#allocation3 + $0xc] sm:$0xf] %vm245, 0
      %s250 = scalar_lea.vmem [#allocation3], 272
      %251 = vst.msk [vmem:[%s250] sm:$0xf] %vm245, 0
      %252 = vst.msk [vmem:[%s250 + $0x4] sm:$0xf] %vm245, 0
      %253 = vst.msk [vmem:[%s250 + $0x8] sm:$0xf] %vm245, 0
      %254 = vst.msk [vmem:[%s250 + $0xc] sm:$0xf] %vm245, 0
      %255 = vst.msk [vmem:[#allocation3] sm:$0xf] %vm245, 0
      %256 = vst.msk [vmem:[#allocation3 + $0x10] sm:$0xf] %vm245, 0
      %257 = vst.msk [vmem:[#allocation3 + $0x20] sm:$0xf] %vm245, 0
      %258 = vst.msk [vmem:[#allocation3 + $0x30] sm:$0xf] %vm245, 0
      %259 = vst.msk [vmem:[#allocation3 + $0x40] sm:$0xf] %vm245, 0
      %260 = vst.msk [vmem:[#allocation3 + $0x50] sm:$0xf] %vm245, 0
      %261 = vst.msk [vmem:[#allocation3 + $0x60] sm:$0xf] %vm245, 0
      %262 = vst.msk [vmem:[#allocation3 + $0x70] sm:$0xf] %vm245, 0
      %263 = vst.msk [vmem:[#allocation3 + $0x80] sm:$0xf] %vm245, 0
      %264 = vst.msk [vmem:[#allocation3 + $0x90] sm:$0xf] %vm245, 0
      %265 = vst.msk [vmem:[#allocation3 + $0xa0] sm:$0xf] %vm245, 0
      %266 = vst.msk [vmem:[#allocation3 + $0xb0] sm:$0xf] %vm245, 0
      %267 = vst.msk [vmem:[#allocation3 + $0xc0] sm:$0xf] %vm245, 0
      %268 = vst.msk [vmem:[#allocation3 + $0xd0] sm:$0xf] %vm245, 0
      %269 = vst.msk [vmem:[#allocation3 + $0xe0] sm:$0xf] %vm245, 0
      %270 = vst.msk [vmem:[#allocation3 + $0xf0] sm:$0xf] %vm245, 0
      %271 = vst.msk [vmem:[#allocation3 + $0x100] sm:$0xf] %vm245, 0
      %272 = vst.msk [vmem:[#allocation3 + $0x110] sm:$0xf] %vm245, 0
      %273 = vst.msk [vmem:[#allocation3 + $0xc] sm:$0xf] %vm245, 0
      %274 = vst.msk [vmem:[#allocation3 + $0x1c] sm:$0xf] %vm245, 0
      %275 = vst.msk [vmem:[#allocation3 + $0x2c] sm:$0xf] %vm245, 0
      %276 = vst.msk [vmem:[#allocation3 + $0x3c] sm:$0xf] %vm245, 0
      %277 = vst.msk [vmem:[#allocation3 + $0x4c] sm:$0xf] %vm245, 0
      %278 = vst.msk [vmem:[#allocation3 + $0x5c] sm:$0xf] %vm245, 0
      %279 = vst.msk [vmem:[#allocation3 + $0x6c] sm:$0xf] %vm245, 0
      %280 = vst.msk [vmem:[#allocation3 + $0x7c] sm:$0xf] %vm245, 0
      %281 = vst.msk [vmem:[#allocation3 + $0x8c] sm:$0xf] %vm245, 0
      %282 = vst.msk [vmem:[#allocation3 + $0x9c] sm:$0xf] %vm245, 0
      %283 = vst.msk [vmem:[#allocation3 + $0xac] sm:$0xf] %vm245, 0
      %284 = vst.msk [vmem:[#allocation3 + $0xbc] sm:$0xf] %vm245, 0
      %285 = vst.msk [vmem:[#allocation3 + $0xcc] sm:$0xf] %vm245, 0
      %286 = vst.msk [vmem:[#allocation3 + $0xdc] sm:$0xf] %vm245, 0
      %287 = vst.msk [vmem:[#allocation3 + $0xec] sm:$0xf] %vm245, 0
      %288 = vst.msk [vmem:[#allocation3 + $0xfc] sm:$0xf] %vm245, 0
      %289 = vst.msk [vmem:[#allocation3 + $0x10c] sm:$0xf] %vm245, 0
      %290 = vst.msk [vmem:[#allocation3 + $0x11c] sm:$0xf] %vm245, 0
      %v291 = vld [vmem:[%s192] sm:$0xf]
      %v292 = vld [vmem:[%s192 + $0x4] sm:$0xf]
      %v293 = vld [vmem:[%s192 + $0x8] sm:$0xf]
      %v294 = vld [vmem:[%s192 + $0xc] sm:$0xf]
      %v295 = vld [vmem:[%s192 + $0x10] sm:$0xf]
      %v296 = vld [vmem:[%s192 + $0x14] sm:$0xf]
      %v297 = vld [vmem:[%s192 + $0x18] sm:$0xf]
      %v298 = vld [vmem:[%s192 + $0x1c] sm:$0xf]
      %v299 = vld [vmem:[%s192 + $0x20] sm:$0xf]
      %v300 = vld [vmem:[%s192 + $0x24] sm:$0xf]
      %v301 = vld [vmem:[%s192 + $0x28] sm:$0xf]
      %v302 = vld [vmem:[%s192 + $0x2c] sm:$0xf]
      %v303 = vld [vmem:[%s192 + $0x30] sm:$0xf]
      %v304 = vld [vmem:[%s192 + $0x34] sm:$0xf]
      %v305 = vld [vmem:[%s192 + $0x38] sm:$0xf]
      %v306 = vld [vmem:[%s192 + $0x3c] sm:$0xf]
      %v307 = vld [vmem:[%s192 + $0x40] sm:$0xf]
      %v308 = vld [vmem:[%s192 + $0x44] sm:$0xf]
      %v309 = vld [vmem:[%s192 + $0x48] sm:$0xf]
      %v310 = vld [vmem:[%s192 + $0x4c] sm:$0xf]
      %v311 = vld [vmem:[%s192 + $0x50] sm:$0xf]
      %v312 = vld [vmem:[%s192 + $0x54] sm:$0xf]
      %v313 = vld [vmem:[%s192 + $0x58] sm:$0xf]
      %v314 = vld [vmem:[%s192 + $0x5c] sm:$0xf]
      %v315 = vld [vmem:[%s192 + $0x60] sm:$0xf]
      %v316 = vld [vmem:[%s192 + $0x64] sm:$0xf]
      %v317 = vld [vmem:[%s192 + $0x68] sm:$0xf]
      %v318 = vld [vmem:[%s192 + $0x6c] sm:$0xf]
      %v319 = vld [vmem:[%s192 + $0x70] sm:$0xf]
      %v320 = vld [vmem:[%s192 + $0x74] sm:$0xf]
      %v321 = vld [vmem:[%s192 + $0x78] sm:$0xf]
      %v322 = vld [vmem:[%s192 + $0x7c] sm:$0xf]
      %s323 = scalar_lea.vmem [#allocation2], 16
      %324 = vst.msk [vmem:[%s323 + $0x4] sm:$0xf] %vm199, %v291
      %325 = vst.msk [vmem:[%s323 + $0x8] sm:$0xf] %vm199, %v292
      %326 = vst.msk [vmem:[%s323 + $0x14] sm:$0xf] %vm199, %v293
      %327 = vst.msk [vmem:[%s323 + $0x18] sm:$0xf] %vm199, %v294
      %328 = vst.msk [vmem:[%s323 + $0x24] sm:$0xf] %vm199, %v295
      %329 = vst.msk [vmem:[%s323 + $0x28] sm:$0xf] %vm199, %v296
      %330 = vst.msk [vmem:[%s323 + $0x34] sm:$0xf] %vm199, %v297
      %331 = vst.msk [vmem:[%s323 + $0x38] sm:$0xf] %vm199, %v298
      %332 = vst.msk [vmem:[%s323 + $0x44] sm:$0xf] %vm199, %v299
      %333 = vst.msk [vmem:[%s323 + $0x48] sm:$0xf] %vm199, %v300
      %334 = vst.msk [vmem:[%s323 + $0x54] sm:$0xf] %vm199, %v301
      %335 = vst.msk [vmem:[%s323 + $0x58] sm:$0xf] %vm199, %v302
      %336 = vst.msk [vmem:[%s323 + $0x64] sm:$0xf] %vm199, %v303
      %337 = vst.msk [vmem:[%s323 + $0x68] sm:$0xf] %vm199, %v304
      %338 = vst.msk [vmem:[%s323 + $0x74] sm:$0xf] %vm199, %v305
      %339 = vst.msk [vmem:[%s323 + $0x78] sm:$0xf] %vm199, %v306
      %340 = vst.msk [vmem:[%s323 + $0x84] sm:$0xf] %vm199, %v307
      %341 = vst.msk [vmem:[%s323 + $0x88] sm:$0xf] %vm199, %v308
      %342 = vst.msk [vmem:[%s323 + $0x94] sm:$0xf] %vm199, %v309
      %343 = vst.msk [vmem:[%s323 + $0x98] sm:$0xf] %vm199, %v310
      %344 = vst.msk [vmem:[%s323 + $0xa4] sm:$0xf] %vm199, %v311
      %345 = vst.msk [vmem:[%s323 + $0xa8] sm:$0xf] %vm199, %v312
      %346 = vst.msk [vmem:[%s323 + $0xb4] sm:$0xf] %vm199, %v313
      %347 = vst.msk [vmem:[%s323 + $0xb8] sm:$0xf] %vm199, %v314
      %348 = vst.msk [vmem:[%s323 + $0xc4] sm:$0xf] %vm199, %v315
      %349 = vst.msk [vmem:[%s323 + $0xc8] sm:$0xf] %vm199, %v316
      %350 = vst.msk [vmem:[%s323 + $0xd4] sm:$0xf] %vm199, %v317
      %351 = vst.msk [vmem:[%s323 + $0xd8] sm:$0xf] %vm199, %v318
      %352 = vst.msk [vmem:[%s323 + $0xe4] sm:$0xf] %vm199, %v319
      %353 = vst.msk [vmem:[%s323 + $0xe8] sm:$0xf] %vm199, %v320
      %354 = vst.msk [vmem:[%s323 + $0xf4] sm:$0xf] %vm199, %v321
      %355 = vst.msk [vmem:[%s323 + $0xf8] sm:$0xf] %vm199, %v322
      %v356 = vld [vmem:[#allocation2] sm:$0x8]
      %v357 = vld [vmem:[#allocation2 + $0x4] sm:$0xf]
      %v358 = vld [vmem:[#allocation2 + $0x8] sm:$0xf]
      %v359 = vld [vmem:[#allocation2 + $0x10] sm:$0x8]
      %v360 = vld [vmem:[#allocation2 + $0x14] sm:$0xf]
      %v361 = vld [vmem:[#allocation2 + $0x18] sm:$0xf]
      %v362 = vld [vmem:[#allocation2 + $0x20] sm:$0x8]
      %v363 = vld [vmem:[#allocation2 + $0x24] sm:$0xf]
      %v364 = vld [vmem:[#allocation2 + $0x28] sm:$0xf]
      %v365 = vld [vmem:[#allocation2 + $0x30] sm:$0x8]
      %v366 = vld [vmem:[#allocation2 + $0x34] sm:$0xf]
      %v367 = vld [vmem:[#allocation2 + $0x38] sm:$0xf]
      %v368 = vld [vmem:[#allocation2 + $0x40] sm:$0x8]
      %v369 = vld [vmem:[#allocation2 + $0x44] sm:$0xf]
      %v370 = vld [vmem:[#allocation2 + $0x48] sm:$0xf]
      %v371 = vld [vmem:[#allocation2 + $0x50] sm:$0x8]
      %v372 = vld [vmem:[#allocation2 + $0x54] sm:$0xf]
      %v373 = vld [vmem:[#allocation2 + $0x58] sm:$0xf]
      %v374 = vld [vmem:[#allocation2 + $0x60] sm:$0x8]
      %v375 = vld [vmem:[#allocation2 + $0x64] sm:$0xf]
      %v376 = vld [vmem:[#allocation2 + $0x68] sm:$0xf]
      %v377 = vld [vmem:[#allocation2 + $0x70] sm:$0x8]
      %v378 = vld [vmem:[#allocation2 + $0x74] sm:$0xf]
      %v379 = vld [vmem:[#allocation2 + $0x78] sm:$0xf]
      %vm380 = vsmask.f32 256
      %vm381 = vsmask.f32 4368
      %vm382 = vmor %vm380, %vm381
      %v384 = vshrl.u32 %v356, 16
      %v386 = vrot.slane %v384, 7
      %v387 = vrot.slane %v386, 4
      %v389 = vshrl.u32 %v357, 16
      %v391 = vrot.slane %v389, 7
      %v392 = vshll.u32 %v357, 16
      %v394 = vor.u32 %v391, %v392
      %v395 = vsel %vm382, %v387, %v394
      %v396 = vrot.slane %v391, 4
      %v398 = vshrl.u32 %v358, 16
      %v400 = vrot.slane %v398, 7
      %v401 = vshll.u32 %v358, 16
      %v403 = vor.u32 %v400, %v401
      %v404 = vsel %vm382, %v396, %v403
      %v406 = vshrl.u32 %v359, 16
      %v408 = vrot.slane %v406, 7
      %v409 = vrot.slane %v408, 4
      %v411 = vshrl.u32 %v360, 16
      %v413 = vrot.slane %v411, 7
      %v414 = vshll.u32 %v360, 16
      %v416 = vor.u32 %v413, %v414
      %v417 = vsel %vm382, %v409, %v416
      %v418 = vrot.slane %v413, 4
      %v420 = vshrl.u32 %v361, 16
      %v422 = vrot.slane %v420, 7
      %v423 = vshll.u32 %v361, 16
      %v425 = vor.u32 %v422, %v423
      %v426 = vsel %vm382, %v418, %v425
      %v428 = vshrl.u32 %v362, 16
      %v430 = vrot.slane %v428, 7
      %v431 = vrot.slane %v430, 4
      %v433 = vshrl.u32 %v363, 16
      %v435 = vrot.slane %v433, 7
      %v436 = vshll.u32 %v363, 16
      %v438 = vor.u32 %v435, %v436
      %v439 = vsel %vm382, %v431, %v438
      %v440 = vrot.slane %v435, 4
      %v442 = vshrl.u32 %v364, 16
      %v444 = vrot.slane %v442, 7
      %v445 = vshll.u32 %v364, 16
      %v447 = vor.u32 %v444, %v445
      %v448 = vsel %vm382, %v440, %v447
      %v450 = vshrl.u32 %v365, 16
      %v452 = vrot.slane %v450, 7
      %v453 = vrot.slane %v452, 4
      %v455 = vshrl.u32 %v366, 16
      %v457 = vrot.slane %v455, 7
      %v458 = vshll.u32 %v366, 16
      %v460 = vor.u32 %v457, %v458
      %v461 = vsel %vm382, %v453, %v460
      %v462 = vrot.slane %v457, 4
      %v464 = vshrl.u32 %v367, 16
      %v466 = vrot.slane %v464, 7
      %v467 = vshll.u32 %v367, 16
      %v469 = vor.u32 %v466, %v467
      %v470 = vsel %vm382, %v462, %v469
      %v472 = vshrl.u32 %v368, 16
      %v474 = vrot.slane %v472, 7
      %v475 = vrot.slane %v474, 4
      %v477 = vshrl.u32 %v369, 16
      %v479 = vrot.slane %v477, 7
      %v480 = vshll.u32 %v369, 16
      %v482 = vor.u32 %v479, %v480
      %v483 = vsel %vm382, %v475, %v482
      %v484 = vrot.slane %v479, 4
      %v486 = vshrl.u32 %v370, 16
      %v488 = vrot.slane %v486, 7
      %v489 = vshll.u32 %v370, 16
      %v491 = vor.u32 %v488, %v489
      %v492 = vsel %vm382, %v484, %v491
      %v494 = vshrl.u32 %v371, 16
      %v496 = vrot.slane %v494, 7
      %v497 = vrot.slane %v496, 4
      %v499 = vshrl.u32 %v372, 16
      %v501 = vrot.slane %v499, 7
      %v502 = vshll.u32 %v372, 16
      %v504 = vor.u32 %v501, %v502
      %v505 = vsel %vm382, %v497, %v504
      %v506 = vrot.slane %v501, 4
      %v508 = vshrl.u32 %v373, 16
      %v510 = vrot.slane %v508, 7
      %v511 = vshll.u32 %v373, 16
      %v513 = vor.u32 %v510, %v511
      %v514 = vsel %vm382, %v506, %v513
      %v516 = vshrl.u32 %v374, 16
      %v518 = vrot.slane %v516, 7
      %v519 = vrot.slane %v518, 4
      %v521 = vshrl.u32 %v375, 16
      %v523 = vrot.slane %v521, 7
      %v524 = vshll.u32 %v375, 16
      %v526 = vor.u32 %v523, %v524
      %v527 = vsel %vm382, %v519, %v526
      %v528 = vrot.slane %v523, 4
      %v530 = vshrl.u32 %v376, 16
      %v532 = vrot.slane %v530, 7
      %v533 = vshll.u32 %v376, 16
      %v535 = vor.u32 %v532, %v533
      %v536 = vsel %vm382, %v528, %v535
      %v538 = vshrl.u32 %v377, 16
      %v540 = vrot.slane %v538, 7
      %v541 = vrot.slane %v540, 4
      %v543 = vshrl.u32 %v378, 16
      %v545 = vrot.slane %v543, 7
      %v546 = vshll.u32 %v378, 16
      %v548 = vor.u32 %v545, %v546
      %v549 = vsel %vm382, %v541, %v548
      %v550 = vrot.slane %v545, 4
      %v552 = vshrl.u32 %v379, 16
      %v554 = vrot.slane %v552, 7
      %v555 = vshll.u32 %v379, 16
      %v557 = vor.u32 %v554, %v555
      %v558 = vsel %vm382, %v550, %v557
      %v559 = vld [vmem:[%s1] sm:$0x3]
      %s560 = scalar_lea.vmem %s1, 2
      %v561 = vld [vmem:[%s560] sm:$0x3]
      %v578 = vunpack.c.l.b16 %v357
      %v579 = vunpack.c.l.b16 %v358
      %v580 = vunpack.c.l.b16 %v360
      %v581 = vunpack.c.l.b16 %v361
      %v582 = vunpack.c.l.b16 %v363
      %v583 = vunpack.c.l.b16 %v364
      %v584 = vunpack.c.l.b16 %v366
      %v585 = vunpack.c.l.b16 %v367
      %v586 = vunpack.c.l.b16 %v369
      %v587 = vunpack.c.l.b16 %v370
      %v588 = vunpack.c.l.b16 %v372
      %v589 = vunpack.c.l.b16 %v373
      %v590 = vunpack.c.l.b16 %v375
      %v591 = vunpack.c.l.b16 %v376
      %v592 = vunpack.c.l.b16 %v378
      %v593 = vunpack.c.l.b16 %v379
      %v594 = vpack.c.b16 %v579, %v578
      %v595 = vpack.c.b16 %v581, %v580
      %v596 = vpack.c.b16 %v583, %v582
      %v597 = vpack.c.b16 %v585, %v584
      %v598 = vpack.c.b16 %v587, %v586
      %v599 = vpack.c.b16 %v589, %v588
      %v600 = vpack.c.b16 %v591, %v590
      %v601 = vpack.c.b16 %v593, %v592
      %vm602 = vcmask 31744
      %v604 = vsel %vm602, %v594, 0
      %v607 = vsel %vm602, %v595, 0
      %v610 = vsel %vm602, %v596, 0
      %v613 = vsel %vm602, %v597, 0
      %v616 = vsel %vm602, %v598, 0
      %v619 = vsel %vm602, %v599, 0
      %v622 = vsel %vm602, %v600, 0
      %v625 = vsel %vm602, %v601, 0
      %vm627 = vcmask 1041408
      %v629 = vsel %vm627, %v561, 0
      %631 = vmatprep.subr.bf16.mxu0 0
      %632 = vmatpush1.bf16.msra.mxu0 0
      %633 = vmatprep.subr.bf16.mxu0 0
      %634 = vmatpush1.bf16.msra.mxu0 0
      %635 = vmatprep.subr.bf16.mxu0 0
      %636 = vmatpush1.bf16.msra.mxu0 0
      %637 = vmatprep.subr.bf16.mxu0 0
      %638 = vmatpush1.bf16.msra.mxu0 0
      %639 = vmatprep.subr.bf16.mxu0 0
      %640 = vmatpush1.bf16.msra.mxu0 0
      %641 = vmatprep.subr.bf16.mxu0 0
      %642 = vmatpush1.bf16.msra.mxu0 0
      %643 = vmatprep.subr.bf16.mxu0 0
      %644 = vmatpush1.bf16.msra.mxu0 0
      %645 = vmatprep.subr.bf16.mxu0 0
      %646 = vmatpush1.bf16.msra.mxu0 %v629
      %647 = vmatprep.subr.bf16.mxu0 0
      %648 = vmatpush2.bf16.msra.mxu0 0
      %649 = vmatprep.subr.bf16.mxu0 0
      %650 = vmatpush2.bf16.msra.mxu0 0
      %651 = vmatprep.subr.bf16.mxu0 0
      %652 = vmatpush2.bf16.msra.mxu0 0
      %653 = vmatprep.subr.bf16.mxu0 0
      %654 = vmatpush2.bf16.msra.mxu0 0
      %655 = vmatprep.subr.bf16.mxu0 0
      %656 = vmatpush2.bf16.msra.mxu0 0
      %657 = vmatprep.subr.bf16.mxu0 0
      %658 = vmatpush2.bf16.msra.mxu0 0
      %659 = vmatprep.subr.bf16.mxu0 0
      %660 = vmatpush2.bf16.msra.mxu0 0
      %661 = vmatprep.subr.bf16.mxu0 0
      %662 = vmatpush2.bf16.msra.mxu0 0
      %663 = vmatprep.mubr.bf16.mxu0 0
      %664 = vmatmul.mubr.bf16.gmra.mxu0 %v604
      %v665 = vpop.f32.mrf.mxu0
      %v666 = vadd.f32 0.0, %v665
      %v667 = vpop.f32.mrf.mxu0
      %v668 = vpop.f32.mrf.mxu0
      %v669 = vadd.f32 0.0, %v668
      %v670 = vpop.f32.mrf.mxu0
      %671 = vmatprep.mubr.bf16.mxu0 0
      %672 = vmatmul.mubr.bf16.gmra.mxu0 %v607
      %v673 = vpop.f32.mrf.mxu0
      %v674 = vadd.f32 0.0, %v673
      %v675 = vpop.f32.mrf.mxu0
      %v676 = vpop.f32.mrf.mxu0
      %v677 = vadd.f32 0.0, %v676
      %v678 = vpop.f32.mrf.mxu0
      %679 = vmatprep.mubr.bf16.mxu0 0
      %680 = vmatmul.mubr.bf16.gmra.mxu0 %v610
      %v681 = vpop.f32.mrf.mxu0
      %v682 = vadd.f32 0.0, %v681
      %v683 = vpop.f32.mrf.mxu0
      %v684 = vpop.f32.mrf.mxu0
      %v685 = vadd.f32 0.0, %v684
      %v686 = vpop.f32.mrf.mxu0
      %687 = vmatprep.mubr.bf16.mxu0 0
      %688 = vmatmul.mubr.bf16.gmra.mxu0 %v613
      %v689 = vpop.f32.mrf.mxu0
      %v690 = vadd.f32 0.0, %v689
      %v691 = vpop.f32.mrf.mxu0
      %v692 = vpop.f32.mrf.mxu0
      %v693 = vadd.f32 0.0, %v692
      %v694 = vpop.f32.mrf.mxu0
      %695 = vmatprep.mubr.bf16.mxu0 0
      %696 = vmatmul.mubr.bf16.gmra.mxu0 %v616
      %v697 = vpop.f32.mrf.mxu0
      %v698 = vadd.f32 0.0, %v697
      %v699 = vpop.f32.mrf.mxu0
      %v700 = vpop.f32.mrf.mxu0
      %v701 = vadd.f32 0.0, %v700
      %v702 = vpop.f32.mrf.mxu0
      %703 = vmatprep.mubr.bf16.mxu0 0
      %704 = vmatmul.mubr.bf16.gmra.mxu0 %v619
      %v705 = vpop.f32.mrf.mxu0
      %v706 = vadd.f32 0.0, %v705
      %v707 = vpop.f32.mrf.mxu0
      %v708 = vpop.f32.mrf.mxu0
      %v709 = vadd.f32 0.0, %v708
      %v710 = vpop.f32.mrf.mxu0
      %711 = vmatprep.mubr.bf16.mxu0 0
      %712 = vmatmul.mubr.bf16.gmra.mxu0 %v622
      %v713 = vpop.f32.mrf.mxu0
      %v714 = vadd.f32 0.0, %v713
      %v715 = vpop.f32.mrf.mxu0
      %v716 = vpop.f32.mrf.mxu0
      %v717 = vadd.f32 0.0, %v716
      %v718 = vpop.f32.mrf.mxu0
      %719 = vmatprep.mubr.bf16.mxu0 0
      %720 = vmatmul.mubr.bf16.gmra.mxu0 %v625
      %v721 = vpop.f32.mrf.mxu0
      %v722 = vadd.f32 0.0, %v721
      %v723 = vpop.f32.mrf.mxu0
      %v724 = vpop.f32.mrf.mxu0
      %v725 = vadd.f32 0.0, %v724
      %v726 = vpop.f32.mrf.mxu0
      %727 = vdwg.mxu0
      %v728 = vunpack.c.l.b16 %v395
      %v729 = vunpack.c.l.b16 %v404
      %v730 = vunpack.c.l.b16 %v417
      %v731 = vunpack.c.l.b16 %v426
      %v732 = vunpack.c.l.b16 %v439
      %v733 = vunpack.c.l.b16 %v448
      %v734 = vunpack.c.l.b16 %v461
      %v735 = vunpack.c.l.b16 %v470
      %v736 = vunpack.c.l.b16 %v483
      %v737 = vunpack.c.l.b16 %v492
      %v738 = vunpack.c.l.b16 %v505
      %v739 = vunpack.c.l.b16 %v514
      %v740 = vunpack.c.l.b16 %v527
      %v741 = vunpack.c.l.b16 %v536
      %v742 = vunpack.c.l.b16 %v549
      %v743 = vunpack.c.l.b16 %v558
      %v744 = vpack.c.b16 %v729, %v728
      %v745 = vpack.c.b16 %v731, %v730
      %v746 = vpack.c.b16 %v733, %v732
      %v747 = vpack.c.b16 %v735, %v734
      %v748 = vpack.c.b16 %v737, %v736
      %v749 = vpack.c.b16 %v739, %v738
      %v750 = vpack.c.b16 %v741, %v740
      %v751 = vpack.c.b16 %v743, %v742
      %v753 = vsel %vm602, %v744, 0
      %v756 = vsel %vm602, %v745, 0
      %v759 = vsel %vm602, %v746, 0
      %v762 = vsel %vm602, %v747, 0
      %v765 = vsel %vm602, %v748, 0
      %v768 = vsel %vm602, %v749, 0
      %v771 = vsel %vm602, %v750, 0
      %v774 = vsel %vm602, %v751, 0
      %v777 = vsel %vm627, %v559, 0
      %779 = vmatprep.subr.bf16.mxu0 0
      %780 = vmatpush1.bf16.msra.mxu0 0
      %781 = vmatprep.subr.bf16.mxu0 0
      %782 = vmatpush1.bf16.msra.mxu0 0
      %783 = vmatprep.subr.bf16.mxu0 0
      %784 = vmatpush1.bf16.msra.mxu0 0
      %785 = vmatprep.subr.bf16.mxu0 0
      %786 = vmatpush1.bf16.msra.mxu0 0
      %787 = vmatprep.subr.bf16.mxu0 0
      %788 = vmatpush1.bf16.msra.mxu0 0
      %789 = vmatprep.subr.bf16.mxu0 0
      %790 = vmatpush1.bf16.msra.mxu0 0
      %791 = vmatprep.subr.bf16.mxu0 0
      %792 = vmatpush1.bf16.msra.mxu0 0
      %793 = vmatprep.subr.bf16.mxu0 0
      %794 = vmatpush1.bf16.msra.mxu0 %v777
      %795 = vmatprep.subr.bf16.mxu0 0
      %796 = vmatpush2.bf16.msra.mxu0 0
      %797 = vmatprep.subr.bf16.mxu0 0
      %798 = vmatpush2.bf16.msra.mxu0 0
      %799 = vmatprep.subr.bf16.mxu0 0
      %800 = vmatpush2.bf16.msra.mxu0 0
      %801 = vmatprep.subr.bf16.mxu0 0
      %802 = vmatpush2.bf16.msra.mxu0 0
      %803 = vmatprep.subr.bf16.mxu0 0
      %804 = vmatpush2.bf16.msra.mxu0 0
      %805 = vmatprep.subr.bf16.mxu0 0
      %806 = vmatpush2.bf16.msra.mxu0 0
      %807 = vmatprep.subr.bf16.mxu0 0
      %808 = vmatpush2.bf16.msra.mxu0 0
      %809 = vmatprep.subr.bf16.mxu0 0
      %810 = vmatpush2.bf16.msra.mxu0 0
      %811 = vmatprep.mubr.bf16.mxu0 0
      %812 = vmatmul.mubr.bf16.gmra.mxu0 %v753
      %v813 = vpop.f32.mrf.mxu0
      %v814 = vadd.f32 %v666, %v813
      %v815 = vpop.f32.mrf.mxu0
      %v816 = vpop.f32.mrf.mxu0
      %v817 = vadd.f32 %v669, %v816
      %v818 = vpop.f32.mrf.mxu0
      %819 = vmatprep.mubr.bf16.mxu0 0
      %820 = vmatmul.mubr.bf16.gmra.mxu0 %v756
      %v821 = vpop.f32.mrf.mxu0
      %v822 = vadd.f32 %v674, %v821
      %v823 = vpop.f32.mrf.mxu0
      %v824 = vpop.f32.mrf.mxu0
      %v825 = vadd.f32 %v677, %v824
      %v826 = vpop.f32.mrf.mxu0
      %827 = vmatprep.mubr.bf16.mxu0 0
      %828 = vmatmul.mubr.bf16.gmra.mxu0 %v759
      %v829 = vpop.f32.mrf.mxu0
      %v830 = vadd.f32 %v682, %v829
      %v831 = vpop.f32.mrf.mxu0
      %v832 = vpop.f32.mrf.mxu0
      %v833 = vadd.f32 %v685, %v832
      %v834 = vpop.f32.mrf.mxu0
      %835 = vmatprep.mubr.bf16.mxu0 0
      %836 = vmatmul.mubr.bf16.gmra.mxu0 %v762
      %v837 = vpop.f32.mrf.mxu0
      %v838 = vadd.f32 %v690, %v837
      %v839 = vpop.f32.mrf.mxu0
      %v840 = vpop.f32.mrf.mxu0
      %v841 = vadd.f32 %v693, %v840
      %v842 = vpop.f32.mrf.mxu0
      %843 = vmatprep.mubr.bf16.mxu0 0
      %844 = vmatmul.mubr.bf16.gmra.mxu0 %v765
      %v845 = vpop.f32.mrf.mxu0
      %v846 = vadd.f32 %v698, %v845
      %v847 = vpop.f32.mrf.mxu0
      %v848 = vpop.f32.mrf.mxu0
      %v849 = vadd.f32 %v701, %v848
      %v850 = vpop.f32.mrf.mxu0
      %851 = vmatprep.mubr.bf16.mxu0 0
      %852 = vmatmul.mubr.bf16.gmra.mxu0 %v768
      %v853 = vpop.f32.mrf.mxu0
      %v854 = vadd.f32 %v706, %v853
      %v855 = vpop.f32.mrf.mxu0
      %v856 = vpop.f32.mrf.mxu0
      %v857 = vadd.f32 %v709, %v856
      %v858 = vpop.f32.mrf.mxu0
      %859 = vmatprep.mubr.bf16.mxu0 0
      %860 = vmatmul.mubr.bf16.gmra.mxu0 %v771
      %v861 = vpop.f32.mrf.mxu0
      %v862 = vadd.f32 %v714, %v861
      %v863 = vpop.f32.mrf.mxu0
      %v864 = vpop.f32.mrf.mxu0
      %v865 = vadd.f32 %v717, %v864
      %v866 = vpop.f32.mrf.mxu0
      %867 = vmatprep.mubr.bf16.mxu0 0
      %868 = vmatmul.mubr.bf16.gmra.mxu0 %v774
      %v869 = vpop.f32.mrf.mxu0
      %v870 = vadd.f32 %v722, %v869
      %v871 = vpop.f32.mrf.mxu0
      %v872 = vpop.f32.mrf.mxu0
      %v873 = vadd.f32 %v725, %v872
      %v874 = vpop.f32.mrf.mxu0
      %875 = vdwg.mxu0
      %v876 = vld [vmem:[#allocation2 + $0x4] sm:$0xf]
      %v877 = vld [vmem:[#allocation2 + $0x8] sm:$0xf]
      %v878 = vld [vmem:[#allocation2 + $0xc] sm:$0x1]
      %v879 = vld [vmem:[#allocation2 + $0x14] sm:$0xf]
      %v880 = vld [vmem:[#allocation2 + $0x18] sm:$0xf]
      %v881 = vld [vmem:[#allocation2 + $0x1c] sm:$0x1]
      %v882 = vld [vmem:[#allocation2 + $0x24] sm:$0xf]
      %v883 = vld [vmem:[#allocation2 + $0x28] sm:$0xf]
      %v884 = vld [vmem:[#allocation2 + $0x2c] sm:$0x1]
      %v885 = vld [vmem:[#allocation2 + $0x34] sm:$0xf]
      %v886 = vld [vmem:[#allocation2 + $0x38] sm:$0xf]
      %v887 = vld [vmem:[#allocation2 + $0x3c] sm:$0x1]
      %v888 = vld [vmem:[#allocation2 + $0x44] sm:$0xf]
      %v889 = vld [vmem:[#allocation2 + $0x48] sm:$0xf]
      %v890 = vld [vmem:[#allocation2 + $0x4c] sm:$0x1]
      %v891 = vld [vmem:[#allocation2 + $0x54] sm:$0xf]
      %v892 = vld [vmem:[#allocation2 + $0x58] sm:$0xf]
      %v893 = vld [vmem:[#allocation2 + $0x5c] sm:$0x1]
      %v894 = vld [vmem:[#allocation2 + $0x64] sm:$0xf]
      %v895 = vld [vmem:[#allocation2 + $0x68] sm:$0xf]
      %v896 = vld [vmem:[#allocation2 + $0x6c] sm:$0x1]
      %v897 = vld [vmem:[#allocation2 + $0x74] sm:$0xf]
      %v898 = vld [vmem:[#allocation2 + $0x78] sm:$0xf]
      %v899 = vld [vmem:[#allocation2 + $0x7c] sm:$0x1]
      %vm900 = vsmask.f32 3328
      %vm901 = vsmask.f32 7440
      %vm902 = vmor %vm900, %vm901
      %v904 = vshrl.u32 %v876, 16
      %v906 = vrot.slane %v904, 4
      %v907 = vshll.u32 %v876, 16
      %v909 = vrot.slane %v907, 5
      %v910 = vor.u32 %v906, %v909
      %v911 = vrot.slane %v910, 4
      %v913 = vshll.u32 %v877, 16
      %v915 = vrot.slane %v913, 5
      %v916 = vsel %vm902, %v911, %v915
      %v917 = vshrl.u32 %v877, 16
      %v919 = vrot.slane %v917, 4
      %v920 = vor.u32 %v919, %v915
      %v921 = vrot.slane %v920, 4
      %v923 = vshll.u32 %v878, 16
      %v925 = vrot.slane %v923, 5
      %v926 = vsel %vm902, %v921, %v925
      %v928 = vshrl.u32 %v879, 16
      %v930 = vrot.slane %v928, 4
      %v931 = vshll.u32 %v879, 16
      %v933 = vrot.slane %v931, 5
      %v934 = vor.u32 %v930, %v933
      %v935 = vrot.slane %v934, 4
      %v937 = vshll.u32 %v880, 16
      %v939 = vrot.slane %v937, 5
      %v940 = vsel %vm902, %v935, %v939
      %v941 = vshrl.u32 %v880, 16
      %v943 = vrot.slane %v941, 4
      %v944 = vor.u32 %v943, %v939
      %v945 = vrot.slane %v944, 4
      %v947 = vshll.u32 %v881, 16
      %v949 = vrot.slane %v947, 5
      %v950 = vsel %vm902, %v945, %v949
      %v952 = vshrl.u32 %v882, 16
      %v954 = vrot.slane %v952, 4
      %v955 = vshll.u32 %v882, 16
      %v957 = vrot.slane %v955, 5
      %v958 = vor.u32 %v954, %v957
      %v959 = vrot.slane %v958, 4
      %v961 = vshll.u32 %v883, 16
      %v963 = vrot.slane %v961, 5
      %v964 = vsel %vm902, %v959, %v963
      %v965 = vshrl.u32 %v883, 16
      %v967 = vrot.slane %v965, 4
      %v968 = vor.u32 %v967, %v963
      %v969 = vrot.slane %v968, 4
      %v971 = vshll.u32 %v884, 16
      %v973 = vrot.slane %v971, 5
      %v974 = vsel %vm902, %v969, %v973
      %v976 = vshrl.u32 %v885, 16
      %v978 = vrot.slane %v976, 4
      %v979 = vshll.u32 %v885, 16
      %v981 = vrot.slane %v979, 5
      %v982 = vor.u32 %v978, %v981
      %v983 = vrot.slane %v982, 4
      %v985 = vshll.u32 %v886, 16
      %v987 = vrot.slane %v985, 5
      %v988 = vsel %vm902, %v983, %v987
      %v989 = vshrl.u32 %v886, 16
      %v991 = vrot.slane %v989, 4
      %v992 = vor.u32 %v991, %v987
      %v993 = vrot.slane %v992, 4
      %v995 = vshll.u32 %v887, 16
      %v997 = vrot.slane %v995, 5
      %v998 = vsel %vm902, %v993, %v997
      %v1000 = vshrl.u32 %v888, 16
      %v1002 = vrot.slane %v1000, 4
      %v1003 = vshll.u32 %v888, 16
      %v1005 = vrot.slane %v1003, 5
      %v1006 = vor.u32 %v1002, %v1005
      %v1007 = vrot.slane %v1006, 4
      %v1009 = vshll.u32 %v889, 16
      %v1011 = vrot.slane %v1009, 5
      %v1012 = vsel %vm902, %v1007, %v1011
      %v1013 = vshrl.u32 %v889, 16
      %v1015 = vrot.slane %v1013, 4
      %v1016 = vor.u32 %v1015, %v1011
      %v1017 = vrot.slane %v1016, 4
      %v1019 = vshll.u32 %v890, 16
      %v1021 = vrot.slane %v1019, 5
      %v1022 = vsel %vm902, %v1017, %v1021
      %v1024 = vshrl.u32 %v891, 16
      %v1026 = vrot.slane %v1024, 4
      %v1027 = vshll.u32 %v891, 16
      %v1029 = vrot.slane %v1027, 5
      %v1030 = vor.u32 %v1026, %v1029
      %v1031 = vrot.slane %v1030, 4
      %v1033 = vshll.u32 %v892, 16
      %v1035 = vrot.slane %v1033, 5
      %v1036 = vsel %vm902, %v1031, %v1035
      %v1037 = vshrl.u32 %v892, 16
      %v1039 = vrot.slane %v1037, 4
      %v1040 = vor.u32 %v1039, %v1035
      %v1041 = vrot.slane %v1040, 4
      %v1043 = vshll.u32 %v893, 16
      %v1045 = vrot.slane %v1043, 5
      %v1046 = vsel %vm902, %v1041, %v1045
      %v1048 = vshrl.u32 %v894, 16
      %v1050 = vrot.slane %v1048, 4
      %v1051 = vshll.u32 %v894, 16
      %v1053 = vrot.slane %v1051, 5
      %v1054 = vor.u32 %v1050, %v1053
      %v1055 = vrot.slane %v1054, 4
      %v1057 = vshll.u32 %v895, 16
      %v1059 = vrot.slane %v1057, 5
      %v1060 = vsel %vm902, %v1055, %v1059
      %v1061 = vshrl.u32 %v895, 16
      %v1063 = vrot.slane %v1061, 4
      %v1064 = vor.u32 %v1063, %v1059
      %v1065 = vrot.slane %v1064, 4
      %v1067 = vshll.u32 %v896, 16
      %v1069 = vrot.slane %v1067, 5
      %v1070 = vsel %vm902, %v1065, %v1069
      %v1072 = vshrl.u32 %v897, 16
      %v1074 = vrot.slane %v1072, 4
      %v1075 = vshll.u32 %v897, 16
      %v1077 = vrot.slane %v1075, 5
      %v1078 = vor.u32 %v1074, %v1077
      %v1079 = vrot.slane %v1078, 4
      %v1081 = vshll.u32 %v898, 16
      %v1083 = vrot.slane %v1081, 5
      %v1084 = vsel %vm902, %v1079, %v1083
      %v1085 = vshrl.u32 %v898, 16
      %v1087 = vrot.slane %v1085, 4
      %v1088 = vor.u32 %v1087, %v1083
      %v1089 = vrot.slane %v1088, 4
      %v1091 = vshll.u32 %v899, 16
      %v1093 = vrot.slane %v1091, 5
      %v1094 = vsel %vm902, %v1089, %v1093
      %s1095 = scalar_lea.vmem %s1, 4
      %v1096 = vld [vmem:[%s1095] sm:$0x3]
      %v1097 = vunpack.c.l.b16 %v916
      %v1098 = vunpack.c.l.b16 %v926
      %v1099 = vunpack.c.l.b16 %v940
      %v1100 = vunpack.c.l.b16 %v950
      %v1101 = vunpack.c.l.b16 %v964
      %v1102 = vunpack.c.l.b16 %v974
      %v1103 = vunpack.c.l.b16 %v988
      %v1104 = vunpack.c.l.b16 %v998
      %v1105 = vunpack.c.l.b16 %v1012
      %v1106 = vunpack.c.l.b16 %v1022
      %v1107 = vunpack.c.l.b16 %v1036
      %v1108 = vunpack.c.l.b16 %v1046
      %v1109 = vunpack.c.l.b16 %v1060
      %v1110 = vunpack.c.l.b16 %v1070
      %v1111 = vunpack.c.l.b16 %v1084
      %v1112 = vunpack.c.l.b16 %v1094
      %v1113 = vpack.c.b16 %v1098, %v1097
      %v1114 = vpack.c.b16 %v1100, %v1099
      %v1115 = vpack.c.b16 %v1102, %v1101
      %v1116 = vpack.c.b16 %v1104, %v1103
      %v1117 = vpack.c.b16 %v1106, %v1105
      %v1118 = vpack.c.b16 %v1108, %v1107
      %v1119 = vpack.c.b16 %v1110, %v1109
      %v1120 = vpack.c.b16 %v1112, %v1111
      %v1122 = vsel %vm602, %v1113, 0
      %v1125 = vsel %vm602, %v1114, 0
      %v1128 = vsel %vm602, %v1115, 0
      %v1131 = vsel %vm602, %v1116, 0
      %v1134 = vsel %vm602, %v1117, 0
      %v1137 = vsel %vm602, %v1118, 0
      %v1140 = vsel %vm602, %v1119, 0
      %v1143 = vsel %vm602, %v1120, 0
      %v1146 = vsel %vm627, %v1096, 0
      %1148 = vmatprep.subr.bf16.mxu0 0
      %1149 = vmatpush1.bf16.msra.mxu0 0
      %1150 = vmatprep.subr.bf16.mxu0 0
      %1151 = vmatpush1.bf16.msra.mxu0 0
      %1152 = vmatprep.subr.bf16.mxu0 0
      %1153 = vmatpush1.bf16.msra.mxu0 0
      %1154 = vmatprep.subr.bf16.mxu0 0
      %1155 = vmatpush1.bf16.msra.mxu0 0
      %1156 = vmatprep.subr.bf16.mxu0 0
      %1157 = vmatpush1.bf16.msra.mxu0 0
      %1158 = vmatprep.subr.bf16.mxu0 0
      %1159 = vmatpush1.bf16.msra.mxu0 0
      %1160 = vmatprep.subr.bf16.mxu0 0
      %1161 = vmatpush1.bf16.msra.mxu0 0
      %1162 = vmatprep.subr.bf16.mxu0 0
      %1163 = vmatpush1.bf16.msra.mxu0 %v1146
      %1164 = vmatprep.subr.bf16.mxu0 0
      %1165 = vmatpush2.bf16.msra.mxu0 0
      %1166 = vmatprep.subr.bf16.mxu0 0
      %1167 = vmatpush2.bf16.msra.mxu0 0
      %1168 = vmatprep.subr.bf16.mxu0 0
      %1169 = vmatpush2.bf16.msra.mxu0 0
      %1170 = vmatprep.subr.bf16.mxu0 0
      %1171 = vmatpush2.bf16.msra.mxu0 0
      %1172 = vmatprep.subr.bf16.mxu0 0
      %1173 = vmatpush2.bf16.msra.mxu0 0
      %1174 = vmatprep.subr.bf16.mxu0 0
      %1175 = vmatpush2.bf16.msra.mxu0 0
      %1176 = vmatprep.subr.bf16.mxu0 0
      %1177 = vmatpush2.bf16.msra.mxu0 0
      %1178 = vmatprep.subr.bf16.mxu0 0
      %1179 = vmatpush2.bf16.msra.mxu0 0
      %1180 = vmatprep.mubr.bf16.mxu0 0
      %1181 = vmatmul.mubr.bf16.gmra.mxu0 %v1122
      %v1182 = vpop.f32.mrf.mxu0
      %v1183 = vadd.f32 0.0, %v1182
      %v1184 = vpop.f32.mrf.mxu0
      %v1185 = vpop.f32.mrf.mxu0
      %v1186 = vadd.f32 0.0, %v1185
      %v1187 = vpop.f32.mrf.mxu0
      %1188 = vmatprep.mubr.bf16.mxu0 0
      %1189 = vmatmul.mubr.bf16.gmra.mxu0 %v1125
      %v1190 = vpop.f32.mrf.mxu0
      %v1191 = vadd.f32 0.0, %v1190
      %v1192 = vpop.f32.mrf.mxu0
      %v1193 = vpop.f32.mrf.mxu0
      %v1194 = vadd.f32 0.0, %v1193
      %v1195 = vpop.f32.mrf.mxu0
      %1196 = vmatprep.mubr.bf16.mxu0 0
      %1197 = vmatmul.mubr.bf16.gmra.mxu0 %v1128
      %v1198 = vpop.f32.mrf.mxu0
      %v1199 = vadd.f32 0.0, %v1198
      %v1200 = vpop.f32.mrf.mxu0
      %v1201 = vpop.f32.mrf.mxu0
      %v1202 = vadd.f32 0.0, %v1201
      %v1203 = vpop.f32.mrf.mxu0
      %1204 = vmatprep.mubr.bf16.mxu0 0
      %1205 = vmatmul.mubr.bf16.gmra.mxu0 %v1131
      %v1206 = vpop.f32.mrf.mxu0
      %v1207 = vadd.f32 0.0, %v1206
      %v1208 = vpop.f32.mrf.mxu0
      %v1209 = vpop.f32.mrf.mxu0
      %v1210 = vadd.f32 0.0, %v1209
      %v1211 = vpop.f32.mrf.mxu0
      %1212 = vmatprep.mubr.bf16.mxu0 0
      %1213 = vmatmul.mubr.bf16.gmra.mxu0 %v1134
      %v1214 = vpop.f32.mrf.mxu0
      %v1215 = vadd.f32 0.0, %v1214
      %v1216 = vpop.f32.mrf.mxu0
      %v1217 = vpop.f32.mrf.mxu0
      %v1218 = vadd.f32 0.0, %v1217
      %v1219 = vpop.f32.mrf.mxu0
      %1220 = vmatprep.mubr.bf16.mxu0 0
      %1221 = vmatmul.mubr.bf16.gmra.mxu0 %v1137
      %v1222 = vpop.f32.mrf.mxu0
      %v1223 = vadd.f32 0.0, %v1222
      %v1224 = vpop.f32.mrf.mxu0
      %v1225 = vpop.f32.mrf.mxu0
      %v1226 = vadd.f32 0.0, %v1225
      %v1227 = vpop.f32.mrf.mxu0
      %1228 = vmatprep.mubr.bf16.mxu0 0
      %1229 = vmatmul.mubr.bf16.gmra.mxu0 %v1140
      %v1230 = vpop.f32.mrf.mxu0
      %v1231 = vadd.f32 0.0, %v1230
      %v1232 = vpop.f32.mrf.mxu0
      %v1233 = vpop.f32.mrf.mxu0
      %v1234 = vadd.f32 0.0, %v1233
      %v1235 = vpop.f32.mrf.mxu0
      %1236 = vmatprep.mubr.bf16.mxu0 0
      %1237 = vmatmul.mubr.bf16.gmra.mxu0 %v1143
      %v1238 = vpop.f32.mrf.mxu0
      %v1239 = vadd.f32 0.0, %v1238
      %v1240 = vpop.f32.mrf.mxu0
      %v1241 = vpop.f32.mrf.mxu0
      %v1242 = vadd.f32 0.0, %v1241
      %v1243 = vpop.f32.mrf.mxu0
      %1244 = vdwg.mxu0
      %v1245 = vadd.f32 %v814, %v1183
      %v1246 = vadd.f32 %v817, %v1186
      %v1247 = vadd.f32 %v822, %v1191
      %v1248 = vadd.f32 %v825, %v1194
      %v1249 = vadd.f32 %v830, %v1199
      %v1250 = vadd.f32 %v833, %v1202
      %v1251 = vadd.f32 %v838, %v1207
      %v1252 = vadd.f32 %v841, %v1210
      %v1253 = vadd.f32 %v846, %v1215
      %v1254 = vadd.f32 %v849, %v1218
      %v1255 = vadd.f32 %v854, %v1223
      %v1256 = vadd.f32 %v857, %v1226
      %v1257 = vadd.f32 %v862, %v1231
      %v1258 = vadd.f32 %v865, %v1234
      %v1259 = vadd.f32 %v870, %v1239
      %v1260 = vadd.f32 %v873, %v1242
      %v1261 = vld [vmem:[%s323] sm:$0x8]
      %v1262 = vld [vmem:[%s323 + $0x4] sm:$0xf]
      %v1263 = vld [vmem:[%s323 + $0x8] sm:$0xf]
      %v1264 = vld [vmem:[%s323 + $0x10] sm:$0x8]
      %v1265 = vld [vmem:[%s323 + $0x14] sm:$0xf]
      %v1266 = vld [vmem:[%s323 + $0x18] sm:$0xf]
      %v1267 = vld [vmem:[%s323 + $0x20] sm:$0x8]
      %v1268 = vld [vmem:[%s323 + $0x24] sm:$0xf]
      %v1269 = vld [vmem:[%s323 + $0x28] sm:$0xf]
      %v1270 = vld [vmem:[%s323 + $0x30] sm:$0x8]
      %v1271 = vld [vmem:[%s323 + $0x34] sm:$0xf]
      %v1272 = vld [vmem:[%s323 + $0x38] sm:$0xf]
      %v1273 = vld [vmem:[%s323 + $0x40] sm:$0x8]
      %v1274 = vld [vmem:[%s323 + $0x44] sm:$0xf]
      %v1275 = vld [vmem:[%s323 + $0x48] sm:$0xf]
      %v1276 = vld [vmem:[%s323 + $0x50] sm:$0x8]
      %v1277 = vld [vmem:[%s323 + $0x54] sm:$0xf]
      %v1278 = vld [vmem:[%s323 + $0x58] sm:$0xf]
      %v1279 = vld [vmem:[%s323 + $0x60] sm:$0x8]
      %v1280 = vld [vmem:[%s323 + $0x64] sm:$0xf]
      %v1281 = vld [vmem:[%s323 + $0x68] sm:$0xf]
      %v1282 = vld [vmem:[%s323 + $0x70] sm:$0x8]
      %v1283 = vld [vmem:[%s323 + $0x74] sm:$0xf]
      %v1284 = vld [vmem:[%s323 + $0x78] sm:$0xf]
      %v1286 = vshrl.u32 %v1261, 16
      %v1288 = vrot.slane %v1286, 7
      %v1289 = vrot.slane %v1288, 4
      %v1291 = vshrl.u32 %v1262, 16
      %v1293 = vrot.slane %v1291, 7
      %v1294 = vshll.u32 %v1262, 16
      %v1296 = vor.u32 %v1293, %v1294
      %v1297 = vsel %vm382, %v1289, %v1296
      %v1298 = vrot.slane %v1293, 4
      %v1300 = vshrl.u32 %v1263, 16
      %v1302 = vrot.slane %v1300, 7
      %v1303 = vshll.u32 %v1263, 16
      %v1305 = vor.u32 %v1302, %v1303
      %v1306 = vsel %vm382, %v1298, %v1305
      %v1308 = vshrl.u32 %v1264, 16
      %v1310 = vrot.slane %v1308, 7
      %v1311 = vrot.slane %v1310, 4
      %v1313 = vshrl.u32 %v1265, 16
      %v1315 = vrot.slane %v1313, 7
      %v1316 = vshll.u32 %v1265, 16
      %v1318 = vor.u32 %v1315, %v1316
      %v1319 = vsel %vm382, %v1311, %v1318
      %v1320 = vrot.slane %v1315, 4
      %v1322 = vshrl.u32 %v1266, 16
      %v1324 = vrot.slane %v1322, 7
      %v1325 = vshll.u32 %v1266, 16
      %v1327 = vor.u32 %v1324, %v1325
      %v1328 = vsel %vm382, %v1320, %v1327
      %v1330 = vshrl.u32 %v1267, 16
      %v1332 = vrot.slane %v1330, 7
      %v1333 = vrot.slane %v1332, 4
      %v1335 = vshrl.u32 %v1268, 16
      %v1337 = vrot.slane %v1335, 7
      %v1338 = vshll.u32 %v1268, 16
      %v1340 = vor.u32 %v1337, %v1338
      %v1341 = vsel %vm382, %v1333, %v1340
      %v1342 = vrot.slane %v1337, 4
      %v1344 = vshrl.u32 %v1269, 16
      %v1346 = vrot.slane %v1344, 7
      %v1347 = vshll.u32 %v1269, 16
      %v1349 = vor.u32 %v1346, %v1347
      %v1350 = vsel %vm382, %v1342, %v1349
      %v1352 = vshrl.u32 %v1270, 16
      %v1354 = vrot.slane %v1352, 7
      %v1355 = vrot.slane %v1354, 4
      %v1357 = vshrl.u32 %v1271, 16
      %v1359 = vrot.slane %v1357, 7
      %v1360 = vshll.u32 %v1271, 16
      %v1362 = vor.u32 %v1359, %v1360
      %v1363 = vsel %vm382, %v1355, %v1362
      %v1364 = vrot.slane %v1359, 4
      %v1366 = vshrl.u32 %v1272, 16
      %v1368 = vrot.slane %v1366, 7
      %v1369 = vshll.u32 %v1272, 16
      %v1371 = vor.u32 %v1368, %v1369
      %v1372 = vsel %vm382, %v1364, %v1371
      %v1374 = vshrl.u32 %v1273, 16
      %v1376 = vrot.slane %v1374, 7
      %v1377 = vrot.slane %v1376, 4
      %v1379 = vshrl.u32 %v1274, 16
      %v1381 = vrot.slane %v1379, 7
      %v1382 = vshll.u32 %v1274, 16
      %v1384 = vor.u32 %v1381, %v1382
      %v1385 = vsel %vm382, %v1377, %v1384
      %v1386 = vrot.slane %v1381, 4
      %v1388 = vshrl.u32 %v1275, 16
      %v1390 = vrot.slane %v1388, 7
      %v1391 = vshll.u32 %v1275, 16
      %v1393 = vor.u32 %v1390, %v1391
      %v1394 = vsel %vm382, %v1386, %v1393
      %v1396 = vshrl.u32 %v1276, 16
      %v1398 = vrot.slane %v1396, 7
      %v1399 = vrot.slane %v1398, 4
      %v1401 = vshrl.u32 %v1277, 16
      %v1403 = vrot.slane %v1401, 7
      %v1404 = vshll.u32 %v1277, 16
      %v1406 = vor.u32 %v1403, %v1404
      %v1407 = vsel %vm382, %v1399, %v1406
      %v1408 = vrot.slane %v1403, 4
      %v1410 = vshrl.u32 %v1278, 16
      %v1412 = vrot.slane %v1410, 7
      %v1413 = vshll.u32 %v1278, 16
      %v1415 = vor.u32 %v1412, %v1413
      %v1416 = vsel %vm382, %v1408, %v1415
      %v1418 = vshrl.u32 %v1279, 16
      %v1420 = vrot.slane %v1418, 7
      %v1421 = vrot.slane %v1420, 4
      %v1423 = vshrl.u32 %v1280, 16
      %v1425 = vrot.slane %v1423, 7
      %v1426 = vshll.u32 %v1280, 16
      %v1428 = vor.u32 %v1425, %v1426
      %v1429 = vsel %vm382, %v1421, %v1428
      %v1430 = vrot.slane %v1425, 4
      %v1432 = vshrl.u32 %v1281, 16
      %v1434 = vrot.slane %v1432, 7
      %v1435 = vshll.u32 %v1281, 16
      %v1437 = vor.u32 %v1434, %v1435
      %v1438 = vsel %vm382, %v1430, %v1437
      %v1440 = vshrl.u32 %v1282, 16
      %v1442 = vrot.slane %v1440, 7
      %v1443 = vrot.slane %v1442, 4
      %v1445 = vshrl.u32 %v1283, 16
      %v1447 = vrot.slane %v1445, 7
      %v1448 = vshll.u32 %v1283, 16
      %v1450 = vor.u32 %v1447, %v1448
      %v1451 = vsel %vm382, %v1443, %v1450
      %v1452 = vrot.slane %v1447, 4
      %v1454 = vshrl.u32 %v1284, 16
      %v1456 = vrot.slane %v1454, 7
      %v1457 = vshll.u32 %v1284, 16
      %v1459 = vor.u32 %v1456, %v1457
      %v1460 = vsel %vm382, %v1452, %v1459
      %s1461 = scalar_lea.vmem %s1, 6
      %v1462 = vld [vmem:[%s1461] sm:$0x3]
      %v1463 = vunpack.c.l.b16 %v1297
      %v1464 = vunpack.c.l.b16 %v1306
      %v1465 = vunpack.c.l.b16 %v1319
      %v1466 = vunpack.c.l.b16 %v1328
      %v1467 = vunpack.c.l.b16 %v1341
      %v1468 = vunpack.c.l.b16 %v1350
      %v1469 = vunpack.c.l.b16 %v1363
      %v1470 = vunpack.c.l.b16 %v1372
      %v1471 = vunpack.c.l.b16 %v1385
      %v1472 = vunpack.c.l.b16 %v1394
      %v1473 = vunpack.c.l.b16 %v1407
      %v1474 = vunpack.c.l.b16 %v1416
      %v1475 = vunpack.c.l.b16 %v1429
      %v1476 = vunpack.c.l.b16 %v1438
      %v1477 = vunpack.c.l.b16 %v1451
      %v1478 = vunpack.c.l.b16 %v1460
      %v1479 = vpack.c.b16 %v1464, %v1463
      %v1480 = vpack.c.b16 %v1466, %v1465
      %v1481 = vpack.c.b16 %v1468, %v1467
      %v1482 = vpack.c.b16 %v1470, %v1469
      %v1483 = vpack.c.b16 %v1472, %v1471
      %v1484 = vpack.c.b16 %v1474, %v1473
      %v1485 = vpack.c.b16 %v1476, %v1475
      %v1486 = vpack.c.b16 %v1478, %v1477
      %v1488 = vsel %vm602, %v1479, 0
      %v1491 = vsel %vm602, %v1480, 0
      %v1494 = vsel %vm602, %v1481, 0
      %v1497 = vsel %vm602, %v1482, 0
      %v1500 = vsel %vm602, %v1483, 0
      %v1503 = vsel %vm602, %v1484, 0
      %v1506 = vsel %vm602, %v1485, 0
      %v1509 = vsel %vm602, %v1486, 0
      %v1512 = vsel %vm627, %v1462, 0
      %1514 = vmatprep.subr.bf16.mxu0 0
      %1515 = vmatpush1.bf16.msra.mxu0 0
      %1516 = vmatprep.subr.bf16.mxu0 0
      %1517 = vmatpush1.bf16.msra.mxu0 0
      %1518 = vmatprep.subr.bf16.mxu0 0
      %1519 = vmatpush1.bf16.msra.mxu0 0
      %1520 = vmatprep.subr.bf16.mxu0 0
      %1521 = vmatpush1.bf16.msra.mxu0 0
      %1522 = vmatprep.subr.bf16.mxu0 0
      %1523 = vmatpush1.bf16.msra.mxu0 0
      %1524 = vmatprep.subr.bf16.mxu0 0
      %1525 = vmatpush1.bf16.msra.mxu0 0
      %1526 = vmatprep.subr.bf16.mxu0 0
      %1527 = vmatpush1.bf16.msra.mxu0 0
      %1528 = vmatprep.subr.bf16.mxu0 0
      %1529 = vmatpush1.bf16.msra.mxu0 %v1512
      %1530 = vmatprep.subr.bf16.mxu0 0
      %1531 = vmatpush2.bf16.msra.mxu0 0
      %1532 = vmatprep.subr.bf16.mxu0 0
      %1533 = vmatpush2.bf16.msra.mxu0 0
      %1534 = vmatprep.subr.bf16.mxu0 0
      %1535 = vmatpush2.bf16.msra.mxu0 0
      %1536 = vmatprep.subr.bf16.mxu0 0
      %1537 = vmatpush2.bf16.msra.mxu0 0
      %1538 = vmatprep.subr.bf16.mxu0 0
      %1539 = vmatpush2.bf16.msra.mxu0 0
      %1540 = vmatprep.subr.bf16.mxu0 0
      %1541 = vmatpush2.bf16.msra.mxu0 0
      %1542 = vmatprep.subr.bf16.mxu0 0
      %1543 = vmatpush2.bf16.msra.mxu0 0
      %1544 = vmatprep.subr.bf16.mxu0 0
      %1545 = vmatpush2.bf16.msra.mxu0 0
      %1546 = vmatprep.mubr.bf16.mxu0 0
      %1547 = vmatmul.mubr.bf16.gmra.mxu0 %v1488
      %v1548 = vpop.f32.mrf.mxu0
      %v1549 = vadd.f32 0.0, %v1548
      %v1550 = vpop.f32.mrf.mxu0
      %v1551 = vpop.f32.mrf.mxu0
      %v1552 = vadd.f32 0.0, %v1551
      %v1553 = vpop.f32.mrf.mxu0
      %1554 = vmatprep.mubr.bf16.mxu0 0
      %1555 = vmatmul.mubr.bf16.gmra.mxu0 %v1491
      %v1556 = vpop.f32.mrf.mxu0
      %v1557 = vadd.f32 0.0, %v1556
      %v1558 = vpop.f32.mrf.mxu0
      %v1559 = vpop.f32.mrf.mxu0
      %v1560 = vadd.f32 0.0, %v1559
      %v1561 = vpop.f32.mrf.mxu0
      %1562 = vmatprep.mubr.bf16.mxu0 0
      %1563 = vmatmul.mubr.bf16.gmra.mxu0 %v1494
      %v1564 = vpop.f32.mrf.mxu0
      %v1565 = vadd.f32 0.0, %v1564
      %v1566 = vpop.f32.mrf.mxu0
      %v1567 = vpop.f32.mrf.mxu0
      %v1568 = vadd.f32 0.0, %v1567
      %v1569 = vpop.f32.mrf.mxu0
      %1570 = vmatprep.mubr.bf16.mxu0 0
      %1571 = vmatmul.mubr.bf16.gmra.mxu0 %v1497
      %v1572 = vpop.f32.mrf.mxu0
      %v1573 = vadd.f32 0.0, %v1572
      %v1574 = vpop.f32.mrf.mxu0
      %v1575 = vpop.f32.mrf.mxu0
      %v1576 = vadd.f32 0.0, %v1575
      %v1577 = vpop.f32.mrf.mxu0
      %1578 = vmatprep.mubr.bf16.mxu0 0
      %1579 = vmatmul.mubr.bf16.gmra.mxu0 %v1500
      %v1580 = vpop.f32.mrf.mxu0
      %v1581 = vadd.f32 0.0, %v1580
      %v1582 = vpop.f32.mrf.mxu0
      %v1583 = vpop.f32.mrf.mxu0
      %v1584 = vadd.f32 0.0, %v1583
      %v1585 = vpop.f32.mrf.mxu0
      %1586 = vmatprep.mubr.bf16.mxu0 0
      %1587 = vmatmul.mubr.bf16.gmra.mxu0 %v1503
      %v1588 = vpop.f32.mrf.mxu0
      %v1589 = vadd.f32 0.0, %v1588
      %v1590 = vpop.f32.mrf.mxu0
      %v1591 = vpop.f32.mrf.mxu0
      %v1592 = vadd.f32 0.0, %v1591
      %v1593 = vpop.f32.mrf.mxu0
      %1594 = vmatprep.mubr.bf16.mxu0 0
      %1595 = vmatmul.mubr.bf16.gmra.mxu0 %v1506
      %v1596 = vpop.f32.mrf.mxu0
      %v1597 = vadd.f32 0.0, %v1596
      %v1598 = vpop.f32.mrf.mxu0
      %v1599 = vpop.f32.mrf.mxu0
      %v1600 = vadd.f32 0.0, %v1599
      %v1601 = vpop.f32.mrf.mxu0
      %1602 = vmatprep.mubr.bf16.mxu0 0
      %1603 = vmatmul.mubr.bf16.gmra.mxu0 %v1509
      %v1604 = vpop.f32.mrf.mxu0
      %v1605 = vadd.f32 0.0, %v1604
      %v1606 = vpop.f32.mrf.mxu0
      %v1607 = vpop.f32.mrf.mxu0
      %v1608 = vadd.f32 0.0, %v1607
      %v1609 = vpop.f32.mrf.mxu0
      %1610 = vdwg.mxu0
      %v1611 = vadd.f32 %v1245, %v1549
      %v1612 = vadd.f32 %v1246, %v1552
      %v1613 = vadd.f32 %v1247, %v1557
      %v1614 = vadd.f32 %v1248, %v1560
      %v1615 = vadd.f32 %v1249, %v1565
      %v1616 = vadd.f32 %v1250, %v1568
      %v1617 = vadd.f32 %v1251, %v1573
      %v1618 = vadd.f32 %v1252, %v1576
      %v1619 = vadd.f32 %v1253, %v1581
      %v1620 = vadd.f32 %v1254, %v1584
      %v1621 = vadd.f32 %v1255, %v1589
      %v1622 = vadd.f32 %v1256, %v1592
      %v1623 = vadd.f32 %v1257, %v1597
      %v1624 = vadd.f32 %v1258, %v1600
      %v1625 = vadd.f32 %v1259, %v1605
      %v1626 = vadd.f32 %v1260, %v1608
      %s1627 = scalar_lea.vmem %s1, 8
      %v1628 = vld [vmem:[%s1627] sm:$0x3]
      %v1645 = vunpack.c.l.b16 %v1262
      %v1646 = vunpack.c.l.b16 %v1263
      %v1647 = vunpack.c.l.b16 %v1265
      %v1648 = vunpack.c.l.b16 %v1266
      %v1649 = vunpack.c.l.b16 %v1268
      %v1650 = vunpack.c.l.b16 %v1269
      %v1651 = vunpack.c.l.b16 %v1271
      %v1652 = vunpack.c.l.b16 %v1272
      %v1653 = vunpack.c.l.b16 %v1274
      %v1654 = vunpack.c.l.b16 %v1275
      %v1655 = vunpack.c.l.b16 %v1277
      %v1656 = vunpack.c.l.b16 %v1278
      %v1657 = vunpack.c.l.b16 %v1280
      %v1658 = vunpack.c.l.b16 %v1281
      %v1659 = vunpack.c.l.b16 %v1283
      %v1660 = vunpack.c.l.b16 %v1284
      %v1661 = vpack.c.b16 %v1646, %v1645
      %v1662 = vpack.c.b16 %v1648, %v1647
      %v1663 = vpack.c.b16 %v1650, %v1649
      %v1664 = vpack.c.b16 %v1652, %v1651
      %v1665 = vpack.c.b16 %v1654, %v1653
      %v1666 = vpack.c.b16 %v1656, %v1655
      %v1667 = vpack.c.b16 %v1658, %v1657
      %v1668 = vpack.c.b16 %v1660, %v1659
      %v1670 = vsel %vm602, %v1661, 0
      %v1673 = vsel %vm602, %v1662, 0
      %v1676 = vsel %vm602, %v1663, 0
      %v1679 = vsel %vm602, %v1664, 0
      %v1682 = vsel %vm602, %v1665, 0
      %v1685 = vsel %vm602, %v1666, 0
      %v1688 = vsel %vm602, %v1667, 0
      %v1691 = vsel %vm602, %v1668, 0
      %v1694 = vsel %vm627, %v1628, 0
      %1696 = vmatprep.subr.bf16.mxu0 0
      %1697 = vmatpush1.bf16.msra.mxu0 0
      %1698 = vmatprep.subr.bf16.mxu0 0
      %1699 = vmatpush1.bf16.msra.mxu0 0
      %1700 = vmatprep.subr.bf16.mxu0 0
      %1701 = vmatpush1.bf16.msra.mxu0 0
      %1702 = vmatprep.subr.bf16.mxu0 0
      %1703 = vmatpush1.bf16.msra.mxu0 0
      %1704 = vmatprep.subr.bf16.mxu0 0
      %1705 = vmatpush1.bf16.msra.mxu0 0
      %1706 = vmatprep.subr.bf16.mxu0 0
      %1707 = vmatpush1.bf16.msra.mxu0 0
      %1708 = vmatprep.subr.bf16.mxu0 0
      %1709 = vmatpush1.bf16.msra.mxu0 0
      %1710 = vmatprep.subr.bf16.mxu0 0
      %1711 = vmatpush1.bf16.msra.mxu0 %v1694
      %1712 = vmatprep.subr.bf16.mxu0 0
      %1713 = vmatpush2.bf16.msra.mxu0 0
      %1714 = vmatprep.subr.bf16.mxu0 0
      %1715 = vmatpush2.bf16.msra.mxu0 0
      %1716 = vmatprep.subr.bf16.mxu0 0
      %1717 = vmatpush2.bf16.msra.mxu0 0
      %1718 = vmatprep.subr.bf16.mxu0 0
      %1719 = vmatpush2.bf16.msra.mxu0 0
      %1720 = vmatprep.subr.bf16.mxu0 0
      %1721 = vmatpush2.bf16.msra.mxu0 0
      %1722 = vmatprep.subr.bf16.mxu0 0
      %1723 = vmatpush2.bf16.msra.mxu0 0
      %1724 = vmatprep.subr.bf16.mxu0 0
      %1725 = vmatpush2.bf16.msra.mxu0 0
      %1726 = vmatprep.subr.bf16.mxu0 0
      %1727 = vmatpush2.bf16.msra.mxu0 0
      %1728 = vmatprep.mubr.bf16.mxu0 0
      %1729 = vmatmul.mubr.bf16.gmra.mxu0 %v1670
      %v1730 = vpop.f32.mrf.mxu0
      %v1731 = vadd.f32 0.0, %v1730
      %v1732 = vpop.f32.mrf.mxu0
      %v1733 = vpop.f32.mrf.mxu0
      %v1734 = vadd.f32 0.0, %v1733
      %v1735 = vpop.f32.mrf.mxu0
      %1736 = vmatprep.mubr.bf16.mxu0 0
      %1737 = vmatmul.mubr.bf16.gmra.mxu0 %v1673
      %v1738 = vpop.f32.mrf.mxu0
      %v1739 = vadd.f32 0.0, %v1738
      %v1740 = vpop.f32.mrf.mxu0
      %v1741 = vpop.f32.mrf.mxu0
      %v1742 = vadd.f32 0.0, %v1741
      %v1743 = vpop.f32.mrf.mxu0
      %1744 = vmatprep.mubr.bf16.mxu0 0
      %1745 = vmatmul.mubr.bf16.gmra.mxu0 %v1676
      %v1746 = vpop.f32.mrf.mxu0
      %v1747 = vadd.f32 0.0, %v1746
      %v1748 = vpop.f32.mrf.mxu0
      %v1749 = vpop.f32.mrf.mxu0
      %v1750 = vadd.f32 0.0, %v1749
      %v1751 = vpop.f32.mrf.mxu0
      %1752 = vmatprep.mubr.bf16.mxu0 0
      %1753 = vmatmul.mubr.bf16.gmra.mxu0 %v1679
      %v1754 = vpop.f32.mrf.mxu0
      %v1755 = vadd.f32 0.0, %v1754
      %v1756 = vpop.f32.mrf.mxu0
      %v1757 = vpop.f32.mrf.mxu0
      %v1758 = vadd.f32 0.0, %v1757
      %v1759 = vpop.f32.mrf.mxu0
      %1760 = vmatprep.mubr.bf16.mxu0 0
      %1761 = vmatmul.mubr.bf16.gmra.mxu0 %v1682
      %v1762 = vpop.f32.mrf.mxu0
      %v1763 = vadd.f32 0.0, %v1762
      %v1764 = vpop.f32.mrf.mxu0
      %v1765 = vpop.f32.mrf.mxu0
      %v1766 = vadd.f32 0.0, %v1765
      %v1767 = vpop.f32.mrf.mxu0
      %1768 = vmatprep.mubr.bf16.mxu0 0
      %1769 = vmatmul.mubr.bf16.gmra.mxu0 %v1685
      %v1770 = vpop.f32.mrf.mxu0
      %v1771 = vadd.f32 0.0, %v1770
      %v1772 = vpop.f32.mrf.mxu0
      %v1773 = vpop.f32.mrf.mxu0
      %v1774 = vadd.f32 0.0, %v1773
      %v1775 = vpop.f32.mrf.mxu0
      %1776 = vmatprep.mubr.bf16.mxu0 0
      %1777 = vmatmul.mubr.bf16.gmra.mxu0 %v1688
      %v1778 = vpop.f32.mrf.mxu0
      %v1779 = vadd.f32 0.0, %v1778
      %v1780 = vpop.f32.mrf.mxu0
      %v1781 = vpop.f32.mrf.mxu0
      %v1782 = vadd.f32 0.0, %v1781
      %v1783 = vpop.f32.mrf.mxu0
      %1784 = vmatprep.mubr.bf16.mxu0 0
      %1785 = vmatmul.mubr.bf16.gmra.mxu0 %v1691
      %v1786 = vpop.f32.mrf.mxu0
      %v1787 = vadd.f32 0.0, %v1786
      %v1788 = vpop.f32.mrf.mxu0
      %v1789 = vpop.f32.mrf.mxu0
      %v1790 = vadd.f32 0.0, %v1789
      %v1791 = vpop.f32.mrf.mxu0
      %1792 = vdwg.mxu0
      %v1793 = vadd.f32 %v1611, %v1731
      %v1794 = vadd.f32 %v1612, %v1734
      %v1795 = vadd.f32 %v1613, %v1739
      %v1796 = vadd.f32 %v1614, %v1742
      %v1797 = vadd.f32 %v1615, %v1747
      %v1798 = vadd.f32 %v1616, %v1750
      %v1799 = vadd.f32 %v1617, %v1755
      %v1800 = vadd.f32 %v1618, %v1758
      %v1801 = vadd.f32 %v1619, %v1763
      %v1802 = vadd.f32 %v1620, %v1766
      %v1803 = vadd.f32 %v1621, %v1771
      %v1804 = vadd.f32 %v1622, %v1774
      %v1805 = vadd.f32 %v1623, %v1779
      %v1806 = vadd.f32 %v1624, %v1782
      %v1807 = vadd.f32 %v1625, %v1787
      %v1808 = vadd.f32 %v1626, %v1790
      %v1809 = vld [vmem:[%s323 + $0x4] sm:$0xf]
      %v1810 = vld [vmem:[%s323 + $0x8] sm:$0xf]
      %v1811 = vld [vmem:[%s323 + $0xc] sm:$0x1]
      %v1812 = vld [vmem:[%s323 + $0x14] sm:$0xf]
      %v1813 = vld [vmem:[%s323 + $0x18] sm:$0xf]
      %v1814 = vld [vmem:[%s323 + $0x1c] sm:$0x1]
      %v1815 = vld [vmem:[%s323 + $0x24] sm:$0xf]
      %v1816 = vld [vmem:[%s323 + $0x28] sm:$0xf]
      %v1817 = vld [vmem:[%s323 + $0x2c] sm:$0x1]
      %v1818 = vld [vmem:[%s323 + $0x34] sm:$0xf]
      %v1819 = vld [vmem:[%s323 + $0x38] sm:$0xf]
      %v1820 = vld [vmem:[%s323 + $0x3c] sm:$0x1]
      %v1821 = vld [vmem:[%s323 + $0x44] sm:$0xf]
      %v1822 = vld [vmem:[%s323 + $0x48] sm:$0xf]
      %v1823 = vld [vmem:[%s323 + $0x4c] sm:$0x1]
      %v1824 = vld [vmem:[%s323 + $0x54] sm:$0xf]
      %v1825 = vld [vmem:[%s323 + $0x58] sm:$0xf]
      %v1826 = vld [vmem:[%s323 + $0x5c] sm:$0x1]
      %v1827 = vld [vmem:[%s323 + $0x64] sm:$0xf]
      %v1828 = vld [vmem:[%s323 + $0x68] sm:$0xf]
      %v1829 = vld [vmem:[%s323 + $0x6c] sm:$0x1]
      %v1830 = vld [vmem:[%s323 + $0x74] sm:$0xf]
      %v1831 = vld [vmem:[%s323 + $0x78] sm:$0xf]
      %v1832 = vld [vmem:[%s323 + $0x7c] sm:$0x1]
      %v1834 = vshrl.u32 %v1809, 16
      %v1836 = vrot.slane %v1834, 4
      %v1837 = vshll.u32 %v1809, 16
      %v1839 = vrot.slane %v1837, 5
      %v1840 = vor.u32 %v1836, %v1839
      %v1841 = vrot.slane %v1840, 4
      %v1843 = vshll.u32 %v1810, 16
      %v1845 = vrot.slane %v1843, 5
      %v1846 = vsel %vm902, %v1841, %v1845
      %v1847 = vshrl.u32 %v1810, 16
      %v1849 = vrot.slane %v1847, 4
      %v1850 = vor.u32 %v1849, %v1845
      %v1851 = vrot.slane %v1850, 4
      %v1853 = vshll.u32 %v1811, 16
      %v1855 = vrot.slane %v1853, 5
      %v1856 = vsel %vm902, %v1851, %v1855
      %v1858 = vshrl.u32 %v1812, 16
      %v1860 = vrot.slane %v1858, 4
      %v1861 = vshll.u32 %v1812, 16
      %v1863 = vrot.slane %v1861, 5
      %v1864 = vor.u32 %v1860, %v1863
      %v1865 = vrot.slane %v1864, 4
      %v1867 = vshll.u32 %v1813, 16
      %v1869 = vrot.slane %v1867, 5
      %v1870 = vsel %vm902, %v1865, %v1869
      %v1871 = vshrl.u32 %v1813, 16
      %v1873 = vrot.slane %v1871, 4
      %v1874 = vor.u32 %v1873, %v1869
      %v1875 = vrot.slane %v1874, 4
      %v1877 = vshll.u32 %v1814, 16
      %v1879 = vrot.slane %v1877, 5
      %v1880 = vsel %vm902, %v1875, %v1879
      %v1882 = vshrl.u32 %v1815, 16
      %v1884 = vrot.slane %v1882, 4
      %v1885 = vshll.u32 %v1815, 16
      %v1887 = vrot.slane %v1885, 5
      %v1888 = vor.u32 %v1884, %v1887
      %v1889 = vrot.slane %v1888, 4
      %v1891 = vshll.u32 %v1816, 16
      %v1893 = vrot.slane %v1891, 5
      %v1894 = vsel %vm902, %v1889, %v1893
      %v1895 = vshrl.u32 %v1816, 16
      %v1897 = vrot.slane %v1895, 4
      %v1898 = vor.u32 %v1897, %v1893
      %v1899 = vrot.slane %v1898, 4
      %v1901 = vshll.u32 %v1817, 16
      %v1903 = vrot.slane %v1901, 5
      %v1904 = vsel %vm902, %v1899, %v1903
      %v1906 = vshrl.u32 %v1818, 16
      %v1908 = vrot.slane %v1906, 4
      %v1909 = vshll.u32 %v1818, 16
      %v1911 = vrot.slane %v1909, 5
      %v1912 = vor.u32 %v1908, %v1911
      %v1913 = vrot.slane %v1912, 4
      %v1915 = vshll.u32 %v1819, 16
      %v1917 = vrot.slane %v1915, 5
      %v1918 = vsel %vm902, %v1913, %v1917
      %v1919 = vshrl.u32 %v1819, 16
      %v1921 = vrot.slane %v1919, 4
      %v1922 = vor.u32 %v1921, %v1917
      %v1923 = vrot.slane %v1922, 4
      %v1925 = vshll.u32 %v1820, 16
      %v1927 = vrot.slane %v1925, 5
      %v1928 = vsel %vm902, %v1923, %v1927
      %v1930 = vshrl.u32 %v1821, 16
      %v1932 = vrot.slane %v1930, 4
      %v1933 = vshll.u32 %v1821, 16
      %v1935 = vrot.slane %v1933, 5
      %v1936 = vor.u32 %v1932, %v1935
      %v1937 = vrot.slane %v1936, 4
      %v1939 = vshll.u32 %v1822, 16
      %v1941 = vrot.slane %v1939, 5
      %v1942 = vsel %vm902, %v1937, %v1941
      %v1943 = vshrl.u32 %v1822, 16
      %v1945 = vrot.slane %v1943, 4
      %v1946 = vor.u32 %v1945, %v1941
      %v1947 = vrot.slane %v1946, 4
      %v1949 = vshll.u32 %v1823, 16
      %v1951 = vrot.slane %v1949, 5
      %v1952 = vsel %vm902, %v1947, %v1951
      %v1954 = vshrl.u32 %v1824, 16
      %v1956 = vrot.slane %v1954, 4
      %v1957 = vshll.u32 %v1824, 16
      %v1959 = vrot.slane %v1957, 5
      %v1960 = vor.u32 %v1956, %v1959
      %v1961 = vrot.slane %v1960, 4
      %v1963 = vshll.u32 %v1825, 16
      %v1965 = vrot.slane %v1963, 5
      %v1966 = vsel %vm902, %v1961, %v1965
      %v1967 = vshrl.u32 %v1825, 16
      %v1969 = vrot.slane %v1967, 4
      %v1970 = vor.u32 %v1969, %v1965
      %v1971 = vrot.slane %v1970, 4
      %v1973 = vshll.u32 %v1826, 16
      %v1975 = vrot.slane %v1973, 5
      %v1976 = vsel %vm902, %v1971, %v1975
      %v1978 = vshrl.u32 %v1827, 16
      %v1980 = vrot.slane %v1978, 4
      %v1981 = vshll.u32 %v1827, 16
      %v1983 = vrot.slane %v1981, 5
      %v1984 = vor.u32 %v1980, %v1983
      %v1985 = vrot.slane %v1984, 4
      %v1987 = vshll.u32 %v1828, 16
      %v1989 = vrot.slane %v1987, 5
      %v1990 = vsel %vm902, %v1985, %v1989
      %v1991 = vshrl.u32 %v1828, 16
      %v1993 = vrot.slane %v1991, 4
      %v1994 = vor.u32 %v1993, %v1989
      %v1995 = vrot.slane %v1994, 4
      %v1997 = vshll.u32 %v1829, 16
      %v1999 = vrot.slane %v1997, 5
      %v2000 = vsel %vm902, %v1995, %v1999
      %v2002 = vshrl.u32 %v1830, 16
      %v2004 = vrot.slane %v2002, 4
      %v2005 = vshll.u32 %v1830, 16
      %v2007 = vrot.slane %v2005, 5
      %v2008 = vor.u32 %v2004, %v2007
      %v2009 = vrot.slane %v2008, 4
      %v2011 = vshll.u32 %v1831, 16
      %v2013 = vrot.slane %v2011, 5
      %v2014 = vsel %vm902, %v2009, %v2013
      %v2015 = vshrl.u32 %v1831, 16
      %v2017 = vrot.slane %v2015, 4
      %v2018 = vor.u32 %v2017, %v2013
      %v2019 = vrot.slane %v2018, 4
      %v2021 = vshll.u32 %v1832, 16
      %v2023 = vrot.slane %v2021, 5
      %v2024 = vsel %vm902, %v2019, %v2023
      %s2025 = scalar_lea.vmem %s1, 10
      %v2026 = vld [vmem:[%s2025] sm:$0x3]
      %v2027 = vunpack.c.l.b16 %v1846
      %v2028 = vunpack.c.l.b16 %v1856
      %v2029 = vunpack.c.l.b16 %v1870
      %v2030 = vunpack.c.l.b16 %v1880
      %v2031 = vunpack.c.l.b16 %v1894
      %v2032 = vunpack.c.l.b16 %v1904
      %v2033 = vunpack.c.l.b16 %v1918
      %v2034 = vunpack.c.l.b16 %v1928
      %v2035 = vunpack.c.l.b16 %v1942
      %v2036 = vunpack.c.l.b16 %v1952
      %v2037 = vunpack.c.l.b16 %v1966
      %v2038 = vunpack.c.l.b16 %v1976
      %v2039 = vunpack.c.l.b16 %v1990
      %v2040 = vunpack.c.l.b16 %v2000
      %v2041 = vunpack.c.l.b16 %v2014
      %v2042 = vunpack.c.l.b16 %v2024
      %v2043 = vpack.c.b16 %v2028, %v2027
      %v2044 = vpack.c.b16 %v2030, %v2029
      %v2045 = vpack.c.b16 %v2032, %v2031
      %v2046 = vpack.c.b16 %v2034, %v2033
      %v2047 = vpack.c.b16 %v2036, %v2035
      %v2048 = vpack.c.b16 %v2038, %v2037
      %v2049 = vpack.c.b16 %v2040, %v2039
      %v2050 = vpack.c.b16 %v2042, %v2041
      %v2052 = vsel %vm602, %v2043, 0
      %v2055 = vsel %vm602, %v2044, 0
      %v2058 = vsel %vm602, %v2045, 0
      %v2061 = vsel %vm602, %v2046, 0
      %v2064 = vsel %vm602, %v2047, 0
      %v2067 = vsel %vm602, %v2048, 0
      %v2070 = vsel %vm602, %v2049, 0
      %v2073 = vsel %vm602, %v2050, 0
      %v2076 = vsel %vm627, %v2026, 0
      %2078 = vmatprep.subr.bf16.mxu0 0
      %2079 = vmatpush1.bf16.msra.mxu0 0
      %2080 = vmatprep.subr.bf16.mxu0 0
      %2081 = vmatpush1.bf16.msra.mxu0 0
      %2082 = vmatprep.subr.bf16.mxu0 0
      %2083 = vmatpush1.bf16.msra.mxu0 0
      %2084 = vmatprep.subr.bf16.mxu0 0
      %2085 = vmatpush1.bf16.msra.mxu0 0
      %2086 = vmatprep.subr.bf16.mxu0 0
      %2087 = vmatpush1.bf16.msra.mxu0 0
      %2088 = vmatprep.subr.bf16.mxu0 0
      %2089 = vmatpush1.bf16.msra.mxu0 0
      %2090 = vmatprep.subr.bf16.mxu0 0
      %2091 = vmatpush1.bf16.msra.mxu0 0
      %2092 = vmatprep.subr.bf16.mxu0 0
      %2093 = vmatpush1.bf16.msra.mxu0 %v2076
      %2094 = vmatprep.subr.bf16.mxu0 0
      %2095 = vmatpush2.bf16.msra.mxu0 0
      %2096 = vmatprep.subr.bf16.mxu0 0
      %2097 = vmatpush2.bf16.msra.mxu0 0
      %2098 = vmatprep.subr.bf16.mxu0 0
      %2099 = vmatpush2.bf16.msra.mxu0 0
      %2100 = vmatprep.subr.bf16.mxu0 0
      %2101 = vmatpush2.bf16.msra.mxu0 0
      %2102 = vmatprep.subr.bf16.mxu0 0
      %2103 = vmatpush2.bf16.msra.mxu0 0
      %2104 = vmatprep.subr.bf16.mxu0 0
      %2105 = vmatpush2.bf16.msra.mxu0 0
      %2106 = vmatprep.subr.bf16.mxu0 0
      %2107 = vmatpush2.bf16.msra.mxu0 0
      %2108 = vmatprep.subr.bf16.mxu0 0
      %2109 = vmatpush2.bf16.msra.mxu0 0
      %2110 = vmatprep.mubr.bf16.mxu0 0
      %2111 = vmatmul.mubr.bf16.gmra.mxu0 %v2052
      %v2112 = vpop.f32.mrf.mxu0
      %v2113 = vadd.f32 0.0, %v2112
      %v2114 = vpop.f32.mrf.mxu0
      %v2115 = vpop.f32.mrf.mxu0
      %v2116 = vadd.f32 0.0, %v2115
      %v2117 = vpop.f32.mrf.mxu0
      %2118 = vmatprep.mubr.bf16.mxu0 0
      %2119 = vmatmul.mubr.bf16.gmra.mxu0 %v2055
      %v2120 = vpop.f32.mrf.mxu0
      %v2121 = vadd.f32 0.0, %v2120
      %v2122 = vpop.f32.mrf.mxu0
      %v2123 = vpop.f32.mrf.mxu0
      %v2124 = vadd.f32 0.0, %v2123
      %v2125 = vpop.f32.mrf.mxu0
      %2126 = vmatprep.mubr.bf16.mxu0 0
      %2127 = vmatmul.mubr.bf16.gmra.mxu0 %v2058
      %v2128 = vpop.f32.mrf.mxu0
      %v2129 = vadd.f32 0.0, %v2128
      %v2130 = vpop.f32.mrf.mxu0
      %v2131 = vpop.f32.mrf.mxu0
      %v2132 = vadd.f32 0.0, %v2131
      %v2133 = vpop.f32.mrf.mxu0
      %2134 = vmatprep.mubr.bf16.mxu0 0
      %2135 = vmatmul.mubr.bf16.gmra.mxu0 %v2061
      %v2136 = vpop.f32.mrf.mxu0
      %v2137 = vadd.f32 0.0, %v2136
      %v2138 = vpop.f32.mrf.mxu0
      %v2139 = vpop.f32.mrf.mxu0
      %v2140 = vadd.f32 0.0, %v2139
      %v2141 = vpop.f32.mrf.mxu0
      %2142 = vmatprep.mubr.bf16.mxu0 0
      %2143 = vmatmul.mubr.bf16.gmra.mxu0 %v2064
      %v2144 = vpop.f32.mrf.mxu0
      %v2145 = vadd.f32 0.0, %v2144
      %v2146 = vpop.f32.mrf.mxu0
      %v2147 = vpop.f32.mrf.mxu0
      %v2148 = vadd.f32 0.0, %v2147
      %v2149 = vpop.f32.mrf.mxu0
      %2150 = vmatprep.mubr.bf16.mxu0 0
      %2151 = vmatmul.mubr.bf16.gmra.mxu0 %v2067
      %v2152 = vpop.f32.mrf.mxu0
      %v2153 = vadd.f32 0.0, %v2152
      %v2154 = vpop.f32.mrf.mxu0
      %v2155 = vpop.f32.mrf.mxu0
      %v2156 = vadd.f32 0.0, %v2155
      %v2157 = vpop.f32.mrf.mxu0
      %2158 = vmatprep.mubr.bf16.mxu0 0
      %2159 = vmatmul.mubr.bf16.gmra.mxu0 %v2070
      %v2160 = vpop.f32.mrf.mxu0
      %v2161 = vadd.f32 0.0, %v2160
      %v2162 = vpop.f32.mrf.mxu0
      %v2163 = vpop.f32.mrf.mxu0
      %v2164 = vadd.f32 0.0, %v2163
      %v2165 = vpop.f32.mrf.mxu0
      %2166 = vmatprep.mubr.bf16.mxu0 0
      %2167 = vmatmul.mubr.bf16.gmra.mxu0 %v2073
      %v2168 = vpop.f32.mrf.mxu0
      %v2169 = vadd.f32 0.0, %v2168
      %v2170 = vpop.f32.mrf.mxu0
      %v2171 = vpop.f32.mrf.mxu0
      %v2172 = vadd.f32 0.0, %v2171
      %v2173 = vpop.f32.mrf.mxu0
      %2174 = vdwg.mxu0
      %v2175 = vadd.f32 %v1793, %v2113
      %v2176 = vadd.f32 %v1794, %v2116
      %v2177 = vadd.f32 %v1795, %v2121
      %v2178 = vadd.f32 %v1796, %v2124
      %v2179 = vadd.f32 %v1797, %v2129
      %v2180 = vadd.f32 %v1798, %v2132
      %v2181 = vadd.f32 %v1799, %v2137
      %v2182 = vadd.f32 %v1800, %v2140
      %v2183 = vadd.f32 %v1801, %v2145
      %v2184 = vadd.f32 %v1802, %v2148
      %v2185 = vadd.f32 %v1803, %v2153
      %v2186 = vadd.f32 %v1804, %v2156
      %v2187 = vadd.f32 %v1805, %v2161
      %v2188 = vadd.f32 %v1806, %v2164
      %v2189 = vadd.f32 %v1807, %v2169
      %v2190 = vadd.f32 %v1808, %v2172
      %s2191 = scalar_lea.vmem [#allocation2], 32
      %v2192 = vld [vmem:[%s2191] sm:$0x8]
      %v2193 = vld [vmem:[%s2191 + $0x4] sm:$0xf]
      %v2194 = vld [vmem:[%s2191 + $0x8] sm:$0xf]
      %v2195 = vld [vmem:[%s2191 + $0x10] sm:$0x8]
      %v2196 = vld [vmem:[%s2191 + $0x14] sm:$0xf]
      %v2197 = vld [vmem:[%s2191 + $0x18] sm:$0xf]
      %v2198 = vld [vmem:[%s2191 + $0x20] sm:$0x8]
      %v2199 = vld [vmem:[%s2191 + $0x24] sm:$0xf]
      %v2200 = vld [vmem:[%s2191 + $0x28] sm:$0xf]
      %v2201 = vld [vmem:[%s2191 + $0x30] sm:$0x8]
      %v2202 = vld [vmem:[%s2191 + $0x34] sm:$0xf]
      %v2203 = vld [vmem:[%s2191 + $0x38] sm:$0xf]
      %v2204 = vld [vmem:[%s2191 + $0x40] sm:$0x8]
      %v2205 = vld [vmem:[%s2191 + $0x44] sm:$0xf]
      %v2206 = vld [vmem:[%s2191 + $0x48] sm:$0xf]
      %v2207 = vld [vmem:[%s2191 + $0x50] sm:$0x8]
      %v2208 = vld [vmem:[%s2191 + $0x54] sm:$0xf]
      %v2209 = vld [vmem:[%s2191 + $0x58] sm:$0xf]
      %v2210 = vld [vmem:[%s2191 + $0x60] sm:$0x8]
      %v2211 = vld [vmem:[%s2191 + $0x64] sm:$0xf]
      %v2212 = vld [vmem:[%s2191 + $0x68] sm:$0xf]
      %v2213 = vld [vmem:[%s2191 + $0x70] sm:$0x8]
      %v2214 = vld [vmem:[%s2191 + $0x74] sm:$0xf]
      %v2215 = vld [vmem:[%s2191 + $0x78] sm:$0xf]
      %v2217 = vshrl.u32 %v2192, 16
      %v2219 = vrot.slane %v2217, 7
      %v2220 = vrot.slane %v2219, 4
      %v2222 = vshrl.u32 %v2193, 16
      %v2224 = vrot.slane %v2222, 7
      %v2225 = vshll.u32 %v2193, 16
      %v2227 = vor.u32 %v2224, %v2225
      %v2228 = vsel %vm382, %v2220, %v2227
      %v2229 = vrot.slane %v2224, 4
      %v2231 = vshrl.u32 %v2194, 16
      %v2233 = vrot.slane %v2231, 7
      %v2234 = vshll.u32 %v2194, 16
      %v2236 = vor.u32 %v2233, %v2234
      %v2237 = vsel %vm382, %v2229, %v2236
      %v2239 = vshrl.u32 %v2195, 16
      %v2241 = vrot.slane %v2239, 7
      %v2242 = vrot.slane %v2241, 4
      %v2244 = vshrl.u32 %v2196, 16
      %v2246 = vrot.slane %v2244, 7
      %v2247 = vshll.u32 %v2196, 16
      %v2249 = vor.u32 %v2246, %v2247
      %v2250 = vsel %vm382, %v2242, %v2249
      %v2251 = vrot.slane %v2246, 4
      %v2253 = vshrl.u32 %v2197, 16
      %v2255 = vrot.slane %v2253, 7
      %v2256 = vshll.u32 %v2197, 16
      %v2258 = vor.u32 %v2255, %v2256
      %v2259 = vsel %vm382, %v2251, %v2258
      %v2261 = vshrl.u32 %v2198, 16
      %v2263 = vrot.slane %v2261, 7
      %v2264 = vrot.slane %v2263, 4
      %v2266 = vshrl.u32 %v2199, 16
      %v2268 = vrot.slane %v2266, 7
      %v2269 = vshll.u32 %v2199, 16
      %v2271 = vor.u32 %v2268, %v2269
      %v2272 = vsel %vm382, %v2264, %v2271
      %v2273 = vrot.slane %v2268, 4
      %v2275 = vshrl.u32 %v2200, 16
      %v2277 = vrot.slane %v2275, 7
      %v2278 = vshll.u32 %v2200, 16
      %v2280 = vor.u32 %v2277, %v2278
      %v2281 = vsel %vm382, %v2273, %v2280
      %v2283 = vshrl.u32 %v2201, 16
      %v2285 = vrot.slane %v2283, 7
      %v2286 = vrot.slane %v2285, 4
      %v2288 = vshrl.u32 %v2202, 16
      %v2290 = vrot.slane %v2288, 7
      %v2291 = vshll.u32 %v2202, 16
      %v2293 = vor.u32 %v2290, %v2291
      %v2294 = vsel %vm382, %v2286, %v2293
      %v2295 = vrot.slane %v2290, 4
      %v2297 = vshrl.u32 %v2203, 16
      %v2299 = vrot.slane %v2297, 7
      %v2300 = vshll.u32 %v2203, 16
      %v2302 = vor.u32 %v2299, %v2300
      %v2303 = vsel %vm382, %v2295, %v2302
      %v2305 = vshrl.u32 %v2204, 16
      %v2307 = vrot.slane %v2305, 7
      %v2308 = vrot.slane %v2307, 4
      %v2310 = vshrl.u32 %v2205, 16
      %v2312 = vrot.slane %v2310, 7
      %v2313 = vshll.u32 %v2205, 16
      %v2315 = vor.u32 %v2312, %v2313
      %v2316 = vsel %vm382, %v2308, %v2315
      %v2317 = vrot.slane %v2312, 4
      %v2319 = vshrl.u32 %v2206, 16
      %v2321 = vrot.slane %v2319, 7
      %v2322 = vshll.u32 %v2206, 16
      %v2324 = vor.u32 %v2321, %v2322
      %v2325 = vsel %vm382, %v2317, %v2324
      %v2327 = vshrl.u32 %v2207, 16
      %v2329 = vrot.slane %v2327, 7
      %v2330 = vrot.slane %v2329, 4
      %v2332 = vshrl.u32 %v2208, 16
      %v2334 = vrot.slane %v2332, 7
      %v2335 = vshll.u32 %v2208, 16
      %v2337 = vor.u32 %v2334, %v2335
      %v2338 = vsel %vm382, %v2330, %v2337
      %v2339 = vrot.slane %v2334, 4
      %v2341 = vshrl.u32 %v2209, 16
      %v2343 = vrot.slane %v2341, 7
      %v2344 = vshll.u32 %v2209, 16
      %v2346 = vor.u32 %v2343, %v2344
      %v2347 = vsel %vm382, %v2339, %v2346
      %v2349 = vshrl.u32 %v2210, 16
      %v2351 = vrot.slane %v2349, 7
      %v2352 = vrot.slane %v2351, 4
      %v2354 = vshrl.u32 %v2211, 16
      %v2356 = vrot.slane %v2354, 7
      %v2357 = vshll.u32 %v2211, 16
      %v2359 = vor.u32 %v2356, %v2357
      %v2360 = vsel %vm382, %v2352, %v2359
      %v2361 = vrot.slane %v2356, 4
      %v2363 = vshrl.u32 %v2212, 16
      %v2365 = vrot.slane %v2363, 7
      %v2366 = vshll.u32 %v2212, 16
      %v2368 = vor.u32 %v2365, %v2366
      %v2369 = vsel %vm382, %v2361, %v2368
      %v2371 = vshrl.u32 %v2213, 16
      %v2373 = vrot.slane %v2371, 7
      %v2374 = vrot.slane %v2373, 4
      %v2376 = vshrl.u32 %v2214, 16
      %v2378 = vrot.slane %v2376, 7
      %v2379 = vshll.u32 %v2214, 16
      %v2381 = vor.u32 %v2378, %v2379
      %v2382 = vsel %vm382, %v2374, %v2381
      %v2383 = vrot.slane %v2378, 4
      %v2385 = vshrl.u32 %v2215, 16
      %v2387 = vrot.slane %v2385, 7
      %v2388 = vshll.u32 %v2215, 16
      %v2390 = vor.u32 %v2387, %v2388
      %v2391 = vsel %vm382, %v2383, %v2390
      %s2392 = scalar_lea.vmem %s1, 12
      %v2393 = vld [vmem:[%s2392] sm:$0x3]
      %v2394 = vunpack.c.l.b16 %v2228
      %v2395 = vunpack.c.l.b16 %v2237
      %v2396 = vunpack.c.l.b16 %v2250
      %v2397 = vunpack.c.l.b16 %v2259
      %v2398 = vunpack.c.l.b16 %v2272
      %v2399 = vunpack.c.l.b16 %v2281
      %v2400 = vunpack.c.l.b16 %v2294
      %v2401 = vunpack.c.l.b16 %v2303
      %v2402 = vunpack.c.l.b16 %v2316
      %v2403 = vunpack.c.l.b16 %v2325
      %v2404 = vunpack.c.l.b16 %v2338
      %v2405 = vunpack.c.l.b16 %v2347
      %v2406 = vunpack.c.l.b16 %v2360
      %v2407 = vunpack.c.l.b16 %v2369
      %v2408 = vunpack.c.l.b16 %v2382
      %v2409 = vunpack.c.l.b16 %v2391
      %v2410 = vpack.c.b16 %v2395, %v2394
      %v2411 = vpack.c.b16 %v2397, %v2396
      %v2412 = vpack.c.b16 %v2399, %v2398
      %v2413 = vpack.c.b16 %v2401, %v2400
      %v2414 = vpack.c.b16 %v2403, %v2402
      %v2415 = vpack.c.b16 %v2405, %v2404
      %v2416 = vpack.c.b16 %v2407, %v2406
      %v2417 = vpack.c.b16 %v2409, %v2408
      %v2419 = vsel %vm602, %v2410, 0
      %v2422 = vsel %vm602, %v2411, 0
      %v2425 = vsel %vm602, %v2412, 0
      %v2428 = vsel %vm602, %v2413, 0
      %v2431 = vsel %vm602, %v2414, 0
      %v2434 = vsel %vm602, %v2415, 0
      %v2437 = vsel %vm602, %v2416, 0
      %v2440 = vsel %vm602, %v2417, 0
      %v2443 = vsel %vm627, %v2393, 0
      %2445 = vmatprep.subr.bf16.mxu0 0
      %2446 = vmatpush1.bf16.msra.mxu0 0
      %2447 = vmatprep.subr.bf16.mxu0 0
      %2448 = vmatpush1.bf16.msra.mxu0 0
      %2449 = vmatprep.subr.bf16.mxu0 0
      %2450 = vmatpush1.bf16.msra.mxu0 0
      %2451 = vmatprep.subr.bf16.mxu0 0
      %2452 = vmatpush1.bf16.msra.mxu0 0
      %2453 = vmatprep.subr.bf16.mxu0 0
      %2454 = vmatpush1.bf16.msra.mxu0 0
      %2455 = vmatprep.subr.bf16.mxu0 0
      %2456 = vmatpush1.bf16.msra.mxu0 0
      %2457 = vmatprep.subr.bf16.mxu0 0
      %2458 = vmatpush1.bf16.msra.mxu0 0
      %2459 = vmatprep.subr.bf16.mxu0 0
      %2460 = vmatpush1.bf16.msra.mxu0 %v2443
      %2461 = vmatprep.subr.bf16.mxu0 0
      %2462 = vmatpush2.bf16.msra.mxu0 0
      %2463 = vmatprep.subr.bf16.mxu0 0
      %2464 = vmatpush2.bf16.msra.mxu0 0
      %2465 = vmatprep.subr.bf16.mxu0 0
      %2466 = vmatpush2.bf16.msra.mxu0 0
      %2467 = vmatprep.subr.bf16.mxu0 0
      %2468 = vmatpush2.bf16.msra.mxu0 0
      %2469 = vmatprep.subr.bf16.mxu0 0
      %2470 = vmatpush2.bf16.msra.mxu0 0
      %2471 = vmatprep.subr.bf16.mxu0 0
      %2472 = vmatpush2.bf16.msra.mxu0 0
      %2473 = vmatprep.subr.bf16.mxu0 0
      %2474 = vmatpush2.bf16.msra.mxu0 0
      %2475 = vmatprep.subr.bf16.mxu0 0
      %2476 = vmatpush2.bf16.msra.mxu0 0
      %2477 = vmatprep.mubr.bf16.mxu0 0
      %2478 = vmatmul.mubr.bf16.gmra.mxu0 %v2419
      %v2479 = vpop.f32.mrf.mxu0
      %v2480 = vadd.f32 0.0, %v2479
      %v2481 = vpop.f32.mrf.mxu0
      %v2482 = vpop.f32.mrf.mxu0
      %v2483 = vadd.f32 0.0, %v2482
      %v2484 = vpop.f32.mrf.mxu0
      %2485 = vmatprep.mubr.bf16.mxu0 0
      %2486 = vmatmul.mubr.bf16.gmra.mxu0 %v2422
      %v2487 = vpop.f32.mrf.mxu0
      %v2488 = vadd.f32 0.0, %v2487
      %v2489 = vpop.f32.mrf.mxu0
      %v2490 = vpop.f32.mrf.mxu0
      %v2491 = vadd.f32 0.0, %v2490
      %v2492 = vpop.f32.mrf.mxu0
      %2493 = vmatprep.mubr.bf16.mxu0 0
      %2494 = vmatmul.mubr.bf16.gmra.mxu0 %v2425
      %v2495 = vpop.f32.mrf.mxu0
      %v2496 = vadd.f32 0.0, %v2495
      %v2497 = vpop.f32.mrf.mxu0
      %v2498 = vpop.f32.mrf.mxu0
      %v2499 = vadd.f32 0.0, %v2498
      %v2500 = vpop.f32.mrf.mxu0
      %2501 = vmatprep.mubr.bf16.mxu0 0
      %2502 = vmatmul.mubr.bf16.gmra.mxu0 %v2428
      %v2503 = vpop.f32.mrf.mxu0
      %v2504 = vadd.f32 0.0, %v2503
      %v2505 = vpop.f32.mrf.mxu0
      %v2506 = vpop.f32.mrf.mxu0
      %v2507 = vadd.f32 0.0, %v2506
      %v2508 = vpop.f32.mrf.mxu0
      %2509 = vmatprep.mubr.bf16.mxu0 0
      %2510 = vmatmul.mubr.bf16.gmra.mxu0 %v2431
      %v2511 = vpop.f32.mrf.mxu0
      %v2512 = vadd.f32 0.0, %v2511
      %v2513 = vpop.f32.mrf.mxu0
      %v2514 = vpop.f32.mrf.mxu0
      %v2515 = vadd.f32 0.0, %v2514
      %v2516 = vpop.f32.mrf.mxu0
      %2517 = vmatprep.mubr.bf16.mxu0 0
      %2518 = vmatmul.mubr.bf16.gmra.mxu0 %v2434
      %v2519 = vpop.f32.mrf.mxu0
      %v2520 = vadd.f32 0.0, %v2519
      %v2521 = vpop.f32.mrf.mxu0
      %v2522 = vpop.f32.mrf.mxu0
      %v2523 = vadd.f32 0.0, %v2522
      %v2524 = vpop.f32.mrf.mxu0
      %2525 = vmatprep.mubr.bf16.mxu0 0
      %2526 = vmatmul.mubr.bf16.gmra.mxu0 %v2437
      %v2527 = vpop.f32.mrf.mxu0
      %v2528 = vadd.f32 0.0, %v2527
      %v2529 = vpop.f32.mrf.mxu0
      %v2530 = vpop.f32.mrf.mxu0
      %v2531 = vadd.f32 0.0, %v2530
      %v2532 = vpop.f32.mrf.mxu0
      %2533 = vmatprep.mubr.bf16.mxu0 0
      %2534 = vmatmul.mubr.bf16.gmra.mxu0 %v2440
      %v2535 = vpop.f32.mrf.mxu0
      %v2536 = vadd.f32 0.0, %v2535
      %v2537 = vpop.f32.mrf.mxu0
      %v2538 = vpop.f32.mrf.mxu0
      %v2539 = vadd.f32 0.0, %v2538
      %v2540 = vpop.f32.mrf.mxu0
      %2541 = vdwg.mxu0
      %v2542 = vadd.f32 %v2175, %v2480
      %v2543 = vadd.f32 %v2176, %v2483
      %v2544 = vadd.f32 %v2177, %v2488
      %v2545 = vadd.f32 %v2178, %v2491
      %v2546 = vadd.f32 %v2179, %v2496
      %v2547 = vadd.f32 %v2180, %v2499
      %v2548 = vadd.f32 %v2181, %v2504
      %v2549 = vadd.f32 %v2182, %v2507
      %v2550 = vadd.f32 %v2183, %v2512
      %v2551 = vadd.f32 %v2184, %v2515
      %v2552 = vadd.f32 %v2185, %v2520
      %v2553 = vadd.f32 %v2186, %v2523
      %v2554 = vadd.f32 %v2187, %v2528
      %v2555 = vadd.f32 %v2188, %v2531
      %v2556 = vadd.f32 %v2189, %v2536
      %v2557 = vadd.f32 %v2190, %v2539
      %s2558 = scalar_lea.vmem %s1, 14
      %v2559 = vld [vmem:[%s2558] sm:$0x3]
      %v2576 = vunpack.c.l.b16 %v2193
      %v2577 = vunpack.c.l.b16 %v2194
      %v2578 = vunpack.c.l.b16 %v2196
      %v2579 = vunpack.c.l.b16 %v2197
      %v2580 = vunpack.c.l.b16 %v2199
      %v2581 = vunpack.c.l.b16 %v2200
      %v2582 = vunpack.c.l.b16 %v2202
      %v2583 = vunpack.c.l.b16 %v2203
      %v2584 = vunpack.c.l.b16 %v2205
      %v2585 = vunpack.c.l.b16 %v2206
      %v2586 = vunpack.c.l.b16 %v2208
      %v2587 = vunpack.c.l.b16 %v2209
      %v2588 = vunpack.c.l.b16 %v2211
      %v2589 = vunpack.c.l.b16 %v2212
      %v2590 = vunpack.c.l.b16 %v2214
      %v2591 = vunpack.c.l.b16 %v2215
      %v2592 = vpack.c.b16 %v2577, %v2576
      %v2593 = vpack.c.b16 %v2579, %v2578
      %v2594 = vpack.c.b16 %v2581, %v2580
      %v2595 = vpack.c.b16 %v2583, %v2582
      %v2596 = vpack.c.b16 %v2585, %v2584
      %v2597 = vpack.c.b16 %v2587, %v2586
      %v2598 = vpack.c.b16 %v2589, %v2588
      %v2599 = vpack.c.b16 %v2591, %v2590
      %v2601 = vsel %vm602, %v2592, 0
      %v2604 = vsel %vm602, %v2593, 0
      %v2607 = vsel %vm602, %v2594, 0
      %v2610 = vsel %vm602, %v2595, 0
      %v2613 = vsel %vm602, %v2596, 0
      %v2616 = vsel %vm602, %v2597, 0
      %v2619 = vsel %vm602, %v2598, 0
      %v2622 = vsel %vm602, %v2599, 0
      %v2625 = vsel %vm627, %v2559, 0
      %2627 = vmatprep.subr.bf16.mxu0 0
      %2628 = vmatpush1.bf16.msra.mxu0 0
      %2629 = vmatprep.subr.bf16.mxu0 0
      %2630 = vmatpush1.bf16.msra.mxu0 0
      %2631 = vmatprep.subr.bf16.mxu0 0
      %2632 = vmatpush1.bf16.msra.mxu0 0
      %2633 = vmatprep.subr.bf16.mxu0 0
      %2634 = vmatpush1.bf16.msra.mxu0 0
      %2635 = vmatprep.subr.bf16.mxu0 0
      %2636 = vmatpush1.bf16.msra.mxu0 0
      %2637 = vmatprep.subr.bf16.mxu0 0
      %2638 = vmatpush1.bf16.msra.mxu0 0
      %2639 = vmatprep.subr.bf16.mxu0 0
      %2640 = vmatpush1.bf16.msra.mxu0 0
      %2641 = vmatprep.subr.bf16.mxu0 0
      %2642 = vmatpush1.bf16.msra.mxu0 %v2625
      %2643 = vmatprep.subr.bf16.mxu0 0
      %2644 = vmatpush2.bf16.msra.mxu0 0
      %2645 = vmatprep.subr.bf16.mxu0 0
      %2646 = vmatpush2.bf16.msra.mxu0 0
      %2647 = vmatprep.subr.bf16.mxu0 0
      %2648 = vmatpush2.bf16.msra.mxu0 0
      %2649 = vmatprep.subr.bf16.mxu0 0
      %2650 = vmatpush2.bf16.msra.mxu0 0
      %2651 = vmatprep.subr.bf16.mxu0 0
      %2652 = vmatpush2.bf16.msra.mxu0 0
      %2653 = vmatprep.subr.bf16.mxu0 0
      %2654 = vmatpush2.bf16.msra.mxu0 0
      %2655 = vmatprep.subr.bf16.mxu0 0
      %2656 = vmatpush2.bf16.msra.mxu0 0
      %2657 = vmatprep.subr.bf16.mxu0 0
      %2658 = vmatpush2.bf16.msra.mxu0 0
      %2659 = vmatprep.mubr.bf16.mxu0 0
      %2660 = vmatmul.mubr.bf16.gmra.mxu0 %v2601
      %v2661 = vpop.f32.mrf.mxu0
      %v2662 = vadd.f32 0.0, %v2661
      %v2663 = vpop.f32.mrf.mxu0
      %v2664 = vpop.f32.mrf.mxu0
      %v2665 = vadd.f32 0.0, %v2664
      %v2666 = vpop.f32.mrf.mxu0
      %2667 = vmatprep.mubr.bf16.mxu0 0
      %2668 = vmatmul.mubr.bf16.gmra.mxu0 %v2604
      %v2669 = vpop.f32.mrf.mxu0
      %v2670 = vadd.f32 0.0, %v2669
      %v2671 = vpop.f32.mrf.mxu0
      %v2672 = vpop.f32.mrf.mxu0
      %v2673 = vadd.f32 0.0, %v2672
      %v2674 = vpop.f32.mrf.mxu0
      %2675 = vmatprep.mubr.bf16.mxu0 0
      %2676 = vmatmul.mubr.bf16.gmra.mxu0 %v2607
      %v2677 = vpop.f32.mrf.mxu0
      %v2678 = vadd.f32 0.0, %v2677
      %v2679 = vpop.f32.mrf.mxu0
      %v2680 = vpop.f32.mrf.mxu0
      %v2681 = vadd.f32 0.0, %v2680
      %v2682 = vpop.f32.mrf.mxu0
      %2683 = vmatprep.mubr.bf16.mxu0 0
      %2684 = vmatmul.mubr.bf16.gmra.mxu0 %v2610
      %v2685 = vpop.f32.mrf.mxu0
      %v2686 = vadd.f32 0.0, %v2685
      %v2687 = vpop.f32.mrf.mxu0
      %v2688 = vpop.f32.mrf.mxu0
      %v2689 = vadd.f32 0.0, %v2688
      %v2690 = vpop.f32.mrf.mxu0
      %2691 = vmatprep.mubr.bf16.mxu0 0
      %2692 = vmatmul.mubr.bf16.gmra.mxu0 %v2613
      %v2693 = vpop.f32.mrf.mxu0
      %v2694 = vadd.f32 0.0, %v2693
      %v2695 = vpop.f32.mrf.mxu0
      %v2696 = vpop.f32.mrf.mxu0
      %v2697 = vadd.f32 0.0, %v2696
      %v2698 = vpop.f32.mrf.mxu0
      %2699 = vmatprep.mubr.bf16.mxu0 0
      %2700 = vmatmul.mubr.bf16.gmra.mxu0 %v2616
      %v2701 = vpop.f32.mrf.mxu0
      %v2702 = vadd.f32 0.0, %v2701
      %v2703 = vpop.f32.mrf.mxu0
      %v2704 = vpop.f32.mrf.mxu0
      %v2705 = vadd.f32 0.0, %v2704
      %v2706 = vpop.f32.mrf.mxu0
      %2707 = vmatprep.mubr.bf16.mxu0 0
      %2708 = vmatmul.mubr.bf16.gmra.mxu0 %v2619
      %v2709 = vpop.f32.mrf.mxu0
      %v2710 = vadd.f32 0.0, %v2709
      %v2711 = vpop.f32.mrf.mxu0
      %v2712 = vpop.f32.mrf.mxu0
      %v2713 = vadd.f32 0.0, %v2712
      %v2714 = vpop.f32.mrf.mxu0
      %2715 = vmatprep.mubr.bf16.mxu0 0
      %2716 = vmatmul.mubr.bf16.gmra.mxu0 %v2622
      %v2717 = vpop.f32.mrf.mxu0
      %v2718 = vadd.f32 0.0, %v2717
      %v2719 = vpop.f32.mrf.mxu0
      %v2720 = vpop.f32.mrf.mxu0
      %v2721 = vadd.f32 0.0, %v2720
      %v2722 = vpop.f32.mrf.mxu0
      %2723 = vdwg.mxu0
      %v2724 = vadd.f32 %v2542, %v2662
      %v2725 = vadd.f32 %v2543, %v2665
      %v2726 = vadd.f32 %v2544, %v2670
      %v2727 = vadd.f32 %v2545, %v2673
      %v2728 = vadd.f32 %v2546, %v2678
      %v2729 = vadd.f32 %v2547, %v2681
      %v2730 = vadd.f32 %v2548, %v2686
      %v2731 = vadd.f32 %v2549, %v2689
      %v2732 = vadd.f32 %v2550, %v2694
      %v2733 = vadd.f32 %v2551, %v2697
      %v2734 = vadd.f32 %v2552, %v2702
      %v2735 = vadd.f32 %v2553, %v2705
      %v2736 = vadd.f32 %v2554, %v2710
      %v2737 = vadd.f32 %v2555, %v2713
      %v2738 = vadd.f32 %v2556, %v2718
      %v2739 = vadd.f32 %v2557, %v2721
      %v2740 = vld [vmem:[%s2191 + $0x4] sm:$0xf]
      %v2741 = vld [vmem:[%s2191 + $0x8] sm:$0xf]
      %v2742 = vld [vmem:[%s2191 + $0xc] sm:$0x1]
      %v2743 = vld [vmem:[%s2191 + $0x14] sm:$0xf]
      %v2744 = vld [vmem:[%s2191 + $0x18] sm:$0xf]
      %v2745 = vld [vmem:[%s2191 + $0x1c] sm:$0x1]
      %v2746 = vld [vmem:[%s2191 + $0x24] sm:$0xf]
      %v2747 = vld [vmem:[%s2191 + $0x28] sm:$0xf]
      %v2748 = vld [vmem:[%s2191 + $0x2c] sm:$0x1]
      %v2749 = vld [vmem:[%s2191 + $0x34] sm:$0xf]
      %v2750 = vld [vmem:[%s2191 + $0x38] sm:$0xf]
      %v2751 = vld [vmem:[%s2191 + $0x3c] sm:$0x1]
      %v2752 = vld [vmem:[%s2191 + $0x44] sm:$0xf]
      %v2753 = vld [vmem:[%s2191 + $0x48] sm:$0xf]
      %v2754 = vld [vmem:[%s2191 + $0x4c] sm:$0x1]
      %v2755 = vld [vmem:[%s2191 + $0x54] sm:$0xf]
      %v2756 = vld [vmem:[%s2191 + $0x58] sm:$0xf]
      %v2757 = vld [vmem:[%s2191 + $0x5c] sm:$0x1]
      %v2758 = vld [vmem:[%s2191 + $0x64] sm:$0xf]
      %v2759 = vld [vmem:[%s2191 + $0x68] sm:$0xf]
      %v2760 = vld [vmem:[%s2191 + $0x6c] sm:$0x1]
      %v2761 = vld [vmem:[%s2191 + $0x74] sm:$0xf]
      %v2762 = vld [vmem:[%s2191 + $0x78] sm:$0xf]
      %v2763 = vld [vmem:[%s2191 + $0x7c] sm:$0x1]
      %v2765 = vshrl.u32 %v2740, 16
      %v2767 = vrot.slane %v2765, 4
      %v2768 = vshll.u32 %v2740, 16
      %v2770 = vrot.slane %v2768, 5
      %v2771 = vor.u32 %v2767, %v2770
      %v2772 = vrot.slane %v2771, 4
      %v2774 = vshll.u32 %v2741, 16
      %v2776 = vrot.slane %v2774, 5
      %v2777 = vsel %vm902, %v2772, %v2776
      %v2778 = vshrl.u32 %v2741, 16
      %v2780 = vrot.slane %v2778, 4
      %v2781 = vor.u32 %v2780, %v2776
      %v2782 = vrot.slane %v2781, 4
      %v2784 = vshll.u32 %v2742, 16
      %v2786 = vrot.slane %v2784, 5
      %v2787 = vsel %vm902, %v2782, %v2786
      %v2789 = vshrl.u32 %v2743, 16
      %v2791 = vrot.slane %v2789, 4
      %v2792 = vshll.u32 %v2743, 16
      %v2794 = vrot.slane %v2792, 5
      %v2795 = vor.u32 %v2791, %v2794
      %v2796 = vrot.slane %v2795, 4
      %v2798 = vshll.u32 %v2744, 16
      %v2800 = vrot.slane %v2798, 5
      %v2801 = vsel %vm902, %v2796, %v2800
      %v2802 = vshrl.u32 %v2744, 16
      %v2804 = vrot.slane %v2802, 4
      %v2805 = vor.u32 %v2804, %v2800
      %v2806 = vrot.slane %v2805, 4
      %v2808 = vshll.u32 %v2745, 16
      %v2810 = vrot.slane %v2808, 5
      %v2811 = vsel %vm902, %v2806, %v2810
      %v2813 = vshrl.u32 %v2746, 16
      %v2815 = vrot.slane %v2813, 4
      %v2816 = vshll.u32 %v2746, 16
      %v2818 = vrot.slane %v2816, 5
      %v2819 = vor.u32 %v2815, %v2818
      %v2820 = vrot.slane %v2819, 4
      %v2822 = vshll.u32 %v2747, 16
      %v2824 = vrot.slane %v2822, 5
      %v2825 = vsel %vm902, %v2820, %v2824
      %v2826 = vshrl.u32 %v2747, 16
      %v2828 = vrot.slane %v2826, 4
      %v2829 = vor.u32 %v2828, %v2824
      %v2830 = vrot.slane %v2829, 4
      %v2832 = vshll.u32 %v2748, 16
      %v2834 = vrot.slane %v2832, 5
      %v2835 = vsel %vm902, %v2830, %v2834
      %v2837 = vshrl.u32 %v2749, 16
      %v2839 = vrot.slane %v2837, 4
      %v2840 = vshll.u32 %v2749, 16
      %v2842 = vrot.slane %v2840, 5
      %v2843 = vor.u32 %v2839, %v2842
      %v2844 = vrot.slane %v2843, 4
      %v2846 = vshll.u32 %v2750, 16
      %v2848 = vrot.slane %v2846, 5
      %v2849 = vsel %vm902, %v2844, %v2848
      %v2850 = vshrl.u32 %v2750, 16
      %v2852 = vrot.slane %v2850, 4
      %v2853 = vor.u32 %v2852, %v2848
      %v2854 = vrot.slane %v2853, 4
      %v2856 = vshll.u32 %v2751, 16
      %v2858 = vrot.slane %v2856, 5
      %v2859 = vsel %vm902, %v2854, %v2858
      %v2861 = vshrl.u32 %v2752, 16
      %v2863 = vrot.slane %v2861, 4
      %v2864 = vshll.u32 %v2752, 16
      %v2866 = vrot.slane %v2864, 5
      %v2867 = vor.u32 %v2863, %v2866
      %v2868 = vrot.slane %v2867, 4
      %v2870 = vshll.u32 %v2753, 16
      %v2872 = vrot.slane %v2870, 5
      %v2873 = vsel %vm902, %v2868, %v2872
      %v2874 = vshrl.u32 %v2753, 16
      %v2876 = vrot.slane %v2874, 4
      %v2877 = vor.u32 %v2876, %v2872
      %v2878 = vrot.slane %v2877, 4
      %v2880 = vshll.u32 %v2754, 16
      %v2882 = vrot.slane %v2880, 5
      %v2883 = vsel %vm902, %v2878, %v2882
      %v2885 = vshrl.u32 %v2755, 16
      %v2887 = vrot.slane %v2885, 4
      %v2888 = vshll.u32 %v2755, 16
      %v2890 = vrot.slane %v2888, 5
      %v2891 = vor.u32 %v2887, %v2890
      %v2892 = vrot.slane %v2891, 4
      %v2894 = vshll.u32 %v2756, 16
      %v2896 = vrot.slane %v2894, 5
      %v2897 = vsel %vm902, %v2892, %v2896
      %v2898 = vshrl.u32 %v2756, 16
      %v2900 = vrot.slane %v2898, 4
      %v2901 = vor.u32 %v2900, %v2896
      %v2902 = vrot.slane %v2901, 4
      %v2904 = vshll.u32 %v2757, 16
      %v2906 = vrot.slane %v2904, 5
      %v2907 = vsel %vm902, %v2902, %v2906
      %v2909 = vshrl.u32 %v2758, 16
      %v2911 = vrot.slane %v2909, 4
      %v2912 = vshll.u32 %v2758, 16
      %v2914 = vrot.slane %v2912, 5
      %v2915 = vor.u32 %v2911, %v2914
      %v2916 = vrot.slane %v2915, 4
      %v2918 = vshll.u32 %v2759, 16
      %v2920 = vrot.slane %v2918, 5
      %v2921 = vsel %vm902, %v2916, %v2920
      %v2922 = vshrl.u32 %v2759, 16
      %v2924 = vrot.slane %v2922, 4
      %v2925 = vor.u32 %v2924, %v2920
      %v2926 = vrot.slane %v2925, 4
      %v2928 = vshll.u32 %v2760, 16
      %v2930 = vrot.slane %v2928, 5
      %v2931 = vsel %vm902, %v2926, %v2930
      %v2933 = vshrl.u32 %v2761, 16
      %v2935 = vrot.slane %v2933, 4
      %v2936 = vshll.u32 %v2761, 16
      %v2938 = vrot.slane %v2936, 5
      %v2939 = vor.u32 %v2935, %v2938
      %v2940 = vrot.slane %v2939, 4
      %v2942 = vshll.u32 %v2762, 16
      %v2944 = vrot.slane %v2942, 5
      %v2945 = vsel %vm902, %v2940, %v2944
      %v2946 = vshrl.u32 %v2762, 16
      %v2948 = vrot.slane %v2946, 4
      %v2949 = vor.u32 %v2948, %v2944
      %v2950 = vrot.slane %v2949, 4
      %v2952 = vshll.u32 %v2763, 16
      %v2954 = vrot.slane %v2952, 5
      %v2955 = vsel %vm902, %v2950, %v2954
      %s2956 = scalar_lea.vmem %s1, 16
      %v2957 = vld [vmem:[%s2956] sm:$0x3]
      %v2958 = vunpack.c.l.b16 %v2777
      %v2959 = vunpack.c.l.b16 %v2787
      %v2960 = vunpack.c.l.b16 %v2801
      %v2961 = vunpack.c.l.b16 %v2811
      %v2962 = vunpack.c.l.b16 %v2825
      %v2963 = vunpack.c.l.b16 %v2835
      %v2964 = vunpack.c.l.b16 %v2849
      %v2965 = vunpack.c.l.b16 %v2859
      %v2966 = vunpack.c.l.b16 %v2873
      %v2967 = vunpack.c.l.b16 %v2883
      %v2968 = vunpack.c.l.b16 %v2897
      %v2969 = vunpack.c.l.b16 %v2907
      %v2970 = vunpack.c.l.b16 %v2921
      %v2971 = vunpack.c.l.b16 %v2931
      %v2972 = vunpack.c.l.b16 %v2945
      %v2973 = vunpack.c.l.b16 %v2955
      %v2974 = vpack.c.b16 %v2959, %v2958
      %v2975 = vpack.c.b16 %v2961, %v2960
      %v2976 = vpack.c.b16 %v2963, %v2962
      %v2977 = vpack.c.b16 %v2965, %v2964
      %v2978 = vpack.c.b16 %v2967, %v2966
      %v2979 = vpack.c.b16 %v2969, %v2968
      %v2980 = vpack.c.b16 %v2971, %v2970
      %v2981 = vpack.c.b16 %v2973, %v2972
      %v2983 = vsel %vm602, %v2974, 0
      %v2986 = vsel %vm602, %v2975, 0
      %v2989 = vsel %vm602, %v2976, 0
      %v2992 = vsel %vm602, %v2977, 0
      %v2995 = vsel %vm602, %v2978, 0
      %v2998 = vsel %vm602, %v2979, 0
      %v3001 = vsel %vm602, %v2980, 0
      %v3004 = vsel %vm602, %v2981, 0
      %v3007 = vsel %vm627, %v2957, 0
      %3009 = vmatprep.subr.bf16.mxu0 0
      %3010 = vmatpush1.bf16.msra.mxu0 0
      %3011 = vmatprep.subr.bf16.mxu0 0
      %3012 = vmatpush1.bf16.msra.mxu0 0
      %3013 = vmatprep.subr.bf16.mxu0 0
      %3014 = vmatpush1.bf16.msra.mxu0 0
      %3015 = vmatprep.subr.bf16.mxu0 0
      %3016 = vmatpush1.bf16.msra.mxu0 0
      %3017 = vmatprep.subr.bf16.mxu0 0
      %3018 = vmatpush1.bf16.msra.mxu0 0
      %3019 = vmatprep.subr.bf16.mxu0 0
      %3020 = vmatpush1.bf16.msra.mxu0 0
      %3021 = vmatprep.subr.bf16.mxu0 0
      %3022 = vmatpush1.bf16.msra.mxu0 0
      %3023 = vmatprep.subr.bf16.mxu0 0
      %3024 = vmatpush1.bf16.msra.mxu0 %v3007
      %3025 = vmatprep.subr.bf16.mxu0 0
      %3026 = vmatpush2.bf16.msra.mxu0 0
      %3027 = vmatprep.subr.bf16.mxu0 0
      %3028 = vmatpush2.bf16.msra.mxu0 0
      %3029 = vmatprep.subr.bf16.mxu0 0
      %3030 = vmatpush2.bf16.msra.mxu0 0
      %3031 = vmatprep.subr.bf16.mxu0 0
      %3032 = vmatpush2.bf16.msra.mxu0 0
      %3033 = vmatprep.subr.bf16.mxu0 0
      %3034 = vmatpush2.bf16.msra.mxu0 0
      %3035 = vmatprep.subr.bf16.mxu0 0
      %3036 = vmatpush2.bf16.msra.mxu0 0
      %3037 = vmatprep.subr.bf16.mxu0 0
      %3038 = vmatpush2.bf16.msra.mxu0 0
      %3039 = vmatprep.subr.bf16.mxu0 0
      %3040 = vmatpush2.bf16.msra.mxu0 0
      %3041 = vmatprep.mubr.bf16.mxu0 0
      %3042 = vmatmul.mubr.bf16.gmra.mxu0 %v2983
      %v3043 = vpop.f32.mrf.mxu0
      %v3044 = vadd.f32 0.0, %v3043
      %v3045 = vpop.f32.mrf.mxu0
      %v3046 = vpop.f32.mrf.mxu0
      %v3047 = vadd.f32 0.0, %v3046
      %v3048 = vpop.f32.mrf.mxu0
      %3049 = vmatprep.mubr.bf16.mxu0 0
      %3050 = vmatmul.mubr.bf16.gmra.mxu0 %v2986
      %v3051 = vpop.f32.mrf.mxu0
      %v3052 = vadd.f32 0.0, %v3051
      %v3053 = vpop.f32.mrf.mxu0
      %v3054 = vpop.f32.mrf.mxu0
      %v3055 = vadd.f32 0.0, %v3054
      %v3056 = vpop.f32.mrf.mxu0
      %3057 = vmatprep.mubr.bf16.mxu0 0
      %3058 = vmatmul.mubr.bf16.gmra.mxu0 %v2989
      %v3059 = vpop.f32.mrf.mxu0
      %v3060 = vadd.f32 0.0, %v3059
      %v3061 = vpop.f32.mrf.mxu0
      %v3062 = vpop.f32.mrf.mxu0
      %v3063 = vadd.f32 0.0, %v3062
      %v3064 = vpop.f32.mrf.mxu0
      %3065 = vmatprep.mubr.bf16.mxu0 0
      %3066 = vmatmul.mubr.bf16.gmra.mxu0 %v2992
      %v3067 = vpop.f32.mrf.mxu0
      %v3068 = vadd.f32 0.0, %v3067
      %v3069 = vpop.f32.mrf.mxu0
      %v3070 = vpop.f32.mrf.mxu0
      %v3071 = vadd.f32 0.0, %v3070
      %v3072 = vpop.f32.mrf.mxu0
      %3073 = vmatprep.mubr.bf16.mxu0 0
      %3074 = vmatmul.mubr.bf16.gmra.mxu0 %v2995
      %v3075 = vpop.f32.mrf.mxu0
      %v3076 = vadd.f32 0.0, %v3075
      %v3077 = vpop.f32.mrf.mxu0
      %v3078 = vpop.f32.mrf.mxu0
      %v3079 = vadd.f32 0.0, %v3078
      %v3080 = vpop.f32.mrf.mxu0
      %3081 = vmatprep.mubr.bf16.mxu0 0
      %3082 = vmatmul.mubr.bf16.gmra.mxu0 %v2998
      %v3083 = vpop.f32.mrf.mxu0
      %v3084 = vadd.f32 0.0, %v3083
      %v3085 = vpop.f32.mrf.mxu0
      %v3086 = vpop.f32.mrf.mxu0
      %v3087 = vadd.f32 0.0, %v3086
      %v3088 = vpop.f32.mrf.mxu0
      %3089 = vmatprep.mubr.bf16.mxu0 0
      %3090 = vmatmul.mubr.bf16.gmra.mxu0 %v3001
      %v3091 = vpop.f32.mrf.mxu0
      %v3092 = vadd.f32 0.0, %v3091
      %v3093 = vpop.f32.mrf.mxu0
      %v3094 = vpop.f32.mrf.mxu0
      %v3095 = vadd.f32 0.0, %v3094
      %v3096 = vpop.f32.mrf.mxu0
      %3097 = vmatprep.mubr.bf16.mxu0 0
      %3098 = vmatmul.mubr.bf16.gmra.mxu0 %v3004
      %v3099 = vpop.f32.mrf.mxu0
      %v3100 = vadd.f32 0.0, %v3099
      %v3101 = vpop.f32.mrf.mxu0
      %v3102 = vpop.f32.mrf.mxu0
      %v3103 = vadd.f32 0.0, %v3102
      %v3104 = vpop.f32.mrf.mxu0
      %3105 = vdwg.mxu0
      %v3106 = vadd.f32 %v2724, %v3044
      %v3107 = vadd.f32 %v2725, %v3047
      %v3108 = vadd.f32 %v2726, %v3052
      %v3109 = vadd.f32 %v2727, %v3055
      %v3110 = vadd.f32 %v2728, %v3060
      %v3111 = vadd.f32 %v2729, %v3063
      %v3112 = vadd.f32 %v2730, %v3068
      %v3113 = vadd.f32 %v2731, %v3071
      %v3114 = vadd.f32 %v2732, %v3076
      %v3115 = vadd.f32 %v2733, %v3079
      %v3116 = vadd.f32 %v2734, %v3084
      %v3117 = vadd.f32 %v2735, %v3087
      %v3118 = vadd.f32 %v2736, %v3092
      %v3119 = vadd.f32 %v2737, %v3095
      %v3120 = vadd.f32 %v2738, %v3100
      %v3121 = vadd.f32 %v2739, %v3103
      %v3122 = vmax.f32 %v3106, 0.0
      %v3123 = vmax.f32 %v3107, 0.0
      %v3124 = vmax.f32 %v3108, 0.0
      %v3125 = vmax.f32 %v3109, 0.0
      %v3126 = vmax.f32 %v3110, 0.0
      %v3127 = vmax.f32 %v3111, 0.0
      %v3128 = vmax.f32 %v3112, 0.0
      %v3129 = vmax.f32 %v3113, 0.0
      %v3130 = vmax.f32 %v3114, 0.0
      %v3131 = vmax.f32 %v3115, 0.0
      %v3132 = vmax.f32 %v3116, 0.0
      %v3133 = vmax.f32 %v3117, 0.0
      %v3134 = vmax.f32 %v3118, 0.0
      %v3135 = vmax.f32 %v3119, 0.0
      %v3136 = vmax.f32 %v3120, 0.0
      %v3137 = vmax.f32 %v3121, 0.0
      %v3138 = vpack.c.bf16 %v3123, %v3122
      %v3139 = vpack.c.bf16 %v3125, %v3124
      %v3140 = vpack.c.bf16 %v3127, %v3126
      %v3141 = vpack.c.bf16 %v3129, %v3128
      %v3142 = vpack.c.bf16 %v3131, %v3130
      %v3143 = vpack.c.bf16 %v3133, %v3132
      %v3144 = vpack.c.bf16 %v3135, %v3134
      %v3145 = vpack.c.bf16 %v3137, %v3136
      %v3154 = vunpack.c.l.b16 %v3138
      %v3155 = vunpack.c.h.b16 %v3138
      %v3156 = vunpack.c.l.b16 %v3139
      %v3157 = vunpack.c.h.b16 %v3139
      %v3158 = vunpack.c.l.b16 %v3140
      %v3159 = vunpack.c.h.b16 %v3140
      %v3160 = vunpack.c.l.b16 %v3141
      %v3161 = vunpack.c.h.b16 %v3141
      %v3162 = vunpack.c.l.b16 %v3142
      %v3163 = vunpack.c.h.b16 %v3142
      %v3164 = vunpack.c.l.b16 %v3143
      %v3165 = vunpack.c.h.b16 %v3143
      %v3166 = vunpack.c.l.b16 %v3144
      %v3167 = vunpack.c.h.b16 %v3144
      %v3168 = vunpack.c.l.b16 %v3145
      %v3169 = vunpack.c.h.b16 %v3145
      %v3170 = vpack.c.b16 %v3154, %v3154
      %v3171 = vpack.c.b16 %v3155, %v3155
      %v3172 = vpack.c.b16 %v3156, %v3156
      %v3173 = vpack.c.b16 %v3157, %v3157
      %v3174 = vpack.c.b16 %v3158, %v3158
      %v3175 = vpack.c.b16 %v3159, %v3159
      %v3176 = vpack.c.b16 %v3160, %v3160
      %v3177 = vpack.c.b16 %v3161, %v3161
      %v3178 = vpack.c.b16 %v3162, %v3162
      %v3179 = vpack.c.b16 %v3163, %v3163
      %v3180 = vpack.c.b16 %v3164, %v3164
      %v3181 = vpack.c.b16 %v3165, %v3165
      %v3182 = vpack.c.b16 %v3166, %v3166
      %v3183 = vpack.c.b16 %v3167, %v3167
      %v3184 = vpack.c.b16 %v3168, %v3168
      %v3185 = vpack.c.b16 %v3169, %v3169
      %s3202 = scalar_lea.vmem [#allocation3], 16
      %3203 = vst.msk [vmem:[%s3202 + $0x4] sm:$0xf] %vm245, %v3170
      %3204 = vst.msk [vmem:[%s3202 + $0x8] sm:$0xf] %vm245, %v3171
      %3205 = vst.msk [vmem:[%s3202 + $0x14] sm:$0xf] %vm245, %v3172
      %3206 = vst.msk [vmem:[%s3202 + $0x18] sm:$0xf] %vm245, %v3173
      %3207 = vst.msk [vmem:[%s3202 + $0x24] sm:$0xf] %vm245, %v3174
      %3208 = vst.msk [vmem:[%s3202 + $0x28] sm:$0xf] %vm245, %v3175
      %3209 = vst.msk [vmem:[%s3202 + $0x34] sm:$0xf] %vm245, %v3176
      %3210 = vst.msk [vmem:[%s3202 + $0x38] sm:$0xf] %vm245, %v3177
      %3211 = vst.msk [vmem:[%s3202 + $0x44] sm:$0xf] %vm245, %v3178
      %3212 = vst.msk [vmem:[%s3202 + $0x48] sm:$0xf] %vm245, %v3179
      %3213 = vst.msk [vmem:[%s3202 + $0x54] sm:$0xf] %vm245, %v3180
      %3214 = vst.msk [vmem:[%s3202 + $0x58] sm:$0xf] %vm245, %v3181
      %3215 = vst.msk [vmem:[%s3202 + $0x64] sm:$0xf] %vm245, %v3182
      %3216 = vst.msk [vmem:[%s3202 + $0x68] sm:$0xf] %vm245, %v3183
      %3217 = vst.msk [vmem:[%s3202 + $0x74] sm:$0xf] %vm245, %v3184
      %3218 = vst.msk [vmem:[%s3202 + $0x78] sm:$0xf] %vm245, %v3185
      %s3219 = scalar_lea.vmem [#allocation2], 128
      %v3220 = vld [vmem:[%s3219] sm:$0x8]
      %v3221 = vld [vmem:[%s3219 + $0x4] sm:$0xf]
      %v3222 = vld [vmem:[%s3219 + $0x8] sm:$0xf]
      %v3223 = vld [vmem:[%s3219 + $0x10] sm:$0x8]
      %v3224 = vld [vmem:[%s3219 + $0x14] sm:$0xf]
      %v3225 = vld [vmem:[%s3219 + $0x18] sm:$0xf]
      %v3226 = vld [vmem:[%s3219 + $0x20] sm:$0x8]
      %v3227 = vld [vmem:[%s3219 + $0x24] sm:$0xf]
      %v3228 = vld [vmem:[%s3219 + $0x28] sm:$0xf]
      %v3229 = vld [vmem:[%s3219 + $0x30] sm:$0x8]
      %v3230 = vld [vmem:[%s3219 + $0x34] sm:$0xf]
      %v3231 = vld [vmem:[%s3219 + $0x38] sm:$0xf]
      %v3232 = vld [vmem:[%s3219 + $0x40] sm:$0x8]
      %v3233 = vld [vmem:[%s3219 + $0x44] sm:$0xf]
      %v3234 = vld [vmem:[%s3219 + $0x48] sm:$0xf]
      %v3235 = vld [vmem:[%s3219 + $0x50] sm:$0x8]
      %v3236 = vld [vmem:[%s3219 + $0x54] sm:$0xf]
      %v3237 = vld [vmem:[%s3219 + $0x58] sm:$0xf]
      %v3238 = vld [vmem:[%s3219 + $0x60] sm:$0x8]
      %v3239 = vld [vmem:[%s3219 + $0x64] sm:$0xf]
      %v3240 = vld [vmem:[%s3219 + $0x68] sm:$0xf]
      %v3241 = vld [vmem:[%s3219 + $0x70] sm:$0x8]
      %v3242 = vld [vmem:[%s3219 + $0x74] sm:$0xf]
      %v3243 = vld [vmem:[%s3219 + $0x78] sm:$0xf]
      %v3245 = vshrl.u32 %v3220, 16
      %v3247 = vrot.slane %v3245, 7
      %v3248 = vrot.slane %v3247, 4
      %v3250 = vshrl.u32 %v3221, 16
      %v3252 = vrot.slane %v3250, 7
      %v3253 = vshll.u32 %v3221, 16
      %v3255 = vor.u32 %v3252, %v3253
      %v3256 = vsel %vm382, %v3248, %v3255
      %v3257 = vrot.slane %v3252, 4
      %v3259 = vshrl.u32 %v3222, 16
      %v3261 = vrot.slane %v3259, 7
      %v3262 = vshll.u32 %v3222, 16
      %v3264 = vor.u32 %v3261, %v3262
      %v3265 = vsel %vm382, %v3257, %v3264
      %v3267 = vshrl.u32 %v3223, 16
      %v3269 = vrot.slane %v3267, 7
      %v3270 = vrot.slane %v3269, 4
      %v3272 = vshrl.u32 %v3224, 16
      %v3274 = vrot.slane %v3272, 7
      %v3275 = vshll.u32 %v3224, 16
      %v3277 = vor.u32 %v3274, %v3275
      %v3278 = vsel %vm382, %v3270, %v3277
      %v3279 = vrot.slane %v3274, 4
      %v3281 = vshrl.u32 %v3225, 16
      %v3283 = vrot.slane %v3281, 7
      %v3284 = vshll.u32 %v3225, 16
      %v3286 = vor.u32 %v3283, %v3284
      %v3287 = vsel %vm382, %v3279, %v3286
      %v3289 = vshrl.u32 %v3226, 16
      %v3291 = vrot.slane %v3289, 7
      %v3292 = vrot.slane %v3291, 4
      %v3294 = vshrl.u32 %v3227, 16
      %v3296 = vrot.slane %v3294, 7
      %v3297 = vshll.u32 %v3227, 16
      %v3299 = vor.u32 %v3296, %v3297
      %v3300 = vsel %vm382, %v3292, %v3299
      %v3301 = vrot.slane %v3296, 4
      %v3303 = vshrl.u32 %v3228, 16
      %v3305 = vrot.slane %v3303, 7
      %v3306 = vshll.u32 %v3228, 16
      %v3308 = vor.u32 %v3305, %v3306
      %v3309 = vsel %vm382, %v3301, %v3308
      %v3311 = vshrl.u32 %v3229, 16
      %v3313 = vrot.slane %v3311, 7
      %v3314 = vrot.slane %v3313, 4
      %v3316 = vshrl.u32 %v3230, 16
      %v3318 = vrot.slane %v3316, 7
      %v3319 = vshll.u32 %v3230, 16
      %v3321 = vor.u32 %v3318, %v3319
      %v3322 = vsel %vm382, %v3314, %v3321
      %v3323 = vrot.slane %v3318, 4
      %v3325 = vshrl.u32 %v3231, 16
      %v3327 = vrot.slane %v3325, 7
      %v3328 = vshll.u32 %v3231, 16
      %v3330 = vor.u32 %v3327, %v3328
      %v3331 = vsel %vm382, %v3323, %v3330
      %v3333 = vshrl.u32 %v3232, 16
      %v3335 = vrot.slane %v3333, 7
      %v3336 = vrot.slane %v3335, 4
      %v3338 = vshrl.u32 %v3233, 16
      %v3340 = vrot.slane %v3338, 7
      %v3341 = vshll.u32 %v3233, 16
      %v3343 = vor.u32 %v3340, %v3341
      %v3344 = vsel %vm382, %v3336, %v3343
      %v3345 = vrot.slane %v3340, 4
      %v3347 = vshrl.u32 %v3234, 16
      %v3349 = vrot.slane %v3347, 7
      %v3350 = vshll.u32 %v3234, 16
      %v3352 = vor.u32 %v3349, %v3350
      %v3353 = vsel %vm382, %v3345, %v3352
      %v3355 = vshrl.u32 %v3235, 16
      %v3357 = vrot.slane %v3355, 7
      %v3358 = vrot.slane %v3357, 4
      %v3360 = vshrl.u32 %v3236, 16
      %v3362 = vrot.slane %v3360, 7
      %v3363 = vshll.u32 %v3236, 16
      %v3365 = vor.u32 %v3362, %v3363
      %v3366 = vsel %vm382, %v3358, %v3365
      %v3367 = vrot.slane %v3362, 4
      %v3369 = vshrl.u32 %v3237, 16
      %v3371 = vrot.slane %v3369, 7
      %v3372 = vshll.u32 %v3237, 16
      %v3374 = vor.u32 %v3371, %v3372
      %v3375 = vsel %vm382, %v3367, %v3374
      %v3377 = vshrl.u32 %v3238, 16
      %v3379 = vrot.slane %v3377, 7
      %v3380 = vrot.slane %v3379, 4
      %v3382 = vshrl.u32 %v3239, 16
      %v3384 = vrot.slane %v3382, 7
      %v3385 = vshll.u32 %v3239, 16
      %v3387 = vor.u32 %v3384, %v3385
      %v3388 = vsel %vm382, %v3380, %v3387
      %v3389 = vrot.slane %v3384, 4
      %v3391 = vshrl.u32 %v3240, 16
      %v3393 = vrot.slane %v3391, 7
      %v3394 = vshll.u32 %v3240, 16
      %v3396 = vor.u32 %v3393, %v3394
      %v3397 = vsel %vm382, %v3389, %v3396
      %v3399 = vshrl.u32 %v3241, 16
      %v3401 = vrot.slane %v3399, 7
      %v3402 = vrot.slane %v3401, 4
      %v3404 = vshrl.u32 %v3242, 16
      %v3406 = vrot.slane %v3404, 7
      %v3407 = vshll.u32 %v3242, 16
      %v3409 = vor.u32 %v3406, %v3407
      %v3410 = vsel %vm382, %v3402, %v3409
      %v3411 = vrot.slane %v3406, 4
      %v3413 = vshrl.u32 %v3243, 16
      %v3415 = vrot.slane %v3413, 7
      %v3416 = vshll.u32 %v3243, 16
      %v3418 = vor.u32 %v3415, %v3416
      %v3419 = vsel %vm382, %v3411, %v3418
      %v3420 = vld [vmem:[%s1] sm:$0x3]
      %v3421 = vld [vmem:[%s560] sm:$0x3]
      %v3438 = vunpack.c.l.b16 %v3221
      %v3439 = vunpack.c.l.b16 %v3222
      %v3440 = vunpack.c.l.b16 %v3224
      %v3441 = vunpack.c.l.b16 %v3225
      %v3442 = vunpack.c.l.b16 %v3227
      %v3443 = vunpack.c.l.b16 %v3228
      %v3444 = vunpack.c.l.b16 %v3230
      %v3445 = vunpack.c.l.b16 %v3231
      %v3446 = vunpack.c.l.b16 %v3233
      %v3447 = vunpack.c.l.b16 %v3234
      %v3448 = vunpack.c.l.b16 %v3236
      %v3449 = vunpack.c.l.b16 %v3237
      %v3450 = vunpack.c.l.b16 %v3239
      %v3451 = vunpack.c.l.b16 %v3240
      %v3452 = vunpack.c.l.b16 %v3242
      %v3453 = vunpack.c.l.b16 %v3243
      %v3454 = vpack.c.b16 %v3439, %v3438
      %v3455 = vpack.c.b16 %v3441, %v3440
      %v3456 = vpack.c.b16 %v3443, %v3442
      %v3457 = vpack.c.b16 %v3445, %v3444
      %v3458 = vpack.c.b16 %v3447, %v3446
      %v3459 = vpack.c.b16 %v3449, %v3448
      %v3460 = vpack.c.b16 %v3451, %v3450
      %v3461 = vpack.c.b16 %v3453, %v3452
      %v3463 = vsel %vm602, %v3454, 0
      %v3466 = vsel %vm602, %v3455, 0
      %v3469 = vsel %vm602, %v3456, 0
      %v3472 = vsel %vm602, %v3457, 0
      %v3475 = vsel %vm602, %v3458, 0
      %v3478 = vsel %vm602, %v3459, 0
      %v3481 = vsel %vm602, %v3460, 0
      %v3484 = vsel %vm602, %v3461, 0
      %v3487 = vsel %vm627, %v3421, 0
      %3489 = vmatprep.subr.bf16.mxu0 0
      %3490 = vmatpush1.bf16.msra.mxu0 0
      %3491 = vmatprep.subr.bf16.mxu0 0
      %3492 = vmatpush1.bf16.msra.mxu0 0
      %3493 = vmatprep.subr.bf16.mxu0 0
      %3494 = vmatpush1.bf16.msra.mxu0 0
      %3495 = vmatprep.subr.bf16.mxu0 0
      %3496 = vmatpush1.bf16.msra.mxu0 0
      %3497 = vmatprep.subr.bf16.mxu0 0
      %3498 = vmatpush1.bf16.msra.mxu0 0
      %3499 = vmatprep.subr.bf16.mxu0 0
      %3500 = vmatpush1.bf16.msra.mxu0 0
      %3501 = vmatprep.subr.bf16.mxu0 0
      %3502 = vmatpush1.bf16.msra.mxu0 0
      %3503 = vmatprep.subr.bf16.mxu0 0
      %3504 = vmatpush1.bf16.msra.mxu0 %v3487
      %3505 = vmatprep.subr.bf16.mxu0 0
      %3506 = vmatpush2.bf16.msra.mxu0 0
      %3507 = vmatprep.subr.bf16.mxu0 0
      %3508 = vmatpush2.bf16.msra.mxu0 0
      %3509 = vmatprep.subr.bf16.mxu0 0
      %3510 = vmatpush2.bf16.msra.mxu0 0
      %3511 = vmatprep.subr.bf16.mxu0 0
      %3512 = vmatpush2.bf16.msra.mxu0 0
      %3513 = vmatprep.subr.bf16.mxu0 0
      %3514 = vmatpush2.bf16.msra.mxu0 0
      %3515 = vmatprep.subr.bf16.mxu0 0
      %3516 = vmatpush2.bf16.msra.mxu0 0
      %3517 = vmatprep.subr.bf16.mxu0 0
      %3518 = vmatpush2.bf16.msra.mxu0 0
      %3519 = vmatprep.subr.bf16.mxu0 0
      %3520 = vmatpush2.bf16.msra.mxu0 0
      %3521 = vmatprep.mubr.bf16.mxu0 0
      %3522 = vmatmul.mubr.bf16.gmra.mxu0 %v3463
      %v3523 = vpop.f32.mrf.mxu0
      %v3524 = vadd.f32 0.0, %v3523
      %v3525 = vpop.f32.mrf.mxu0
      %v3526 = vpop.f32.mrf.mxu0
      %v3527 = vadd.f32 0.0, %v3526
      %v3528 = vpop.f32.mrf.mxu0
      %3529 = vmatprep.mubr.bf16.mxu0 0
      %3530 = vmatmul.mubr.bf16.gmra.mxu0 %v3466
      %v3531 = vpop.f32.mrf.mxu0
      %v3532 = vadd.f32 0.0, %v3531
      %v3533 = vpop.f32.mrf.mxu0
      %v3534 = vpop.f32.mrf.mxu0
      %v3535 = vadd.f32 0.0, %v3534
      %v3536 = vpop.f32.mrf.mxu0
      %3537 = vmatprep.mubr.bf16.mxu0 0
      %3538 = vmatmul.mubr.bf16.gmra.mxu0 %v3469
      %v3539 = vpop.f32.mrf.mxu0
      %v3540 = vadd.f32 0.0, %v3539
      %v3541 = vpop.f32.mrf.mxu0
      %v3542 = vpop.f32.mrf.mxu0
      %v3543 = vadd.f32 0.0, %v3542
      %v3544 = vpop.f32.mrf.mxu0
      %3545 = vmatprep.mubr.bf16.mxu0 0
      %3546 = vmatmul.mubr.bf16.gmra.mxu0 %v3472
      %v3547 = vpop.f32.mrf.mxu0
      %v3548 = vadd.f32 0.0, %v3547
      %v3549 = vpop.f32.mrf.mxu0
      %v3550 = vpop.f32.mrf.mxu0
      %v3551 = vadd.f32 0.0, %v3550
      %v3552 = vpop.f32.mrf.mxu0
      %3553 = vmatprep.mubr.bf16.mxu0 0
      %3554 = vmatmul.mubr.bf16.gmra.mxu0 %v3475
      %v3555 = vpop.f32.mrf.mxu0
      %v3556 = vadd.f32 0.0, %v3555
      %v3557 = vpop.f32.mrf.mxu0
      %v3558 = vpop.f32.mrf.mxu0
      %v3559 = vadd.f32 0.0, %v3558
      %v3560 = vpop.f32.mrf.mxu0
      %3561 = vmatprep.mubr.bf16.mxu0 0
      %3562 = vmatmul.mubr.bf16.gmra.mxu0 %v3478
      %v3563 = vpop.f32.mrf.mxu0
      %v3564 = vadd.f32 0.0, %v3563
      %v3565 = vpop.f32.mrf.mxu0
      %v3566 = vpop.f32.mrf.mxu0
      %v3567 = vadd.f32 0.0, %v3566
      %v3568 = vpop.f32.mrf.mxu0
      %3569 = vmatprep.mubr.bf16.mxu0 0
      %3570 = vmatmul.mubr.bf16.gmra.mxu0 %v3481
      %v3571 = vpop.f32.mrf.mxu0
      %v3572 = vadd.f32 0.0, %v3571
      %v3573 = vpop.f32.mrf.mxu0
      %v3574 = vpop.f32.mrf.mxu0
      %v3575 = vadd.f32 0.0, %v3574
      %v3576 = vpop.f32.mrf.mxu0
      %3577 = vmatprep.mubr.bf16.mxu0 0
      %3578 = vmatmul.mubr.bf16.gmra.mxu0 %v3484
      %v3579 = vpop.f32.mrf.mxu0
      %v3580 = vadd.f32 0.0, %v3579
      %v3581 = vpop.f32.mrf.mxu0
      %v3582 = vpop.f32.mrf.mxu0
      %v3583 = vadd.f32 0.0, %v3582
      %v3584 = vpop.f32.mrf.mxu0
      %3585 = vdwg.mxu0
      %v3586 = vunpack.c.l.b16 %v3256
      %v3587 = vunpack.c.l.b16 %v3265
      %v3588 = vunpack.c.l.b16 %v3278
      %v3589 = vunpack.c.l.b16 %v3287
      %v3590 = vunpack.c.l.b16 %v3300
      %v3591 = vunpack.c.l.b16 %v3309
      %v3592 = vunpack.c.l.b16 %v3322
      %v3593 = vunpack.c.l.b16 %v3331
      %v3594 = vunpack.c.l.b16 %v3344
      %v3595 = vunpack.c.l.b16 %v3353
      %v3596 = vunpack.c.l.b16 %v3366
      %v3597 = vunpack.c.l.b16 %v3375
      %v3598 = vunpack.c.l.b16 %v3388
      %v3599 = vunpack.c.l.b16 %v3397
      %v3600 = vunpack.c.l.b16 %v3410
      %v3601 = vunpack.c.l.b16 %v3419
      %v3602 = vpack.c.b16 %v3587, %v3586
      %v3603 = vpack.c.b16 %v3589, %v3588
      %v3604 = vpack.c.b16 %v3591, %v3590
      %v3605 = vpack.c.b16 %v3593, %v3592
      %v3606 = vpack.c.b16 %v3595, %v3594
      %v3607 = vpack.c.b16 %v3597, %v3596
      %v3608 = vpack.c.b16 %v3599, %v3598
      %v3609 = vpack.c.b16 %v3601, %v3600
      %v3611 = vsel %vm602, %v3602, 0
      %v3614 = vsel %vm602, %v3603, 0
      %v3617 = vsel %vm602, %v3604, 0
      %v3620 = vsel %vm602, %v3605, 0
      %v3623 = vsel %vm602, %v3606, 0
      %v3626 = vsel %vm602, %v3607, 0
      %v3629 = vsel %vm602, %v3608, 0
      %v3632 = vsel %vm602, %v3609, 0
      %v3635 = vsel %vm627, %v3420, 0
      %3637 = vmatprep.subr.bf16.mxu0 0
      %3638 = vmatpush1.bf16.msra.mxu0 0
      %3639 = vmatprep.subr.bf16.mxu0 0
      %3640 = vmatpush1.bf16.msra.mxu0 0
      %3641 = vmatprep.subr.bf16.mxu0 0
      %3642 = vmatpush1.bf16.msra.mxu0 0
      %3643 = vmatprep.subr.bf16.mxu0 0
      %3644 = vmatpush1.bf16.msra.mxu0 0
      %3645 = vmatprep.subr.bf16.mxu0 0
      %3646 = vmatpush1.bf16.msra.mxu0 0
      %3647 = vmatprep.subr.bf16.mxu0 0
      %3648 = vmatpush1.bf16.msra.mxu0 0
      %3649 = vmatprep.subr.bf16.mxu0 0
      %3650 = vmatpush1.bf16.msra.mxu0 0
      %3651 = vmatprep.subr.bf16.mxu0 0
      %3652 = vmatpush1.bf16.msra.mxu0 %v3635
      %3653 = vmatprep.subr.bf16.mxu0 0
      %3654 = vmatpush2.bf16.msra.mxu0 0
      %3655 = vmatprep.subr.bf16.mxu0 0
      %3656 = vmatpush2.bf16.msra.mxu0 0
      %3657 = vmatprep.subr.bf16.mxu0 0
      %3658 = vmatpush2.bf16.msra.mxu0 0
      %3659 = vmatprep.subr.bf16.mxu0 0
      %3660 = vmatpush2.bf16.msra.mxu0 0
      %3661 = vmatprep.subr.bf16.mxu0 0
      %3662 = vmatpush2.bf16.msra.mxu0 0
      %3663 = vmatprep.subr.bf16.mxu0 0
      %3664 = vmatpush2.bf16.msra.mxu0 0
      %3665 = vmatprep.subr.bf16.mxu0 0
      %3666 = vmatpush2.bf16.msra.mxu0 0
      %3667 = vmatprep.subr.bf16.mxu0 0
      %3668 = vmatpush2.bf16.msra.mxu0 0
      %3669 = vmatprep.mubr.bf16.mxu0 0
      %3670 = vmatmul.mubr.bf16.gmra.mxu0 %v3611
      %v3671 = vpop.f32.mrf.mxu0
      %v3672 = vadd.f32 %v3524, %v3671
      %v3673 = vpop.f32.mrf.mxu0
      %v3674 = vpop.f32.mrf.mxu0
      %v3675 = vadd.f32 %v3527, %v3674
      %v3676 = vpop.f32.mrf.mxu0
      %3677 = vmatprep.mubr.bf16.mxu0 0
      %3678 = vmatmul.mubr.bf16.gmra.mxu0 %v3614
      %v3679 = vpop.f32.mrf.mxu0
      %v3680 = vadd.f32 %v3532, %v3679
      %v3681 = vpop.f32.mrf.mxu0
      %v3682 = vpop.f32.mrf.mxu0
      %v3683 = vadd.f32 %v3535, %v3682
      %v3684 = vpop.f32.mrf.mxu0
      %3685 = vmatprep.mubr.bf16.mxu0 0
      %3686 = vmatmul.mubr.bf16.gmra.mxu0 %v3617
      %v3687 = vpop.f32.mrf.mxu0
      %v3688 = vadd.f32 %v3540, %v3687
      %v3689 = vpop.f32.mrf.mxu0
      %v3690 = vpop.f32.mrf.mxu0
      %v3691 = vadd.f32 %v3543, %v3690
      %v3692 = vpop.f32.mrf.mxu0
      %3693 = vmatprep.mubr.bf16.mxu0 0
      %3694 = vmatmul.mubr.bf16.gmra.mxu0 %v3620
      %v3695 = vpop.f32.mrf.mxu0
      %v3696 = vadd.f32 %v3548, %v3695
      %v3697 = vpop.f32.mrf.mxu0
      %v3698 = vpop.f32.mrf.mxu0
      %v3699 = vadd.f32 %v3551, %v3698
      %v3700 = vpop.f32.mrf.mxu0
      %3701 = vmatprep.mubr.bf16.mxu0 0
      %3702 = vmatmul.mubr.bf16.gmra.mxu0 %v3623
      %v3703 = vpop.f32.mrf.mxu0
      %v3704 = vadd.f32 %v3556, %v3703
      %v3705 = vpop.f32.mrf.mxu0
      %v3706 = vpop.f32.mrf.mxu0
      %v3707 = vadd.f32 %v3559, %v3706
      %v3708 = vpop.f32.mrf.mxu0
      %3709 = vmatprep.mubr.bf16.mxu0 0
      %3710 = vmatmul.mubr.bf16.gmra.mxu0 %v3626
      %v3711 = vpop.f32.mrf.mxu0
      %v3712 = vadd.f32 %v3564, %v3711
      %v3713 = vpop.f32.mrf.mxu0
      %v3714 = vpop.f32.mrf.mxu0
      %v3715 = vadd.f32 %v3567, %v3714
      %v3716 = vpop.f32.mrf.mxu0
      %3717 = vmatprep.mubr.bf16.mxu0 0
      %3718 = vmatmul.mubr.bf16.gmra.mxu0 %v3629
      %v3719 = vpop.f32.mrf.mxu0
      %v3720 = vadd.f32 %v3572, %v3719
      %v3721 = vpop.f32.mrf.mxu0
      %v3722 = vpop.f32.mrf.mxu0
      %v3723 = vadd.f32 %v3575, %v3722
      %v3724 = vpop.f32.mrf.mxu0
      %3725 = vmatprep.mubr.bf16.mxu0 0
      %3726 = vmatmul.mubr.bf16.gmra.mxu0 %v3632
      %v3727 = vpop.f32.mrf.mxu0
      %v3728 = vadd.f32 %v3580, %v3727
      %v3729 = vpop.f32.mrf.mxu0
      %v3730 = vpop.f32.mrf.mxu0
      %v3731 = vadd.f32 %v3583, %v3730
      %v3732 = vpop.f32.mrf.mxu0
      %3733 = vdwg.mxu0
      %v3734 = vld [vmem:[%s3219 + $0x4] sm:$0xf]
      %v3735 = vld [vmem:[%s3219 + $0x8] sm:$0xf]
      %v3736 = vld [vmem:[%s3219 + $0xc] sm:$0x1]
      %v3737 = vld [vmem:[%s3219 + $0x14] sm:$0xf]
      %v3738 = vld [vmem:[%s3219 + $0x18] sm:$0xf]
      %v3739 = vld [vmem:[%s3219 + $0x1c] sm:$0x1]
      %v3740 = vld [vmem:[%s3219 + $0x24] sm:$0xf]
      %v3741 = vld [vmem:[%s3219 + $0x28] sm:$0xf]
      %v3742 = vld [vmem:[%s3219 + $0x2c] sm:$0x1]
      %v3743 = vld [vmem:[%s3219 + $0x34] sm:$0xf]
      %v3744 = vld [vmem:[%s3219 + $0x38] sm:$0xf]
      %v3745 = vld [vmem:[%s3219 + $0x3c] sm:$0x1]
      %v3746 = vld [vmem:[%s3219 + $0x44] sm:$0xf]
      %v3747 = vld [vmem:[%s3219 + $0x48] sm:$0xf]
      %v3748 = vld [vmem:[%s3219 + $0x4c] sm:$0x1]
      %v3749 = vld [vmem:[%s3219 + $0x54] sm:$0xf]
      %v3750 = vld [vmem:[%s3219 + $0x58] sm:$0xf]
      %v3751 = vld [vmem:[%s3219 + $0x5c] sm:$0x1]
      %v3752 = vld [vmem:[%s3219 + $0x64] sm:$0xf]
      %v3753 = vld [vmem:[%s3219 + $0x68] sm:$0xf]
      %v3754 = vld [vmem:[%s3219 + $0x6c] sm:$0x1]
      %v3755 = vld [vmem:[%s3219 + $0x74] sm:$0xf]
      %v3756 = vld [vmem:[%s3219 + $0x78] sm:$0xf]
      %v3757 = vld [vmem:[%s3219 + $0x7c] sm:$0x1]
      %v3759 = vshrl.u32 %v3734, 16
      %v3761 = vrot.slane %v3759, 4
      %v3762 = vshll.u32 %v3734, 16
      %v3764 = vrot.slane %v3762, 5
      %v3765 = vor.u32 %v3761, %v3764
      %v3766 = vrot.slane %v3765, 4
      %v3768 = vshll.u32 %v3735, 16
      %v3770 = vrot.slane %v3768, 5
      %v3771 = vsel %vm902, %v3766, %v3770
      %v3772 = vshrl.u32 %v3735, 16
      %v3774 = vrot.slane %v3772, 4
      %v3775 = vor.u32 %v3774, %v3770
      %v3776 = vrot.slane %v3775, 4
      %v3778 = vshll.u32 %v3736, 16
      %v3780 = vrot.slane %v3778, 5
      %v3781 = vsel %vm902, %v3776, %v3780
      %v3783 = vshrl.u32 %v3737, 16
      %v3785 = vrot.slane %v3783, 4
      %v3786 = vshll.u32 %v3737, 16
      %v3788 = vrot.slane %v3786, 5
      %v3789 = vor.u32 %v3785, %v3788
      %v3790 = vrot.slane %v3789, 4
      %v3792 = vshll.u32 %v3738, 16
      %v3794 = vrot.slane %v3792, 5
      %v3795 = vsel %vm902, %v3790, %v3794
      %v3796 = vshrl.u32 %v3738, 16
      %v3798 = vrot.slane %v3796, 4
      %v3799 = vor.u32 %v3798, %v3794
      %v3800 = vrot.slane %v3799, 4
      %v3802 = vshll.u32 %v3739, 16
      %v3804 = vrot.slane %v3802, 5
      %v3805 = vsel %vm902, %v3800, %v3804
      %v3807 = vshrl.u32 %v3740, 16
      %v3809 = vrot.slane %v3807, 4
      %v3810 = vshll.u32 %v3740, 16
      %v3812 = vrot.slane %v3810, 5
      %v3813 = vor.u32 %v3809, %v3812
      %v3814 = vrot.slane %v3813, 4
      %v3816 = vshll.u32 %v3741, 16
      %v3818 = vrot.slane %v3816, 5
      %v3819 = vsel %vm902, %v3814, %v3818
      %v3820 = vshrl.u32 %v3741, 16
      %v3822 = vrot.slane %v3820, 4
      %v3823 = vor.u32 %v3822, %v3818
      %v3824 = vrot.slane %v3823, 4
      %v3826 = vshll.u32 %v3742, 16
      %v3828 = vrot.slane %v3826, 5
      %v3829 = vsel %vm902, %v3824, %v3828
      %v3831 = vshrl.u32 %v3743, 16
      %v3833 = vrot.slane %v3831, 4
      %v3834 = vshll.u32 %v3743, 16
      %v3836 = vrot.slane %v3834, 5
      %v3837 = vor.u32 %v3833, %v3836
      %v3838 = vrot.slane %v3837, 4
      %v3840 = vshll.u32 %v3744, 16
      %v3842 = vrot.slane %v3840, 5
      %v3843 = vsel %vm902, %v3838, %v3842
      %v3844 = vshrl.u32 %v3744, 16
      %v3846 = vrot.slane %v3844, 4
      %v3847 = vor.u32 %v3846, %v3842
      %v3848 = vrot.slane %v3847, 4
      %v3850 = vshll.u32 %v3745, 16
      %v3852 = vrot.slane %v3850, 5
      %v3853 = vsel %vm902, %v3848, %v3852
      %v3855 = vshrl.u32 %v3746, 16
      %v3857 = vrot.slane %v3855, 4
      %v3858 = vshll.u32 %v3746, 16
      %v3860 = vrot.slane %v3858, 5
      %v3861 = vor.u32 %v3857, %v3860
      %v3862 = vrot.slane %v3861, 4
      %v3864 = vshll.u32 %v3747, 16
      %v3866 = vrot.slane %v3864, 5
      %v3867 = vsel %vm902, %v3862, %v3866
      %v3868 = vshrl.u32 %v3747, 16
      %v3870 = vrot.slane %v3868, 4
      %v3871 = vor.u32 %v3870, %v3866
      %v3872 = vrot.slane %v3871, 4
      %v3874 = vshll.u32 %v3748, 16
      %v3876 = vrot.slane %v3874, 5
      %v3877 = vsel %vm902, %v3872, %v3876
      %v3879 = vshrl.u32 %v3749, 16
      %v3881 = vrot.slane %v3879, 4
      %v3882 = vshll.u32 %v3749, 16
      %v3884 = vrot.slane %v3882, 5
      %v3885 = vor.u32 %v3881, %v3884
      %v3886 = vrot.slane %v3885, 4
      %v3888 = vshll.u32 %v3750, 16
      %v3890 = vrot.slane %v3888, 5
      %v3891 = vsel %vm902, %v3886, %v3890
      %v3892 = vshrl.u32 %v3750, 16
      %v3894 = vrot.slane %v3892, 4
      %v3895 = vor.u32 %v3894, %v3890
      %v3896 = vrot.slane %v3895, 4
      %v3898 = vshll.u32 %v3751, 16
      %v3900 = vrot.slane %v3898, 5
      %v3901 = vsel %vm902, %v3896, %v3900
      %v3903 = vshrl.u32 %v3752, 16
      %v3905 = vrot.slane %v3903, 4
      %v3906 = vshll.u32 %v3752, 16
      %v3908 = vrot.slane %v3906, 5
      %v3909 = vor.u32 %v3905, %v3908
      %v3910 = vrot.slane %v3909, 4
      %v3912 = vshll.u32 %v3753, 16
      %v3914 = vrot.slane %v3912, 5
      %v3915 = vsel %vm902, %v3910, %v3914
      %v3916 = vshrl.u32 %v3753, 16
      %v3918 = vrot.slane %v3916, 4
      %v3919 = vor.u32 %v3918, %v3914
      %v3920 = vrot.slane %v3919, 4
      %v3922 = vshll.u32 %v3754, 16
      %v3924 = vrot.slane %v3922, 5
      %v3925 = vsel %vm902, %v3920, %v3924
      %v3927 = vshrl.u32 %v3755, 16
      %v3929 = vrot.slane %v3927, 4
      %v3930 = vshll.u32 %v3755, 16
      %v3932 = vrot.slane %v3930, 5
      %v3933 = vor.u32 %v3929, %v3932
      %v3934 = vrot.slane %v3933, 4
      %v3936 = vshll.u32 %v3756, 16
      %v3938 = vrot.slane %v3936, 5
      %v3939 = vsel %vm902, %v3934, %v3938
      %v3940 = vshrl.u32 %v3756, 16
      %v3942 = vrot.slane %v3940, 4
      %v3943 = vor.u32 %v3942, %v3938
      %v3944 = vrot.slane %v3943, 4
      %v3946 = vshll.u32 %v3757, 16
      %v3948 = vrot.slane %v3946, 5
      %v3949 = vsel %vm902, %v3944, %v3948
      %v3950 = vld [vmem:[%s1095] sm:$0x3]
      %v3951 = vunpack.c.l.b16 %v3771
      %v3952 = vunpack.c.l.b16 %v3781
      %v3953 = vunpack.c.l.b16 %v3795
      %v3954 = vunpack.c.l.b16 %v3805
      %v3955 = vunpack.c.l.b16 %v3819
      %v3956 = vunpack.c.l.b16 %v3829
      %v3957 = vunpack.c.l.b16 %v3843
      %v3958 = vunpack.c.l.b16 %v3853
      %v3959 = vunpack.c.l.b16 %v3867
      %v3960 = vunpack.c.l.b16 %v3877
      %v3961 = vunpack.c.l.b16 %v3891
      %v3962 = vunpack.c.l.b16 %v3901
      %v3963 = vunpack.c.l.b16 %v3915
      %v3964 = vunpack.c.l.b16 %v3925
      %v3965 = vunpack.c.l.b16 %v3939
      %v3966 = vunpack.c.l.b16 %v3949
      %v3967 = vpack.c.b16 %v3952, %v3951
      %v3968 = vpack.c.b16 %v3954, %v3953
      %v3969 = vpack.c.b16 %v3956, %v3955
      %v3970 = vpack.c.b16 %v3958, %v3957
      %v3971 = vpack.c.b16 %v3960, %v3959
      %v3972 = vpack.c.b16 %v3962, %v3961
      %v3973 = vpack.c.b16 %v3964, %v3963
      %v3974 = vpack.c.b16 %v3966, %v3965
      %v3976 = vsel %vm602, %v3967, 0
      %v3979 = vsel %vm602, %v3968, 0
      %v3982 = vsel %vm602, %v3969, 0
      %v3985 = vsel %vm602, %v3970, 0
      %v3988 = vsel %vm602, %v3971, 0
      %v3991 = vsel %vm602, %v3972, 0
      %v3994 = vsel %vm602, %v3973, 0
      %v3997 = vsel %vm602, %v3974, 0
      %v4000 = vsel %vm627, %v3950, 0
      %4002 = vmatprep.subr.bf16.mxu0 0
      %4003 = vmatpush1.bf16.msra.mxu0 0
      %4004 = vmatprep.subr.bf16.mxu0 0
      %4005 = vmatpush1.bf16.msra.mxu0 0
      %4006 = vmatprep.subr.bf16.mxu0 0
      %4007 = vmatpush1.bf16.msra.mxu0 0
      %4008 = vmatprep.subr.bf16.mxu0 0
      %4009 = vmatpush1.bf16.msra.mxu0 0
      %4010 = vmatprep.subr.bf16.mxu0 0
      %4011 = vmatpush1.bf16.msra.mxu0 0
      %4012 = vmatprep.subr.bf16.mxu0 0
      %4013 = vmatpush1.bf16.msra.mxu0 0
      %4014 = vmatprep.subr.bf16.mxu0 0
      %4015 = vmatpush1.bf16.msra.mxu0 0
      %4016 = vmatprep.subr.bf16.mxu0 0
      %4017 = vmatpush1.bf16.msra.mxu0 %v4000
      %4018 = vmatprep.subr.bf16.mxu0 0
      %4019 = vmatpush2.bf16.msra.mxu0 0
      %4020 = vmatprep.subr.bf16.mxu0 0
      %4021 = vmatpush2.bf16.msra.mxu0 0
      %4022 = vmatprep.subr.bf16.mxu0 0
      %4023 = vmatpush2.bf16.msra.mxu0 0
      %4024 = vmatprep.subr.bf16.mxu0 0
      %4025 = vmatpush2.bf16.msra.mxu0 0
      %4026 = vmatprep.subr.bf16.mxu0 0
      %4027 = vmatpush2.bf16.msra.mxu0 0
      %4028 = vmatprep.subr.bf16.mxu0 0
      %4029 = vmatpush2.bf16.msra.mxu0 0
      %4030 = vmatprep.subr.bf16.mxu0 0
      %4031 = vmatpush2.bf16.msra.mxu0 0
      %4032 = vmatprep.subr.bf16.mxu0 0
      %4033 = vmatpush2.bf16.msra.mxu0 0
      %4034 = vmatprep.mubr.bf16.mxu0 0
      %4035 = vmatmul.mubr.bf16.gmra.mxu0 %v3976
      %v4036 = vpop.f32.mrf.mxu0
      %v4037 = vadd.f32 0.0, %v4036
      %v4038 = vpop.f32.mrf.mxu0
      %v4039 = vpop.f32.mrf.mxu0
      %v4040 = vadd.f32 0.0, %v4039
      %v4041 = vpop.f32.mrf.mxu0
      %4042 = vmatprep.mubr.bf16.mxu0 0
      %4043 = vmatmul.mubr.bf16.gmra.mxu0 %v3979
      %v4044 = vpop.f32.mrf.mxu0
      %v4045 = vadd.f32 0.0, %v4044
      %v4046 = vpop.f32.mrf.mxu0
      %v4047 = vpop.f32.mrf.mxu0
      %v4048 = vadd.f32 0.0, %v4047
      %v4049 = vpop.f32.mrf.mxu0
      %4050 = vmatprep.mubr.bf16.mxu0 0
      %4051 = vmatmul.mubr.bf16.gmra.mxu0 %v3982
      %v4052 = vpop.f32.mrf.mxu0
      %v4053 = vadd.f32 0.0, %v4052
      %v4054 = vpop.f32.mrf.mxu0
      %v4055 = vpop.f32.mrf.mxu0
      %v4056 = vadd.f32 0.0, %v4055
      %v4057 = vpop.f32.mrf.mxu0
      %4058 = vmatprep.mubr.bf16.mxu0 0
      %4059 = vmatmul.mubr.bf16.gmra.mxu0 %v3985
      %v4060 = vpop.f32.mrf.mxu0
      %v4061 = vadd.f32 0.0, %v4060
      %v4062 = vpop.f32.mrf.mxu0
      %v4063 = vpop.f32.mrf.mxu0
      %v4064 = vadd.f32 0.0, %v4063
      %v4065 = vpop.f32.mrf.mxu0
      %4066 = vmatprep.mubr.bf16.mxu0 0
      %4067 = vmatmul.mubr.bf16.gmra.mxu0 %v3988
      %v4068 = vpop.f32.mrf.mxu0
      %v4069 = vadd.f32 0.0, %v4068
      %v4070 = vpop.f32.mrf.mxu0
      %v4071 = vpop.f32.mrf.mxu0
      %v4072 = vadd.f32 0.0, %v4071
      %v4073 = vpop.f32.mrf.mxu0
      %4074 = vmatprep.mubr.bf16.mxu0 0
      %4075 = vmatmul.mubr.bf16.gmra.mxu0 %v3991
      %v4076 = vpop.f32.mrf.mxu0
      %v4077 = vadd.f32 0.0, %v4076
      %v4078 = vpop.f32.mrf.mxu0
      %v4079 = vpop.f32.mrf.mxu0
      %v4080 = vadd.f32 0.0, %v4079
      %v4081 = vpop.f32.mrf.mxu0
      %4082 = vmatprep.mubr.bf16.mxu0 0
      %4083 = vmatmul.mubr.bf16.gmra.mxu0 %v3994
      %v4084 = vpop.f32.mrf.mxu0
      %v4085 = vadd.f32 0.0, %v4084
      %v4086 = vpop.f32.mrf.mxu0
      %v4087 = vpop.f32.mrf.mxu0
      %v4088 = vadd.f32 0.0, %v4087
      %v4089 = vpop.f32.mrf.mxu0
      %4090 = vmatprep.mubr.bf16.mxu0 0
      %4091 = vmatmul.mubr.bf16.gmra.mxu0 %v3997
      %v4092 = vpop.f32.mrf.mxu0
      %v4093 = vadd.f32 0.0, %v4092
      %v4094 = vpop.f32.mrf.mxu0
      %v4095 = vpop.f32.mrf.mxu0
      %v4096 = vadd.f32 0.0, %v4095
      %v4097 = vpop.f32.mrf.mxu0
      %4098 = vdwg.mxu0
      %v4099 = vadd.f32 %v3672, %v4037
      %v4100 = vadd.f32 %v3675, %v4040
      %v4101 = vadd.f32 %v3680, %v4045
      %v4102 = vadd.f32 %v3683, %v4048
      %v4103 = vadd.f32 %v3688, %v4053
      %v4104 = vadd.f32 %v3691, %v4056
      %v4105 = vadd.f32 %v3696, %v4061
      %v4106 = vadd.f32 %v3699, %v4064
      %v4107 = vadd.f32 %v3704, %v4069
      %v4108 = vadd.f32 %v3707, %v4072
      %v4109 = vadd.f32 %v3712, %v4077
      %v4110 = vadd.f32 %v3715, %v4080
      %v4111 = vadd.f32 %v3720, %v4085
      %v4112 = vadd.f32 %v3723, %v4088
      %v4113 = vadd.f32 %v3728, %v4093
      %v4114 = vadd.f32 %v3731, %v4096
      %s4115 = scalar_lea.vmem [#allocation2], 144
      %v4116 = vld [vmem:[%s4115] sm:$0x8]
      %v4117 = vld [vmem:[%s4115 + $0x4] sm:$0xf]
      %v4118 = vld [vmem:[%s4115 + $0x8] sm:$0xf]
      %v4119 = vld [vmem:[%s4115 + $0x10] sm:$0x8]
      %v4120 = vld [vmem:[%s4115 + $0x14] sm:$0xf]
      %v4121 = vld [vmem:[%s4115 + $0x18] sm:$0xf]
      %v4122 = vld [vmem:[%s4115 + $0x20] sm:$0x8]
      %v4123 = vld [vmem:[%s4115 + $0x24] sm:$0xf]
      %v4124 = vld [vmem:[%s4115 + $0x28] sm:$0xf]
      %v4125 = vld [vmem:[%s4115 + $0x30] sm:$0x8]
      %v4126 = vld [vmem:[%s4115 + $0x34] sm:$0xf]
      %v4127 = vld [vmem:[%s4115 + $0x38] sm:$0xf]
      %v4128 = vld [vmem:[%s4115 + $0x40] sm:$0x8]
      %v4129 = vld [vmem:[%s4115 + $0x44] sm:$0xf]
      %v4130 = vld [vmem:[%s4115 + $0x48] sm:$0xf]
      %v4131 = vld [vmem:[%s4115 + $0x50] sm:$0x8]
      %v4132 = vld [vmem:[%s4115 + $0x54] sm:$0xf]
      %v4133 = vld [vmem:[%s4115 + $0x58] sm:$0xf]
      %v4134 = vld [vmem:[%s4115 + $0x60] sm:$0x8]
      %v4135 = vld [vmem:[%s4115 + $0x64] sm:$0xf]
      %v4136 = vld [vmem:[%s4115 + $0x68] sm:$0xf]
      %v4137 = vld [vmem:[%s4115 + $0x70] sm:$0x8]
      %v4138 = vld [vmem:[%s4115 + $0x74] sm:$0xf]
      %v4139 = vld [vmem:[%s4115 + $0x78] sm:$0xf]
      %v4141 = vshrl.u32 %v4116, 16
      %v4143 = vrot.slane %v4141, 7
      %v4144 = vrot.slane %v4143, 4
      %v4146 = vshrl.u32 %v4117, 16
      %v4148 = vrot.slane %v4146, 7
      %v4149 = vshll.u32 %v4117, 16
      %v4151 = vor.u32 %v4148, %v4149
      %v4152 = vsel %vm382, %v4144, %v4151
      %v4153 = vrot.slane %v4148, 4
      %v4155 = vshrl.u32 %v4118, 16
      %v4157 = vrot.slane %v4155, 7
      %v4158 = vshll.u32 %v4118, 16
      %v4160 = vor.u32 %v4157, %v4158
      %v4161 = vsel %vm382, %v4153, %v4160
      %v4163 = vshrl.u32 %v4119, 16
      %v4165 = vrot.slane %v4163, 7
      %v4166 = vrot.slane %v4165, 4
      %v4168 = vshrl.u32 %v4120, 16
      %v4170 = vrot.slane %v4168, 7
      %v4171 = vshll.u32 %v4120, 16
      %v4173 = vor.u32 %v4170, %v4171
      %v4174 = vsel %vm382, %v4166, %v4173
      %v4175 = vrot.slane %v4170, 4
      %v4177 = vshrl.u32 %v4121, 16
      %v4179 = vrot.slane %v4177, 7
      %v4180 = vshll.u32 %v4121, 16
      %v4182 = vor.u32 %v4179, %v4180
      %v4183 = vsel %vm382, %v4175, %v4182
      %v4185 = vshrl.u32 %v4122, 16
      %v4187 = vrot.slane %v4185, 7
      %v4188 = vrot.slane %v4187, 4
      %v4190 = vshrl.u32 %v4123, 16
      %v4192 = vrot.slane %v4190, 7
      %v4193 = vshll.u32 %v4123, 16
      %v4195 = vor.u32 %v4192, %v4193
      %v4196 = vsel %vm382, %v4188, %v4195
      %v4197 = vrot.slane %v4192, 4
      %v4199 = vshrl.u32 %v4124, 16
      %v4201 = vrot.slane %v4199, 7
      %v4202 = vshll.u32 %v4124, 16
      %v4204 = vor.u32 %v4201, %v4202
      %v4205 = vsel %vm382, %v4197, %v4204
      %v4207 = vshrl.u32 %v4125, 16
      %v4209 = vrot.slane %v4207, 7
      %v4210 = vrot.slane %v4209, 4
      %v4212 = vshrl.u32 %v4126, 16
      %v4214 = vrot.slane %v4212, 7
      %v4215 = vshll.u32 %v4126, 16
      %v4217 = vor.u32 %v4214, %v4215
      %v4218 = vsel %vm382, %v4210, %v4217
      %v4219 = vrot.slane %v4214, 4
      %v4221 = vshrl.u32 %v4127, 16
      %v4223 = vrot.slane %v4221, 7
      %v4224 = vshll.u32 %v4127, 16
      %v4226 = vor.u32 %v4223, %v4224
      %v4227 = vsel %vm382, %v4219, %v4226
      %v4229 = vshrl.u32 %v4128, 16
      %v4231 = vrot.slane %v4229, 7
      %v4232 = vrot.slane %v4231, 4
      %v4234 = vshrl.u32 %v4129, 16
      %v4236 = vrot.slane %v4234, 7
      %v4237 = vshll.u32 %v4129, 16
      %v4239 = vor.u32 %v4236, %v4237
      %v4240 = vsel %vm382, %v4232, %v4239
      %v4241 = vrot.slane %v4236, 4
      %v4243 = vshrl.u32 %v4130, 16
      %v4245 = vrot.slane %v4243, 7
      %v4246 = vshll.u32 %v4130, 16
      %v4248 = vor.u32 %v4245, %v4246
      %v4249 = vsel %vm382, %v4241, %v4248
      %v4251 = vshrl.u32 %v4131, 16
      %v4253 = vrot.slane %v4251, 7
      %v4254 = vrot.slane %v4253, 4
      %v4256 = vshrl.u32 %v4132, 16
      %v4258 = vrot.slane %v4256, 7
      %v4259 = vshll.u32 %v4132, 16
      %v4261 = vor.u32 %v4258, %v4259
      %v4262 = vsel %vm382, %v4254, %v4261
      %v4263 = vrot.slane %v4258, 4
      %v4265 = vshrl.u32 %v4133, 16
      %v4267 = vrot.slane %v4265, 7
      %v4268 = vshll.u32 %v4133, 16
      %v4270 = vor.u32 %v4267, %v4268
      %v4271 = vsel %vm382, %v4263, %v4270
      %v4273 = vshrl.u32 %v4134, 16
      %v4275 = vrot.slane %v4273, 7
      %v4276 = vrot.slane %v4275, 4
      %v4278 = vshrl.u32 %v4135, 16
      %v4280 = vrot.slane %v4278, 7
      %v4281 = vshll.u32 %v4135, 16
      %v4283 = vor.u32 %v4280, %v4281
      %v4284 = vsel %vm382, %v4276, %v4283
      %v4285 = vrot.slane %v4280, 4
      %v4287 = vshrl.u32 %v4136, 16
      %v4289 = vrot.slane %v4287, 7
      %v4290 = vshll.u32 %v4136, 16
      %v4292 = vor.u32 %v4289, %v4290
      %v4293 = vsel %vm382, %v4285, %v4292
      %v4295 = vshrl.u32 %v4137, 16
      %v4297 = vrot.slane %v4295, 7
      %v4298 = vrot.slane %v4297, 4
      %v4300 = vshrl.u32 %v4138, 16
      %v4302 = vrot.slane %v4300, 7
      %v4303 = vshll.u32 %v4138, 16
      %v4305 = vor.u32 %v4302, %v4303
      %v4306 = vsel %vm382, %v4298, %v4305
      %v4307 = vrot.slane %v4302, 4
      %v4309 = vshrl.u32 %v4139, 16
      %v4311 = vrot.slane %v4309, 7
      %v4312 = vshll.u32 %v4139, 16
      %v4314 = vor.u32 %v4311, %v4312
      %v4315 = vsel %vm382, %v4307, %v4314
      %v4316 = vld [vmem:[%s1461] sm:$0x3]
      %v4317 = vunpack.c.l.b16 %v4152
      %v4318 = vunpack.c.l.b16 %v4161
      %v4319 = vunpack.c.l.b16 %v4174
      %v4320 = vunpack.c.l.b16 %v4183
      %v4321 = vunpack.c.l.b16 %v4196
      %v4322 = vunpack.c.l.b16 %v4205
      %v4323 = vunpack.c.l.b16 %v4218
      %v4324 = vunpack.c.l.b16 %v4227
      %v4325 = vunpack.c.l.b16 %v4240
      %v4326 = vunpack.c.l.b16 %v4249
      %v4327 = vunpack.c.l.b16 %v4262
      %v4328 = vunpack.c.l.b16 %v4271
      %v4329 = vunpack.c.l.b16 %v4284
      %v4330 = vunpack.c.l.b16 %v4293
      %v4331 = vunpack.c.l.b16 %v4306
      %v4332 = vunpack.c.l.b16 %v4315
      %v4333 = vpack.c.b16 %v4318, %v4317
      %v4334 = vpack.c.b16 %v4320, %v4319
      %v4335 = vpack.c.b16 %v4322, %v4321
      %v4336 = vpack.c.b16 %v4324, %v4323
      %v4337 = vpack.c.b16 %v4326, %v4325
      %v4338 = vpack.c.b16 %v4328, %v4327
      %v4339 = vpack.c.b16 %v4330, %v4329
      %v4340 = vpack.c.b16 %v4332, %v4331
      %v4342 = vsel %vm602, %v4333, 0
      %v4345 = vsel %vm602, %v4334, 0
      %v4348 = vsel %vm602, %v4335, 0
      %v4351 = vsel %vm602, %v4336, 0
      %v4354 = vsel %vm602, %v4337, 0
      %v4357 = vsel %vm602, %v4338, 0
      %v4360 = vsel %vm602, %v4339, 0
      %v4363 = vsel %vm602, %v4340, 0
      %v4366 = vsel %vm627, %v4316, 0
      %4368 = vmatprep.subr.bf16.mxu0 0
      %4369 = vmatpush1.bf16.msra.mxu0 0
      %4370 = vmatprep.subr.bf16.mxu0 0
      %4371 = vmatpush1.bf16.msra.mxu0 0
      %4372 = vmatprep.subr.bf16.mxu0 0
      %4373 = vmatpush1.bf16.msra.mxu0 0
      %4374 = vmatprep.subr.bf16.mxu0 0
      %4375 = vmatpush1.bf16.msra.mxu0 0
      %4376 = vmatprep.subr.bf16.mxu0 0
      %4377 = vmatpush1.bf16.msra.mxu0 0
      %4378 = vmatprep.subr.bf16.mxu0 0
      %4379 = vmatpush1.bf16.msra.mxu0 0
      %4380 = vmatprep.subr.bf16.mxu0 0
      %4381 = vmatpush1.bf16.msra.mxu0 0
      %4382 = vmatprep.subr.bf16.mxu0 0
      %4383 = vmatpush1.bf16.msra.mxu0 %v4366
      %4384 = vmatprep.subr.bf16.mxu0 0
      %4385 = vmatpush2.bf16.msra.mxu0 0
      %4386 = vmatprep.subr.bf16.mxu0 0
      %4387 = vmatpush2.bf16.msra.mxu0 0
      %4388 = vmatprep.subr.bf16.mxu0 0
      %4389 = vmatpush2.bf16.msra.mxu0 0
      %4390 = vmatprep.subr.bf16.mxu0 0
      %4391 = vmatpush2.bf16.msra.mxu0 0
      %4392 = vmatprep.subr.bf16.mxu0 0
      %4393 = vmatpush2.bf16.msra.mxu0 0
      %4394 = vmatprep.subr.bf16.mxu0 0
      %4395 = vmatpush2.bf16.msra.mxu0 0
      %4396 = vmatprep.subr.bf16.mxu0 0
      %4397 = vmatpush2.bf16.msra.mxu0 0
      %4398 = vmatprep.subr.bf16.mxu0 0
      %4399 = vmatpush2.bf16.msra.mxu0 0
      %4400 = vmatprep.mubr.bf16.mxu0 0
      %4401 = vmatmul.mubr.bf16.gmra.mxu0 %v4342
      %v4402 = vpop.f32.mrf.mxu0
      %v4403 = vadd.f32 0.0, %v4402
      %v4404 = vpop.f32.mrf.mxu0
      %v4405 = vpop.f32.mrf.mxu0
      %v4406 = vadd.f32 0.0, %v4405
      %v4407 = vpop.f32.mrf.mxu0
      %4408 = vmatprep.mubr.bf16.mxu0 0
      %4409 = vmatmul.mubr.bf16.gmra.mxu0 %v4345
      %v4410 = vpop.f32.mrf.mxu0
      %v4411 = vadd.f32 0.0, %v4410
      %v4412 = vpop.f32.mrf.mxu0
      %v4413 = vpop.f32.mrf.mxu0
      %v4414 = vadd.f32 0.0, %v4413
      %v4415 = vpop.f32.mrf.mxu0
      %4416 = vmatprep.mubr.bf16.mxu0 0
      %4417 = vmatmul.mubr.bf16.gmra.mxu0 %v4348
      %v4418 = vpop.f32.mrf.mxu0
      %v4419 = vadd.f32 0.0, %v4418
      %v4420 = vpop.f32.mrf.mxu0
      %v4421 = vpop.f32.mrf.mxu0
      %v4422 = vadd.f32 0.0, %v4421
      %v4423 = vpop.f32.mrf.mxu0
      %4424 = vmatprep.mubr.bf16.mxu0 0
      %4425 = vmatmul.mubr.bf16.gmra.mxu0 %v4351
      %v4426 = vpop.f32.mrf.mxu0
      %v4427 = vadd.f32 0.0, %v4426
      %v4428 = vpop.f32.mrf.mxu0
      %v4429 = vpop.f32.mrf.mxu0
      %v4430 = vadd.f32 0.0, %v4429
      %v4431 = vpop.f32.mrf.mxu0
      %4432 = vmatprep.mubr.bf16.mxu0 0
      %4433 = vmatmul.mubr.bf16.gmra.mxu0 %v4354
      %v4434 = vpop.f32.mrf.mxu0
      %v4435 = vadd.f32 0.0, %v4434
      %v4436 = vpop.f32.mrf.mxu0
      %v4437 = vpop.f32.mrf.mxu0
      %v4438 = vadd.f32 0.0, %v4437
      %v4439 = vpop.f32.mrf.mxu0
      %4440 = vmatprep.mubr.bf16.mxu0 0
      %4441 = vmatmul.mubr.bf16.gmra.mxu0 %v4357
      %v4442 = vpop.f32.mrf.mxu0
      %v4443 = vadd.f32 0.0, %v4442
      %v4444 = vpop.f32.mrf.mxu0
      %v4445 = vpop.f32.mrf.mxu0
      %v4446 = vadd.f32 0.0, %v4445
      %v4447 = vpop.f32.mrf.mxu0
      %4448 = vmatprep.mubr.bf16.mxu0 0
      %4449 = vmatmul.mubr.bf16.gmra.mxu0 %v4360
      %v4450 = vpop.f32.mrf.mxu0
      %v4451 = vadd.f32 0.0, %v4450
      %v4452 = vpop.f32.mrf.mxu0
      %v4453 = vpop.f32.mrf.mxu0
      %v4454 = vadd.f32 0.0, %v4453
      %v4455 = vpop.f32.mrf.mxu0
      %4456 = vmatprep.mubr.bf16.mxu0 0
      %4457 = vmatmul.mubr.bf16.gmra.mxu0 %v4363
      %v4458 = vpop.f32.mrf.mxu0
      %v4459 = vadd.f32 0.0, %v4458
      %v4460 = vpop.f32.mrf.mxu0
      %v4461 = vpop.f32.mrf.mxu0
      %v4462 = vadd.f32 0.0, %v4461
      %v4463 = vpop.f32.mrf.mxu0
      %4464 = vdwg.mxu0
      %v4465 = vadd.f32 %v4099, %v4403
      %v4466 = vadd.f32 %v4100, %v4406
      %v4467 = vadd.f32 %v4101, %v4411
      %v4468 = vadd.f32 %v4102, %v4414
      %v4469 = vadd.f32 %v4103, %v4419
      %v4470 = vadd.f32 %v4104, %v4422
      %v4471 = vadd.f32 %v4105, %v4427
      %v4472 = vadd.f32 %v4106, %v4430
      %v4473 = vadd.f32 %v4107, %v4435
      %v4474 = vadd.f32 %v4108, %v4438
      %v4475 = vadd.f32 %v4109, %v4443
      %v4476 = vadd.f32 %v4110, %v4446
      %v4477 = vadd.f32 %v4111, %v4451
      %v4478 = vadd.f32 %v4112, %v4454
      %v4479 = vadd.f32 %v4113, %v4459
      %v4480 = vadd.f32 %v4114, %v4462
      %v4481 = vld [vmem:[%s1627] sm:$0x3]
      %v4498 = vunpack.c.l.b16 %v4117
      %v4499 = vunpack.c.l.b16 %v4118
      %v4500 = vunpack.c.l.b16 %v4120
      %v4501 = vunpack.c.l.b16 %v4121
      %v4502 = vunpack.c.l.b16 %v4123
      %v4503 = vunpack.c.l.b16 %v4124
      %v4504 = vunpack.c.l.b16 %v4126
      %v4505 = vunpack.c.l.b16 %v4127
      %v4506 = vunpack.c.l.b16 %v4129
      %v4507 = vunpack.c.l.b16 %v4130
      %v4508 = vunpack.c.l.b16 %v4132
      %v4509 = vunpack.c.l.b16 %v4133
      %v4510 = vunpack.c.l.b16 %v4135
      %v4511 = vunpack.c.l.b16 %v4136
      %v4512 = vunpack.c.l.b16 %v4138
      %v4513 = vunpack.c.l.b16 %v4139
      %v4514 = vpack.c.b16 %v4499, %v4498
      %v4515 = vpack.c.b16 %v4501, %v4500
      %v4516 = vpack.c.b16 %v4503, %v4502
      %v4517 = vpack.c.b16 %v4505, %v4504
      %v4518 = vpack.c.b16 %v4507, %v4506
      %v4519 = vpack.c.b16 %v4509, %v4508
      %v4520 = vpack.c.b16 %v4511, %v4510
      %v4521 = vpack.c.b16 %v4513, %v4512
      %v4523 = vsel %vm602, %v4514, 0
      %v4526 = vsel %vm602, %v4515, 0
      %v4529 = vsel %vm602, %v4516, 0
      %v4532 = vsel %vm602, %v4517, 0
      %v4535 = vsel %vm602, %v4518, 0
      %v4538 = vsel %vm602, %v4519, 0
      %v4541 = vsel %vm602, %v4520, 0
      %v4544 = vsel %vm602, %v4521, 0
      %v4547 = vsel %vm627, %v4481, 0
      %4549 = vmatprep.subr.bf16.mxu0 0
      %4550 = vmatpush1.bf16.msra.mxu0 0
      %4551 = vmatprep.subr.bf16.mxu0 0
      %4552 = vmatpush1.bf16.msra.mxu0 0
      %4553 = vmatprep.subr.bf16.mxu0 0
      %4554 = vmatpush1.bf16.msra.mxu0 0
      %4555 = vmatprep.subr.bf16.mxu0 0
      %4556 = vmatpush1.bf16.msra.mxu0 0
      %4557 = vmatprep.subr.bf16.mxu0 0
      %4558 = vmatpush1.bf16.msra.mxu0 0
      %4559 = vmatprep.subr.bf16.mxu0 0
      %4560 = vmatpush1.bf16.msra.mxu0 0
      %4561 = vmatprep.subr.bf16.mxu0 0
      %4562 = vmatpush1.bf16.msra.mxu0 0
      %4563 = vmatprep.subr.bf16.mxu0 0
      %4564 = vmatpush1.bf16.msra.mxu0 %v4547
      %4565 = vmatprep.subr.bf16.mxu0 0
      %4566 = vmatpush2.bf16.msra.mxu0 0
      %4567 = vmatprep.subr.bf16.mxu0 0
      %4568 = vmatpush2.bf16.msra.mxu0 0
      %4569 = vmatprep.subr.bf16.mxu0 0
      %4570 = vmatpush2.bf16.msra.mxu0 0
      %4571 = vmatprep.subr.bf16.mxu0 0
      %4572 = vmatpush2.bf16.msra.mxu0 0
      %4573 = vmatprep.subr.bf16.mxu0 0
      %4574 = vmatpush2.bf16.msra.mxu0 0
      %4575 = vmatprep.subr.bf16.mxu0 0
      %4576 = vmatpush2.bf16.msra.mxu0 0
      %4577 = vmatprep.subr.bf16.mxu0 0
      %4578 = vmatpush2.bf16.msra.mxu0 0
      %4579 = vmatprep.subr.bf16.mxu0 0
      %4580 = vmatpush2.bf16.msra.mxu0 0
      %4581 = vmatprep.mubr.bf16.mxu0 0
      %4582 = vmatmul.mubr.bf16.gmra.mxu0 %v4523
      %v4583 = vpop.f32.mrf.mxu0
      %v4584 = vadd.f32 0.0, %v4583
      %v4585 = vpop.f32.mrf.mxu0
      %v4586 = vpop.f32.mrf.mxu0
      %v4587 = vadd.f32 0.0, %v4586
      %v4588 = vpop.f32.mrf.mxu0
      %4589 = vmatprep.mubr.bf16.mxu0 0
      %4590 = vmatmul.mubr.bf16.gmra.mxu0 %v4526
      %v4591 = vpop.f32.mrf.mxu0
      %v4592 = vadd.f32 0.0, %v4591
      %v4593 = vpop.f32.mrf.mxu0
      %v4594 = vpop.f32.mrf.mxu0
      %v4595 = vadd.f32 0.0, %v4594
      %v4596 = vpop.f32.mrf.mxu0
      %4597 = vmatprep.mubr.bf16.mxu0 0
      %4598 = vmatmul.mubr.bf16.gmra.mxu0 %v4529
      %v4599 = vpop.f32.mrf.mxu0
      %v4600 = vadd.f32 0.0, %v4599
      %v4601 = vpop.f32.mrf.mxu0
      %v4602 = vpop.f32.mrf.mxu0
      %v4603 = vadd.f32 0.0, %v4602
      %v4604 = vpop.f32.mrf.mxu0
      %4605 = vmatprep.mubr.bf16.mxu0 0
      %4606 = vmatmul.mubr.bf16.gmra.mxu0 %v4532
      %v4607 = vpop.f32.mrf.mxu0
      %v4608 = vadd.f32 0.0, %v4607
      %v4609 = vpop.f32.mrf.mxu0
      %v4610 = vpop.f32.mrf.mxu0
      %v4611 = vadd.f32 0.0, %v4610
      %v4612 = vpop.f32.mrf.mxu0
      %4613 = vmatprep.mubr.bf16.mxu0 0
      %4614 = vmatmul.mubr.bf16.gmra.mxu0 %v4535
      %v4615 = vpop.f32.mrf.mxu0
      %v4616 = vadd.f32 0.0, %v4615
      %v4617 = vpop.f32.mrf.mxu0
      %v4618 = vpop.f32.mrf.mxu0
      %v4619 = vadd.f32 0.0, %v4618
      %v4620 = vpop.f32.mrf.mxu0
      %4621 = vmatprep.mubr.bf16.mxu0 0
      %4622 = vmatmul.mubr.bf16.gmra.mxu0 %v4538
      %v4623 = vpop.f32.mrf.mxu0
      %v4624 = vadd.f32 0.0, %v4623
      %v4625 = vpop.f32.mrf.mxu0
      %v4626 = vpop.f32.mrf.mxu0
      %v4627 = vadd.f32 0.0, %v4626
      %v4628 = vpop.f32.mrf.mxu0
      %4629 = vmatprep.mubr.bf16.mxu0 0
      %4630 = vmatmul.mubr.bf16.gmra.mxu0 %v4541
      %v4631 = vpop.f32.mrf.mxu0
      %v4632 = vadd.f32 0.0, %v4631
      %v4633 = vpop.f32.mrf.mxu0
      %v4634 = vpop.f32.mrf.mxu0
      %v4635 = vadd.f32 0.0, %v4634
      %v4636 = vpop.f32.mrf.mxu0
      %4637 = vmatprep.mubr.bf16.mxu0 0
      %4638 = vmatmul.mubr.bf16.gmra.mxu0 %v4544
      %v4639 = vpop.f32.mrf.mxu0
      %v4640 = vadd.f32 0.0, %v4639
      %v4641 = vpop.f32.mrf.mxu0
      %v4642 = vpop.f32.mrf.mxu0
      %v4643 = vadd.f32 0.0, %v4642
      %v4644 = vpop.f32.mrf.mxu0
      %4645 = vdwg.mxu0
      %v4646 = vadd.f32 %v4465, %v4584
      %v4647 = vadd.f32 %v4466, %v4587
      %v4648 = vadd.f32 %v4467, %v4592
      %v4649 = vadd.f32 %v4468, %v4595
      %v4650 = vadd.f32 %v4469, %v4600
      %v4651 = vadd.f32 %v4470, %v4603
      %v4652 = vadd.f32 %v4471, %v4608
      %v4653 = vadd.f32 %v4472, %v4611
      %v4654 = vadd.f32 %v4473, %v4616
      %v4655 = vadd.f32 %v4474, %v4619
      %v4656 = vadd.f32 %v4475, %v4624
      %v4657 = vadd.f32 %v4476, %v4627
      %v4658 = vadd.f32 %v4477, %v4632
      %v4659 = vadd.f32 %v4478, %v4635
      %v4660 = vadd.f32 %v4479, %v4640
      %v4661 = vadd.f32 %v4480, %v4643
      %v4662 = vld [vmem:[%s4115 + $0x4] sm:$0xf]
      %v4663 = vld [vmem:[%s4115 + $0x8] sm:$0xf]
      %v4664 = vld [vmem:[%s4115 + $0xc] sm:$0x1]
      %v4665 = vld [vmem:[%s4115 + $0x14] sm:$0xf]
      %v4666 = vld [vmem:[%s4115 + $0x18] sm:$0xf]
      %v4667 = vld [vmem:[%s4115 + $0x1c] sm:$0x1]
      %v4668 = vld [vmem:[%s4115 + $0x24] sm:$0xf]
      %v4669 = vld [vmem:[%s4115 + $0x28] sm:$0xf]
      %v4670 = vld [vmem:[%s4115 + $0x2c] sm:$0x1]
      %v4671 = vld [vmem:[%s4115 + $0x34] sm:$0xf]
      %v4672 = vld [vmem:[%s4115 + $0x38] sm:$0xf]
      %v4673 = vld [vmem:[%s4115 + $0x3c] sm:$0x1]
      %v4674 = vld [vmem:[%s4115 + $0x44] sm:$0xf]
      %v4675 = vld [vmem:[%s4115 + $0x48] sm:$0xf]
      %v4676 = vld [vmem:[%s4115 + $0x4c] sm:$0x1]
      %v4677 = vld [vmem:[%s4115 + $0x54] sm:$0xf]
      %v4678 = vld [vmem:[%s4115 + $0x58] sm:$0xf]
      %v4679 = vld [vmem:[%s4115 + $0x5c] sm:$0x1]
      %v4680 = vld [vmem:[%s4115 + $0x64] sm:$0xf]
      %v4681 = vld [vmem:[%s4115 + $0x68] sm:$0xf]
      %v4682 = vld [vmem:[%s4115 + $0x6c] sm:$0x1]
      %v4683 = vld [vmem:[%s4115 + $0x74] sm:$0xf]
      %v4684 = vld [vmem:[%s4115 + $0x78] sm:$0xf]
      %v4685 = vld [vmem:[%s4115 + $0x7c] sm:$0x1]
      %v4687 = vshrl.u32 %v4662, 16
      %v4689 = vrot.slane %v4687, 4
      %v4690 = vshll.u32 %v4662, 16
      %v4692 = vrot.slane %v4690, 5
      %v4693 = vor.u32 %v4689, %v4692
      %v4694 = vrot.slane %v4693, 4
      %v4696 = vshll.u32 %v4663, 16
      %v4698 = vrot.slane %v4696, 5
      %v4699 = vsel %vm902, %v4694, %v4698
      %v4700 = vshrl.u32 %v4663, 16
      %v4702 = vrot.slane %v4700, 4
      %v4703 = vor.u32 %v4702, %v4698
      %v4704 = vrot.slane %v4703, 4
      %v4706 = vshll.u32 %v4664, 16
      %v4708 = vrot.slane %v4706, 5
      %v4709 = vsel %vm902, %v4704, %v4708
      %v4711 = vshrl.u32 %v4665, 16
      %v4713 = vrot.slane %v4711, 4
      %v4714 = vshll.u32 %v4665, 16
      %v4716 = vrot.slane %v4714, 5
      %v4717 = vor.u32 %v4713, %v4716
      %v4718 = vrot.slane %v4717, 4
      %v4720 = vshll.u32 %v4666, 16
      %v4722 = vrot.slane %v4720, 5
      %v4723 = vsel %vm902, %v4718, %v4722
      %v4724 = vshrl.u32 %v4666, 16
      %v4726 = vrot.slane %v4724, 4
      %v4727 = vor.u32 %v4726, %v4722
      %v4728 = vrot.slane %v4727, 4
      %v4730 = vshll.u32 %v4667, 16
      %v4732 = vrot.slane %v4730, 5
      %v4733 = vsel %vm902, %v4728, %v4732
      %v4735 = vshrl.u32 %v4668, 16
      %v4737 = vrot.slane %v4735, 4
      %v4738 = vshll.u32 %v4668, 16
      %v4740 = vrot.slane %v4738, 5
      %v4741 = vor.u32 %v4737, %v4740
      %v4742 = vrot.slane %v4741, 4
      %v4744 = vshll.u32 %v4669, 16
      %v4746 = vrot.slane %v4744, 5
      %v4747 = vsel %vm902, %v4742, %v4746
      %v4748 = vshrl.u32 %v4669, 16
      %v4750 = vrot.slane %v4748, 4
      %v4751 = vor.u32 %v4750, %v4746
      %v4752 = vrot.slane %v4751, 4
      %v4754 = vshll.u32 %v4670, 16
      %v4756 = vrot.slane %v4754, 5
      %v4757 = vsel %vm902, %v4752, %v4756
      %v4759 = vshrl.u32 %v4671, 16
      %v4761 = vrot.slane %v4759, 4
      %v4762 = vshll.u32 %v4671, 16
      %v4764 = vrot.slane %v4762, 5
      %v4765 = vor.u32 %v4761, %v4764
      %v4766 = vrot.slane %v4765, 4
      %v4768 = vshll.u32 %v4672, 16
      %v4770 = vrot.slane %v4768, 5
      %v4771 = vsel %vm902, %v4766, %v4770
      %v4772 = vshrl.u32 %v4672, 16
      %v4774 = vrot.slane %v4772, 4
      %v4775 = vor.u32 %v4774, %v4770
      %v4776 = vrot.slane %v4775, 4
      %v4778 = vshll.u32 %v4673, 16
      %v4780 = vrot.slane %v4778, 5
      %v4781 = vsel %vm902, %v4776, %v4780
      %v4783 = vshrl.u32 %v4674, 16
      %v4785 = vrot.slane %v4783, 4
      %v4786 = vshll.u32 %v4674, 16
      %v4788 = vrot.slane %v4786, 5
      %v4789 = vor.u32 %v4785, %v4788
      %v4790 = vrot.slane %v4789, 4
      %v4792 = vshll.u32 %v4675, 16
      %v4794 = vrot.slane %v4792, 5
      %v4795 = vsel %vm902, %v4790, %v4794
      %v4796 = vshrl.u32 %v4675, 16
      %v4798 = vrot.slane %v4796, 4
      %v4799 = vor.u32 %v4798, %v4794
      %v4800 = vrot.slane %v4799, 4
      %v4802 = vshll.u32 %v4676, 16
      %v4804 = vrot.slane %v4802, 5
      %v4805 = vsel %vm902, %v4800, %v4804
      %v4807 = vshrl.u32 %v4677, 16
      %v4809 = vrot.slane %v4807, 4
      %v4810 = vshll.u32 %v4677, 16
      %v4812 = vrot.slane %v4810, 5
      %v4813 = vor.u32 %v4809, %v4812
      %v4814 = vrot.slane %v4813, 4
      %v4816 = vshll.u32 %v4678, 16
      %v4818 = vrot.slane %v4816, 5
      %v4819 = vsel %vm902, %v4814, %v4818
      %v4820 = vshrl.u32 %v4678, 16
      %v4822 = vrot.slane %v4820, 4
      %v4823 = vor.u32 %v4822, %v4818
      %v4824 = vrot.slane %v4823, 4
      %v4826 = vshll.u32 %v4679, 16
      %v4828 = vrot.slane %v4826, 5
      %v4829 = vsel %vm902, %v4824, %v4828
      %v4831 = vshrl.u32 %v4680, 16
      %v4833 = vrot.slane %v4831, 4
      %v4834 = vshll.u32 %v4680, 16
      %v4836 = vrot.slane %v4834, 5
      %v4837 = vor.u32 %v4833, %v4836
      %v4838 = vrot.slane %v4837, 4
      %v4840 = vshll.u32 %v4681, 16
      %v4842 = vrot.slane %v4840, 5
      %v4843 = vsel %vm902, %v4838, %v4842
      %v4844 = vshrl.u32 %v4681, 16
      %v4846 = vrot.slane %v4844, 4
      %v4847 = vor.u32 %v4846, %v4842
      %v4848 = vrot.slane %v4847, 4
      %v4850 = vshll.u32 %v4682, 16
      %v4852 = vrot.slane %v4850, 5
      %v4853 = vsel %vm902, %v4848, %v4852
      %v4855 = vshrl.u32 %v4683, 16
      %v4857 = vrot.slane %v4855, 4
      %v4858 = vshll.u32 %v4683, 16
      %v4860 = vrot.slane %v4858, 5
      %v4861 = vor.u32 %v4857, %v4860
      %v4862 = vrot.slane %v4861, 4
      %v4864 = vshll.u32 %v4684, 16
      %v4866 = vrot.slane %v4864, 5
      %v4867 = vsel %vm902, %v4862, %v4866
      %v4868 = vshrl.u32 %v4684, 16
      %v4870 = vrot.slane %v4868, 4
      %v4871 = vor.u32 %v4870, %v4866
      %v4872 = vrot.slane %v4871, 4
      %v4874 = vshll.u32 %v4685, 16
      %v4876 = vrot.slane %v4874, 5
      %v4877 = vsel %vm902, %v4872, %v4876
      %v4878 = vld [vmem:[%s2025] sm:$0x3]
      %v4879 = vunpack.c.l.b16 %v4699
      %v4880 = vunpack.c.l.b16 %v4709
      %v4881 = vunpack.c.l.b16 %v4723
      %v4882 = vunpack.c.l.b16 %v4733
      %v4883 = vunpack.c.l.b16 %v4747
      %v4884 = vunpack.c.l.b16 %v4757
      %v4885 = vunpack.c.l.b16 %v4771
      %v4886 = vunpack.c.l.b16 %v4781
      %v4887 = vunpack.c.l.b16 %v4795
      %v4888 = vunpack.c.l.b16 %v4805
      %v4889 = vunpack.c.l.b16 %v4819
      %v4890 = vunpack.c.l.b16 %v4829
      %v4891 = vunpack.c.l.b16 %v4843
      %v4892 = vunpack.c.l.b16 %v4853
      %v4893 = vunpack.c.l.b16 %v4867
      %v4894 = vunpack.c.l.b16 %v4877
      %v4895 = vpack.c.b16 %v4880, %v4879
      %v4896 = vpack.c.b16 %v4882, %v4881
      %v4897 = vpack.c.b16 %v4884, %v4883
      %v4898 = vpack.c.b16 %v4886, %v4885
      %v4899 = vpack.c.b16 %v4888, %v4887
      %v4900 = vpack.c.b16 %v4890, %v4889
      %v4901 = vpack.c.b16 %v4892, %v4891
      %v4902 = vpack.c.b16 %v4894, %v4893
      %v4904 = vsel %vm602, %v4895, 0
      %v4907 = vsel %vm602, %v4896, 0
      %v4910 = vsel %vm602, %v4897, 0
      %v4913 = vsel %vm602, %v4898, 0
      %v4916 = vsel %vm602, %v4899, 0
      %v4919 = vsel %vm602, %v4900, 0
      %v4922 = vsel %vm602, %v4901, 0
      %v4925 = vsel %vm602, %v4902, 0
      %v4928 = vsel %vm627, %v4878, 0
      %4930 = vmatprep.subr.bf16.mxu0 0
      %4931 = vmatpush1.bf16.msra.mxu0 0
      %4932 = vmatprep.subr.bf16.mxu0 0
      %4933 = vmatpush1.bf16.msra.mxu0 0
      %4934 = vmatprep.subr.bf16.mxu0 0
      %4935 = vmatpush1.bf16.msra.mxu0 0
      %4936 = vmatprep.subr.bf16.mxu0 0
      %4937 = vmatpush1.bf16.msra.mxu0 0
      %4938 = vmatprep.subr.bf16.mxu0 0
      %4939 = vmatpush1.bf16.msra.mxu0 0
      %4940 = vmatprep.subr.bf16.mxu0 0
      %4941 = vmatpush1.bf16.msra.mxu0 0
      %4942 = vmatprep.subr.bf16.mxu0 0
      %4943 = vmatpush1.bf16.msra.mxu0 0
      %4944 = vmatprep.subr.bf16.mxu0 0
      %4945 = vmatpush1.bf16.msra.mxu0 %v4928
      %4946 = vmatprep.subr.bf16.mxu0 0
      %4947 = vmatpush2.bf16.msra.mxu0 0
      %4948 = vmatprep.subr.bf16.mxu0 0
      %4949 = vmatpush2.bf16.msra.mxu0 0
      %4950 = vmatprep.subr.bf16.mxu0 0
      %4951 = vmatpush2.bf16.msra.mxu0 0
      %4952 = vmatprep.subr.bf16.mxu0 0
      %4953 = vmatpush2.bf16.msra.mxu0 0
      %4954 = vmatprep.subr.bf16.mxu0 0
      %4955 = vmatpush2.bf16.msra.mxu0 0
      %4956 = vmatprep.subr.bf16.mxu0 0
      %4957 = vmatpush2.bf16.msra.mxu0 0
      %4958 = vmatprep.subr.bf16.mxu0 0
      %4959 = vmatpush2.bf16.msra.mxu0 0
      %4960 = vmatprep.subr.bf16.mxu0 0
      %4961 = vmatpush2.bf16.msra.mxu0 0
      %4962 = vmatprep.mubr.bf16.mxu0 0
      %4963 = vmatmul.mubr.bf16.gmra.mxu0 %v4904
      %v4964 = vpop.f32.mrf.mxu0
      %v4965 = vadd.f32 0.0, %v4964
      %v4966 = vpop.f32.mrf.mxu0
      %v4967 = vpop.f32.mrf.mxu0
      %v4968 = vadd.f32 0.0, %v4967
      %v4969 = vpop.f32.mrf.mxu0
      %4970 = vmatprep.mubr.bf16.mxu0 0
      %4971 = vmatmul.mubr.bf16.gmra.mxu0 %v4907
      %v4972 = vpop.f32.mrf.mxu0
      %v4973 = vadd.f32 0.0, %v4972
      %v4974 = vpop.f32.mrf.mxu0
      %v4975 = vpop.f32.mrf.mxu0
      %v4976 = vadd.f32 0.0, %v4975
      %v4977 = vpop.f32.mrf.mxu0
      %4978 = vmatprep.mubr.bf16.mxu0 0
      %4979 = vmatmul.mubr.bf16.gmra.mxu0 %v4910
      %v4980 = vpop.f32.mrf.mxu0
      %v4981 = vadd.f32 0.0, %v4980
      %v4982 = vpop.f32.mrf.mxu0
      %v4983 = vpop.f32.mrf.mxu0
      %v4984 = vadd.f32 0.0, %v4983
      %v4985 = vpop.f32.mrf.mxu0
      %4986 = vmatprep.mubr.bf16.mxu0 0
      %4987 = vmatmul.mubr.bf16.gmra.mxu0 %v4913
      %v4988 = vpop.f32.mrf.mxu0
      %v4989 = vadd.f32 0.0, %v4988
      %v4990 = vpop.f32.mrf.mxu0
      %v4991 = vpop.f32.mrf.mxu0
      %v4992 = vadd.f32 0.0, %v4991
      %v4993 = vpop.f32.mrf.mxu0
      %4994 = vmatprep.mubr.bf16.mxu0 0
      %4995 = vmatmul.mubr.bf16.gmra.mxu0 %v4916
      %v4996 = vpop.f32.mrf.mxu0
      %v4997 = vadd.f32 0.0, %v4996
      %v4998 = vpop.f32.mrf.mxu0
      %v4999 = vpop.f32.mrf.mxu0
      %v5000 = vadd.f32 0.0, %v4999
      %v5001 = vpop.f32.mrf.mxu0
      %5002 = vmatprep.mubr.bf16.mxu0 0
      %5003 = vmatmul.mubr.bf16.gmra.mxu0 %v4919
      %v5004 = vpop.f32.mrf.mxu0
      %v5005 = vadd.f32 0.0, %v5004
      %v5006 = vpop.f32.mrf.mxu0
      %v5007 = vpop.f32.mrf.mxu0
      %v5008 = vadd.f32 0.0, %v5007
      %v5009 = vpop.f32.mrf.mxu0
      %5010 = vmatprep.mubr.bf16.mxu0 0
      %5011 = vmatmul.mubr.bf16.gmra.mxu0 %v4922
      %v5012 = vpop.f32.mrf.mxu0
      %v5013 = vadd.f32 0.0, %v5012
      %v5014 = vpop.f32.mrf.mxu0
      %v5015 = vpop.f32.mrf.mxu0
      %v5016 = vadd.f32 0.0, %v5015
      %v5017 = vpop.f32.mrf.mxu0
      %5018 = vmatprep.mubr.bf16.mxu0 0
      %5019 = vmatmul.mubr.bf16.gmra.mxu0 %v4925
      %v5020 = vpop.f32.mrf.mxu0
      %v5021 = vadd.f32 0.0, %v5020
      %v5022 = vpop.f32.mrf.mxu0
      %v5023 = vpop.f32.mrf.mxu0
      %v5024 = vadd.f32 0.0, %v5023
      %v5025 = vpop.f32.mrf.mxu0
      %5026 = vdwg.mxu0
      %v5027 = vadd.f32 %v4646, %v4965
      %v5028 = vadd.f32 %v4647, %v4968
      %v5029 = vadd.f32 %v4648, %v4973
      %v5030 = vadd.f32 %v4649, %v4976
      %v5031 = vadd.f32 %v4650, %v4981
      %v5032 = vadd.f32 %v4651, %v4984
      %v5033 = vadd.f32 %v4652, %v4989
      %v5034 = vadd.f32 %v4653, %v4992
      %v5035 = vadd.f32 %v4654, %v4997
      %v5036 = vadd.f32 %v4655, %v5000
      %v5037 = vadd.f32 %v4656, %v5005
      %v5038 = vadd.f32 %v4657, %v5008
      %v5039 = vadd.f32 %v4658, %v5013
      %v5040 = vadd.f32 %v4659, %v5016
      %v5041 = vadd.f32 %v4660, %v5021
      %v5042 = vadd.f32 %v4661, %v5024
      %s5043 = scalar_lea.vmem [#allocation2], 160
      %v5044 = vld [vmem:[%s5043] sm:$0x8]
      %v5045 = vld [vmem:[%s5043 + $0x4] sm:$0xf]
      %v5046 = vld [vmem:[%s5043 + $0x8] sm:$0xf]
      %v5047 = vld [vmem:[%s5043 + $0x10] sm:$0x8]
      %v5048 = vld [vmem:[%s5043 + $0x14] sm:$0xf]
      %v5049 = vld [vmem:[%s5043 + $0x18] sm:$0xf]
      %v5050 = vld [vmem:[%s5043 + $0x20] sm:$0x8]
      %v5051 = vld [vmem:[%s5043 + $0x24] sm:$0xf]
      %v5052 = vld [vmem:[%s5043 + $0x28] sm:$0xf]
      %v5053 = vld [vmem:[%s5043 + $0x30] sm:$0x8]
      %v5054 = vld [vmem:[%s5043 + $0x34] sm:$0xf]
      %v5055 = vld [vmem:[%s5043 + $0x38] sm:$0xf]
      %v5056 = vld [vmem:[%s5043 + $0x40] sm:$0x8]
      %v5057 = vld [vmem:[%s5043 + $0x44] sm:$0xf]
      %v5058 = vld [vmem:[%s5043 + $0x48] sm:$0xf]
      %v5059 = vld [vmem:[%s5043 + $0x50] sm:$0x8]
      %v5060 = vld [vmem:[%s5043 + $0x54] sm:$0xf]
      %v5061 = vld [vmem:[%s5043 + $0x58] sm:$0xf]
      %v5062 = vld [vmem:[%s5043 + $0x60] sm:$0x8]
      %v5063 = vld [vmem:[%s5043 + $0x64] sm:$0xf]
      %v5064 = vld [vmem:[%s5043 + $0x68] sm:$0xf]
      %v5065 = vld [vmem:[%s5043 + $0x70] sm:$0x8]
      %v5066 = vld [vmem:[%s5043 + $0x74] sm:$0xf]
      %v5067 = vld [vmem:[%s5043 + $0x78] sm:$0xf]
      %v5069 = vshrl.u32 %v5044, 16
      %v5071 = vrot.slane %v5069, 7
      %v5072 = vrot.slane %v5071, 4
      %v5074 = vshrl.u32 %v5045, 16
      %v5076 = vrot.slane %v5074, 7
      %v5077 = vshll.u32 %v5045, 16
      %v5079 = vor.u32 %v5076, %v5077
      %v5080 = vsel %vm382, %v5072, %v5079
      %v5081 = vrot.slane %v5076, 4
      %v5083 = vshrl.u32 %v5046, 16
      %v5085 = vrot.slane %v5083, 7
      %v5086 = vshll.u32 %v5046, 16
      %v5088 = vor.u32 %v5085, %v5086
      %v5089 = vsel %vm382, %v5081, %v5088
      %v5091 = vshrl.u32 %v5047, 16
      %v5093 = vrot.slane %v5091, 7
      %v5094 = vrot.slane %v5093, 4
      %v5096 = vshrl.u32 %v5048, 16
      %v5098 = vrot.slane %v5096, 7
      %v5099 = vshll.u32 %v5048, 16
      %v5101 = vor.u32 %v5098, %v5099
      %v5102 = vsel %vm382, %v5094, %v5101
      %v5103 = vrot.slane %v5098, 4
      %v5105 = vshrl.u32 %v5049, 16
      %v5107 = vrot.slane %v5105, 7
      %v5108 = vshll.u32 %v5049, 16
      %v5110 = vor.u32 %v5107, %v5108
      %v5111 = vsel %vm382, %v5103, %v5110
      %v5113 = vshrl.u32 %v5050, 16
      %v5115 = vrot.slane %v5113, 7
      %v5116 = vrot.slane %v5115, 4
      %v5118 = vshrl.u32 %v5051, 16
      %v5120 = vrot.slane %v5118, 7
      %v5121 = vshll.u32 %v5051, 16
      %v5123 = vor.u32 %v5120, %v5121
      %v5124 = vsel %vm382, %v5116, %v5123
      %v5125 = vrot.slane %v5120, 4
      %v5127 = vshrl.u32 %v5052, 16
      %v5129 = vrot.slane %v5127, 7
      %v5130 = vshll.u32 %v5052, 16
      %v5132 = vor.u32 %v5129, %v5130
      %v5133 = vsel %vm382, %v5125, %v5132
      %v5135 = vshrl.u32 %v5053, 16
      %v5137 = vrot.slane %v5135, 7
      %v5138 = vrot.slane %v5137, 4
      %v5140 = vshrl.u32 %v5054, 16
      %v5142 = vrot.slane %v5140, 7
      %v5143 = vshll.u32 %v5054, 16
      %v5145 = vor.u32 %v5142, %v5143
      %v5146 = vsel %vm382, %v5138, %v5145
      %v5147 = vrot.slane %v5142, 4
      %v5149 = vshrl.u32 %v5055, 16
      %v5151 = vrot.slane %v5149, 7
      %v5152 = vshll.u32 %v5055, 16
      %v5154 = vor.u32 %v5151, %v5152
      %v5155 = vsel %vm382, %v5147, %v5154
      %v5157 = vshrl.u32 %v5056, 16
      %v5159 = vrot.slane %v5157, 7
      %v5160 = vrot.slane %v5159, 4
      %v5162 = vshrl.u32 %v5057, 16
      %v5164 = vrot.slane %v5162, 7
      %v5165 = vshll.u32 %v5057, 16
      %v5167 = vor.u32 %v5164, %v5165
      %v5168 = vsel %vm382, %v5160, %v5167
      %v5169 = vrot.slane %v5164, 4
      %v5171 = vshrl.u32 %v5058, 16
      %v5173 = vrot.slane %v5171, 7
      %v5174 = vshll.u32 %v5058, 16
      %v5176 = vor.u32 %v5173, %v5174
      %v5177 = vsel %vm382, %v5169, %v5176
      %v5179 = vshrl.u32 %v5059, 16
      %v5181 = vrot.slane %v5179, 7
      %v5182 = vrot.slane %v5181, 4
      %v5184 = vshrl.u32 %v5060, 16
      %v5186 = vrot.slane %v5184, 7
      %v5187 = vshll.u32 %v5060, 16
      %v5189 = vor.u32 %v5186, %v5187
      %v5190 = vsel %vm382, %v5182, %v5189
      %v5191 = vrot.slane %v5186, 4
      %v5193 = vshrl.u32 %v5061, 16
      %v5195 = vrot.slane %v5193, 7
      %v5196 = vshll.u32 %v5061, 16
      %v5198 = vor.u32 %v5195, %v5196
      %v5199 = vsel %vm382, %v5191, %v5198
      %v5201 = vshrl.u32 %v5062, 16
      %v5203 = vrot.slane %v5201, 7
      %v5204 = vrot.slane %v5203, 4
      %v5206 = vshrl.u32 %v5063, 16
      %v5208 = vrot.slane %v5206, 7
      %v5209 = vshll.u32 %v5063, 16
      %v5211 = vor.u32 %v5208, %v5209
      %v5212 = vsel %vm382, %v5204, %v5211
      %v5213 = vrot.slane %v5208, 4
      %v5215 = vshrl.u32 %v5064, 16
      %v5217 = vrot.slane %v5215, 7
      %v5218 = vshll.u32 %v5064, 16
      %v5220 = vor.u32 %v5217, %v5218
      %v5221 = vsel %vm382, %v5213, %v5220
      %v5223 = vshrl.u32 %v5065, 16
      %v5225 = vrot.slane %v5223, 7
      %v5226 = vrot.slane %v5225, 4
      %v5228 = vshrl.u32 %v5066, 16
      %v5230 = vrot.slane %v5228, 7
      %v5231 = vshll.u32 %v5066, 16
      %v5233 = vor.u32 %v5230, %v5231
      %v5234 = vsel %vm382, %v5226, %v5233
      %v5235 = vrot.slane %v5230, 4
      %v5237 = vshrl.u32 %v5067, 16
      %v5239 = vrot.slane %v5237, 7
      %v5240 = vshll.u32 %v5067, 16
      %v5242 = vor.u32 %v5239, %v5240
      %v5243 = vsel %vm382, %v5235, %v5242
      %v5244 = vld [vmem:[%s2392] sm:$0x3]
      %v5245 = vunpack.c.l.b16 %v5080
      %v5246 = vunpack.c.l.b16 %v5089
      %v5247 = vunpack.c.l.b16 %v5102
      %v5248 = vunpack.c.l.b16 %v5111
      %v5249 = vunpack.c.l.b16 %v5124
      %v5250 = vunpack.c.l.b16 %v5133
      %v5251 = vunpack.c.l.b16 %v5146
      %v5252 = vunpack.c.l.b16 %v5155
      %v5253 = vunpack.c.l.b16 %v5168
      %v5254 = vunpack.c.l.b16 %v5177
      %v5255 = vunpack.c.l.b16 %v5190
      %v5256 = vunpack.c.l.b16 %v5199
      %v5257 = vunpack.c.l.b16 %v5212
      %v5258 = vunpack.c.l.b16 %v5221
      %v5259 = vunpack.c.l.b16 %v5234
      %v5260 = vunpack.c.l.b16 %v5243
      %v5261 = vpack.c.b16 %v5246, %v5245
      %v5262 = vpack.c.b16 %v5248, %v5247
      %v5263 = vpack.c.b16 %v5250, %v5249
      %v5264 = vpack.c.b16 %v5252, %v5251
      %v5265 = vpack.c.b16 %v5254, %v5253
      %v5266 = vpack.c.b16 %v5256, %v5255
      %v5267 = vpack.c.b16 %v5258, %v5257
      %v5268 = vpack.c.b16 %v5260, %v5259
      %v5270 = vsel %vm602, %v5261, 0
      %v5273 = vsel %vm602, %v5262, 0
      %v5276 = vsel %vm602, %v5263, 0
      %v5279 = vsel %vm602, %v5264, 0
      %v5282 = vsel %vm602, %v5265, 0
      %v5285 = vsel %vm602, %v5266, 0
      %v5288 = vsel %vm602, %v5267, 0
      %v5291 = vsel %vm602, %v5268, 0
      %v5294 = vsel %vm627, %v5244, 0
      %5296 = vmatprep.subr.bf16.mxu0 0
      %5297 = vmatpush1.bf16.msra.mxu0 0
      %5298 = vmatprep.subr.bf16.mxu0 0
      %5299 = vmatpush1.bf16.msra.mxu0 0
      %5300 = vmatprep.subr.bf16.mxu0 0
      %5301 = vmatpush1.bf16.msra.mxu0 0
      %5302 = vmatprep.subr.bf16.mxu0 0
      %5303 = vmatpush1.bf16.msra.mxu0 0
      %5304 = vmatprep.subr.bf16.mxu0 0
      %5305 = vmatpush1.bf16.msra.mxu0 0
      %5306 = vmatprep.subr.bf16.mxu0 0
      %5307 = vmatpush1.bf16.msra.mxu0 0
      %5308 = vmatprep.subr.bf16.mxu0 0
      %5309 = vmatpush1.bf16.msra.mxu0 0
      %5310 = vmatprep.subr.bf16.mxu0 0
      %5311 = vmatpush1.bf16.msra.mxu0 %v5294
      %5312 = vmatprep.subr.bf16.mxu0 0
      %5313 = vmatpush2.bf16.msra.mxu0 0
      %5314 = vmatprep.subr.bf16.mxu0 0
      %5315 = vmatpush2.bf16.msra.mxu0 0
      %5316 = vmatprep.subr.bf16.mxu0 0
      %5317 = vmatpush2.bf16.msra.mxu0 0
      %5318 = vmatprep.subr.bf16.mxu0 0
      %5319 = vmatpush2.bf16.msra.mxu0 0
      %5320 = vmatprep.subr.bf16.mxu0 0
      %5321 = vmatpush2.bf16.msra.mxu0 0
      %5322 = vmatprep.subr.bf16.mxu0 0
      %5323 = vmatpush2.bf16.msra.mxu0 0
      %5324 = vmatprep.subr.bf16.mxu0 0
      %5325 = vmatpush2.bf16.msra.mxu0 0
      %5326 = vmatprep.subr.bf16.mxu0 0
      %5327 = vmatpush2.bf16.msra.mxu0 0
      %5328 = vmatprep.mubr.bf16.mxu0 0
      %5329 = vmatmul.mubr.bf16.gmra.mxu0 %v5270
      %v5330 = vpop.f32.mrf.mxu0
      %v5331 = vadd.f32 0.0, %v5330
      %v5332 = vpop.f32.mrf.mxu0
      %v5333 = vpop.f32.mrf.mxu0
      %v5334 = vadd.f32 0.0, %v5333
      %v5335 = vpop.f32.mrf.mxu0
      %5336 = vmatprep.mubr.bf16.mxu0 0
      %5337 = vmatmul.mubr.bf16.gmra.mxu0 %v5273
      %v5338 = vpop.f32.mrf.mxu0
      %v5339 = vadd.f32 0.0, %v5338
      %v5340 = vpop.f32.mrf.mxu0
      %v5341 = vpop.f32.mrf.mxu0
      %v5342 = vadd.f32 0.0, %v5341
      %v5343 = vpop.f32.mrf.mxu0
      %5344 = vmatprep.mubr.bf16.mxu0 0
      %5345 = vmatmul.mubr.bf16.gmra.mxu0 %v5276
      %v5346 = vpop.f32.mrf.mxu0
      %v5347 = vadd.f32 0.0, %v5346
      %v5348 = vpop.f32.mrf.mxu0
      %v5349 = vpop.f32.mrf.mxu0
      %v5350 = vadd.f32 0.0, %v5349
      %v5351 = vpop.f32.mrf.mxu0
      %5352 = vmatprep.mubr.bf16.mxu0 0
      %5353 = vmatmul.mubr.bf16.gmra.mxu0 %v5279
      %v5354 = vpop.f32.mrf.mxu0
      %v5355 = vadd.f32 0.0, %v5354
      %v5356 = vpop.f32.mrf.mxu0
      %v5357 = vpop.f32.mrf.mxu0
      %v5358 = vadd.f32 0.0, %v5357
      %v5359 = vpop.f32.mrf.mxu0
      %5360 = vmatprep.mubr.bf16.mxu0 0
      %5361 = vmatmul.mubr.bf16.gmra.mxu0 %v5282
      %v5362 = vpop.f32.mrf.mxu0
      %v5363 = vadd.f32 0.0, %v5362
      %v5364 = vpop.f32.mrf.mxu0
      %v5365 = vpop.f32.mrf.mxu0
      %v5366 = vadd.f32 0.0, %v5365
      %v5367 = vpop.f32.mrf.mxu0
      %5368 = vmatprep.mubr.bf16.mxu0 0
      %5369 = vmatmul.mubr.bf16.gmra.mxu0 %v5285
      %v5370 = vpop.f32.mrf.mxu0
      %v5371 = vadd.f32 0.0, %v5370
      %v5372 = vpop.f32.mrf.mxu0
      %v5373 = vpop.f32.mrf.mxu0
      %v5374 = vadd.f32 0.0, %v5373
      %v5375 = vpop.f32.mrf.mxu0
      %5376 = vmatprep.mubr.bf16.mxu0 0
      %5377 = vmatmul.mubr.bf16.gmra.mxu0 %v5288
      %v5378 = vpop.f32.mrf.mxu0
      %v5379 = vadd.f32 0.0, %v5378
      %v5380 = vpop.f32.mrf.mxu0
      %v5381 = vpop.f32.mrf.mxu0
      %v5382 = vadd.f32 0.0, %v5381
      %v5383 = vpop.f32.mrf.mxu0
      %5384 = vmatprep.mubr.bf16.mxu0 0
      %5385 = vmatmul.mubr.bf16.gmra.mxu0 %v5291
      %v5386 = vpop.f32.mrf.mxu0
      %v5387 = vadd.f32 0.0, %v5386
      %v5388 = vpop.f32.mrf.mxu0
      %v5389 = vpop.f32.mrf.mxu0
      %v5390 = vadd.f32 0.0, %v5389
      %v5391 = vpop.f32.mrf.mxu0
      %5392 = vdwg.mxu0
      %v5393 = vadd.f32 %v5027, %v5331
      %v5394 = vadd.f32 %v5028, %v5334
      %v5395 = vadd.f32 %v5029, %v5339
      %v5396 = vadd.f32 %v5030, %v5342
      %v5397 = vadd.f32 %v5031, %v5347
      %v5398 = vadd.f32 %v5032, %v5350
      %v5399 = vadd.f32 %v5033, %v5355
      %v5400 = vadd.f32 %v5034, %v5358
      %v5401 = vadd.f32 %v5035, %v5363
      %v5402 = vadd.f32 %v5036, %v5366
      %v5403 = vadd.f32 %v5037, %v5371
      %v5404 = vadd.f32 %v5038, %v5374
      %v5405 = vadd.f32 %v5039, %v5379
      %v5406 = vadd.f32 %v5040, %v5382
      %v5407 = vadd.f32 %v5041, %v5387
      %v5408 = vadd.f32 %v5042, %v5390
      %v5409 = vld [vmem:[%s2558] sm:$0x3]
      %v5426 = vunpack.c.l.b16 %v5045
      %v5427 = vunpack.c.l.b16 %v5046
      %v5428 = vunpack.c.l.b16 %v5048
      %v5429 = vunpack.c.l.b16 %v5049
      %v5430 = vunpack.c.l.b16 %v5051
      %v5431 = vunpack.c.l.b16 %v5052
      %v5432 = vunpack.c.l.b16 %v5054
      %v5433 = vunpack.c.l.b16 %v5055
      %v5434 = vunpack.c.l.b16 %v5057
      %v5435 = vunpack.c.l.b16 %v5058
      %v5436 = vunpack.c.l.b16 %v5060
      %v5437 = vunpack.c.l.b16 %v5061
      %v5438 = vunpack.c.l.b16 %v5063
      %v5439 = vunpack.c.l.b16 %v5064
      %v5440 = vunpack.c.l.b16 %v5066
      %v5441 = vunpack.c.l.b16 %v5067
      %v5442 = vpack.c.b16 %v5427, %v5426
      %v5443 = vpack.c.b16 %v5429, %v5428
      %v5444 = vpack.c.b16 %v5431, %v5430
      %v5445 = vpack.c.b16 %v5433, %v5432
      %v5446 = vpack.c.b16 %v5435, %v5434
      %v5447 = vpack.c.b16 %v5437, %v5436
      %v5448 = vpack.c.b16 %v5439, %v5438
      %v5449 = vpack.c.b16 %v5441, %v5440
      %v5451 = vsel %vm602, %v5442, 0
      %v5454 = vsel %vm602, %v5443, 0
      %v5457 = vsel %vm602, %v5444, 0
      %v5460 = vsel %vm602, %v5445, 0
      %v5463 = vsel %vm602, %v5446, 0
      %v5466 = vsel %vm602, %v5447, 0
      %v5469 = vsel %vm602, %v5448, 0
      %v5472 = vsel %vm602, %v5449, 0
      %v5475 = vsel %vm627, %v5409, 0
      %5477 = vmatprep.subr.bf16.mxu0 0
      %5478 = vmatpush1.bf16.msra.mxu0 0
      %5479 = vmatprep.subr.bf16.mxu0 0
      %5480 = vmatpush1.bf16.msra.mxu0 0
      %5481 = vmatprep.subr.bf16.mxu0 0
      %5482 = vmatpush1.bf16.msra.mxu0 0
      %5483 = vmatprep.subr.bf16.mxu0 0
      %5484 = vmatpush1.bf16.msra.mxu0 0
      %5485 = vmatprep.subr.bf16.mxu0 0
      %5486 = vmatpush1.bf16.msra.mxu0 0
      %5487 = vmatprep.subr.bf16.mxu0 0
      %5488 = vmatpush1.bf16.msra.mxu0 0
      %5489 = vmatprep.subr.bf16.mxu0 0
      %5490 = vmatpush1.bf16.msra.mxu0 0
      %5491 = vmatprep.subr.bf16.mxu0 0
      %5492 = vmatpush1.bf16.msra.mxu0 %v5475
      %5493 = vmatprep.subr.bf16.mxu0 0
      %5494 = vmatpush2.bf16.msra.mxu0 0
      %5495 = vmatprep.subr.bf16.mxu0 0
      %5496 = vmatpush2.bf16.msra.mxu0 0
      %5497 = vmatprep.subr.bf16.mxu0 0
      %5498 = vmatpush2.bf16.msra.mxu0 0
      %5499 = vmatprep.subr.bf16.mxu0 0
      %5500 = vmatpush2.bf16.msra.mxu0 0
      %5501 = vmatprep.subr.bf16.mxu0 0
      %5502 = vmatpush2.bf16.msra.mxu0 0
      %5503 = vmatprep.subr.bf16.mxu0 0
      %5504 = vmatpush2.bf16.msra.mxu0 0
      %5505 = vmatprep.subr.bf16.mxu0 0
      %5506 = vmatpush2.bf16.msra.mxu0 0
      %5507 = vmatprep.subr.bf16.mxu0 0
      %5508 = vmatpush2.bf16.msra.mxu0 0
      %5509 = vmatprep.mubr.bf16.mxu0 0
      %5510 = vmatmul.mubr.bf16.gmra.mxu0 %v5451
      %v5511 = vpop.f32.mrf.mxu0
      %v5512 = vadd.f32 0.0, %v5511
      %v5513 = vpop.f32.mrf.mxu0
      %v5514 = vpop.f32.mrf.mxu0
      %v5515 = vadd.f32 0.0, %v5514
      %v5516 = vpop.f32.mrf.mxu0
      %5517 = vmatprep.mubr.bf16.mxu0 0
      %5518 = vmatmul.mubr.bf16.gmra.mxu0 %v5454
      %v5519 = vpop.f32.mrf.mxu0
      %v5520 = vadd.f32 0.0, %v5519
      %v5521 = vpop.f32.mrf.mxu0
      %v5522 = vpop.f32.mrf.mxu0
      %v5523 = vadd.f32 0.0, %v5522
      %v5524 = vpop.f32.mrf.mxu0
      %5525 = vmatprep.mubr.bf16.mxu0 0
      %5526 = vmatmul.mubr.bf16.gmra.mxu0 %v5457
      %v5527 = vpop.f32.mrf.mxu0
      %v5528 = vadd.f32 0.0, %v5527
      %v5529 = vpop.f32.mrf.mxu0
      %v5530 = vpop.f32.mrf.mxu0
      %v5531 = vadd.f32 0.0, %v5530
      %v5532 = vpop.f32.mrf.mxu0
      %5533 = vmatprep.mubr.bf16.mxu0 0
      %5534 = vmatmul.mubr.bf16.gmra.mxu0 %v5460
      %v5535 = vpop.f32.mrf.mxu0
      %v5536 = vadd.f32 0.0, %v5535
      %v5537 = vpop.f32.mrf.mxu0
      %v5538 = vpop.f32.mrf.mxu0
      %v5539 = vadd.f32 0.0, %v5538
      %v5540 = vpop.f32.mrf.mxu0
      %5541 = vmatprep.mubr.bf16.mxu0 0
      %5542 = vmatmul.mubr.bf16.gmra.mxu0 %v5463
      %v5543 = vpop.f32.mrf.mxu0
      %v5544 = vadd.f32 0.0, %v5543
      %v5545 = vpop.f32.mrf.mxu0
      %v5546 = vpop.f32.mrf.mxu0
      %v5547 = vadd.f32 0.0, %v5546
      %v5548 = vpop.f32.mrf.mxu0
      %5549 = vmatprep.mubr.bf16.mxu0 0
      %5550 = vmatmul.mubr.bf16.gmra.mxu0 %v5466
      %v5551 = vpop.f32.mrf.mxu0
      %v5552 = vadd.f32 0.0, %v5551
      %v5553 = vpop.f32.mrf.mxu0
      %v5554 = vpop.f32.mrf.mxu0
      %v5555 = vadd.f32 0.0, %v5554
      %v5556 = vpop.f32.mrf.mxu0
      %5557 = vmatprep.mubr.bf16.mxu0 0
      %5558 = vmatmul.mubr.bf16.gmra.mxu0 %v5469
      %v5559 = vpop.f32.mrf.mxu0
      %v5560 = vadd.f32 0.0, %v5559
      %v5561 = vpop.f32.mrf.mxu0
      %v5562 = vpop.f32.mrf.mxu0
      %v5563 = vadd.f32 0.0, %v5562
      %v5564 = vpop.f32.mrf.mxu0
      %5565 = vmatprep.mubr.bf16.mxu0 0
      %5566 = vmatmul.mubr.bf16.gmra.mxu0 %v5472
      %v5567 = vpop.f32.mrf.mxu0
      %v5568 = vadd.f32 0.0, %v5567
      %v5569 = vpop.f32.mrf.mxu0
      %v5570 = vpop.f32.mrf.mxu0
      %v5571 = vadd.f32 0.0, %v5570
      %v5572 = vpop.f32.mrf.mxu0
      %5573 = vdwg.mxu0
      %v5574 = vadd.f32 %v5393, %v5512
      %v5575 = vadd.f32 %v5394, %v5515
      %v5576 = vadd.f32 %v5395, %v5520
      %v5577 = vadd.f32 %v5396, %v5523
      %v5578 = vadd.f32 %v5397, %v5528
      %v5579 = vadd.f32 %v5398, %v5531
      %v5580 = vadd.f32 %v5399, %v5536
      %v5581 = vadd.f32 %v5400, %v5539
      %v5582 = vadd.f32 %v5401, %v5544
      %v5583 = vadd.f32 %v5402, %v5547
      %v5584 = vadd.f32 %v5403, %v5552
      %v5585 = vadd.f32 %v5404, %v5555
      %v5586 = vadd.f32 %v5405, %v5560
      %v5587 = vadd.f32 %v5406, %v5563
      %v5588 = vadd.f32 %v5407, %v5568
      %v5589 = vadd.f32 %v5408, %v5571
      %v5590 = vld [vmem:[%s5043 + $0x4] sm:$0xf]
      %v5591 = vld [vmem:[%s5043 + $0x8] sm:$0xf]
      %v5592 = vld [vmem:[%s5043 + $0xc] sm:$0x1]
      %v5593 = vld [vmem:[%s5043 + $0x14] sm:$0xf]
      %v5594 = vld [vmem:[%s5043 + $0x18] sm:$0xf]
      %v5595 = vld [vmem:[%s5043 + $0x1c] sm:$0x1]
      %v5596 = vld [vmem:[%s5043 + $0x24] sm:$0xf]
      %v5597 = vld [vmem:[%s5043 + $0x28] sm:$0xf]
      %v5598 = vld [vmem:[%s5043 + $0x2c] sm:$0x1]
      %v5599 = vld [vmem:[%s5043 + $0x34] sm:$0xf]
      %v5600 = vld [vmem:[%s5043 + $0x38] sm:$0xf]
      %v5601 = vld [vmem:[%s5043 + $0x3c] sm:$0x1]
      %v5602 = vld [vmem:[%s5043 + $0x44] sm:$0xf]
      %v5603 = vld [vmem:[%s5043 + $0x48] sm:$0xf]
      %v5604 = vld [vmem:[%s5043 + $0x4c] sm:$0x1]
      %v5605 = vld [vmem:[%s5043 + $0x54] sm:$0xf]
      %v5606 = vld [vmem:[%s5043 + $0x58] sm:$0xf]
      %v5607 = vld [vmem:[%s5043 + $0x5c] sm:$0x1]
      %v5608 = vld [vmem:[%s5043 + $0x64] sm:$0xf]
      %v5609 = vld [vmem:[%s5043 + $0x68] sm:$0xf]
      %v5610 = vld [vmem:[%s5043 + $0x6c] sm:$0x1]
      %v5611 = vld [vmem:[%s5043 + $0x74] sm:$0xf]
      %v5612 = vld [vmem:[%s5043 + $0x78] sm:$0xf]
      %v5613 = vld [vmem:[%s5043 + $0x7c] sm:$0x1]
      %v5615 = vshrl.u32 %v5590, 16
      %v5617 = vrot.slane %v5615, 4
      %v5618 = vshll.u32 %v5590, 16
      %v5620 = vrot.slane %v5618, 5
      %v5621 = vor.u32 %v5617, %v5620
      %v5622 = vrot.slane %v5621, 4
      %v5624 = vshll.u32 %v5591, 16
      %v5626 = vrot.slane %v5624, 5
      %v5627 = vsel %vm902, %v5622, %v5626
      %v5628 = vshrl.u32 %v5591, 16
      %v5630 = vrot.slane %v5628, 4
      %v5631 = vor.u32 %v5630, %v5626
      %v5632 = vrot.slane %v5631, 4
      %v5634 = vshll.u32 %v5592, 16
      %v5636 = vrot.slane %v5634, 5
      %v5637 = vsel %vm902, %v5632, %v5636
      %v5639 = vshrl.u32 %v5593, 16
      %v5641 = vrot.slane %v5639, 4
      %v5642 = vshll.u32 %v5593, 16
      %v5644 = vrot.slane %v5642, 5
      %v5645 = vor.u32 %v5641, %v5644
      %v5646 = vrot.slane %v5645, 4
      %v5648 = vshll.u32 %v5594, 16
      %v5650 = vrot.slane %v5648, 5
      %v5651 = vsel %vm902, %v5646, %v5650
      %v5652 = vshrl.u32 %v5594, 16
      %v5654 = vrot.slane %v5652, 4
      %v5655 = vor.u32 %v5654, %v5650
      %v5656 = vrot.slane %v5655, 4
      %v5658 = vshll.u32 %v5595, 16
      %v5660 = vrot.slane %v5658, 5
      %v5661 = vsel %vm902, %v5656, %v5660
      %v5663 = vshrl.u32 %v5596, 16
      %v5665 = vrot.slane %v5663, 4
      %v5666 = vshll.u32 %v5596, 16
      %v5668 = vrot.slane %v5666, 5
      %v5669 = vor.u32 %v5665, %v5668
      %v5670 = vrot.slane %v5669, 4
      %v5672 = vshll.u32 %v5597, 16
      %v5674 = vrot.slane %v5672, 5
      %v5675 = vsel %vm902, %v5670, %v5674
      %v5676 = vshrl.u32 %v5597, 16
      %v5678 = vrot.slane %v5676, 4
      %v5679 = vor.u32 %v5678, %v5674
      %v5680 = vrot.slane %v5679, 4
      %v5682 = vshll.u32 %v5598, 16
      %v5684 = vrot.slane %v5682, 5
      %v5685 = vsel %vm902, %v5680, %v5684
      %v5687 = vshrl.u32 %v5599, 16
      %v5689 = vrot.slane %v5687, 4
      %v5690 = vshll.u32 %v5599, 16
      %v5692 = vrot.slane %v5690, 5
      %v5693 = vor.u32 %v5689, %v5692
      %v5694 = vrot.slane %v5693, 4
      %v5696 = vshll.u32 %v5600, 16
      %v5698 = vrot.slane %v5696, 5
      %v5699 = vsel %vm902, %v5694, %v5698
      %v5700 = vshrl.u32 %v5600, 16
      %v5702 = vrot.slane %v5700, 4
      %v5703 = vor.u32 %v5702, %v5698
      %v5704 = vrot.slane %v5703, 4
      %v5706 = vshll.u32 %v5601, 16
      %v5708 = vrot.slane %v5706, 5
      %v5709 = vsel %vm902, %v5704, %v5708
      %v5711 = vshrl.u32 %v5602, 16
      %v5713 = vrot.slane %v5711, 4
      %v5714 = vshll.u32 %v5602, 16
      %v5716 = vrot.slane %v5714, 5
      %v5717 = vor.u32 %v5713, %v5716
      %v5718 = vrot.slane %v5717, 4
      %v5720 = vshll.u32 %v5603, 16
      %v5722 = vrot.slane %v5720, 5
      %v5723 = vsel %vm902, %v5718, %v5722
      %v5724 = vshrl.u32 %v5603, 16
      %v5726 = vrot.slane %v5724, 4
      %v5727 = vor.u32 %v5726, %v5722
      %v5728 = vrot.slane %v5727, 4
      %v5730 = vshll.u32 %v5604, 16
      %v5732 = vrot.slane %v5730, 5
      %v5733 = vsel %vm902, %v5728, %v5732
      %v5735 = vshrl.u32 %v5605, 16
      %v5737 = vrot.slane %v5735, 4
      %v5738 = vshll.u32 %v5605, 16
      %v5740 = vrot.slane %v5738, 5
      %v5741 = vor.u32 %v5737, %v5740
      %v5742 = vrot.slane %v5741, 4
      %v5744 = vshll.u32 %v5606, 16
      %v5746 = vrot.slane %v5744, 5
      %v5747 = vsel %vm902, %v5742, %v5746
      %v5748 = vshrl.u32 %v5606, 16
      %v5750 = vrot.slane %v5748, 4
      %v5751 = vor.u32 %v5750, %v5746
      %v5752 = vrot.slane %v5751, 4
      %v5754 = vshll.u32 %v5607, 16
      %v5756 = vrot.slane %v5754, 5
      %v5757 = vsel %vm902, %v5752, %v5756
      %v5759 = vshrl.u32 %v5608, 16
      %v5761 = vrot.slane %v5759, 4
      %v5762 = vshll.u32 %v5608, 16
      %v5764 = vrot.slane %v5762, 5
      %v5765 = vor.u32 %v5761, %v5764
      %v5766 = vrot.slane %v5765, 4
      %v5768 = vshll.u32 %v5609, 16
      %v5770 = vrot.slane %v5768, 5
      %v5771 = vsel %vm902, %v5766, %v5770
      %v5772 = vshrl.u32 %v5609, 16
      %v5774 = vrot.slane %v5772, 4
      %v5775 = vor.u32 %v5774, %v5770
      %v5776 = vrot.slane %v5775, 4
      %v5778 = vshll.u32 %v5610, 16
      %v5780 = vrot.slane %v5778, 5
      %v5781 = vsel %vm902, %v5776, %v5780
      %v5783 = vshrl.u32 %v5611, 16
      %v5785 = vrot.slane %v5783, 4
      %v5786 = vshll.u32 %v5611, 16
      %v5788 = vrot.slane %v5786, 5
      %v5789 = vor.u32 %v5785, %v5788
      %v5790 = vrot.slane %v5789, 4
      %v5792 = vshll.u32 %v5612, 16
      %v5794 = vrot.slane %v5792, 5
      %v5795 = vsel %vm902, %v5790, %v5794
      %v5796 = vshrl.u32 %v5612, 16
      %v5798 = vrot.slane %v5796, 4
      %v5799 = vor.u32 %v5798, %v5794
      %v5800 = vrot.slane %v5799, 4
      %v5802 = vshll.u32 %v5613, 16
      %v5804 = vrot.slane %v5802, 5
      %v5805 = vsel %vm902, %v5800, %v5804
      %v5806 = vld [vmem:[%s2956] sm:$0x3]
      %v5807 = vunpack.c.l.b16 %v5627
      %v5808 = vunpack.c.l.b16 %v5637
      %v5809 = vunpack.c.l.b16 %v5651
      %v5810 = vunpack.c.l.b16 %v5661
      %v5811 = vunpack.c.l.b16 %v5675
      %v5812 = vunpack.c.l.b16 %v5685
      %v5813 = vunpack.c.l.b16 %v5699
      %v5814 = vunpack.c.l.b16 %v5709
      %v5815 = vunpack.c.l.b16 %v5723
      %v5816 = vunpack.c.l.b16 %v5733
      %v5817 = vunpack.c.l.b16 %v5747
      %v5818 = vunpack.c.l.b16 %v5757
      %v5819 = vunpack.c.l.b16 %v5771
      %v5820 = vunpack.c.l.b16 %v5781
      %v5821 = vunpack.c.l.b16 %v5795
      %v5822 = vunpack.c.l.b16 %v5805
      %v5823 = vpack.c.b16 %v5808, %v5807
      %v5824 = vpack.c.b16 %v5810, %v5809
      %v5825 = vpack.c.b16 %v5812, %v5811
      %v5826 = vpack.c.b16 %v5814, %v5813
      %v5827 = vpack.c.b16 %v5816, %v5815
      %v5828 = vpack.c.b16 %v5818, %v5817
      %v5829 = vpack.c.b16 %v5820, %v5819
      %v5830 = vpack.c.b16 %v5822, %v5821
      %v5832 = vsel %vm602, %v5823, 0
      %v5835 = vsel %vm602, %v5824, 0
      %v5838 = vsel %vm602, %v5825, 0
      %v5841 = vsel %vm602, %v5826, 0
      %v5844 = vsel %vm602, %v5827, 0
      %v5847 = vsel %vm602, %v5828, 0
      %v5850 = vsel %vm602, %v5829, 0
      %v5853 = vsel %vm602, %v5830, 0
      %v5856 = vsel %vm627, %v5806, 0
      %5858 = vmatprep.subr.bf16.mxu0 0
      %5859 = vmatpush1.bf16.msra.mxu0 0
      %5860 = vmatprep.subr.bf16.mxu0 0
      %5861 = vmatpush1.bf16.msra.mxu0 0
      %5862 = vmatprep.subr.bf16.mxu0 0
      %5863 = vmatpush1.bf16.msra.mxu0 0
      %5864 = vmatprep.subr.bf16.mxu0 0
      %5865 = vmatpush1.bf16.msra.mxu0 0
      %5866 = vmatprep.subr.bf16.mxu0 0
      %5867 = vmatpush1.bf16.msra.mxu0 0
      %5868 = vmatprep.subr.bf16.mxu0 0
      %5869 = vmatpush1.bf16.msra.mxu0 0
      %5870 = vmatprep.subr.bf16.mxu0 0
      %5871 = vmatpush1.bf16.msra.mxu0 0
      %5872 = vmatprep.subr.bf16.mxu0 0
      %5873 = vmatpush1.bf16.msra.mxu0 %v5856
      %5874 = vmatprep.subr.bf16.mxu0 0
      %5875 = vmatpush2.bf16.msra.mxu0 0
      %5876 = vmatprep.subr.bf16.mxu0 0
      %5877 = vmatpush2.bf16.msra.mxu0 0
      %5878 = vmatprep.subr.bf16.mxu0 0
      %5879 = vmatpush2.bf16.msra.mxu0 0
      %5880 = vmatprep.subr.bf16.mxu0 0
      %5881 = vmatpush2.bf16.msra.mxu0 0
      %5882 = vmatprep.subr.bf16.mxu0 0
      %5883 = vmatpush2.bf16.msra.mxu0 0
      %5884 = vmatprep.subr.bf16.mxu0 0
      %5885 = vmatpush2.bf16.msra.mxu0 0
      %5886 = vmatprep.subr.bf16.mxu0 0
      %5887 = vmatpush2.bf16.msra.mxu0 0
      %5888 = vmatprep.subr.bf16.mxu0 0
      %5889 = vmatpush2.bf16.msra.mxu0 0
      %5890 = vmatprep.mubr.bf16.mxu0 0
      %5891 = vmatmul.mubr.bf16.gmra.mxu0 %v5832
      %v5892 = vpop.f32.mrf.mxu0
      %v5893 = vadd.f32 0.0, %v5892
      %v5894 = vpop.f32.mrf.mxu0
      %v5895 = vpop.f32.mrf.mxu0
      %v5896 = vadd.f32 0.0, %v5895
      %v5897 = vpop.f32.mrf.mxu0
      %5898 = vmatprep.mubr.bf16.mxu0 0
      %5899 = vmatmul.mubr.bf16.gmra.mxu0 %v5835
      %v5900 = vpop.f32.mrf.mxu0
      %v5901 = vadd.f32 0.0, %v5900
      %v5902 = vpop.f32.mrf.mxu0
      %v5903 = vpop.f32.mrf.mxu0
      %v5904 = vadd.f32 0.0, %v5903
      %v5905 = vpop.f32.mrf.mxu0
      %5906 = vmatprep.mubr.bf16.mxu0 0
      %5907 = vmatmul.mubr.bf16.gmra.mxu0 %v5838
      %v5908 = vpop.f32.mrf.mxu0
      %v5909 = vadd.f32 0.0, %v5908
      %v5910 = vpop.f32.mrf.mxu0
      %v5911 = vpop.f32.mrf.mxu0
      %v5912 = vadd.f32 0.0, %v5911
      %v5913 = vpop.f32.mrf.mxu0
      %5914 = vmatprep.mubr.bf16.mxu0 0
      %5915 = vmatmul.mubr.bf16.gmra.mxu0 %v5841
      %v5916 = vpop.f32.mrf.mxu0
      %v5917 = vadd.f32 0.0, %v5916
      %v5918 = vpop.f32.mrf.mxu0
      %v5919 = vpop.f32.mrf.mxu0
      %v5920 = vadd.f32 0.0, %v5919
      %v5921 = vpop.f32.mrf.mxu0
      %5922 = vmatprep.mubr.bf16.mxu0 0
      %5923 = vmatmul.mubr.bf16.gmra.mxu0 %v5844
      %v5924 = vpop.f32.mrf.mxu0
      %v5925 = vadd.f32 0.0, %v5924
      %v5926 = vpop.f32.mrf.mxu0
      %v5927 = vpop.f32.mrf.mxu0
      %v5928 = vadd.f32 0.0, %v5927
      %v5929 = vpop.f32.mrf.mxu0
      %5930 = vmatprep.mubr.bf16.mxu0 0
      %5931 = vmatmul.mubr.bf16.gmra.mxu0 %v5847
      %v5932 = vpop.f32.mrf.mxu0
      %v5933 = vadd.f32 0.0, %v5932
      %v5934 = vpop.f32.mrf.mxu0
      %v5935 = vpop.f32.mrf.mxu0
      %v5936 = vadd.f32 0.0, %v5935
      %v5937 = vpop.f32.mrf.mxu0
      %5938 = vmatprep.mubr.bf16.mxu0 0
      %5939 = vmatmul.mubr.bf16.gmra.mxu0 %v5850
      %v5940 = vpop.f32.mrf.mxu0
      %v5941 = vadd.f32 0.0, %v5940
      %v5942 = vpop.f32.mrf.mxu0
      %v5943 = vpop.f32.mrf.mxu0
      %v5944 = vadd.f32 0.0, %v5943
      %v5945 = vpop.f32.mrf.mxu0
      %5946 = vmatprep.mubr.bf16.mxu0 0
      %5947 = vmatmul.mubr.bf16.gmra.mxu0 %v5853
      %v5948 = vpop.f32.mrf.mxu0
      %v5949 = vadd.f32 0.0, %v5948
      %v5950 = vpop.f32.mrf.mxu0
      %v5951 = vpop.f32.mrf.mxu0
      %v5952 = vadd.f32 0.0, %v5951
      %v5953 = vpop.f32.mrf.mxu0
      %5954 = vdwg.mxu0
      %v5955 = vadd.f32 %v5574, %v5893
      %v5956 = vadd.f32 %v5575, %v5896
      %v5957 = vadd.f32 %v5576, %v5901
      %v5958 = vadd.f32 %v5577, %v5904
      %v5959 = vadd.f32 %v5578, %v5909
      %v5960 = vadd.f32 %v5579, %v5912
      %v5961 = vadd.f32 %v5580, %v5917
      %v5962 = vadd.f32 %v5581, %v5920
      %v5963 = vadd.f32 %v5582, %v5925
      %v5964 = vadd.f32 %v5583, %v5928
      %v5965 = vadd.f32 %v5584, %v5933
      %v5966 = vadd.f32 %v5585, %v5936
      %v5967 = vadd.f32 %v5586, %v5941
      %v5968 = vadd.f32 %v5587, %v5944
      %v5969 = vadd.f32 %v5588, %v5949
      %v5970 = vadd.f32 %v5589, %v5952
      %v5971 = vmax.f32 %v5955, 0.0
      %v5972 = vmax.f32 %v5956, 0.0
      %v5973 = vmax.f32 %v5957, 0.0
      %v5974 = vmax.f32 %v5958, 0.0
      %v5975 = vmax.f32 %v5959, 0.0
      %v5976 = vmax.f32 %v5960, 0.0
      %v5977 = vmax.f32 %v5961, 0.0
      %v5978 = vmax.f32 %v5962, 0.0
      %v5979 = vmax.f32 %v5963, 0.0
      %v5980 = vmax.f32 %v5964, 0.0
      %v5981 = vmax.f32 %v5965, 0.0
      %v5982 = vmax.f32 %v5966, 0.0
      %v5983 = vmax.f32 %v5967, 0.0
      %v5984 = vmax.f32 %v5968, 0.0
      %v5985 = vmax.f32 %v5969, 0.0
      %v5986 = vmax.f32 %v5970, 0.0
      %v5987 = vpack.c.bf16 %v5972, %v5971
      %v5988 = vpack.c.bf16 %v5974, %v5973
      %v5989 = vpack.c.bf16 %v5976, %v5975
      %v5990 = vpack.c.bf16 %v5978, %v5977
      %v5991 = vpack.c.bf16 %v5980, %v5979
      %v5992 = vpack.c.bf16 %v5982, %v5981
      %v5993 = vpack.c.bf16 %v5984, %v5983
      %v5994 = vpack.c.bf16 %v5986, %v5985
      %v6003 = vunpack.c.l.b16 %v5987
      %v6004 = vunpack.c.h.b16 %v5987
      %v6005 = vunpack.c.l.b16 %v5988
      %v6006 = vunpack.c.h.b16 %v5988
      %v6007 = vunpack.c.l.b16 %v5989
      %v6008 = vunpack.c.h.b16 %v5989
      %v6009 = vunpack.c.l.b16 %v5990
      %v6010 = vunpack.c.h.b16 %v5990
      %v6011 = vunpack.c.l.b16 %v5991
      %v6012 = vunpack.c.h.b16 %v5991
      %v6013 = vunpack.c.l.b16 %v5992
      %v6014 = vunpack.c.h.b16 %v5992
      %v6015 = vunpack.c.l.b16 %v5993
      %v6016 = vunpack.c.h.b16 %v5993
      %v6017 = vunpack.c.l.b16 %v5994
      %v6018 = vunpack.c.h.b16 %v5994
      %v6019 = vpack.c.b16 %v6003, %v6003
      %v6020 = vpack.c.b16 %v6004, %v6004
      %v6021 = vpack.c.b16 %v6005, %v6005
      %v6022 = vpack.c.b16 %v6006, %v6006
      %v6023 = vpack.c.b16 %v6007, %v6007
      %v6024 = vpack.c.b16 %v6008, %v6008
      %v6025 = vpack.c.b16 %v6009, %v6009
      %v6026 = vpack.c.b16 %v6010, %v6010
      %v6027 = vpack.c.b16 %v6011, %v6011
      %v6028 = vpack.c.b16 %v6012, %v6012
      %v6029 = vpack.c.b16 %v6013, %v6013
      %v6030 = vpack.c.b16 %v6014, %v6014
      %v6031 = vpack.c.b16 %v6015, %v6015
      %v6032 = vpack.c.b16 %v6016, %v6016
      %v6033 = vpack.c.b16 %v6017, %v6017
      %v6034 = vpack.c.b16 %v6018, %v6018
      %s6051 = scalar_lea.vmem [#allocation3], 144
      %6052 = vst.msk [vmem:[%s6051 + $0x4] sm:$0xf] %vm245, %v6019
      %6053 = vst.msk [vmem:[%s6051 + $0x8] sm:$0xf] %vm245, %v6020
      %6054 = vst.msk [vmem:[%s6051 + $0x14] sm:$0xf] %vm245, %v6021
      %6055 = vst.msk [vmem:[%s6051 + $0x18] sm:$0xf] %vm245, %v6022
      %6056 = vst.msk [vmem:[%s6051 + $0x24] sm:$0xf] %vm245, %v6023
      %6057 = vst.msk [vmem:[%s6051 + $0x28] sm:$0xf] %vm245, %v6024
      %6058 = vst.msk [vmem:[%s6051 + $0x34] sm:$0xf] %vm245, %v6025
      %6059 = vst.msk [vmem:[%s6051 + $0x38] sm:$0xf] %vm245, %v6026
      %6060 = vst.msk [vmem:[%s6051 + $0x44] sm:$0xf] %vm245, %v6027
      %6061 = vst.msk [vmem:[%s6051 + $0x48] sm:$0xf] %vm245, %v6028
      %6062 = vst.msk [vmem:[%s6051 + $0x54] sm:$0xf] %vm245, %v6029
      %6063 = vst.msk [vmem:[%s6051 + $0x58] sm:$0xf] %vm245, %v6030
      %6064 = vst.msk [vmem:[%s6051 + $0x64] sm:$0xf] %vm245, %v6031
      %6065 = vst.msk [vmem:[%s6051 + $0x68] sm:$0xf] %vm245, %v6032
      %6066 = vst.msk [vmem:[%s6051 + $0x74] sm:$0xf] %vm245, %v6033
      %6067 = vst.msk [vmem:[%s6051 + $0x78] sm:$0xf] %vm245, %v6034
      %v6068 = vld [vmem:[#allocation3] sm:$0x8]
      %v6069 = vld [vmem:[#allocation3 + $0x4] sm:$0xf]
      %v6070 = vld [vmem:[#allocation3 + $0x8] sm:$0xf]
      %v6071 = vld [vmem:[#allocation3 + $0x10] sm:$0x8]
      %v6072 = vld [vmem:[#allocation3 + $0x14] sm:$0xf]
      %v6073 = vld [vmem:[#allocation3 + $0x18] sm:$0xf]
      %v6074 = vld [vmem:[#allocation3 + $0x20] sm:$0x8]
      %v6075 = vld [vmem:[#allocation3 + $0x24] sm:$0xf]
      %v6076 = vld [vmem:[#allocation3 + $0x28] sm:$0xf]
      %v6077 = vld [vmem:[#allocation3 + $0x30] sm:$0x8]
      %v6078 = vld [vmem:[#allocation3 + $0x34] sm:$0xf]
      %v6079 = vld [vmem:[#allocation3 + $0x38] sm:$0xf]
      %v6080 = vld [vmem:[#allocation3 + $0x40] sm:$0x8]
      %v6081 = vld [vmem:[#allocation3 + $0x44] sm:$0xf]
      %v6082 = vld [vmem:[#allocation3 + $0x48] sm:$0xf]
      %v6083 = vld [vmem:[#allocation3 + $0x50] sm:$0x8]
      %v6084 = vld [vmem:[#allocation3 + $0x54] sm:$0xf]
      %v6085 = vld [vmem:[#allocation3 + $0x58] sm:$0xf]
      %v6086 = vld [vmem:[#allocation3 + $0x60] sm:$0x8]
      %v6087 = vld [vmem:[#allocation3 + $0x64] sm:$0xf]
      %v6088 = vld [vmem:[#allocation3 + $0x68] sm:$0xf]
      %v6089 = vld [vmem:[#allocation3 + $0x70] sm:$0x8]
      %v6090 = vld [vmem:[#allocation3 + $0x74] sm:$0xf]
      %v6091 = vld [vmem:[#allocation3 + $0x78] sm:$0xf]
      %v6093 = vshrl.u32 %v6068, 16
      %v6095 = vrot.slane %v6093, 7
      %v6096 = vrot.slane %v6095, 4
      %v6098 = vshrl.u32 %v6069, 16
      %v6100 = vrot.slane %v6098, 7
      %v6101 = vshll.u32 %v6069, 16
      %v6103 = vor.u32 %v6100, %v6101
      %v6104 = vsel %vm382, %v6096, %v6103
      %v6105 = vrot.slane %v6100, 4
      %v6107 = vshrl.u32 %v6070, 16
      %v6109 = vrot.slane %v6107, 7
      %v6110 = vshll.u32 %v6070, 16
      %v6112 = vor.u32 %v6109, %v6110
      %v6113 = vsel %vm382, %v6105, %v6112
      %v6115 = vshrl.u32 %v6071, 16
      %v6117 = vrot.slane %v6115, 7
      %v6118 = vrot.slane %v6117, 4
      %v6120 = vshrl.u32 %v6072, 16
      %v6122 = vrot.slane %v6120, 7
      %v6123 = vshll.u32 %v6072, 16
      %v6125 = vor.u32 %v6122, %v6123
      %v6126 = vsel %vm382, %v6118, %v6125
      %v6127 = vrot.slane %v6122, 4
      %v6129 = vshrl.u32 %v6073, 16
      %v6131 = vrot.slane %v6129, 7
      %v6132 = vshll.u32 %v6073, 16
      %v6134 = vor.u32 %v6131, %v6132
      %v6135 = vsel %vm382, %v6127, %v6134
      %v6137 = vshrl.u32 %v6074, 16
      %v6139 = vrot.slane %v6137, 7
      %v6140 = vrot.slane %v6139, 4
      %v6142 = vshrl.u32 %v6075, 16
      %v6144 = vrot.slane %v6142, 7
      %v6145 = vshll.u32 %v6075, 16
      %v6147 = vor.u32 %v6144, %v6145
      %v6148 = vsel %vm382, %v6140, %v6147
      %v6149 = vrot.slane %v6144, 4
      %v6151 = vshrl.u32 %v6076, 16
      %v6153 = vrot.slane %v6151, 7
      %v6154 = vshll.u32 %v6076, 16
      %v6156 = vor.u32 %v6153, %v6154
      %v6157 = vsel %vm382, %v6149, %v6156
      %v6159 = vshrl.u32 %v6077, 16
      %v6161 = vrot.slane %v6159, 7
      %v6162 = vrot.slane %v6161, 4
      %v6164 = vshrl.u32 %v6078, 16
      %v6166 = vrot.slane %v6164, 7
      %v6167 = vshll.u32 %v6078, 16
      %v6169 = vor.u32 %v6166, %v6167
      %v6170 = vsel %vm382, %v6162, %v6169
      %v6171 = vrot.slane %v6166, 4
      %v6173 = vshrl.u32 %v6079, 16
      %v6175 = vrot.slane %v6173, 7
      %v6176 = vshll.u32 %v6079, 16
      %v6178 = vor.u32 %v6175, %v6176
      %v6179 = vsel %vm382, %v6171, %v6178
      %v6181 = vshrl.u32 %v6080, 16
      %v6183 = vrot.slane %v6181, 7
      %v6184 = vrot.slane %v6183, 4
      %v6186 = vshrl.u32 %v6081, 16
      %v6188 = vrot.slane %v6186, 7
      %v6189 = vshll.u32 %v6081, 16
      %v6191 = vor.u32 %v6188, %v6189
      %v6192 = vsel %vm382, %v6184, %v6191
      %v6193 = vrot.slane %v6188, 4
      %v6195 = vshrl.u32 %v6082, 16
      %v6197 = vrot.slane %v6195, 7
      %v6198 = vshll.u32 %v6082, 16
      %v6200 = vor.u32 %v6197, %v6198
      %v6201 = vsel %vm382, %v6193, %v6200
      %v6203 = vshrl.u32 %v6083, 16
      %v6205 = vrot.slane %v6203, 7
      %v6206 = vrot.slane %v6205, 4
      %v6208 = vshrl.u32 %v6084, 16
      %v6210 = vrot.slane %v6208, 7
      %v6211 = vshll.u32 %v6084, 16
      %v6213 = vor.u32 %v6210, %v6211
      %v6214 = vsel %vm382, %v6206, %v6213
      %v6215 = vrot.slane %v6210, 4
      %v6217 = vshrl.u32 %v6085, 16
      %v6219 = vrot.slane %v6217, 7
      %v6220 = vshll.u32 %v6085, 16
      %v6222 = vor.u32 %v6219, %v6220
      %v6223 = vsel %vm382, %v6215, %v6222
      %v6225 = vshrl.u32 %v6086, 16
      %v6227 = vrot.slane %v6225, 7
      %v6228 = vrot.slane %v6227, 4
      %v6230 = vshrl.u32 %v6087, 16
      %v6232 = vrot.slane %v6230, 7
      %v6233 = vshll.u32 %v6087, 16
      %v6235 = vor.u32 %v6232, %v6233
      %v6236 = vsel %vm382, %v6228, %v6235
      %v6237 = vrot.slane %v6232, 4
      %v6239 = vshrl.u32 %v6088, 16
      %v6241 = vrot.slane %v6239, 7
      %v6242 = vshll.u32 %v6088, 16
      %v6244 = vor.u32 %v6241, %v6242
      %v6245 = vsel %vm382, %v6237, %v6244
      %v6247 = vshrl.u32 %v6089, 16
      %v6249 = vrot.slane %v6247, 7
      %v6250 = vrot.slane %v6249, 4
      %v6252 = vshrl.u32 %v6090, 16
      %v6254 = vrot.slane %v6252, 7
      %v6255 = vshll.u32 %v6090, 16
      %v6257 = vor.u32 %v6254, %v6255
      %v6258 = vsel %vm382, %v6250, %v6257
      %v6259 = vrot.slane %v6254, 4
      %v6261 = vshrl.u32 %v6091, 16
      %v6263 = vrot.slane %v6261, 7
      %v6264 = vshll.u32 %v6091, 16
      %v6266 = vor.u32 %v6263, %v6264
      %v6267 = vsel %vm382, %v6259, %v6266
      %v6268 = vld [vmem:[%s2] sm:$0xf]
      %s6269 = scalar_lea.vmem %s2, 4
      %v6270 = vld [vmem:[%s6269] sm:$0xf]
      %v6287 = vunpack.c.l.b16 %v6069
      %v6288 = vunpack.c.l.b16 %v6070
      %v6289 = vunpack.c.l.b16 %v6072
      %v6290 = vunpack.c.l.b16 %v6073
      %v6291 = vunpack.c.l.b16 %v6075
      %v6292 = vunpack.c.l.b16 %v6076
      %v6293 = vunpack.c.l.b16 %v6078
      %v6294 = vunpack.c.l.b16 %v6079
      %v6295 = vunpack.c.l.b16 %v6081
      %v6296 = vunpack.c.l.b16 %v6082
      %v6297 = vunpack.c.l.b16 %v6084
      %v6298 = vunpack.c.l.b16 %v6085
      %v6299 = vunpack.c.l.b16 %v6087
      %v6300 = vunpack.c.l.b16 %v6088
      %v6301 = vunpack.c.l.b16 %v6090
      %v6302 = vunpack.c.l.b16 %v6091
      %v6303 = vpack.c.b16 %v6288, %v6287
      %v6304 = vpack.c.b16 %v6290, %v6289
      %v6305 = vpack.c.b16 %v6292, %v6291
      %v6306 = vpack.c.b16 %v6294, %v6293
      %v6307 = vpack.c.b16 %v6296, %v6295
      %v6308 = vpack.c.b16 %v6298, %v6297
      %v6309 = vpack.c.b16 %v6300, %v6299
      %v6310 = vpack.c.b16 %v6302, %v6301
      %vm6311 = vcmask 64512
      %v6313 = vsel %vm6311, %v6303, 0
      %v6316 = vsel %vm6311, %v6304, 0
      %v6319 = vsel %vm6311, %v6305, 0
      %v6322 = vsel %vm6311, %v6306, 0
      %v6325 = vsel %vm6311, %v6307, 0
      %v6328 = vsel %vm6311, %v6308, 0
      %v6331 = vsel %vm6311, %v6309, 0
      %v6334 = vsel %vm6311, %v6310, 0
      %vm6336 = vcmask 1043456
      %v6338 = vsel %vm6336, %v6270, 0
      %6340 = vmatprep.subr.bf16.mxu0 0
      %6341 = vmatpush1.bf16.msra.mxu0 0
      %6342 = vmatprep.subr.bf16.mxu0 0
      %6343 = vmatpush1.bf16.msra.mxu0 0
      %6344 = vmatprep.subr.bf16.mxu0 0
      %6345 = vmatpush1.bf16.msra.mxu0 0
      %6346 = vmatprep.subr.bf16.mxu0 0
      %6347 = vmatpush1.bf16.msra.mxu0 0
      %6348 = vmatprep.subr.bf16.mxu0 0
      %6349 = vmatpush1.bf16.msra.mxu0 0
      %6350 = vmatprep.subr.bf16.mxu0 0
      %6351 = vmatpush1.bf16.msra.mxu0 0
      %6352 = vmatprep.subr.bf16.mxu0 0
      %6353 = vmatpush1.bf16.msra.mxu0 0
      %6354 = vmatprep.subr.bf16.mxu0 0
      %6355 = vmatpush1.bf16.msra.mxu0 %v6338
      %6356 = vmatprep.subr.bf16.mxu0 0
      %6357 = vmatpush2.bf16.msra.mxu0 0
      %6358 = vmatprep.subr.bf16.mxu0 0
      %6359 = vmatpush2.bf16.msra.mxu0 0
      %6360 = vmatprep.subr.bf16.mxu0 0
      %6361 = vmatpush2.bf16.msra.mxu0 0
      %6362 = vmatprep.subr.bf16.mxu0 0
      %6363 = vmatpush2.bf16.msra.mxu0 0
      %6364 = vmatprep.subr.bf16.mxu0 0
      %6365 = vmatpush2.bf16.msra.mxu0 0
      %6366 = vmatprep.subr.bf16.mxu0 0
      %6367 = vmatpush2.bf16.msra.mxu0 0
      %6368 = vmatprep.subr.bf16.mxu0 0
      %6369 = vmatpush2.bf16.msra.mxu0 0
      %6370 = vmatprep.subr.bf16.mxu0 0
      %6371 = vmatpush2.bf16.msra.mxu0 0
      %6372 = vmatprep.mubr.bf16.mxu0 0
      %6373 = vmatmul.mubr.bf16.gmra.mxu0 %v6313
      %v6374 = vpop.f32.mrf.mxu0
      %v6375 = vadd.f32 0.0, %v6374
      %v6376 = vpop.f32.mrf.mxu0
      %v6377 = vpop.f32.mrf.mxu0
      %v6378 = vadd.f32 0.0, %v6377
      %v6379 = vpop.f32.mrf.mxu0
      %6380 = vmatprep.mubr.bf16.mxu0 0
      %6381 = vmatmul.mubr.bf16.gmra.mxu0 %v6316
      %v6382 = vpop.f32.mrf.mxu0
      %v6383 = vadd.f32 0.0, %v6382
      %v6384 = vpop.f32.mrf.mxu0
      %v6385 = vpop.f32.mrf.mxu0
      %v6386 = vadd.f32 0.0, %v6385
      %v6387 = vpop.f32.mrf.mxu0
      %6388 = vmatprep.mubr.bf16.mxu0 0
      %6389 = vmatmul.mubr.bf16.gmra.mxu0 %v6319
      %v6390 = vpop.f32.mrf.mxu0
      %v6391 = vadd.f32 0.0, %v6390
      %v6392 = vpop.f32.mrf.mxu0
      %v6393 = vpop.f32.mrf.mxu0
      %v6394 = vadd.f32 0.0, %v6393
      %v6395 = vpop.f32.mrf.mxu0
      %6396 = vmatprep.mubr.bf16.mxu0 0
      %6397 = vmatmul.mubr.bf16.gmra.mxu0 %v6322
      %v6398 = vpop.f32.mrf.mxu0
      %v6399 = vadd.f32 0.0, %v6398
      %v6400 = vpop.f32.mrf.mxu0
      %v6401 = vpop.f32.mrf.mxu0
      %v6402 = vadd.f32 0.0, %v6401
      %v6403 = vpop.f32.mrf.mxu0
      %6404 = vmatprep.mubr.bf16.mxu0 0
      %6405 = vmatmul.mubr.bf16.gmra.mxu0 %v6325
      %v6406 = vpop.f32.mrf.mxu0
      %v6407 = vadd.f32 0.0, %v6406
      %v6408 = vpop.f32.mrf.mxu0
      %v6409 = vpop.f32.mrf.mxu0
      %v6410 = vadd.f32 0.0, %v6409
      %v6411 = vpop.f32.mrf.mxu0
      %6412 = vmatprep.mubr.bf16.mxu0 0
      %6413 = vmatmul.mubr.bf16.gmra.mxu0 %v6328
      %v6414 = vpop.f32.mrf.mxu0
      %v6415 = vadd.f32 0.0, %v6414
      %v6416 = vpop.f32.mrf.mxu0
      %v6417 = vpop.f32.mrf.mxu0
      %v6418 = vadd.f32 0.0, %v6417
      %v6419 = vpop.f32.mrf.mxu0
      %6420 = vmatprep.mubr.bf16.mxu0 0
      %6421 = vmatmul.mubr.bf16.gmra.mxu0 %v6331
      %v6422 = vpop.f32.mrf.mxu0
      %v6423 = vadd.f32 0.0, %v6422
      %v6424 = vpop.f32.mrf.mxu0
      %v6425 = vpop.f32.mrf.mxu0
      %v6426 = vadd.f32 0.0, %v6425
      %v6427 = vpop.f32.mrf.mxu0
      %6428 = vmatprep.mubr.bf16.mxu0 0
      %6429 = vmatmul.mubr.bf16.gmra.mxu0 %v6334
      %v6430 = vpop.f32.mrf.mxu0
      %v6431 = vadd.f32 0.0, %v6430
      %v6432 = vpop.f32.mrf.mxu0
      %v6433 = vpop.f32.mrf.mxu0
      %v6434 = vadd.f32 0.0, %v6433
      %v6435 = vpop.f32.mrf.mxu0
      %6436 = vdwg.mxu0
      %v6437 = vunpack.c.l.b16 %v6104
      %v6438 = vunpack.c.l.b16 %v6113
      %v6439 = vunpack.c.l.b16 %v6126
      %v6440 = vunpack.c.l.b16 %v6135
      %v6441 = vunpack.c.l.b16 %v6148
      %v6442 = vunpack.c.l.b16 %v6157
      %v6443 = vunpack.c.l.b16 %v6170
      %v6444 = vunpack.c.l.b16 %v6179
      %v6445 = vunpack.c.l.b16 %v6192
      %v6446 = vunpack.c.l.b16 %v6201
      %v6447 = vunpack.c.l.b16 %v6214
      %v6448 = vunpack.c.l.b16 %v6223
      %v6449 = vunpack.c.l.b16 %v6236
      %v6450 = vunpack.c.l.b16 %v6245
      %v6451 = vunpack.c.l.b16 %v6258
      %v6452 = vunpack.c.l.b16 %v6267
      %v6453 = vpack.c.b16 %v6438, %v6437
      %v6454 = vpack.c.b16 %v6440, %v6439
      %v6455 = vpack.c.b16 %v6442, %v6441
      %v6456 = vpack.c.b16 %v6444, %v6443
      %v6457 = vpack.c.b16 %v6446, %v6445
      %v6458 = vpack.c.b16 %v6448, %v6447
      %v6459 = vpack.c.b16 %v6450, %v6449
      %v6460 = vpack.c.b16 %v6452, %v6451
      %v6462 = vsel %vm6311, %v6453, 0
      %v6465 = vsel %vm6311, %v6454, 0
      %v6468 = vsel %vm6311, %v6455, 0
      %v6471 = vsel %vm6311, %v6456, 0
      %v6474 = vsel %vm6311, %v6457, 0
      %v6477 = vsel %vm6311, %v6458, 0
      %v6480 = vsel %vm6311, %v6459, 0
      %v6483 = vsel %vm6311, %v6460, 0
      %v6486 = vsel %vm6336, %v6268, 0
      %6488 = vmatprep.subr.bf16.mxu0 0
      %6489 = vmatpush1.bf16.msra.mxu0 0
      %6490 = vmatprep.subr.bf16.mxu0 0
      %6491 = vmatpush1.bf16.msra.mxu0 0
      %6492 = vmatprep.subr.bf16.mxu0 0
      %6493 = vmatpush1.bf16.msra.mxu0 0
      %6494 = vmatprep.subr.bf16.mxu0 0
      %6495 = vmatpush1.bf16.msra.mxu0 0
      %6496 = vmatprep.subr.bf16.mxu0 0
      %6497 = vmatpush1.bf16.msra.mxu0 0
      %6498 = vmatprep.subr.bf16.mxu0 0
      %6499 = vmatpush1.bf16.msra.mxu0 0
      %6500 = vmatprep.subr.bf16.mxu0 0
      %6501 = vmatpush1.bf16.msra.mxu0 0
      %6502 = vmatprep.subr.bf16.mxu0 0
      %6503 = vmatpush1.bf16.msra.mxu0 %v6486
      %6504 = vmatprep.subr.bf16.mxu0 0
      %6505 = vmatpush2.bf16.msra.mxu0 0
      %6506 = vmatprep.subr.bf16.mxu0 0
      %6507 = vmatpush2.bf16.msra.mxu0 0
      %6508 = vmatprep.subr.bf16.mxu0 0
      %6509 = vmatpush2.bf16.msra.mxu0 0
      %6510 = vmatprep.subr.bf16.mxu0 0
      %6511 = vmatpush2.bf16.msra.mxu0 0
      %6512 = vmatprep.subr.bf16.mxu0 0
      %6513 = vmatpush2.bf16.msra.mxu0 0
      %6514 = vmatprep.subr.bf16.mxu0 0
      %6515 = vmatpush2.bf16.msra.mxu0 0
      %6516 = vmatprep.subr.bf16.mxu0 0
      %6517 = vmatpush2.bf16.msra.mxu0 0
      %6518 = vmatprep.subr.bf16.mxu0 0
      %6519 = vmatpush2.bf16.msra.mxu0 0
      %6520 = vmatprep.mubr.bf16.mxu0 0
      %6521 = vmatmul.mubr.bf16.gmra.mxu0 %v6462
      %v6522 = vpop.f32.mrf.mxu0
      %v6523 = vadd.f32 %v6375, %v6522
      %v6524 = vpop.f32.mrf.mxu0
      %v6525 = vpop.f32.mrf.mxu0
      %v6526 = vadd.f32 %v6378, %v6525
      %v6527 = vpop.f32.mrf.mxu0
      %6528 = vmatprep.mubr.bf16.mxu0 0
      %6529 = vmatmul.mubr.bf16.gmra.mxu0 %v6465
      %v6530 = vpop.f32.mrf.mxu0
      %v6531 = vadd.f32 %v6383, %v6530
      %v6532 = vpop.f32.mrf.mxu0
      %v6533 = vpop.f32.mrf.mxu0
      %v6534 = vadd.f32 %v6386, %v6533
      %v6535 = vpop.f32.mrf.mxu0
      %6536 = vmatprep.mubr.bf16.mxu0 0
      %6537 = vmatmul.mubr.bf16.gmra.mxu0 %v6468
      %v6538 = vpop.f32.mrf.mxu0
      %v6539 = vadd.f32 %v6391, %v6538
      %v6540 = vpop.f32.mrf.mxu0
      %v6541 = vpop.f32.mrf.mxu0
      %v6542 = vadd.f32 %v6394, %v6541
      %v6543 = vpop.f32.mrf.mxu0
      %6544 = vmatprep.mubr.bf16.mxu0 0
      %6545 = vmatmul.mubr.bf16.gmra.mxu0 %v6471
      %v6546 = vpop.f32.mrf.mxu0
      %v6547 = vadd.f32 %v6399, %v6546
      %v6548 = vpop.f32.mrf.mxu0
      %v6549 = vpop.f32.mrf.mxu0
      %v6550 = vadd.f32 %v6402, %v6549
      %v6551 = vpop.f32.mrf.mxu0
      %6552 = vmatprep.mubr.bf16.mxu0 0
      %6553 = vmatmul.mubr.bf16.gmra.mxu0 %v6474
      %v6554 = vpop.f32.mrf.mxu0
      %v6555 = vadd.f32 %v6407, %v6554
      %v6556 = vpop.f32.mrf.mxu0
      %v6557 = vpop.f32.mrf.mxu0
      %v6558 = vadd.f32 %v6410, %v6557
      %v6559 = vpop.f32.mrf.mxu0
      %6560 = vmatprep.mubr.bf16.mxu0 0
      %6561 = vmatmul.mubr.bf16.gmra.mxu0 %v6477
      %v6562 = vpop.f32.mrf.mxu0
      %v6563 = vadd.f32 %v6415, %v6562
      %v6564 = vpop.f32.mrf.mxu0
      %v6565 = vpop.f32.mrf.mxu0
      %v6566 = vadd.f32 %v6418, %v6565
      %v6567 = vpop.f32.mrf.mxu0
      %6568 = vmatprep.mubr.bf16.mxu0 0
      %6569 = vmatmul.mubr.bf16.gmra.mxu0 %v6480
      %v6570 = vpop.f32.mrf.mxu0
      %v6571 = vadd.f32 %v6423, %v6570
      %v6572 = vpop.f32.mrf.mxu0
      %v6573 = vpop.f32.mrf.mxu0
      %v6574 = vadd.f32 %v6426, %v6573
      %v6575 = vpop.f32.mrf.mxu0
      %6576 = vmatprep.mubr.bf16.mxu0 0
      %6577 = vmatmul.mubr.bf16.gmra.mxu0 %v6483
      %v6578 = vpop.f32.mrf.mxu0
      %v6579 = vadd.f32 %v6431, %v6578
      %v6580 = vpop.f32.mrf.mxu0
      %v6581 = vpop.f32.mrf.mxu0
      %v6582 = vadd.f32 %v6434, %v6581
      %v6583 = vpop.f32.mrf.mxu0
      %6584 = vdwg.mxu0
      %v6585 = vld [vmem:[#allocation3 + $0x4] sm:$0xf]
      %v6586 = vld [vmem:[#allocation3 + $0x8] sm:$0xf]
      %v6587 = vld [vmem:[#allocation3 + $0xc] sm:$0x1]
      %v6588 = vld [vmem:[#allocation3 + $0x14] sm:$0xf]
      %v6589 = vld [vmem:[#allocation3 + $0x18] sm:$0xf]
      %v6590 = vld [vmem:[#allocation3 + $0x1c] sm:$0x1]
      %v6591 = vld [vmem:[#allocation3 + $0x24] sm:$0xf]
      %v6592 = vld [vmem:[#allocation3 + $0x28] sm:$0xf]
      %v6593 = vld [vmem:[#allocation3 + $0x2c] sm:$0x1]
      %v6594 = vld [vmem:[#allocation3 + $0x34] sm:$0xf]
      %v6595 = vld [vmem:[#allocation3 + $0x38] sm:$0xf]
      %v6596 = vld [vmem:[#allocation3 + $0x3c] sm:$0x1]
      %v6597 = vld [vmem:[#allocation3 + $0x44] sm:$0xf]
      %v6598 = vld [vmem:[#allocation3 + $0x48] sm:$0xf]
      %v6599 = vld [vmem:[#allocation3 + $0x4c] sm:$0x1]
      %v6600 = vld [vmem:[#allocation3 + $0x54] sm:$0xf]
      %v6601 = vld [vmem:[#allocation3 + $0x58] sm:$0xf]
      %v6602 = vld [vmem:[#allocation3 + $0x5c] sm:$0x1]
      %v6603 = vld [vmem:[#allocation3 + $0x64] sm:$0xf]
      %v6604 = vld [vmem:[#allocation3 + $0x68] sm:$0xf]
      %v6605 = vld [vmem:[#allocation3 + $0x6c] sm:$0x1]
      %v6606 = vld [vmem:[#allocation3 + $0x74] sm:$0xf]
      %v6607 = vld [vmem:[#allocation3 + $0x78] sm:$0xf]
      %v6608 = vld [vmem:[#allocation3 + $0x7c] sm:$0x1]
      %v6610 = vshrl.u32 %v6585, 16
      %v6612 = vrot.slane %v6610, 4
      %v6613 = vshll.u32 %v6585, 16
      %v6615 = vrot.slane %v6613, 5
      %v6616 = vor.u32 %v6612, %v6615
      %v6617 = vrot.slane %v6616, 4
      %v6619 = vshll.u32 %v6586, 16
      %v6621 = vrot.slane %v6619, 5
      %v6622 = vsel %vm902, %v6617, %v6621
      %v6623 = vshrl.u32 %v6586, 16
      %v6625 = vrot.slane %v6623, 4
      %v6626 = vor.u32 %v6625, %v6621
      %v6627 = vrot.slane %v6626, 4
      %v6629 = vshll.u32 %v6587, 16
      %v6631 = vrot.slane %v6629, 5
      %v6632 = vsel %vm902, %v6627, %v6631
      %v6634 = vshrl.u32 %v6588, 16
      %v6636 = vrot.slane %v6634, 4
      %v6637 = vshll.u32 %v6588, 16
      %v6639 = vrot.slane %v6637, 5
      %v6640 = vor.u32 %v6636, %v6639
      %v6641 = vrot.slane %v6640, 4
      %v6643 = vshll.u32 %v6589, 16
      %v6645 = vrot.slane %v6643, 5
      %v6646 = vsel %vm902, %v6641, %v6645
      %v6647 = vshrl.u32 %v6589, 16
      %v6649 = vrot.slane %v6647, 4
      %v6650 = vor.u32 %v6649, %v6645
      %v6651 = vrot.slane %v6650, 4
      %v6653 = vshll.u32 %v6590, 16
      %v6655 = vrot.slane %v6653, 5
      %v6656 = vsel %vm902, %v6651, %v6655
      %v6658 = vshrl.u32 %v6591, 16
      %v6660 = vrot.slane %v6658, 4
      %v6661 = vshll.u32 %v6591, 16
      %v6663 = vrot.slane %v6661, 5
      %v6664 = vor.u32 %v6660, %v6663
      %v6665 = vrot.slane %v6664, 4
      %v6667 = vshll.u32 %v6592, 16
      %v6669 = vrot.slane %v6667, 5
      %v6670 = vsel %vm902, %v6665, %v6669
      %v6671 = vshrl.u32 %v6592, 16
      %v6673 = vrot.slane %v6671, 4
      %v6674 = vor.u32 %v6673, %v6669
      %v6675 = vrot.slane %v6674, 4
      %v6677 = vshll.u32 %v6593, 16
      %v6679 = vrot.slane %v6677, 5
      %v6680 = vsel %vm902, %v6675, %v6679
      %v6682 = vshrl.u32 %v6594, 16
      %v6684 = vrot.slane %v6682, 4
      %v6685 = vshll.u32 %v6594, 16
      %v6687 = vrot.slane %v6685, 5
      %v6688 = vor.u32 %v6684, %v6687
      %v6689 = vrot.slane %v6688, 4
      %v6691 = vshll.u32 %v6595, 16
      %v6693 = vrot.slane %v6691, 5
      %v6694 = vsel %vm902, %v6689, %v6693
      %v6695 = vshrl.u32 %v6595, 16
      %v6697 = vrot.slane %v6695, 4
      %v6698 = vor.u32 %v6697, %v6693
      %v6699 = vrot.slane %v6698, 4
      %v6701 = vshll.u32 %v6596, 16
      %v6703 = vrot.slane %v6701, 5
      %v6704 = vsel %vm902, %v6699, %v6703
      %v6706 = vshrl.u32 %v6597, 16
      %v6708 = vrot.slane %v6706, 4
      %v6709 = vshll.u32 %v6597, 16
      %v6711 = vrot.slane %v6709, 5
      %v6712 = vor.u32 %v6708, %v6711
      %v6713 = vrot.slane %v6712, 4
      %v6715 = vshll.u32 %v6598, 16
      %v6717 = vrot.slane %v6715, 5
      %v6718 = vsel %vm902, %v6713, %v6717
      %v6719 = vshrl.u32 %v6598, 16
      %v6721 = vrot.slane %v6719, 4
      %v6722 = vor.u32 %v6721, %v6717
      %v6723 = vrot.slane %v6722, 4
      %v6725 = vshll.u32 %v6599, 16
      %v6727 = vrot.slane %v6725, 5
      %v6728 = vsel %vm902, %v6723, %v6727
      %v6730 = vshrl.u32 %v6600, 16
      %v6732 = vrot.slane %v6730, 4
      %v6733 = vshll.u32 %v6600, 16
      %v6735 = vrot.slane %v6733, 5
      %v6736 = vor.u32 %v6732, %v6735
      %v6737 = vrot.slane %v6736, 4
      %v6739 = vshll.u32 %v6601, 16
      %v6741 = vrot.slane %v6739, 5
      %v6742 = vsel %vm902, %v6737, %v6741
      %v6743 = vshrl.u32 %v6601, 16
      %v6745 = vrot.slane %v6743, 4
      %v6746 = vor.u32 %v6745, %v6741
      %v6747 = vrot.slane %v6746, 4
      %v6749 = vshll.u32 %v6602, 16
      %v6751 = vrot.slane %v6749, 5
      %v6752 = vsel %vm902, %v6747, %v6751
      %v6754 = vshrl.u32 %v6603, 16
      %v6756 = vrot.slane %v6754, 4
      %v6757 = vshll.u32 %v6603, 16
      %v6759 = vrot.slane %v6757, 5
      %v6760 = vor.u32 %v6756, %v6759
      %v6761 = vrot.slane %v6760, 4
      %v6763 = vshll.u32 %v6604, 16
      %v6765 = vrot.slane %v6763, 5
      %v6766 = vsel %vm902, %v6761, %v6765
      %v6767 = vshrl.u32 %v6604, 16
      %v6769 = vrot.slane %v6767, 4
      %v6770 = vor.u32 %v6769, %v6765
      %v6771 = vrot.slane %v6770, 4
      %v6773 = vshll.u32 %v6605, 16
      %v6775 = vrot.slane %v6773, 5
      %v6776 = vsel %vm902, %v6771, %v6775
      %v6778 = vshrl.u32 %v6606, 16
      %v6780 = vrot.slane %v6778, 4
      %v6781 = vshll.u32 %v6606, 16
      %v6783 = vrot.slane %v6781, 5
      %v6784 = vor.u32 %v6780, %v6783
      %v6785 = vrot.slane %v6784, 4
      %v6787 = vshll.u32 %v6607, 16
      %v6789 = vrot.slane %v6787, 5
      %v6790 = vsel %vm902, %v6785, %v6789
      %v6791 = vshrl.u32 %v6607, 16
      %v6793 = vrot.slane %v6791, 4
      %v6794 = vor.u32 %v6793, %v6789
      %v6795 = vrot.slane %v6794, 4
      %v6797 = vshll.u32 %v6608, 16
      %v6799 = vrot.slane %v6797, 5
      %v6800 = vsel %vm902, %v6795, %v6799
      %s6801 = scalar_lea.vmem %s2, 8
      %v6802 = vld [vmem:[%s6801] sm:$0xf]
      %v6803 = vunpack.c.l.b16 %v6622
      %v6804 = vunpack.c.l.b16 %v6632
      %v6805 = vunpack.c.l.b16 %v6646
      %v6806 = vunpack.c.l.b16 %v6656
      %v6807 = vunpack.c.l.b16 %v6670
      %v6808 = vunpack.c.l.b16 %v6680
      %v6809 = vunpack.c.l.b16 %v6694
      %v6810 = vunpack.c.l.b16 %v6704
      %v6811 = vunpack.c.l.b16 %v6718
      %v6812 = vunpack.c.l.b16 %v6728
      %v6813 = vunpack.c.l.b16 %v6742
      %v6814 = vunpack.c.l.b16 %v6752
      %v6815 = vunpack.c.l.b16 %v6766
      %v6816 = vunpack.c.l.b16 %v6776
      %v6817 = vunpack.c.l.b16 %v6790
      %v6818 = vunpack.c.l.b16 %v6800
      %v6819 = vpack.c.b16 %v6804, %v6803
      %v6820 = vpack.c.b16 %v6806, %v6805
      %v6821 = vpack.c.b16 %v6808, %v6807
      %v6822 = vpack.c.b16 %v6810, %v6809
      %v6823 = vpack.c.b16 %v6812, %v6811
      %v6824 = vpack.c.b16 %v6814, %v6813
      %v6825 = vpack.c.b16 %v6816, %v6815
      %v6826 = vpack.c.b16 %v6818, %v6817
      %v6828 = vsel %vm6311, %v6819, 0
      %v6831 = vsel %vm6311, %v6820, 0
      %v6834 = vsel %vm6311, %v6821, 0
      %v6837 = vsel %vm6311, %v6822, 0
      %v6840 = vsel %vm6311, %v6823, 0
      %v6843 = vsel %vm6311, %v6824, 0
      %v6846 = vsel %vm6311, %v6825, 0
      %v6849 = vsel %vm6311, %v6826, 0
      %v6852 = vsel %vm6336, %v6802, 0
      %6854 = vmatprep.subr.bf16.mxu0 0
      %6855 = vmatpush1.bf16.msra.mxu0 0
      %6856 = vmatprep.subr.bf16.mxu0 0
      %6857 = vmatpush1.bf16.msra.mxu0 0
      %6858 = vmatprep.subr.bf16.mxu0 0
      %6859 = vmatpush1.bf16.msra.mxu0 0
      %6860 = vmatprep.subr.bf16.mxu0 0
      %6861 = vmatpush1.bf16.msra.mxu0 0
      %6862 = vmatprep.subr.bf16.mxu0 0
      %6863 = vmatpush1.bf16.msra.mxu0 0
      %6864 = vmatprep.subr.bf16.mxu0 0
      %6865 = vmatpush1.bf16.msra.mxu0 0
      %6866 = vmatprep.subr.bf16.mxu0 0
      %6867 = vmatpush1.bf16.msra.mxu0 0
      %6868 = vmatprep.subr.bf16.mxu0 0
      %6869 = vmatpush1.bf16.msra.mxu0 %v6852
      %6870 = vmatprep.subr.bf16.mxu0 0
      %6871 = vmatpush2.bf16.msra.mxu0 0
      %6872 = vmatprep.subr.bf16.mxu0 0
      %6873 = vmatpush2.bf16.msra.mxu0 0
      %6874 = vmatprep.subr.bf16.mxu0 0
      %6875 = vmatpush2.bf16.msra.mxu0 0
      %6876 = vmatprep.subr.bf16.mxu0 0
      %6877 = vmatpush2.bf16.msra.mxu0 0
      %6878 = vmatprep.subr.bf16.mxu0 0
      %6879 = vmatpush2.bf16.msra.mxu0 0
      %6880 = vmatprep.subr.bf16.mxu0 0
      %6881 = vmatpush2.bf16.msra.mxu0 0
      %6882 = vmatprep.subr.bf16.mxu0 0
      %6883 = vmatpush2.bf16.msra.mxu0 0
      %6884 = vmatprep.subr.bf16.mxu0 0
      %6885 = vmatpush2.bf16.msra.mxu0 0
      %6886 = vmatprep.mubr.bf16.mxu0 0
      %6887 = vmatmul.mubr.bf16.gmra.mxu0 %v6828
      %v6888 = vpop.f32.mrf.mxu0
      %v6889 = vadd.f32 0.0, %v6888
      %v6890 = vpop.f32.mrf.mxu0
      %v6891 = vpop.f32.mrf.mxu0
      %v6892 = vadd.f32 0.0, %v6891
      %v6893 = vpop.f32.mrf.mxu0
      %6894 = vmatprep.mubr.bf16.mxu0 0
      %6895 = vmatmul.mubr.bf16.gmra.mxu0 %v6831
      %v6896 = vpop.f32.mrf.mxu0
      %v6897 = vadd.f32 0.0, %v6896
      %v6898 = vpop.f32.mrf.mxu0
      %v6899 = vpop.f32.mrf.mxu0
      %v6900 = vadd.f32 0.0, %v6899
      %v6901 = vpop.f32.mrf.mxu0
      %6902 = vmatprep.mubr.bf16.mxu0 0
      %6903 = vmatmul.mubr.bf16.gmra.mxu0 %v6834
      %v6904 = vpop.f32.mrf.mxu0
      %v6905 = vadd.f32 0.0, %v6904
      %v6906 = vpop.f32.mrf.mxu0
      %v6907 = vpop.f32.mrf.mxu0
      %v6908 = vadd.f32 0.0, %v6907
      %v6909 = vpop.f32.mrf.mxu0
      %6910 = vmatprep.mubr.bf16.mxu0 0
      %6911 = vmatmul.mubr.bf16.gmra.mxu0 %v6837
      %v6912 = vpop.f32.mrf.mxu0
      %v6913 = vadd.f32 0.0, %v6912
      %v6914 = vpop.f32.mrf.mxu0
      %v6915 = vpop.f32.mrf.mxu0
      %v6916 = vadd.f32 0.0, %v6915
      %v6917 = vpop.f32.mrf.mxu0
      %6918 = vmatprep.mubr.bf16.mxu0 0
      %6919 = vmatmul.mubr.bf16.gmra.mxu0 %v6840
      %v6920 = vpop.f32.mrf.mxu0
      %v6921 = vadd.f32 0.0, %v6920
      %v6922 = vpop.f32.mrf.mxu0
      %v6923 = vpop.f32.mrf.mxu0
      %v6924 = vadd.f32 0.0, %v6923
      %v6925 = vpop.f32.mrf.mxu0
      %6926 = vmatprep.mubr.bf16.mxu0 0
      %6927 = vmatmul.mubr.bf16.gmra.mxu0 %v6843
      %v6928 = vpop.f32.mrf.mxu0
      %v6929 = vadd.f32 0.0, %v6928
      %v6930 = vpop.f32.mrf.mxu0
      %v6931 = vpop.f32.mrf.mxu0
      %v6932 = vadd.f32 0.0, %v6931
      %v6933 = vpop.f32.mrf.mxu0
      %6934 = vmatprep.mubr.bf16.mxu0 0
      %6935 = vmatmul.mubr.bf16.gmra.mxu0 %v6846
      %v6936 = vpop.f32.mrf.mxu0
      %v6937 = vadd.f32 0.0, %v6936
      %v6938 = vpop.f32.mrf.mxu0
      %v6939 = vpop.f32.mrf.mxu0
      %v6940 = vadd.f32 0.0, %v6939
      %v6941 = vpop.f32.mrf.mxu0
      %6942 = vmatprep.mubr.bf16.mxu0 0
      %6943 = vmatmul.mubr.bf16.gmra.mxu0 %v6849
      %v6944 = vpop.f32.mrf.mxu0
      %v6945 = vadd.f32 0.0, %v6944
      %v6946 = vpop.f32.mrf.mxu0
      %v6947 = vpop.f32.mrf.mxu0
      %v6948 = vadd.f32 0.0, %v6947
      %v6949 = vpop.f32.mrf.mxu0
      %6950 = vdwg.mxu0
      %v6951 = vadd.f32 %v6523, %v6889
      %v6952 = vadd.f32 %v6526, %v6892
      %v6953 = vadd.f32 %v6531, %v6897
      %v6954 = vadd.f32 %v6534, %v6900
      %v6955 = vadd.f32 %v6539, %v6905
      %v6956 = vadd.f32 %v6542, %v6908
      %v6957 = vadd.f32 %v6547, %v6913
      %v6958 = vadd.f32 %v6550, %v6916
      %v6959 = vadd.f32 %v6555, %v6921
      %v6960 = vadd.f32 %v6558, %v6924
      %v6961 = vadd.f32 %v6563, %v6929
      %v6962 = vadd.f32 %v6566, %v6932
      %v6963 = vadd.f32 %v6571, %v6937
      %v6964 = vadd.f32 %v6574, %v6940
      %v6965 = vadd.f32 %v6579, %v6945
      %v6966 = vadd.f32 %v6582, %v6948
      %v6967 = vld [vmem:[%s3202] sm:$0x8]
      %v6968 = vld [vmem:[%s3202 + $0x4] sm:$0xf]
      %v6969 = vld [vmem:[%s3202 + $0x8] sm:$0xf]
      %v6970 = vld [vmem:[%s3202 + $0x10] sm:$0x8]
      %v6971 = vld [vmem:[%s3202 + $0x14] sm:$0xf]
      %v6972 = vld [vmem:[%s3202 + $0x18] sm:$0xf]
      %v6973 = vld [vmem:[%s3202 + $0x20] sm:$0x8]
      %v6974 = vld [vmem:[%s3202 + $0x24] sm:$0xf]
      %v6975 = vld [vmem:[%s3202 + $0x28] sm:$0xf]
      %v6976 = vld [vmem:[%s3202 + $0x30] sm:$0x8]
      %v6977 = vld [vmem:[%s3202 + $0x34] sm:$0xf]
      %v6978 = vld [vmem:[%s3202 + $0x38] sm:$0xf]
      %v6979 = vld [vmem:[%s3202 + $0x40] sm:$0x8]
      %v6980 = vld [vmem:[%s3202 + $0x44] sm:$0xf]
      %v6981 = vld [vmem:[%s3202 + $0x48] sm:$0xf]
      %v6982 = vld [vmem:[%s3202 + $0x50] sm:$0x8]
      %v6983 = vld [vmem:[%s3202 + $0x54] sm:$0xf]
      %v6984 = vld [vmem:[%s3202 + $0x58] sm:$0xf]
      %v6985 = vld [vmem:[%s3202 + $0x60] sm:$0x8]
      %v6986 = vld [vmem:[%s3202 + $0x64] sm:$0xf]
      %v6987 = vld [vmem:[%s3202 + $0x68] sm:$0xf]
      %v6988 = vld [vmem:[%s3202 + $0x70] sm:$0x8]
      %v6989 = vld [vmem:[%s3202 + $0x74] sm:$0xf]
      %v6990 = vld [vmem:[%s3202 + $0x78] sm:$0xf]
      %v6992 = vshrl.u32 %v6967, 16
      %v6994 = vrot.slane %v6992, 7
      %v6995 = vrot.slane %v6994, 4
      %v6997 = vshrl.u32 %v6968, 16
      %v6999 = vrot.slane %v6997, 7
      %v7000 = vshll.u32 %v6968, 16
      %v7002 = vor.u32 %v6999, %v7000
      %v7003 = vsel %vm382, %v6995, %v7002
      %v7004 = vrot.slane %v6999, 4
      %v7006 = vshrl.u32 %v6969, 16
      %v7008 = vrot.slane %v7006, 7
      %v7009 = vshll.u32 %v6969, 16
      %v7011 = vor.u32 %v7008, %v7009
      %v7012 = vsel %vm382, %v7004, %v7011
      %v7014 = vshrl.u32 %v6970, 16
      %v7016 = vrot.slane %v7014, 7
      %v7017 = vrot.slane %v7016, 4
      %v7019 = vshrl.u32 %v6971, 16
      %v7021 = vrot.slane %v7019, 7
      %v7022 = vshll.u32 %v6971, 16
      %v7024 = vor.u32 %v7021, %v7022
      %v7025 = vsel %vm382, %v7017, %v7024
      %v7026 = vrot.slane %v7021, 4
      %v7028 = vshrl.u32 %v6972, 16
      %v7030 = vrot.slane %v7028, 7
      %v7031 = vshll.u32 %v6972, 16
      %v7033 = vor.u32 %v7030, %v7031
      %v7034 = vsel %vm382, %v7026, %v7033
      %v7036 = vshrl.u32 %v6973, 16
      %v7038 = vrot.slane %v7036, 7
      %v7039 = vrot.slane %v7038, 4
      %v7041 = vshrl.u32 %v6974, 16
      %v7043 = vrot.slane %v7041, 7
      %v7044 = vshll.u32 %v6974, 16
      %v7046 = vor.u32 %v7043, %v7044
      %v7047 = vsel %vm382, %v7039, %v7046
      %v7048 = vrot.slane %v7043, 4
      %v7050 = vshrl.u32 %v6975, 16
      %v7052 = vrot.slane %v7050, 7
      %v7053 = vshll.u32 %v6975, 16
      %v7055 = vor.u32 %v7052, %v7053
      %v7056 = vsel %vm382, %v7048, %v7055
      %v7058 = vshrl.u32 %v6976, 16
      %v7060 = vrot.slane %v7058, 7
      %v7061 = vrot.slane %v7060, 4
      %v7063 = vshrl.u32 %v6977, 16
      %v7065 = vrot.slane %v7063, 7
      %v7066 = vshll.u32 %v6977, 16
      %v7068 = vor.u32 %v7065, %v7066
      %v7069 = vsel %vm382, %v7061, %v7068
      %v7070 = vrot.slane %v7065, 4
      %v7072 = vshrl.u32 %v6978, 16
      %v7074 = vrot.slane %v7072, 7
      %v7075 = vshll.u32 %v6978, 16
      %v7077 = vor.u32 %v7074, %v7075
      %v7078 = vsel %vm382, %v7070, %v7077
      %v7080 = vshrl.u32 %v6979, 16
      %v7082 = vrot.slane %v7080, 7
      %v7083 = vrot.slane %v7082, 4
      %v7085 = vshrl.u32 %v6980, 16
      %v7087 = vrot.slane %v7085, 7
      %v7088 = vshll.u32 %v6980, 16
      %v7090 = vor.u32 %v7087, %v7088
      %v7091 = vsel %vm382, %v7083, %v7090
      %v7092 = vrot.slane %v7087, 4
      %v7094 = vshrl.u32 %v6981, 16
      %v7096 = vrot.slane %v7094, 7
      %v7097 = vshll.u32 %v6981, 16
      %v7099 = vor.u32 %v7096, %v7097
      %v7100 = vsel %vm382, %v7092, %v7099
      %v7102 = vshrl.u32 %v6982, 16
      %v7104 = vrot.slane %v7102, 7
      %v7105 = vrot.slane %v7104, 4
      %v7107 = vshrl.u32 %v6983, 16
      %v7109 = vrot.slane %v7107, 7
      %v7110 = vshll.u32 %v6983, 16
      %v7112 = vor.u32 %v7109, %v7110
      %v7113 = vsel %vm382, %v7105, %v7112
      %v7114 = vrot.slane %v7109, 4
      %v7116 = vshrl.u32 %v6984, 16
      %v7118 = vrot.slane %v7116, 7
      %v7119 = vshll.u32 %v6984, 16
      %v7121 = vor.u32 %v7118, %v7119
      %v7122 = vsel %vm382, %v7114, %v7121
      %v7124 = vshrl.u32 %v6985, 16
      %v7126 = vrot.slane %v7124, 7
      %v7127 = vrot.slane %v7126, 4
      %v7129 = vshrl.u32 %v6986, 16
      %v7131 = vrot.slane %v7129, 7
      %v7132 = vshll.u32 %v6986, 16
      %v7134 = vor.u32 %v7131, %v7132
      %v7135 = vsel %vm382, %v7127, %v7134
      %v7136 = vrot.slane %v7131, 4
      %v7138 = vshrl.u32 %v6987, 16
      %v7140 = vrot.slane %v7138, 7
      %v7141 = vshll.u32 %v6987, 16
      %v7143 = vor.u32 %v7140, %v7141
      %v7144 = vsel %vm382, %v7136, %v7143
      %v7146 = vshrl.u32 %v6988, 16
      %v7148 = vrot.slane %v7146, 7
      %v7149 = vrot.slane %v7148, 4
      %v7151 = vshrl.u32 %v6989, 16
      %v7153 = vrot.slane %v7151, 7
      %v7154 = vshll.u32 %v6989, 16
      %v7156 = vor.u32 %v7153, %v7154
      %v7157 = vsel %vm382, %v7149, %v7156
      %v7158 = vrot.slane %v7153, 4
      %v7160 = vshrl.u32 %v6990, 16
      %v7162 = vrot.slane %v7160, 7
      %v7163 = vshll.u32 %v6990, 16
      %v7165 = vor.u32 %v7162, %v7163
      %v7166 = vsel %vm382, %v7158, %v7165
      %s7167 = scalar_lea.vmem %s2, 12
      %v7168 = vld [vmem:[%s7167] sm:$0xf]
      %v7169 = vunpack.c.l.b16 %v7003
      %v7170 = vunpack.c.l.b16 %v7012
      %v7171 = vunpack.c.l.b16 %v7025
      %v7172 = vunpack.c.l.b16 %v7034
      %v7173 = vunpack.c.l.b16 %v7047
      %v7174 = vunpack.c.l.b16 %v7056
      %v7175 = vunpack.c.l.b16 %v7069
      %v7176 = vunpack.c.l.b16 %v7078
      %v7177 = vunpack.c.l.b16 %v7091
      %v7178 = vunpack.c.l.b16 %v7100
      %v7179 = vunpack.c.l.b16 %v7113
      %v7180 = vunpack.c.l.b16 %v7122
      %v7181 = vunpack.c.l.b16 %v7135
      %v7182 = vunpack.c.l.b16 %v7144
      %v7183 = vunpack.c.l.b16 %v7157
      %v7184 = vunpack.c.l.b16 %v7166
      %v7185 = vpack.c.b16 %v7170, %v7169
      %v7186 = vpack.c.b16 %v7172, %v7171
      %v7187 = vpack.c.b16 %v7174, %v7173
      %v7188 = vpack.c.b16 %v7176, %v7175
      %v7189 = vpack.c.b16 %v7178, %v7177
      %v7190 = vpack.c.b16 %v7180, %v7179
      %v7191 = vpack.c.b16 %v7182, %v7181
      %v7192 = vpack.c.b16 %v7184, %v7183
      %v7194 = vsel %vm6311, %v7185, 0
      %v7197 = vsel %vm6311, %v7186, 0
      %v7200 = vsel %vm6311, %v7187, 0
      %v7203 = vsel %vm6311, %v7188, 0
      %v7206 = vsel %vm6311, %v7189, 0
      %v7209 = vsel %vm6311, %v7190, 0
      %v7212 = vsel %vm6311, %v7191, 0
      %v7215 = vsel %vm6311, %v7192, 0
      %v7218 = vsel %vm6336, %v7168, 0
      %7220 = vmatprep.subr.bf16.mxu0 0
      %7221 = vmatpush1.bf16.msra.mxu0 0
      %7222 = vmatprep.subr.bf16.mxu0 0
      %7223 = vmatpush1.bf16.msra.mxu0 0
      %7224 = vmatprep.subr.bf16.mxu0 0
      %7225 = vmatpush1.bf16.msra.mxu0 0
      %7226 = vmatprep.subr.bf16.mxu0 0
      %7227 = vmatpush1.bf16.msra.mxu0 0
      %7228 = vmatprep.subr.bf16.mxu0 0
      %7229 = vmatpush1.bf16.msra.mxu0 0
      %7230 = vmatprep.subr.bf16.mxu0 0
      %7231 = vmatpush1.bf16.msra.mxu0 0
      %7232 = vmatprep.subr.bf16.mxu0 0
      %7233 = vmatpush1.bf16.msra.mxu0 0
      %7234 = vmatprep.subr.bf16.mxu0 0
      %7235 = vmatpush1.bf16.msra.mxu0 %v7218
      %7236 = vmatprep.subr.bf16.mxu0 0
      %7237 = vmatpush2.bf16.msra.mxu0 0
      %7238 = vmatprep.subr.bf16.mxu0 0
      %7239 = vmatpush2.bf16.msra.mxu0 0
      %7240 = vmatprep.subr.bf16.mxu0 0
      %7241 = vmatpush2.bf16.msra.mxu0 0
      %7242 = vmatprep.subr.bf16.mxu0 0
      %7243 = vmatpush2.bf16.msra.mxu0 0
      %7244 = vmatprep.subr.bf16.mxu0 0
      %7245 = vmatpush2.bf16.msra.mxu0 0
      %7246 = vmatprep.subr.bf16.mxu0 0
      %7247 = vmatpush2.bf16.msra.mxu0 0
      %7248 = vmatprep.subr.bf16.mxu0 0
      %7249 = vmatpush2.bf16.msra.mxu0 0
      %7250 = vmatprep.subr.bf16.mxu0 0
      %7251 = vmatpush2.bf16.msra.mxu0 0
      %7252 = vmatprep.mubr.bf16.mxu0 0
      %7253 = vmatmul.mubr.bf16.gmra.mxu0 %v7194
      %v7254 = vpop.f32.mrf.mxu0
      %v7255 = vadd.f32 0.0, %v7254
      %v7256 = vpop.f32.mrf.mxu0
      %v7257 = vpop.f32.mrf.mxu0
      %v7258 = vadd.f32 0.0, %v7257
      %v7259 = vpop.f32.mrf.mxu0
      %7260 = vmatprep.mubr.bf16.mxu0 0
      %7261 = vmatmul.mubr.bf16.gmra.mxu0 %v7197
      %v7262 = vpop.f32.mrf.mxu0
      %v7263 = vadd.f32 0.0, %v7262
      %v7264 = vpop.f32.mrf.mxu0
      %v7265 = vpop.f32.mrf.mxu0
      %v7266 = vadd.f32 0.0, %v7265
      %v7267 = vpop.f32.mrf.mxu0
      %7268 = vmatprep.mubr.bf16.mxu0 0
      %7269 = vmatmul.mubr.bf16.gmra.mxu0 %v7200
      %v7270 = vpop.f32.mrf.mxu0
      %v7271 = vadd.f32 0.0, %v7270
      %v7272 = vpop.f32.mrf.mxu0
      %v7273 = vpop.f32.mrf.mxu0
      %v7274 = vadd.f32 0.0, %v7273
      %v7275 = vpop.f32.mrf.mxu0
      %7276 = vmatprep.mubr.bf16.mxu0 0
      %7277 = vmatmul.mubr.bf16.gmra.mxu0 %v7203
      %v7278 = vpop.f32.mrf.mxu0
      %v7279 = vadd.f32 0.0, %v7278
      %v7280 = vpop.f32.mrf.mxu0
      %v7281 = vpop.f32.mrf.mxu0
      %v7282 = vadd.f32 0.0, %v7281
      %v7283 = vpop.f32.mrf.mxu0
      %7284 = vmatprep.mubr.bf16.mxu0 0
      %7285 = vmatmul.mubr.bf16.gmra.mxu0 %v7206
      %v7286 = vpop.f32.mrf.mxu0
      %v7287 = vadd.f32 0.0, %v7286
      %v7288 = vpop.f32.mrf.mxu0
      %v7289 = vpop.f32.mrf.mxu0
      %v7290 = vadd.f32 0.0, %v7289
      %v7291 = vpop.f32.mrf.mxu0
      %7292 = vmatprep.mubr.bf16.mxu0 0
      %7293 = vmatmul.mubr.bf16.gmra.mxu0 %v7209
      %v7294 = vpop.f32.mrf.mxu0
      %v7295 = vadd.f32 0.0, %v7294
      %v7296 = vpop.f32.mrf.mxu0
      %v7297 = vpop.f32.mrf.mxu0
      %v7298 = vadd.f32 0.0, %v7297
      %v7299 = vpop.f32.mrf.mxu0
      %7300 = vmatprep.mubr.bf16.mxu0 0
      %7301 = vmatmul.mubr.bf16.gmra.mxu0 %v7212
      %v7302 = vpop.f32.mrf.mxu0
      %v7303 = vadd.f32 0.0, %v7302
      %v7304 = vpop.f32.mrf.mxu0
      %v7305 = vpop.f32.mrf.mxu0
      %v7306 = vadd.f32 0.0, %v7305
      %v7307 = vpop.f32.mrf.mxu0
      %7308 = vmatprep.mubr.bf16.mxu0 0
      %7309 = vmatmul.mubr.bf16.gmra.mxu0 %v7215
      %v7310 = vpop.f32.mrf.mxu0
      %v7311 = vadd.f32 0.0, %v7310
      %v7312 = vpop.f32.mrf.mxu0
      %v7313 = vpop.f32.mrf.mxu0
      %v7314 = vadd.f32 0.0, %v7313
      %v7315 = vpop.f32.mrf.mxu0
      %7316 = vdwg.mxu0
      %v7317 = vadd.f32 %v6951, %v7255
      %v7318 = vadd.f32 %v6952, %v7258
      %v7319 = vadd.f32 %v6953, %v7263
      %v7320 = vadd.f32 %v6954, %v7266
      %v7321 = vadd.f32 %v6955, %v7271
      %v7322 = vadd.f32 %v6956, %v7274
      %v7323 = vadd.f32 %v6957, %v7279
      %v7324 = vadd.f32 %v6958, %v7282
      %v7325 = vadd.f32 %v6959, %v7287
      %v7326 = vadd.f32 %v6960, %v7290
      %v7327 = vadd.f32 %v6961, %v7295
      %v7328 = vadd.f32 %v6962, %v7298
      %v7329 = vadd.f32 %v6963, %v7303
      %v7330 = vadd.f32 %v6964, %v7306
      %v7331 = vadd.f32 %v6965, %v7311
      %v7332 = vadd.f32 %v6966, %v7314
      %s7333 = scalar_lea.vmem %s2, 16
      %v7334 = vld [vmem:[%s7333] sm:$0xf]
      %v7351 = vunpack.c.l.b16 %v6968
      %v7352 = vunpack.c.l.b16 %v6969
      %v7353 = vunpack.c.l.b16 %v6971
      %v7354 = vunpack.c.l.b16 %v6972
      %v7355 = vunpack.c.l.b16 %v6974
      %v7356 = vunpack.c.l.b16 %v6975
      %v7357 = vunpack.c.l.b16 %v6977
      %v7358 = vunpack.c.l.b16 %v6978
      %v7359 = vunpack.c.l.b16 %v6980
      %v7360 = vunpack.c.l.b16 %v6981
      %v7361 = vunpack.c.l.b16 %v6983
      %v7362 = vunpack.c.l.b16 %v6984
      %v7363 = vunpack.c.l.b16 %v6986
      %v7364 = vunpack.c.l.b16 %v6987
      %v7365 = vunpack.c.l.b16 %v6989
      %v7366 = vunpack.c.l.b16 %v6990
      %v7367 = vpack.c.b16 %v7352, %v7351
      %v7368 = vpack.c.b16 %v7354, %v7353
      %v7369 = vpack.c.b16 %v7356, %v7355
      %v7370 = vpack.c.b16 %v7358, %v7357
      %v7371 = vpack.c.b16 %v7360, %v7359
      %v7372 = vpack.c.b16 %v7362, %v7361
      %v7373 = vpack.c.b16 %v7364, %v7363
      %v7374 = vpack.c.b16 %v7366, %v7365
      %v7376 = vsel %vm6311, %v7367, 0
      %v7379 = vsel %vm6311, %v7368, 0
      %v7382 = vsel %vm6311, %v7369, 0
      %v7385 = vsel %vm6311, %v7370, 0
      %v7388 = vsel %vm6311, %v7371, 0
      %v7391 = vsel %vm6311, %v7372, 0
      %v7394 = vsel %vm6311, %v7373, 0
      %v7397 = vsel %vm6311, %v7374, 0
      %v7400 = vsel %vm6336, %v7334, 0
      %7402 = vmatprep.subr.bf16.mxu0 0
      %7403 = vmatpush1.bf16.msra.mxu0 0
      %7404 = vmatprep.subr.bf16.mxu0 0
      %7405 = vmatpush1.bf16.msra.mxu0 0
      %7406 = vmatprep.subr.bf16.mxu0 0
      %7407 = vmatpush1.bf16.msra.mxu0 0
      %7408 = vmatprep.subr.bf16.mxu0 0
      %7409 = vmatpush1.bf16.msra.mxu0 0
      %7410 = vmatprep.subr.bf16.mxu0 0
      %7411 = vmatpush1.bf16.msra.mxu0 0
      %7412 = vmatprep.subr.bf16.mxu0 0
      %7413 = vmatpush1.bf16.msra.mxu0 0
      %7414 = vmatprep.subr.bf16.mxu0 0
      %7415 = vmatpush1.bf16.msra.mxu0 0
      %7416 = vmatprep.subr.bf16.mxu0 0
      %7417 = vmatpush1.bf16.msra.mxu0 %v7400
      %7418 = vmatprep.subr.bf16.mxu0 0
      %7419 = vmatpush2.bf16.msra.mxu0 0
      %7420 = vmatprep.subr.bf16.mxu0 0
      %7421 = vmatpush2.bf16.msra.mxu0 0
      %7422 = vmatprep.subr.bf16.mxu0 0
      %7423 = vmatpush2.bf16.msra.mxu0 0
      %7424 = vmatprep.subr.bf16.mxu0 0
      %7425 = vmatpush2.bf16.msra.mxu0 0
      %7426 = vmatprep.subr.bf16.mxu0 0
      %7427 = vmatpush2.bf16.msra.mxu0 0
      %7428 = vmatprep.subr.bf16.mxu0 0
      %7429 = vmatpush2.bf16.msra.mxu0 0
      %7430 = vmatprep.subr.bf16.mxu0 0
      %7431 = vmatpush2.bf16.msra.mxu0 0
      %7432 = vmatprep.subr.bf16.mxu0 0
      %7433 = vmatpush2.bf16.msra.mxu0 0
      %7434 = vmatprep.mubr.bf16.mxu0 0
      %7435 = vmatmul.mubr.bf16.gmra.mxu0 %v7376
      %v7436 = vpop.f32.mrf.mxu0
      %v7437 = vadd.f32 0.0, %v7436
      %v7438 = vpop.f32.mrf.mxu0
      %v7439 = vpop.f32.mrf.mxu0
      %v7440 = vadd.f32 0.0, %v7439
      %v7441 = vpop.f32.mrf.mxu0
      %7442 = vmatprep.mubr.bf16.mxu0 0
      %7443 = vmatmul.mubr.bf16.gmra.mxu0 %v7379
      %v7444 = vpop.f32.mrf.mxu0
      %v7445 = vadd.f32 0.0, %v7444
      %v7446 = vpop.f32.mrf.mxu0
      %v7447 = vpop.f32.mrf.mxu0
      %v7448 = vadd.f32 0.0, %v7447
      %v7449 = vpop.f32.mrf.mxu0
      %7450 = vmatprep.mubr.bf16.mxu0 0
      %7451 = vmatmul.mubr.bf16.gmra.mxu0 %v7382
      %v7452 = vpop.f32.mrf.mxu0
      %v7453 = vadd.f32 0.0, %v7452
      %v7454 = vpop.f32.mrf.mxu0
      %v7455 = vpop.f32.mrf.mxu0
      %v7456 = vadd.f32 0.0, %v7455
      %v7457 = vpop.f32.mrf.mxu0
      %7458 = vmatprep.mubr.bf16.mxu0 0
      %7459 = vmatmul.mubr.bf16.gmra.mxu0 %v7385
      %v7460 = vpop.f32.mrf.mxu0
      %v7461 = vadd.f32 0.0, %v7460
      %v7462 = vpop.f32.mrf.mxu0
      %v7463 = vpop.f32.mrf.mxu0
      %v7464 = vadd.f32 0.0, %v7463
      %v7465 = vpop.f32.mrf.mxu0
      %7466 = vmatprep.mubr.bf16.mxu0 0
      %7467 = vmatmul.mubr.bf16.gmra.mxu0 %v7388
      %v7468 = vpop.f32.mrf.mxu0
      %v7469 = vadd.f32 0.0, %v7468
      %v7470 = vpop.f32.mrf.mxu0
      %v7471 = vpop.f32.mrf.mxu0
      %v7472 = vadd.f32 0.0, %v7471
      %v7473 = vpop.f32.mrf.mxu0
      %7474 = vmatprep.mubr.bf16.mxu0 0
      %7475 = vmatmul.mubr.bf16.gmra.mxu0 %v7391
      %v7476 = vpop.f32.mrf.mxu0
      %v7477 = vadd.f32 0.0, %v7476
      %v7478 = vpop.f32.mrf.mxu0
      %v7479 = vpop.f32.mrf.mxu0
      %v7480 = vadd.f32 0.0, %v7479
      %v7481 = vpop.f32.mrf.mxu0
      %7482 = vmatprep.mubr.bf16.mxu0 0
      %7483 = vmatmul.mubr.bf16.gmra.mxu0 %v7394
      %v7484 = vpop.f32.mrf.mxu0
      %v7485 = vadd.f32 0.0, %v7484
      %v7486 = vpop.f32.mrf.mxu0
      %v7487 = vpop.f32.mrf.mxu0
      %v7488 = vadd.f32 0.0, %v7487
      %v7489 = vpop.f32.mrf.mxu0
      %7490 = vmatprep.mubr.bf16.mxu0 0
      %7491 = vmatmul.mubr.bf16.gmra.mxu0 %v7397
      %v7492 = vpop.f32.mrf.mxu0
      %v7493 = vadd.f32 0.0, %v7492
      %v7494 = vpop.f32.mrf.mxu0
      %v7495 = vpop.f32.mrf.mxu0
      %v7496 = vadd.f32 0.0, %v7495
      %v7497 = vpop.f32.mrf.mxu0
      %7498 = vdwg.mxu0
      %v7499 = vadd.f32 %v7317, %v7437
      %v7500 = vadd.f32 %v7318, %v7440
      %v7501 = vadd.f32 %v7319, %v7445
      %v7502 = vadd.f32 %v7320, %v7448
      %v7503 = vadd.f32 %v7321, %v7453
      %v7504 = vadd.f32 %v7322, %v7456
      %v7505 = vadd.f32 %v7323, %v7461
      %v7506 = vadd.f32 %v7324, %v7464
      %v7507 = vadd.f32 %v7325, %v7469
      %v7508 = vadd.f32 %v7326, %v7472
      %v7509 = vadd.f32 %v7327, %v7477
      %v7510 = vadd.f32 %v7328, %v7480
      %v7511 = vadd.f32 %v7329, %v7485
      %v7512 = vadd.f32 %v7330, %v7488
      %v7513 = vadd.f32 %v7331, %v7493
      %v7514 = vadd.f32 %v7332, %v7496
      %v7515 = vld [vmem:[%s3202 + $0x4] sm:$0xf]
      %v7516 = vld [vmem:[%s3202 + $0x8] sm:$0xf]
      %v7517 = vld [vmem:[%s3202 + $0xc] sm:$0x1]
      %v7518 = vld [vmem:[%s3202 + $0x14] sm:$0xf]
      %v7519 = vld [vmem:[%s3202 + $0x18] sm:$0xf]
      %v7520 = vld [vmem:[%s3202 + $0x1c] sm:$0x1]
      %v7521 = vld [vmem:[%s3202 + $0x24] sm:$0xf]
      %v7522 = vld [vmem:[%s3202 + $0x28] sm:$0xf]
      %v7523 = vld [vmem:[%s3202 + $0x2c] sm:$0x1]
      %v7524 = vld [vmem:[%s3202 + $0x34] sm:$0xf]
      %v7525 = vld [vmem:[%s3202 + $0x38] sm:$0xf]
      %v7526 = vld [vmem:[%s3202 + $0x3c] sm:$0x1]
      %v7527 = vld [vmem:[%s3202 + $0x44] sm:$0xf]
      %v7528 = vld [vmem:[%s3202 + $0x48] sm:$0xf]
      %v7529 = vld [vmem:[%s3202 + $0x4c] sm:$0x1]
      %v7530 = vld [vmem:[%s3202 + $0x54] sm:$0xf]
      %v7531 = vld [vmem:[%s3202 + $0x58] sm:$0xf]
      %v7532 = vld [vmem:[%s3202 + $0x5c] sm:$0x1]
      %v7533 = vld [vmem:[%s3202 + $0x64] sm:$0xf]
      %v7534 = vld [vmem:[%s3202 + $0x68] sm:$0xf]
      %v7535 = vld [vmem:[%s3202 + $0x6c] sm:$0x1]
      %v7536 = vld [vmem:[%s3202 + $0x74] sm:$0xf]
      %v7537 = vld [vmem:[%s3202 + $0x78] sm:$0xf]
      %v7538 = vld [vmem:[%s3202 + $0x7c] sm:$0x1]
      %v7540 = vshrl.u32 %v7515, 16
      %v7542 = vrot.slane %v7540, 4
      %v7543 = vshll.u32 %v7515, 16
      %v7545 = vrot.slane %v7543, 5
      %v7546 = vor.u32 %v7542, %v7545
      %v7547 = vrot.slane %v7546, 4
      %v7549 = vshll.u32 %v7516, 16
      %v7551 = vrot.slane %v7549, 5
      %v7552 = vsel %vm902, %v7547, %v7551
      %v7553 = vshrl.u32 %v7516, 16
      %v7555 = vrot.slane %v7553, 4
      %v7556 = vor.u32 %v7555, %v7551
      %v7557 = vrot.slane %v7556, 4
      %v7559 = vshll.u32 %v7517, 16
      %v7561 = vrot.slane %v7559, 5
      %v7562 = vsel %vm902, %v7557, %v7561
      %v7564 = vshrl.u32 %v7518, 16
      %v7566 = vrot.slane %v7564, 4
      %v7567 = vshll.u32 %v7518, 16
      %v7569 = vrot.slane %v7567, 5
      %v7570 = vor.u32 %v7566, %v7569
      %v7571 = vrot.slane %v7570, 4
      %v7573 = vshll.u32 %v7519, 16
      %v7575 = vrot.slane %v7573, 5
      %v7576 = vsel %vm902, %v7571, %v7575
      %v7577 = vshrl.u32 %v7519, 16
      %v7579 = vrot.slane %v7577, 4
      %v7580 = vor.u32 %v7579, %v7575
      %v7581 = vrot.slane %v7580, 4
      %v7583 = vshll.u32 %v7520, 16
      %v7585 = vrot.slane %v7583, 5
      %v7586 = vsel %vm902, %v7581, %v7585
      %v7588 = vshrl.u32 %v7521, 16
      %v7590 = vrot.slane %v7588, 4
      %v7591 = vshll.u32 %v7521, 16
      %v7593 = vrot.slane %v7591, 5
      %v7594 = vor.u32 %v7590, %v7593
      %v7595 = vrot.slane %v7594, 4
      %v7597 = vshll.u32 %v7522, 16
      %v7599 = vrot.slane %v7597, 5
      %v7600 = vsel %vm902, %v7595, %v7599
      %v7601 = vshrl.u32 %v7522, 16
      %v7603 = vrot.slane %v7601, 4
      %v7604 = vor.u32 %v7603, %v7599
      %v7605 = vrot.slane %v7604, 4
      %v7607 = vshll.u32 %v7523, 16
      %v7609 = vrot.slane %v7607, 5
      %v7610 = vsel %vm902, %v7605, %v7609
      %v7612 = vshrl.u32 %v7524, 16
      %v7614 = vrot.slane %v7612, 4
      %v7615 = vshll.u32 %v7524, 16
      %v7617 = vrot.slane %v7615, 5
      %v7618 = vor.u32 %v7614, %v7617
      %v7619 = vrot.slane %v7618, 4
      %v7621 = vshll.u32 %v7525, 16
      %v7623 = vrot.slane %v7621, 5
      %v7624 = vsel %vm902, %v7619, %v7623
      %v7625 = vshrl.u32 %v7525, 16
      %v7627 = vrot.slane %v7625, 4
      %v7628 = vor.u32 %v7627, %v7623
      %v7629 = vrot.slane %v7628, 4
      %v7631 = vshll.u32 %v7526, 16
      %v7633 = vrot.slane %v7631, 5
      %v7634 = vsel %vm902, %v7629, %v7633
      %v7636 = vshrl.u32 %v7527, 16
      %v7638 = vrot.slane %v7636, 4
      %v7639 = vshll.u32 %v7527, 16
      %v7641 = vrot.slane %v7639, 5
      %v7642 = vor.u32 %v7638, %v7641
      %v7643 = vrot.slane %v7642, 4
      %v7645 = vshll.u32 %v7528, 16
      %v7647 = vrot.slane %v7645, 5
      %v7648 = vsel %vm902, %v7643, %v7647
      %v7649 = vshrl.u32 %v7528, 16
      %v7651 = vrot.slane %v7649, 4
      %v7652 = vor.u32 %v7651, %v7647
      %v7653 = vrot.slane %v7652, 4
      %v7655 = vshll.u32 %v7529, 16
      %v7657 = vrot.slane %v7655, 5
      %v7658 = vsel %vm902, %v7653, %v7657
      %v7660 = vshrl.u32 %v7530, 16
      %v7662 = vrot.slane %v7660, 4
      %v7663 = vshll.u32 %v7530, 16
      %v7665 = vrot.slane %v7663, 5
      %v7666 = vor.u32 %v7662, %v7665
      %v7667 = vrot.slane %v7666, 4
      %v7669 = vshll.u32 %v7531, 16
      %v7671 = vrot.slane %v7669, 5
      %v7672 = vsel %vm902, %v7667, %v7671
      %v7673 = vshrl.u32 %v7531, 16
      %v7675 = vrot.slane %v7673, 4
      %v7676 = vor.u32 %v7675, %v7671
      %v7677 = vrot.slane %v7676, 4
      %v7679 = vshll.u32 %v7532, 16
      %v7681 = vrot.slane %v7679, 5
      %v7682 = vsel %vm902, %v7677, %v7681
      %v7684 = vshrl.u32 %v7533, 16
      %v7686 = vrot.slane %v7684, 4
      %v7687 = vshll.u32 %v7533, 16
      %v7689 = vrot.slane %v7687, 5
      %v7690 = vor.u32 %v7686, %v7689
      %v7691 = vrot.slane %v7690, 4
      %v7693 = vshll.u32 %v7534, 16
      %v7695 = vrot.slane %v7693, 5
      %v7696 = vsel %vm902, %v7691, %v7695
      %v7697 = vshrl.u32 %v7534, 16
      %v7699 = vrot.slane %v7697, 4
      %v7700 = vor.u32 %v7699, %v7695
      %v7701 = vrot.slane %v7700, 4
      %v7703 = vshll.u32 %v7535, 16
      %v7705 = vrot.slane %v7703, 5
      %v7706 = vsel %vm902, %v7701, %v7705
      %v7708 = vshrl.u32 %v7536, 16
      %v7710 = vrot.slane %v7708, 4
      %v7711 = vshll.u32 %v7536, 16
      %v7713 = vrot.slane %v7711, 5
      %v7714 = vor.u32 %v7710, %v7713
      %v7715 = vrot.slane %v7714, 4
      %v7717 = vshll.u32 %v7537, 16
      %v7719 = vrot.slane %v7717, 5
      %v7720 = vsel %vm902, %v7715, %v7719
      %v7721 = vshrl.u32 %v7537, 16
      %v7723 = vrot.slane %v7721, 4
      %v7724 = vor.u32 %v7723, %v7719
      %v7725 = vrot.slane %v7724, 4
      %v7727 = vshll.u32 %v7538, 16
      %v7729 = vrot.slane %v7727, 5
      %v7730 = vsel %vm902, %v7725, %v7729
      %s7731 = scalar_lea.vmem %s2, 20
      %v7732 = vld [vmem:[%s7731] sm:$0xf]
      %v7733 = vunpack.c.l.b16 %v7552
      %v7734 = vunpack.c.l.b16 %v7562
      %v7735 = vunpack.c.l.b16 %v7576
      %v7736 = vunpack.c.l.b16 %v7586
      %v7737 = vunpack.c.l.b16 %v7600
      %v7738 = vunpack.c.l.b16 %v7610
      %v7739 = vunpack.c.l.b16 %v7624
      %v7740 = vunpack.c.l.b16 %v7634
      %v7741 = vunpack.c.l.b16 %v7648
      %v7742 = vunpack.c.l.b16 %v7658
      %v7743 = vunpack.c.l.b16 %v7672
      %v7744 = vunpack.c.l.b16 %v7682
      %v7745 = vunpack.c.l.b16 %v7696
      %v7746 = vunpack.c.l.b16 %v7706
      %v7747 = vunpack.c.l.b16 %v7720
      %v7748 = vunpack.c.l.b16 %v7730
      %v7749 = vpack.c.b16 %v7734, %v7733
      %v7750 = vpack.c.b16 %v7736, %v7735
      %v7751 = vpack.c.b16 %v7738, %v7737
      %v7752 = vpack.c.b16 %v7740, %v7739
      %v7753 = vpack.c.b16 %v7742, %v7741
      %v7754 = vpack.c.b16 %v7744, %v7743
      %v7755 = vpack.c.b16 %v7746, %v7745
      %v7756 = vpack.c.b16 %v7748, %v7747
      %v7758 = vsel %vm6311, %v7749, 0
      %v7761 = vsel %vm6311, %v7750, 0
      %v7764 = vsel %vm6311, %v7751, 0
      %v7767 = vsel %vm6311, %v7752, 0
      %v7770 = vsel %vm6311, %v7753, 0
      %v7773 = vsel %vm6311, %v7754, 0
      %v7776 = vsel %vm6311, %v7755, 0
      %v7779 = vsel %vm6311, %v7756, 0
      %v7782 = vsel %vm6336, %v7732, 0
      %7784 = vmatprep.subr.bf16.mxu0 0
      %7785 = vmatpush1.bf16.msra.mxu0 0
      %7786 = vmatprep.subr.bf16.mxu0 0
      %7787 = vmatpush1.bf16.msra.mxu0 0
      %7788 = vmatprep.subr.bf16.mxu0 0
      %7789 = vmatpush1.bf16.msra.mxu0 0
      %7790 = vmatprep.subr.bf16.mxu0 0
      %7791 = vmatpush1.bf16.msra.mxu0 0
      %7792 = vmatprep.subr.bf16.mxu0 0
      %7793 = vmatpush1.bf16.msra.mxu0 0
      %7794 = vmatprep.subr.bf16.mxu0 0
      %7795 = vmatpush1.bf16.msra.mxu0 0
      %7796 = vmatprep.subr.bf16.mxu0 0
      %7797 = vmatpush1.bf16.msra.mxu0 0
      %7798 = vmatprep.subr.bf16.mxu0 0
      %7799 = vmatpush1.bf16.msra.mxu0 %v7782
      %7800 = vmatprep.subr.bf16.mxu0 0
      %7801 = vmatpush2.bf16.msra.mxu0 0
      %7802 = vmatprep.subr.bf16.mxu0 0
      %7803 = vmatpush2.bf16.msra.mxu0 0
      %7804 = vmatprep.subr.bf16.mxu0 0
      %7805 = vmatpush2.bf16.msra.mxu0 0
      %7806 = vmatprep.subr.bf16.mxu0 0
      %7807 = vmatpush2.bf16.msra.mxu0 0
      %7808 = vmatprep.subr.bf16.mxu0 0
      %7809 = vmatpush2.bf16.msra.mxu0 0
      %7810 = vmatprep.subr.bf16.mxu0 0
      %7811 = vmatpush2.bf16.msra.mxu0 0
      %7812 = vmatprep.subr.bf16.mxu0 0
      %7813 = vmatpush2.bf16.msra.mxu0 0
      %7814 = vmatprep.subr.bf16.mxu0 0
      %7815 = vmatpush2.bf16.msra.mxu0 0
      %7816 = vmatprep.mubr.bf16.mxu0 0
      %7817 = vmatmul.mubr.bf16.gmra.mxu0 %v7758
      %v7818 = vpop.f32.mrf.mxu0
      %v7819 = vadd.f32 0.0, %v7818
      %v7820 = vpop.f32.mrf.mxu0
      %v7821 = vpop.f32.mrf.mxu0
      %v7822 = vadd.f32 0.0, %v7821
      %v7823 = vpop.f32.mrf.mxu0
      %7824 = vmatprep.mubr.bf16.mxu0 0
      %7825 = vmatmul.mubr.bf16.gmra.mxu0 %v7761
      %v7826 = vpop.f32.mrf.mxu0
      %v7827 = vadd.f32 0.0, %v7826
      %v7828 = vpop.f32.mrf.mxu0
      %v7829 = vpop.f32.mrf.mxu0
      %v7830 = vadd.f32 0.0, %v7829
      %v7831 = vpop.f32.mrf.mxu0
      %7832 = vmatprep.mubr.bf16.mxu0 0
      %7833 = vmatmul.mubr.bf16.gmra.mxu0 %v7764
      %v7834 = vpop.f32.mrf.mxu0
      %v7835 = vadd.f32 0.0, %v7834
      %v7836 = vpop.f32.mrf.mxu0
      %v7837 = vpop.f32.mrf.mxu0
      %v7838 = vadd.f32 0.0, %v7837
      %v7839 = vpop.f32.mrf.mxu0
      %7840 = vmatprep.mubr.bf16.mxu0 0
      %7841 = vmatmul.mubr.bf16.gmra.mxu0 %v7767
      %v7842 = vpop.f32.mrf.mxu0
      %v7843 = vadd.f32 0.0, %v7842
      %v7844 = vpop.f32.mrf.mxu0
      %v7845 = vpop.f32.mrf.mxu0
      %v7846 = vadd.f32 0.0, %v7845
      %v7847 = vpop.f32.mrf.mxu0
      %7848 = vmatprep.mubr.bf16.mxu0 0
      %7849 = vmatmul.mubr.bf16.gmra.mxu0 %v7770
      %v7850 = vpop.f32.mrf.mxu0
      %v7851 = vadd.f32 0.0, %v7850
      %v7852 = vpop.f32.mrf.mxu0
      %v7853 = vpop.f32.mrf.mxu0
      %v7854 = vadd.f32 0.0, %v7853
      %v7855 = vpop.f32.mrf.mxu0
      %7856 = vmatprep.mubr.bf16.mxu0 0
      %7857 = vmatmul.mubr.bf16.gmra.mxu0 %v7773
      %v7858 = vpop.f32.mrf.mxu0
      %v7859 = vadd.f32 0.0, %v7858
      %v7860 = vpop.f32.mrf.mxu0
      %v7861 = vpop.f32.mrf.mxu0
      %v7862 = vadd.f32 0.0, %v7861
      %v7863 = vpop.f32.mrf.mxu0
      %7864 = vmatprep.mubr.bf16.mxu0 0
      %7865 = vmatmul.mubr.bf16.gmra.mxu0 %v7776
      %v7866 = vpop.f32.mrf.mxu0
      %v7867 = vadd.f32 0.0, %v7866
      %v7868 = vpop.f32.mrf.mxu0
      %v7869 = vpop.f32.mrf.mxu0
      %v7870 = vadd.f32 0.0, %v7869
      %v7871 = vpop.f32.mrf.mxu0
      %7872 = vmatprep.mubr.bf16.mxu0 0
      %7873 = vmatmul.mubr.bf16.gmra.mxu0 %v7779
      %v7874 = vpop.f32.mrf.mxu0
      %v7875 = vadd.f32 0.0, %v7874
      %v7876 = vpop.f32.mrf.mxu0
      %v7877 = vpop.f32.mrf.mxu0
      %v7878 = vadd.f32 0.0, %v7877
      %v7879 = vpop.f32.mrf.mxu0
      %7880 = vdwg.mxu0
      %v7881 = vadd.f32 %v7499, %v7819
      %v7882 = vadd.f32 %v7500, %v7822
      %v7883 = vadd.f32 %v7501, %v7827
      %v7884 = vadd.f32 %v7502, %v7830
      %v7885 = vadd.f32 %v7503, %v7835
      %v7886 = vadd.f32 %v7504, %v7838
      %v7887 = vadd.f32 %v7505, %v7843
      %v7888 = vadd.f32 %v7506, %v7846
      %v7889 = vadd.f32 %v7507, %v7851
      %v7890 = vadd.f32 %v7508, %v7854
      %v7891 = vadd.f32 %v7509, %v7859
      %v7892 = vadd.f32 %v7510, %v7862
      %v7893 = vadd.f32 %v7511, %v7867
      %v7894 = vadd.f32 %v7512, %v7870
      %v7895 = vadd.f32 %v7513, %v7875
      %v7896 = vadd.f32 %v7514, %v7878
      %s7897 = scalar_lea.vmem [#allocation3], 32
      %v7898 = vld [vmem:[%s7897] sm:$0x8]
      %v7899 = vld [vmem:[%s7897 + $0x4] sm:$0xf]
      %v7900 = vld [vmem:[%s7897 + $0x8] sm:$0xf]
      %v7901 = vld [vmem:[%s7897 + $0x10] sm:$0x8]
      %v7902 = vld [vmem:[%s7897 + $0x14] sm:$0xf]
      %v7903 = vld [vmem:[%s7897 + $0x18] sm:$0xf]
      %v7904 = vld [vmem:[%s7897 + $0x20] sm:$0x8]
      %v7905 = vld [vmem:[%s7897 + $0x24] sm:$0xf]
      %v7906 = vld [vmem:[%s7897 + $0x28] sm:$0xf]
      %v7907 = vld [vmem:[%s7897 + $0x30] sm:$0x8]
      %v7908 = vld [vmem:[%s7897 + $0x34] sm:$0xf]
      %v7909 = vld [vmem:[%s7897 + $0x38] sm:$0xf]
      %v7910 = vld [vmem:[%s7897 + $0x40] sm:$0x8]
      %v7911 = vld [vmem:[%s7897 + $0x44] sm:$0xf]
      %v7912 = vld [vmem:[%s7897 + $0x48] sm:$0xf]
      %v7913 = vld [vmem:[%s7897 + $0x50] sm:$0x8]
      %v7914 = vld [vmem:[%s7897 + $0x54] sm:$0xf]
      %v7915 = vld [vmem:[%s7897 + $0x58] sm:$0xf]
      %v7916 = vld [vmem:[%s7897 + $0x60] sm:$0x8]
      %v7917 = vld [vmem:[%s7897 + $0x64] sm:$0xf]
      %v7918 = vld [vmem:[%s7897 + $0x68] sm:$0xf]
      %v7919 = vld [vmem:[%s7897 + $0x70] sm:$0x8]
      %v7920 = vld [vmem:[%s7897 + $0x74] sm:$0xf]
      %v7921 = vld [vmem:[%s7897 + $0x78] sm:$0xf]
      %v7923 = vshrl.u32 %v7898, 16
      %v7925 = vrot.slane %v7923, 7
      %v7926 = vrot.slane %v7925, 4
      %v7928 = vshrl.u32 %v7899, 16
      %v7930 = vrot.slane %v7928, 7
      %v7931 = vshll.u32 %v7899, 16
      %v7933 = vor.u32 %v7930, %v7931
      %v7934 = vsel %vm382, %v7926, %v7933
      %v7935 = vrot.slane %v7930, 4
      %v7937 = vshrl.u32 %v7900, 16
      %v7939 = vrot.slane %v7937, 7
      %v7940 = vshll.u32 %v7900, 16
      %v7942 = vor.u32 %v7939, %v7940
      %v7943 = vsel %vm382, %v7935, %v7942
      %v7945 = vshrl.u32 %v7901, 16
      %v7947 = vrot.slane %v7945, 7
      %v7948 = vrot.slane %v7947, 4
      %v7950 = vshrl.u32 %v7902, 16
      %v7952 = vrot.slane %v7950, 7
      %v7953 = vshll.u32 %v7902, 16
      %v7955 = vor.u32 %v7952, %v7953
      %v7956 = vsel %vm382, %v7948, %v7955
      %v7957 = vrot.slane %v7952, 4
      %v7959 = vshrl.u32 %v7903, 16
      %v7961 = vrot.slane %v7959, 7
      %v7962 = vshll.u32 %v7903, 16
      %v7964 = vor.u32 %v7961, %v7962
      %v7965 = vsel %vm382, %v7957, %v7964
      %v7967 = vshrl.u32 %v7904, 16
      %v7969 = vrot.slane %v7967, 7
      %v7970 = vrot.slane %v7969, 4
      %v7972 = vshrl.u32 %v7905, 16
      %v7974 = vrot.slane %v7972, 7
      %v7975 = vshll.u32 %v7905, 16
      %v7977 = vor.u32 %v7974, %v7975
      %v7978 = vsel %vm382, %v7970, %v7977
      %v7979 = vrot.slane %v7974, 4
      %v7981 = vshrl.u32 %v7906, 16
      %v7983 = vrot.slane %v7981, 7
      %v7984 = vshll.u32 %v7906, 16
      %v7986 = vor.u32 %v7983, %v7984
      %v7987 = vsel %vm382, %v7979, %v7986
      %v7989 = vshrl.u32 %v7907, 16
      %v7991 = vrot.slane %v7989, 7
      %v7992 = vrot.slane %v7991, 4
      %v7994 = vshrl.u32 %v7908, 16
      %v7996 = vrot.slane %v7994, 7
      %v7997 = vshll.u32 %v7908, 16
      %v7999 = vor.u32 %v7996, %v7997
      %v8000 = vsel %vm382, %v7992, %v7999
      %v8001 = vrot.slane %v7996, 4
      %v8003 = vshrl.u32 %v7909, 16
      %v8005 = vrot.slane %v8003, 7
      %v8006 = vshll.u32 %v7909, 16
      %v8008 = vor.u32 %v8005, %v8006
      %v8009 = vsel %vm382, %v8001, %v8008
      %v8011 = vshrl.u32 %v7910, 16
      %v8013 = vrot.slane %v8011, 7
      %v8014 = vrot.slane %v8013, 4
      %v8016 = vshrl.u32 %v7911, 16
      %v8018 = vrot.slane %v8016, 7
      %v8019 = vshll.u32 %v7911, 16
      %v8021 = vor.u32 %v8018, %v8019
      %v8022 = vsel %vm382, %v8014, %v8021
      %v8023 = vrot.slane %v8018, 4
      %v8025 = vshrl.u32 %v7912, 16
      %v8027 = vrot.slane %v8025, 7
      %v8028 = vshll.u32 %v7912, 16
      %v8030 = vor.u32 %v8027, %v8028
      %v8031 = vsel %vm382, %v8023, %v8030
      %v8033 = vshrl.u32 %v7913, 16
      %v8035 = vrot.slane %v8033, 7
      %v8036 = vrot.slane %v8035, 4
      %v8038 = vshrl.u32 %v7914, 16
      %v8040 = vrot.slane %v8038, 7
      %v8041 = vshll.u32 %v7914, 16
      %v8043 = vor.u32 %v8040, %v8041
      %v8044 = vsel %vm382, %v8036, %v8043
      %v8045 = vrot.slane %v8040, 4
      %v8047 = vshrl.u32 %v7915, 16
      %v8049 = vrot.slane %v8047, 7
      %v8050 = vshll.u32 %v7915, 16
      %v8052 = vor.u32 %v8049, %v8050
      %v8053 = vsel %vm382, %v8045, %v8052
      %v8055 = vshrl.u32 %v7916, 16
      %v8057 = vrot.slane %v8055, 7
      %v8058 = vrot.slane %v8057, 4
      %v8060 = vshrl.u32 %v7917, 16
      %v8062 = vrot.slane %v8060, 7
      %v8063 = vshll.u32 %v7917, 16
      %v8065 = vor.u32 %v8062, %v8063
      %v8066 = vsel %vm382, %v8058, %v8065
      %v8067 = vrot.slane %v8062, 4
      %v8069 = vshrl.u32 %v7918, 16
      %v8071 = vrot.slane %v8069, 7
      %v8072 = vshll.u32 %v7918, 16
      %v8074 = vor.u32 %v8071, %v8072
      %v8075 = vsel %vm382, %v8067, %v8074
      %v8077 = vshrl.u32 %v7919, 16
      %v8079 = vrot.slane %v8077, 7
      %v8080 = vrot.slane %v8079, 4
      %v8082 = vshrl.u32 %v7920, 16
      %v8084 = vrot.slane %v8082, 7
      %v8085 = vshll.u32 %v7920, 16
      %v8087 = vor.u32 %v8084, %v8085
      %v8088 = vsel %vm382, %v8080, %v8087
      %v8089 = vrot.slane %v8084, 4
      %v8091 = vshrl.u32 %v7921, 16
      %v8093 = vrot.slane %v8091, 7
      %v8094 = vshll.u32 %v7921, 16
      %v8096 = vor.u32 %v8093, %v8094
      %v8097 = vsel %vm382, %v8089, %v8096
      %s8098 = scalar_lea.vmem %s2, 24
      %v8099 = vld [vmem:[%s8098] sm:$0xf]
      %v8100 = vunpack.c.l.b16 %v7934
      %v8101 = vunpack.c.l.b16 %v7943
      %v8102 = vunpack.c.l.b16 %v7956
      %v8103 = vunpack.c.l.b16 %v7965
      %v8104 = vunpack.c.l.b16 %v7978
      %v8105 = vunpack.c.l.b16 %v7987
      %v8106 = vunpack.c.l.b16 %v8000
      %v8107 = vunpack.c.l.b16 %v8009
      %v8108 = vunpack.c.l.b16 %v8022
      %v8109 = vunpack.c.l.b16 %v8031
      %v8110 = vunpack.c.l.b16 %v8044
      %v8111 = vunpack.c.l.b16 %v8053
      %v8112 = vunpack.c.l.b16 %v8066
      %v8113 = vunpack.c.l.b16 %v8075
      %v8114 = vunpack.c.l.b16 %v8088
      %v8115 = vunpack.c.l.b16 %v8097
      %v8116 = vpack.c.b16 %v8101, %v8100
      %v8117 = vpack.c.b16 %v8103, %v8102
      %v8118 = vpack.c.b16 %v8105, %v8104
      %v8119 = vpack.c.b16 %v8107, %v8106
      %v8120 = vpack.c.b16 %v8109, %v8108
      %v8121 = vpack.c.b16 %v8111, %v8110
      %v8122 = vpack.c.b16 %v8113, %v8112
      %v8123 = vpack.c.b16 %v8115, %v8114
      %v8125 = vsel %vm6311, %v8116, 0
      %v8128 = vsel %vm6311, %v8117, 0
      %v8131 = vsel %vm6311, %v8118, 0
      %v8134 = vsel %vm6311, %v8119, 0
      %v8137 = vsel %vm6311, %v8120, 0
      %v8140 = vsel %vm6311, %v8121, 0
      %v8143 = vsel %vm6311, %v8122, 0
      %v8146 = vsel %vm6311, %v8123, 0
      %v8149 = vsel %vm6336, %v8099, 0
      %8151 = vmatprep.subr.bf16.mxu0 0
      %8152 = vmatpush1.bf16.msra.mxu0 0
      %8153 = vmatprep.subr.bf16.mxu0 0
      %8154 = vmatpush1.bf16.msra.mxu0 0
      %8155 = vmatprep.subr.bf16.mxu0 0
      %8156 = vmatpush1.bf16.msra.mxu0 0
      %8157 = vmatprep.subr.bf16.mxu0 0
      %8158 = vmatpush1.bf16.msra.mxu0 0
      %8159 = vmatprep.subr.bf16.mxu0 0
      %8160 = vmatpush1.bf16.msra.mxu0 0
      %8161 = vmatprep.subr.bf16.mxu0 0
      %8162 = vmatpush1.bf16.msra.mxu0 0
      %8163 = vmatprep.subr.bf16.mxu0 0
      %8164 = vmatpush1.bf16.msra.mxu0 0
      %8165 = vmatprep.subr.bf16.mxu0 0
      %8166 = vmatpush1.bf16.msra.mxu0 %v8149
      %8167 = vmatprep.subr.bf16.mxu0 0
      %8168 = vmatpush2.bf16.msra.mxu0 0
      %8169 = vmatprep.subr.bf16.mxu0 0
      %8170 = vmatpush2.bf16.msra.mxu0 0
      %8171 = vmatprep.subr.bf16.mxu0 0
      %8172 = vmatpush2.bf16.msra.mxu0 0
      %8173 = vmatprep.subr.bf16.mxu0 0
      %8174 = vmatpush2.bf16.msra.mxu0 0
      %8175 = vmatprep.subr.bf16.mxu0 0
      %8176 = vmatpush2.bf16.msra.mxu0 0
      %8177 = vmatprep.subr.bf16.mxu0 0
      %8178 = vmatpush2.bf16.msra.mxu0 0
      %8179 = vmatprep.subr.bf16.mxu0 0
      %8180 = vmatpush2.bf16.msra.mxu0 0
      %8181 = vmatprep.subr.bf16.mxu0 0
      %8182 = vmatpush2.bf16.msra.mxu0 0
      %8183 = vmatprep.mubr.bf16.mxu0 0
      %8184 = vmatmul.mubr.bf16.gmra.mxu0 %v8125
      %v8185 = vpop.f32.mrf.mxu0
      %v8186 = vadd.f32 0.0, %v8185
      %v8187 = vpop.f32.mrf.mxu0
      %v8188 = vpop.f32.mrf.mxu0
      %v8189 = vadd.f32 0.0, %v8188
      %v8190 = vpop.f32.mrf.mxu0
      %8191 = vmatprep.mubr.bf16.mxu0 0
      %8192 = vmatmul.mubr.bf16.gmra.mxu0 %v8128
      %v8193 = vpop.f32.mrf.mxu0
      %v8194 = vadd.f32 0.0, %v8193
      %v8195 = vpop.f32.mrf.mxu0
      %v8196 = vpop.f32.mrf.mxu0
      %v8197 = vadd.f32 0.0, %v8196
      %v8198 = vpop.f32.mrf.mxu0
      %8199 = vmatprep.mubr.bf16.mxu0 0
      %8200 = vmatmul.mubr.bf16.gmra.mxu0 %v8131
      %v8201 = vpop.f32.mrf.mxu0
      %v8202 = vadd.f32 0.0, %v8201
      %v8203 = vpop.f32.mrf.mxu0
      %v8204 = vpop.f32.mrf.mxu0
      %v8205 = vadd.f32 0.0, %v8204
      %v8206 = vpop.f32.mrf.mxu0
      %8207 = vmatprep.mubr.bf16.mxu0 0
      %8208 = vmatmul.mubr.bf16.gmra.mxu0 %v8134
      %v8209 = vpop.f32.mrf.mxu0
      %v8210 = vadd.f32 0.0, %v8209
      %v8211 = vpop.f32.mrf.mxu0
      %v8212 = vpop.f32.mrf.mxu0
      %v8213 = vadd.f32 0.0, %v8212
      %v8214 = vpop.f32.mrf.mxu0
      %8215 = vmatprep.mubr.bf16.mxu0 0
      %8216 = vmatmul.mubr.bf16.gmra.mxu0 %v8137
      %v8217 = vpop.f32.mrf.mxu0
      %v8218 = vadd.f32 0.0, %v8217
      %v8219 = vpop.f32.mrf.mxu0
      %v8220 = vpop.f32.mrf.mxu0
      %v8221 = vadd.f32 0.0, %v8220
      %v8222 = vpop.f32.mrf.mxu0
      %8223 = vmatprep.mubr.bf16.mxu0 0
      %8224 = vmatmul.mubr.bf16.gmra.mxu0 %v8140
      %v8225 = vpop.f32.mrf.mxu0
      %v8226 = vadd.f32 0.0, %v8225
      %v8227 = vpop.f32.mrf.mxu0
      %v8228 = vpop.f32.mrf.mxu0
      %v8229 = vadd.f32 0.0, %v8228
      %v8230 = vpop.f32.mrf.mxu0
      %8231 = vmatprep.mubr.bf16.mxu0 0
      %8232 = vmatmul.mubr.bf16.gmra.mxu0 %v8143
      %v8233 = vpop.f32.mrf.mxu0
      %v8234 = vadd.f32 0.0, %v8233
      %v8235 = vpop.f32.mrf.mxu0
      %v8236 = vpop.f32.mrf.mxu0
      %v8237 = vadd.f32 0.0, %v8236
      %v8238 = vpop.f32.mrf.mxu0
      %8239 = vmatprep.mubr.bf16.mxu0 0
      %8240 = vmatmul.mubr.bf16.gmra.mxu0 %v8146
      %v8241 = vpop.f32.mrf.mxu0
      %v8242 = vadd.f32 0.0, %v8241
      %v8243 = vpop.f32.mrf.mxu0
      %v8244 = vpop.f32.mrf.mxu0
      %v8245 = vadd.f32 0.0, %v8244
      %v8246 = vpop.f32.mrf.mxu0
      %8247 = vdwg.mxu0
      %v8248 = vadd.f32 %v7881, %v8186
      %v8249 = vadd.f32 %v7882, %v8189
      %v8250 = vadd.f32 %v7883, %v8194
      %v8251 = vadd.f32 %v7884, %v8197
      %v8252 = vadd.f32 %v7885, %v8202
      %v8253 = vadd.f32 %v7886, %v8205
      %v8254 = vadd.f32 %v7887, %v8210
      %v8255 = vadd.f32 %v7888, %v8213
      %v8256 = vadd.f32 %v7889, %v8218
      %v8257 = vadd.f32 %v7890, %v8221
      %v8258 = vadd.f32 %v7891, %v8226
      %v8259 = vadd.f32 %v7892, %v8229
      %v8260 = vadd.f32 %v7893, %v8234
      %v8261 = vadd.f32 %v7894, %v8237
      %v8262 = vadd.f32 %v7895, %v8242
      %v8263 = vadd.f32 %v7896, %v8245
      %s8264 = scalar_lea.vmem %s2, 28
      %v8265 = vld [vmem:[%s8264] sm:$0xf]
      %v8282 = vunpack.c.l.b16 %v7899
      %v8283 = vunpack.c.l.b16 %v7900
      %v8284 = vunpack.c.l.b16 %v7902
      %v8285 = vunpack.c.l.b16 %v7903
      %v8286 = vunpack.c.l.b16 %v7905
      %v8287 = vunpack.c.l.b16 %v7906
      %v8288 = vunpack.c.l.b16 %v7908
      %v8289 = vunpack.c.l.b16 %v7909
      %v8290 = vunpack.c.l.b16 %v7911
      %v8291 = vunpack.c.l.b16 %v7912
      %v8292 = vunpack.c.l.b16 %v7914
      %v8293 = vunpack.c.l.b16 %v7915
      %v8294 = vunpack.c.l.b16 %v7917
      %v8295 = vunpack.c.l.b16 %v7918
      %v8296 = vunpack.c.l.b16 %v7920
      %v8297 = vunpack.c.l.b16 %v7921
      %v8298 = vpack.c.b16 %v8283, %v8282
      %v8299 = vpack.c.b16 %v8285, %v8284
      %v8300 = vpack.c.b16 %v8287, %v8286
      %v8301 = vpack.c.b16 %v8289, %v8288
      %v8302 = vpack.c.b16 %v8291, %v8290
      %v8303 = vpack.c.b16 %v8293, %v8292
      %v8304 = vpack.c.b16 %v8295, %v8294
      %v8305 = vpack.c.b16 %v8297, %v8296
      %v8307 = vsel %vm6311, %v8298, 0
      %v8310 = vsel %vm6311, %v8299, 0
      %v8313 = vsel %vm6311, %v8300, 0
      %v8316 = vsel %vm6311, %v8301, 0
      %v8319 = vsel %vm6311, %v8302, 0
      %v8322 = vsel %vm6311, %v8303, 0
      %v8325 = vsel %vm6311, %v8304, 0
      %v8328 = vsel %vm6311, %v8305, 0
      %v8331 = vsel %vm6336, %v8265, 0
      %8333 = vmatprep.subr.bf16.mxu0 0
      %8334 = vmatpush1.bf16.msra.mxu0 0
      %8335 = vmatprep.subr.bf16.mxu0 0
      %8336 = vmatpush1.bf16.msra.mxu0 0
      %8337 = vmatprep.subr.bf16.mxu0 0
      %8338 = vmatpush1.bf16.msra.mxu0 0
      %8339 = vmatprep.subr.bf16.mxu0 0
      %8340 = vmatpush1.bf16.msra.mxu0 0
      %8341 = vmatprep.subr.bf16.mxu0 0
      %8342 = vmatpush1.bf16.msra.mxu0 0
      %8343 = vmatprep.subr.bf16.mxu0 0
      %8344 = vmatpush1.bf16.msra.mxu0 0
      %8345 = vmatprep.subr.bf16.mxu0 0
      %8346 = vmatpush1.bf16.msra.mxu0 0
      %8347 = vmatprep.subr.bf16.mxu0 0
      %8348 = vmatpush1.bf16.msra.mxu0 %v8331
      %8349 = vmatprep.subr.bf16.mxu0 0
      %8350 = vmatpush2.bf16.msra.mxu0 0
      %8351 = vmatprep.subr.bf16.mxu0 0
      %8352 = vmatpush2.bf16.msra.mxu0 0
      %8353 = vmatprep.subr.bf16.mxu0 0
      %8354 = vmatpush2.bf16.msra.mxu0 0
      %8355 = vmatprep.subr.bf16.mxu0 0
      %8356 = vmatpush2.bf16.msra.mxu0 0
      %8357 = vmatprep.subr.bf16.mxu0 0
      %8358 = vmatpush2.bf16.msra.mxu0 0
      %8359 = vmatprep.subr.bf16.mxu0 0
      %8360 = vmatpush2.bf16.msra.mxu0 0
      %8361 = vmatprep.subr.bf16.mxu0 0
      %8362 = vmatpush2.bf16.msra.mxu0 0
      %8363 = vmatprep.subr.bf16.mxu0 0
      %8364 = vmatpush2.bf16.msra.mxu0 0
      %8365 = vmatprep.mubr.bf16.mxu0 0
      %8366 = vmatmul.mubr.bf16.gmra.mxu0 %v8307
      %v8367 = vpop.f32.mrf.mxu0
      %v8368 = vadd.f32 0.0, %v8367
      %v8369 = vpop.f32.mrf.mxu0
      %v8370 = vpop.f32.mrf.mxu0
      %v8371 = vadd.f32 0.0, %v8370
      %v8372 = vpop.f32.mrf.mxu0
      %8373 = vmatprep.mubr.bf16.mxu0 0
      %8374 = vmatmul.mubr.bf16.gmra.mxu0 %v8310
      %v8375 = vpop.f32.mrf.mxu0
      %v8376 = vadd.f32 0.0, %v8375
      %v8377 = vpop.f32.mrf.mxu0
      %v8378 = vpop.f32.mrf.mxu0
      %v8379 = vadd.f32 0.0, %v8378
      %v8380 = vpop.f32.mrf.mxu0
      %8381 = vmatprep.mubr.bf16.mxu0 0
      %8382 = vmatmul.mubr.bf16.gmra.mxu0 %v8313
      %v8383 = vpop.f32.mrf.mxu0
      %v8384 = vadd.f32 0.0, %v8383
      %v8385 = vpop.f32.mrf.mxu0
      %v8386 = vpop.f32.mrf.mxu0
      %v8387 = vadd.f32 0.0, %v8386
      %v8388 = vpop.f32.mrf.mxu0
      %8389 = vmatprep.mubr.bf16.mxu0 0
      %8390 = vmatmul.mubr.bf16.gmra.mxu0 %v8316
      %v8391 = vpop.f32.mrf.mxu0
      %v8392 = vadd.f32 0.0, %v8391
      %v8393 = vpop.f32.mrf.mxu0
      %v8394 = vpop.f32.mrf.mxu0
      %v8395 = vadd.f32 0.0, %v8394
      %v8396 = vpop.f32.mrf.mxu0
      %8397 = vmatprep.mubr.bf16.mxu0 0
      %8398 = vmatmul.mubr.bf16.gmra.mxu0 %v8319
      %v8399 = vpop.f32.mrf.mxu0
      %v8400 = vadd.f32 0.0, %v8399
      %v8401 = vpop.f32.mrf.mxu0
      %v8402 = vpop.f32.mrf.mxu0
      %v8403 = vadd.f32 0.0, %v8402
      %v8404 = vpop.f32.mrf.mxu0
      %8405 = vmatprep.mubr.bf16.mxu0 0
      %8406 = vmatmul.mubr.bf16.gmra.mxu0 %v8322
      %v8407 = vpop.f32.mrf.mxu0
      %v8408 = vadd.f32 0.0, %v8407
      %v8409 = vpop.f32.mrf.mxu0
      %v8410 = vpop.f32.mrf.mxu0
      %v8411 = vadd.f32 0.0, %v8410
      %v8412 = vpop.f32.mrf.mxu0
      %8413 = vmatprep.mubr.bf16.mxu0 0
      %8414 = vmatmul.mubr.bf16.gmra.mxu0 %v8325
      %v8415 = vpop.f32.mrf.mxu0
      %v8416 = vadd.f32 0.0, %v8415
      %v8417 = vpop.f32.mrf.mxu0
      %v8418 = vpop.f32.mrf.mxu0
      %v8419 = vadd.f32 0.0, %v8418
      %v8420 = vpop.f32.mrf.mxu0
      %8421 = vmatprep.mubr.bf16.mxu0 0
      %8422 = vmatmul.mubr.bf16.gmra.mxu0 %v8328
      %v8423 = vpop.f32.mrf.mxu0
      %v8424 = vadd.f32 0.0, %v8423
      %v8425 = vpop.f32.mrf.mxu0
      %v8426 = vpop.f32.mrf.mxu0
      %v8427 = vadd.f32 0.0, %v8426
      %v8428 = vpop.f32.mrf.mxu0
      %8429 = vdwg.mxu0
      %v8430 = vadd.f32 %v8248, %v8368
      %v8431 = vadd.f32 %v8249, %v8371
      %v8432 = vadd.f32 %v8250, %v8376
      %v8433 = vadd.f32 %v8251, %v8379
      %v8434 = vadd.f32 %v8252, %v8384
      %v8435 = vadd.f32 %v8253, %v8387
      %v8436 = vadd.f32 %v8254, %v8392
      %v8437 = vadd.f32 %v8255, %v8395
      %v8438 = vadd.f32 %v8256, %v8400
      %v8439 = vadd.f32 %v8257, %v8403
      %v8440 = vadd.f32 %v8258, %v8408
      %v8441 = vadd.f32 %v8259, %v8411
      %v8442 = vadd.f32 %v8260, %v8416
      %v8443 = vadd.f32 %v8261, %v8419
      %v8444 = vadd.f32 %v8262, %v8424
      %v8445 = vadd.f32 %v8263, %v8427
      %v8446 = vld [vmem:[%s7897 + $0x4] sm:$0xf]
      %v8447 = vld [vmem:[%s7897 + $0x8] sm:$0xf]
      %v8448 = vld [vmem:[%s7897 + $0xc] sm:$0x1]
      %v8449 = vld [vmem:[%s7897 + $0x14] sm:$0xf]
      %v8450 = vld [vmem:[%s7897 + $0x18] sm:$0xf]
      %v8451 = vld [vmem:[%s7897 + $0x1c] sm:$0x1]
      %v8452 = vld [vmem:[%s7897 + $0x24] sm:$0xf]
      %v8453 = vld [vmem:[%s7897 + $0x28] sm:$0xf]
      %v8454 = vld [vmem:[%s7897 + $0x2c] sm:$0x1]
      %v8455 = vld [vmem:[%s7897 + $0x34] sm:$0xf]
      %v8456 = vld [vmem:[%s7897 + $0x38] sm:$0xf]
      %v8457 = vld [vmem:[%s7897 + $0x3c] sm:$0x1]
      %v8458 = vld [vmem:[%s7897 + $0x44] sm:$0xf]
      %v8459 = vld [vmem:[%s7897 + $0x48] sm:$0xf]
      %v8460 = vld [vmem:[%s7897 + $0x4c] sm:$0x1]
      %v8461 = vld [vmem:[%s7897 + $0x54] sm:$0xf]
      %v8462 = vld [vmem:[%s7897 + $0x58] sm:$0xf]
      %v8463 = vld [vmem:[%s7897 + $0x5c] sm:$0x1]
      %v8464 = vld [vmem:[%s7897 + $0x64] sm:$0xf]
      %v8465 = vld [vmem:[%s7897 + $0x68] sm:$0xf]
      %v8466 = vld [vmem:[%s7897 + $0x6c] sm:$0x1]
      %v8467 = vld [vmem:[%s7897 + $0x74] sm:$0xf]
      %v8468 = vld [vmem:[%s7897 + $0x78] sm:$0xf]
      %v8469 = vld [vmem:[%s7897 + $0x7c] sm:$0x1]
      %v8471 = vshrl.u32 %v8446, 16
      %v8473 = vrot.slane %v8471, 4
      %v8474 = vshll.u32 %v8446, 16
      %v8476 = vrot.slane %v8474, 5
      %v8477 = vor.u32 %v8473, %v8476
      %v8478 = vrot.slane %v8477, 4
      %v8480 = vshll.u32 %v8447, 16
      %v8482 = vrot.slane %v8480, 5
      %v8483 = vsel %vm902, %v8478, %v8482
      %v8484 = vshrl.u32 %v8447, 16
      %v8486 = vrot.slane %v8484, 4
      %v8487 = vor.u32 %v8486, %v8482
      %v8488 = vrot.slane %v8487, 4
      %v8490 = vshll.u32 %v8448, 16
      %v8492 = vrot.slane %v8490, 5
      %v8493 = vsel %vm902, %v8488, %v8492
      %v8495 = vshrl.u32 %v8449, 16
      %v8497 = vrot.slane %v8495, 4
      %v8498 = vshll.u32 %v8449, 16
      %v8500 = vrot.slane %v8498, 5
      %v8501 = vor.u32 %v8497, %v8500
      %v8502 = vrot.slane %v8501, 4
      %v8504 = vshll.u32 %v8450, 16
      %v8506 = vrot.slane %v8504, 5
      %v8507 = vsel %vm902, %v8502, %v8506
      %v8508 = vshrl.u32 %v8450, 16
      %v8510 = vrot.slane %v8508, 4
      %v8511 = vor.u32 %v8510, %v8506
      %v8512 = vrot.slane %v8511, 4
      %v8514 = vshll.u32 %v8451, 16
      %v8516 = vrot.slane %v8514, 5
      %v8517 = vsel %vm902, %v8512, %v8516
      %v8519 = vshrl.u32 %v8452, 16
      %v8521 = vrot.slane %v8519, 4
      %v8522 = vshll.u32 %v8452, 16
      %v8524 = vrot.slane %v8522, 5
      %v8525 = vor.u32 %v8521, %v8524
      %v8526 = vrot.slane %v8525, 4
      %v8528 = vshll.u32 %v8453, 16
      %v8530 = vrot.slane %v8528, 5
      %v8531 = vsel %vm902, %v8526, %v8530
      %v8532 = vshrl.u32 %v8453, 16
      %v8534 = vrot.slane %v8532, 4
      %v8535 = vor.u32 %v8534, %v8530
      %v8536 = vrot.slane %v8535, 4
      %v8538 = vshll.u32 %v8454, 16
      %v8540 = vrot.slane %v8538, 5
      %v8541 = vsel %vm902, %v8536, %v8540
      %v8543 = vshrl.u32 %v8455, 16
      %v8545 = vrot.slane %v8543, 4
      %v8546 = vshll.u32 %v8455, 16
      %v8548 = vrot.slane %v8546, 5
      %v8549 = vor.u32 %v8545, %v8548
      %v8550 = vrot.slane %v8549, 4
      %v8552 = vshll.u32 %v8456, 16
      %v8554 = vrot.slane %v8552, 5
      %v8555 = vsel %vm902, %v8550, %v8554
      %v8556 = vshrl.u32 %v8456, 16
      %v8558 = vrot.slane %v8556, 4
      %v8559 = vor.u32 %v8558, %v8554
      %v8560 = vrot.slane %v8559, 4
      %v8562 = vshll.u32 %v8457, 16
      %v8564 = vrot.slane %v8562, 5
      %v8565 = vsel %vm902, %v8560, %v8564
      %v8567 = vshrl.u32 %v8458, 16
      %v8569 = vrot.slane %v8567, 4
      %v8570 = vshll.u32 %v8458, 16
      %v8572 = vrot.slane %v8570, 5
      %v8573 = vor.u32 %v8569, %v8572
      %v8574 = vrot.slane %v8573, 4
      %v8576 = vshll.u32 %v8459, 16
      %v8578 = vrot.slane %v8576, 5
      %v8579 = vsel %vm902, %v8574, %v8578
      %v8580 = vshrl.u32 %v8459, 16
      %v8582 = vrot.slane %v8580, 4
      %v8583 = vor.u32 %v8582, %v8578
      %v8584 = vrot.slane %v8583, 4
      %v8586 = vshll.u32 %v8460, 16
      %v8588 = vrot.slane %v8586, 5
      %v8589 = vsel %vm902, %v8584, %v8588
      %v8591 = vshrl.u32 %v8461, 16
      %v8593 = vrot.slane %v8591, 4
      %v8594 = vshll.u32 %v8461, 16
      %v8596 = vrot.slane %v8594, 5
      %v8597 = vor.u32 %v8593, %v8596
      %v8598 = vrot.slane %v8597, 4
      %v8600 = vshll.u32 %v8462, 16
      %v8602 = vrot.slane %v8600, 5
      %v8603 = vsel %vm902, %v8598, %v8602
      %v8604 = vshrl.u32 %v8462, 16
      %v8606 = vrot.slane %v8604, 4
      %v8607 = vor.u32 %v8606, %v8602
      %v8608 = vrot.slane %v8607, 4
      %v8610 = vshll.u32 %v8463, 16
      %v8612 = vrot.slane %v8610, 5
      %v8613 = vsel %vm902, %v8608, %v8612
      %v8615 = vshrl.u32 %v8464, 16
      %v8617 = vrot.slane %v8615, 4
      %v8618 = vshll.u32 %v8464, 16
      %v8620 = vrot.slane %v8618, 5
      %v8621 = vor.u32 %v8617, %v8620
      %v8622 = vrot.slane %v8621, 4
      %v8624 = vshll.u32 %v8465, 16
      %v8626 = vrot.slane %v8624, 5
      %v8627 = vsel %vm902, %v8622, %v8626
      %v8628 = vshrl.u32 %v8465, 16
      %v8630 = vrot.slane %v8628, 4
      %v8631 = vor.u32 %v8630, %v8626
      %v8632 = vrot.slane %v8631, 4
      %v8634 = vshll.u32 %v8466, 16
      %v8636 = vrot.slane %v8634, 5
      %v8637 = vsel %vm902, %v8632, %v8636
      %v8639 = vshrl.u32 %v8467, 16
      %v8641 = vrot.slane %v8639, 4
      %v8642 = vshll.u32 %v8467, 16
      %v8644 = vrot.slane %v8642, 5
      %v8645 = vor.u32 %v8641, %v8644
      %v8646 = vrot.slane %v8645, 4
      %v8648 = vshll.u32 %v8468, 16
      %v8650 = vrot.slane %v8648, 5
      %v8651 = vsel %vm902, %v8646, %v8650
      %v8652 = vshrl.u32 %v8468, 16
      %v8654 = vrot.slane %v8652, 4
      %v8655 = vor.u32 %v8654, %v8650
      %v8656 = vrot.slane %v8655, 4
      %v8658 = vshll.u32 %v8469, 16
      %v8660 = vrot.slane %v8658, 5
      %v8661 = vsel %vm902, %v8656, %v8660
      %s8662 = scalar_lea.vmem %s2, 32
      %v8663 = vld [vmem:[%s8662] sm:$0xf]
      %v8664 = vunpack.c.l.b16 %v8483
      %v8665 = vunpack.c.l.b16 %v8493
      %v8666 = vunpack.c.l.b16 %v8507
      %v8667 = vunpack.c.l.b16 %v8517
      %v8668 = vunpack.c.l.b16 %v8531
      %v8669 = vunpack.c.l.b16 %v8541
      %v8670 = vunpack.c.l.b16 %v8555
      %v8671 = vunpack.c.l.b16 %v8565
      %v8672 = vunpack.c.l.b16 %v8579
      %v8673 = vunpack.c.l.b16 %v8589
      %v8674 = vunpack.c.l.b16 %v8603
      %v8675 = vunpack.c.l.b16 %v8613
      %v8676 = vunpack.c.l.b16 %v8627
      %v8677 = vunpack.c.l.b16 %v8637
      %v8678 = vunpack.c.l.b16 %v8651
      %v8679 = vunpack.c.l.b16 %v8661
      %v8680 = vpack.c.b16 %v8665, %v8664
      %v8681 = vpack.c.b16 %v8667, %v8666
      %v8682 = vpack.c.b16 %v8669, %v8668
      %v8683 = vpack.c.b16 %v8671, %v8670
      %v8684 = vpack.c.b16 %v8673, %v8672
      %v8685 = vpack.c.b16 %v8675, %v8674
      %v8686 = vpack.c.b16 %v8677, %v8676
      %v8687 = vpack.c.b16 %v8679, %v8678
      %v8689 = vsel %vm6311, %v8680, 0
      %v8692 = vsel %vm6311, %v8681, 0
      %v8695 = vsel %vm6311, %v8682, 0
      %v8698 = vsel %vm6311, %v8683, 0
      %v8701 = vsel %vm6311, %v8684, 0
      %v8704 = vsel %vm6311, %v8685, 0
      %v8707 = vsel %vm6311, %v8686, 0
      %v8710 = vsel %vm6311, %v8687, 0
      %v8713 = vsel %vm6336, %v8663, 0
      %8715 = vmatprep.subr.bf16.mxu0 0
      %8716 = vmatpush1.bf16.msra.mxu0 0
      %8717 = vmatprep.subr.bf16.mxu0 0
      %8718 = vmatpush1.bf16.msra.mxu0 0
      %8719 = vmatprep.subr.bf16.mxu0 0
      %8720 = vmatpush1.bf16.msra.mxu0 0
      %8721 = vmatprep.subr.bf16.mxu0 0
      %8722 = vmatpush1.bf16.msra.mxu0 0
      %8723 = vmatprep.subr.bf16.mxu0 0
      %8724 = vmatpush1.bf16.msra.mxu0 0
      %8725 = vmatprep.subr.bf16.mxu0 0
      %8726 = vmatpush1.bf16.msra.mxu0 0
      %8727 = vmatprep.subr.bf16.mxu0 0
      %8728 = vmatpush1.bf16.msra.mxu0 0
      %8729 = vmatprep.subr.bf16.mxu0 0
      %8730 = vmatpush1.bf16.msra.mxu0 %v8713
      %8731 = vmatprep.subr.bf16.mxu0 0
      %8732 = vmatpush2.bf16.msra.mxu0 0
      %8733 = vmatprep.subr.bf16.mxu0 0
      %8734 = vmatpush2.bf16.msra.mxu0 0
      %8735 = vmatprep.subr.bf16.mxu0 0
      %8736 = vmatpush2.bf16.msra.mxu0 0
      %8737 = vmatprep.subr.bf16.mxu0 0
      %8738 = vmatpush2.bf16.msra.mxu0 0
      %8739 = vmatprep.subr.bf16.mxu0 0
      %8740 = vmatpush2.bf16.msra.mxu0 0
      %8741 = vmatprep.subr.bf16.mxu0 0
      %8742 = vmatpush2.bf16.msra.mxu0 0
      %8743 = vmatprep.subr.bf16.mxu0 0
      %8744 = vmatpush2.bf16.msra.mxu0 0
      %8745 = vmatprep.subr.bf16.mxu0 0
      %8746 = vmatpush2.bf16.msra.mxu0 0
      %8747 = vmatprep.mubr.bf16.mxu0 0
      %8748 = vmatmul.mubr.bf16.gmra.mxu0 %v8689
      %v8749 = vpop.f32.mrf.mxu0
      %v8750 = vadd.f32 0.0, %v8749
      %v8751 = vpop.f32.mrf.mxu0
      %v8752 = vpop.f32.mrf.mxu0
      %v8753 = vadd.f32 0.0, %v8752
      %v8754 = vpop.f32.mrf.mxu0
      %8755 = vmatprep.mubr.bf16.mxu0 0
      %8756 = vmatmul.mubr.bf16.gmra.mxu0 %v8692
      %v8757 = vpop.f32.mrf.mxu0
      %v8758 = vadd.f32 0.0, %v8757
      %v8759 = vpop.f32.mrf.mxu0
      %v8760 = vpop.f32.mrf.mxu0
      %v8761 = vadd.f32 0.0, %v8760
      %v8762 = vpop.f32.mrf.mxu0
      %8763 = vmatprep.mubr.bf16.mxu0 0
      %8764 = vmatmul.mubr.bf16.gmra.mxu0 %v8695
      %v8765 = vpop.f32.mrf.mxu0
      %v8766 = vadd.f32 0.0, %v8765
      %v8767 = vpop.f32.mrf.mxu0
      %v8768 = vpop.f32.mrf.mxu0
      %v8769 = vadd.f32 0.0, %v8768
      %v8770 = vpop.f32.mrf.mxu0
      %8771 = vmatprep.mubr.bf16.mxu0 0
      %8772 = vmatmul.mubr.bf16.gmra.mxu0 %v8698
      %v8773 = vpop.f32.mrf.mxu0
      %v8774 = vadd.f32 0.0, %v8773
      %v8775 = vpop.f32.mrf.mxu0
      %v8776 = vpop.f32.mrf.mxu0
      %v8777 = vadd.f32 0.0, %v8776
      %v8778 = vpop.f32.mrf.mxu0
      %8779 = vmatprep.mubr.bf16.mxu0 0
      %8780 = vmatmul.mubr.bf16.gmra.mxu0 %v8701
      %v8781 = vpop.f32.mrf.mxu0
      %v8782 = vadd.f32 0.0, %v8781
      %v8783 = vpop.f32.mrf.mxu0
      %v8784 = vpop.f32.mrf.mxu0
      %v8785 = vadd.f32 0.0, %v8784
      %v8786 = vpop.f32.mrf.mxu0
      %8787 = vmatprep.mubr.bf16.mxu0 0
      %8788 = vmatmul.mubr.bf16.gmra.mxu0 %v8704
      %v8789 = vpop.f32.mrf.mxu0
      %v8790 = vadd.f32 0.0, %v8789
      %v8791 = vpop.f32.mrf.mxu0
      %v8792 = vpop.f32.mrf.mxu0
      %v8793 = vadd.f32 0.0, %v8792
      %v8794 = vpop.f32.mrf.mxu0
      %8795 = vmatprep.mubr.bf16.mxu0 0
      %8796 = vmatmul.mubr.bf16.gmra.mxu0 %v8707
      %v8797 = vpop.f32.mrf.mxu0
      %v8798 = vadd.f32 0.0, %v8797
      %v8799 = vpop.f32.mrf.mxu0
      %v8800 = vpop.f32.mrf.mxu0
      %v8801 = vadd.f32 0.0, %v8800
      %v8802 = vpop.f32.mrf.mxu0
      %8803 = vmatprep.mubr.bf16.mxu0 0
      %8804 = vmatmul.mubr.bf16.gmra.mxu0 %v8710
      %v8805 = vpop.f32.mrf.mxu0
      %v8806 = vadd.f32 0.0, %v8805
      %v8807 = vpop.f32.mrf.mxu0
      %v8808 = vpop.f32.mrf.mxu0
      %v8809 = vadd.f32 0.0, %v8808
      %v8810 = vpop.f32.mrf.mxu0
      %8811 = vdwg.mxu0
      %v8812 = vadd.f32 %v8430, %v8750
      %v8813 = vadd.f32 %v8431, %v8753
      %v8814 = vadd.f32 %v8432, %v8758
      %v8815 = vadd.f32 %v8433, %v8761
      %v8816 = vadd.f32 %v8434, %v8766
      %v8817 = vadd.f32 %v8435, %v8769
      %v8818 = vadd.f32 %v8436, %v8774
      %v8819 = vadd.f32 %v8437, %v8777
      %v8820 = vadd.f32 %v8438, %v8782
      %v8821 = vadd.f32 %v8439, %v8785
      %v8822 = vadd.f32 %v8440, %v8790
      %v8823 = vadd.f32 %v8441, %v8793
      %v8824 = vadd.f32 %v8442, %v8798
      %v8825 = vadd.f32 %v8443, %v8801
      %v8826 = vadd.f32 %v8444, %v8806
      %v8827 = vadd.f32 %v8445, %v8809
      %v8828 = vld [vmem:[%s192] sm:$0xf]
      %v8829 = vld [vmem:[%s192 + $0x4] sm:$0xf]
      %v8830 = vld [vmem:[%s192 + $0x8] sm:$0xf]
      %v8831 = vld [vmem:[%s192 + $0xc] sm:$0xf]
      %v8832 = vld [vmem:[%s192 + $0x10] sm:$0xf]
      %v8833 = vld [vmem:[%s192 + $0x14] sm:$0xf]
      %v8834 = vld [vmem:[%s192 + $0x18] sm:$0xf]
      %v8835 = vld [vmem:[%s192 + $0x1c] sm:$0xf]
      %v8836 = vld [vmem:[%s192 + $0x20] sm:$0xf]
      %v8837 = vld [vmem:[%s192 + $0x24] sm:$0xf]
      %v8838 = vld [vmem:[%s192 + $0x28] sm:$0xf]
      %v8839 = vld [vmem:[%s192 + $0x2c] sm:$0xf]
      %v8840 = vld [vmem:[%s192 + $0x30] sm:$0xf]
      %v8841 = vld [vmem:[%s192 + $0x34] sm:$0xf]
      %v8842 = vld [vmem:[%s192 + $0x38] sm:$0xf]
      %v8843 = vld [vmem:[%s192 + $0x3c] sm:$0xf]
      %v8844 = vld [vmem:[%s3] sm:$0x3]
      %v8861 = vunpack.c.l.b16 %v8828
      %v8862 = vunpack.c.l.b16 %v8829
      %v8863 = vunpack.c.l.b16 %v8830
      %v8864 = vunpack.c.l.b16 %v8831
      %v8865 = vunpack.c.l.b16 %v8832
      %v8866 = vunpack.c.l.b16 %v8833
      %v8867 = vunpack.c.l.b16 %v8834
      %v8868 = vunpack.c.l.b16 %v8835
      %v8869 = vunpack.c.l.b16 %v8836
      %v8870 = vunpack.c.l.b16 %v8837
      %v8871 = vunpack.c.l.b16 %v8838
      %v8872 = vunpack.c.l.b16 %v8839
      %v8873 = vunpack.c.l.b16 %v8840
      %v8874 = vunpack.c.l.b16 %v8841
      %v8875 = vunpack.c.l.b16 %v8842
      %v8876 = vunpack.c.l.b16 %v8843
      %v8877 = vpack.c.b16 %v8862, %v8861
      %v8878 = vpack.c.b16 %v8864, %v8863
      %v8879 = vpack.c.b16 %v8866, %v8865
      %v8880 = vpack.c.b16 %v8868, %v8867
      %v8881 = vpack.c.b16 %v8870, %v8869
      %v8882 = vpack.c.b16 %v8872, %v8871
      %v8883 = vpack.c.b16 %v8874, %v8873
      %v8884 = vpack.c.b16 %v8876, %v8875
      %v8886 = vsel %vm602, %v8877, 0
      %v8889 = vsel %vm602, %v8878, 0
      %v8892 = vsel %vm602, %v8879, 0
      %v8895 = vsel %vm602, %v8880, 0
      %v8898 = vsel %vm602, %v8881, 0
      %v8901 = vsel %vm602, %v8882, 0
      %v8904 = vsel %vm602, %v8883, 0
      %v8907 = vsel %vm602, %v8884, 0
      %v8910 = vsel %vm627, %v8844, 0
      %8912 = vmatprep.subr.bf16.mxu0 0
      %8913 = vmatpush1.bf16.msra.mxu0 0
      %8914 = vmatprep.subr.bf16.mxu0 0
      %8915 = vmatpush1.bf16.msra.mxu0 0
      %8916 = vmatprep.subr.bf16.mxu0 0
      %8917 = vmatpush1.bf16.msra.mxu0 0
      %8918 = vmatprep.subr.bf16.mxu0 0
      %8919 = vmatpush1.bf16.msra.mxu0 0
      %8920 = vmatprep.subr.bf16.mxu0 0
      %8921 = vmatpush1.bf16.msra.mxu0 0
      %8922 = vmatprep.subr.bf16.mxu0 0
      %8923 = vmatpush1.bf16.msra.mxu0 0
      %8924 = vmatprep.subr.bf16.mxu0 0
      %8925 = vmatpush1.bf16.msra.mxu0 0
      %8926 = vmatprep.subr.bf16.mxu0 0
      %8927 = vmatpush1.bf16.msra.mxu0 %v8910
      %8928 = vmatprep.subr.bf16.mxu0 0
      %8929 = vmatpush2.bf16.msra.mxu0 0
      %8930 = vmatprep.subr.bf16.mxu0 0
      %8931 = vmatpush2.bf16.msra.mxu0 0
      %8932 = vmatprep.subr.bf16.mxu0 0
      %8933 = vmatpush2.bf16.msra.mxu0 0
      %8934 = vmatprep.subr.bf16.mxu0 0
      %8935 = vmatpush2.bf16.msra.mxu0 0
      %8936 = vmatprep.subr.bf16.mxu0 0
      %8937 = vmatpush2.bf16.msra.mxu0 0
      %8938 = vmatprep.subr.bf16.mxu0 0
      %8939 = vmatpush2.bf16.msra.mxu0 0
      %8940 = vmatprep.subr.bf16.mxu0 0
      %8941 = vmatpush2.bf16.msra.mxu0 0
      %8942 = vmatprep.subr.bf16.mxu0 0
      %8943 = vmatpush2.bf16.msra.mxu0 0
      %8944 = vmatprep.mubr.bf16.mxu0 0
      %8945 = vmatmul.mubr.bf16.gmra.mxu0 %v8886
      %v8946 = vpop.f32.mrf.mxu0
      %v8947 = vadd.f32 0.0, %v8946
      %v8948 = vpop.f32.mrf.mxu0
      %v8949 = vpop.f32.mrf.mxu0
      %v8950 = vadd.f32 0.0, %v8949
      %v8951 = vpop.f32.mrf.mxu0
      %8952 = vmatprep.mubr.bf16.mxu0 0
      %8953 = vmatmul.mubr.bf16.gmra.mxu0 %v8889
      %v8954 = vpop.f32.mrf.mxu0
      %v8955 = vadd.f32 0.0, %v8954
      %v8956 = vpop.f32.mrf.mxu0
      %v8957 = vpop.f32.mrf.mxu0
      %v8958 = vadd.f32 0.0, %v8957
      %v8959 = vpop.f32.mrf.mxu0
      %8960 = vmatprep.mubr.bf16.mxu0 0
      %8961 = vmatmul.mubr.bf16.gmra.mxu0 %v8892
      %v8962 = vpop.f32.mrf.mxu0
      %v8963 = vadd.f32 0.0, %v8962
      %v8964 = vpop.f32.mrf.mxu0
      %v8965 = vpop.f32.mrf.mxu0
      %v8966 = vadd.f32 0.0, %v8965
      %v8967 = vpop.f32.mrf.mxu0
      %8968 = vmatprep.mubr.bf16.mxu0 0
      %8969 = vmatmul.mubr.bf16.gmra.mxu0 %v8895
      %v8970 = vpop.f32.mrf.mxu0
      %v8971 = vadd.f32 0.0, %v8970
      %v8972 = vpop.f32.mrf.mxu0
      %v8973 = vpop.f32.mrf.mxu0
      %v8974 = vadd.f32 0.0, %v8973
      %v8975 = vpop.f32.mrf.mxu0
      %8976 = vmatprep.mubr.bf16.mxu0 0
      %8977 = vmatmul.mubr.bf16.gmra.mxu0 %v8898
      %v8978 = vpop.f32.mrf.mxu0
      %v8979 = vadd.f32 0.0, %v8978
      %v8980 = vpop.f32.mrf.mxu0
      %v8981 = vpop.f32.mrf.mxu0
      %v8982 = vadd.f32 0.0, %v8981
      %v8983 = vpop.f32.mrf.mxu0
      %8984 = vmatprep.mubr.bf16.mxu0 0
      %8985 = vmatmul.mubr.bf16.gmra.mxu0 %v8901
      %v8986 = vpop.f32.mrf.mxu0
      %v8987 = vadd.f32 0.0, %v8986
      %v8988 = vpop.f32.mrf.mxu0
      %v8989 = vpop.f32.mrf.mxu0
      %v8990 = vadd.f32 0.0, %v8989
      %v8991 = vpop.f32.mrf.mxu0
      %8992 = vmatprep.mubr.bf16.mxu0 0
      %8993 = vmatmul.mubr.bf16.gmra.mxu0 %v8904
      %v8994 = vpop.f32.mrf.mxu0
      %v8995 = vadd.f32 0.0, %v8994
      %v8996 = vpop.f32.mrf.mxu0
      %v8997 = vpop.f32.mrf.mxu0
      %v8998 = vadd.f32 0.0, %v8997
      %v8999 = vpop.f32.mrf.mxu0
      %9000 = vmatprep.mubr.bf16.mxu0 0
      %9001 = vmatmul.mubr.bf16.gmra.mxu0 %v8907
      %v9002 = vpop.f32.mrf.mxu0
      %v9003 = vadd.f32 0.0, %v9002
      %v9004 = vpop.f32.mrf.mxu0
      %v9005 = vpop.f32.mrf.mxu0
      %v9006 = vadd.f32 0.0, %v9005
      %v9007 = vpop.f32.mrf.mxu0
      %9008 = vdwg.mxu0
      %v9009 = vadd.f32 %v8812, %v8947
      %v9010 = vadd.f32 %v8813, %v8950
      %v9011 = vadd.f32 %v8814, %v8955
      %v9012 = vadd.f32 %v8815, %v8958
      %v9013 = vadd.f32 %v8816, %v8963
      %v9014 = vadd.f32 %v8817, %v8966
      %v9015 = vadd.f32 %v8818, %v8971
      %v9016 = vadd.f32 %v8819, %v8974
      %v9017 = vadd.f32 %v8820, %v8979
      %v9018 = vadd.f32 %v8821, %v8982
      %v9019 = vadd.f32 %v8822, %v8987
      %v9020 = vadd.f32 %v8823, %v8990
      %v9021 = vadd.f32 %v8824, %v8995
      %v9022 = vadd.f32 %v8825, %v8998
      %v9023 = vadd.f32 %v8826, %v9003
      %v9024 = vadd.f32 %v8827, %v9006
      %v9025 = vmax.f32 %v9009, 0.0
      %v9026 = vmax.f32 %v9010, 0.0
      %v9027 = vmax.f32 %v9011, 0.0
      %v9028 = vmax.f32 %v9012, 0.0
      %v9029 = vmax.f32 %v9013, 0.0
      %v9030 = vmax.f32 %v9014, 0.0
      %v9031 = vmax.f32 %v9015, 0.0
      %v9032 = vmax.f32 %v9016, 0.0
      %v9033 = vmax.f32 %v9017, 0.0
      %v9034 = vmax.f32 %v9018, 0.0
      %v9035 = vmax.f32 %v9019, 0.0
      %v9036 = vmax.f32 %v9020, 0.0
      %v9037 = vmax.f32 %v9021, 0.0
      %v9038 = vmax.f32 %v9022, 0.0
      %v9039 = vmax.f32 %v9023, 0.0
      %v9040 = vmax.f32 %v9024, 0.0
      %9041 = vst.msk [vmem:[%s197] sm:$0xff] %vm6311, %v9025
      %9042 = vst.msk [vmem:[%s197 + $0x8] sm:$0xff] %vm6311, %v9026
      %9043 = vst.msk [vmem:[%s197 + $0x10] sm:$0xff] %vm6311, %v9027
      %9044 = vst.msk [vmem:[%s197 + $0x18] sm:$0xff] %vm6311, %v9028
      %9045 = vst.msk [vmem:[%s197 + $0x20] sm:$0xff] %vm6311, %v9029
      %9046 = vst.msk [vmem:[%s197 + $0x28] sm:$0xff] %vm6311, %v9030
      %9047 = vst.msk [vmem:[%s197 + $0x30] sm:$0xff] %vm6311, %v9031
      %9048 = vst.msk [vmem:[%s197 + $0x38] sm:$0xff] %vm6311, %v9032
      %9049 = vst.msk [vmem:[%s197 + $0x40] sm:$0xff] %vm6311, %v9033
      %9050 = vst.msk [vmem:[%s197 + $0x48] sm:$0xff] %vm6311, %v9034
      %9051 = vst.msk [vmem:[%s197 + $0x50] sm:$0xff] %vm6311, %v9035
      %9052 = vst.msk [vmem:[%s197 + $0x58] sm:$0xff] %vm6311, %v9036
      %9053 = vst.msk [vmem:[%s197 + $0x60] sm:$0xff] %vm6311, %v9037
      %9054 = vst.msk [vmem:[%s197 + $0x68] sm:$0xff] %vm6311, %v9038
      %9055 = vst.msk [vmem:[%s197 + $0x70] sm:$0xff] %vm6311, %v9039
      %9056 = vst.msk [vmem:[%s197 + $0x78] sm:$0xff] %vm6311, %v9040
      %s9057 = scalar_lea.vmem [#allocation3], 128
      %v9058 = vld [vmem:[%s9057] sm:$0x8]
      %v9059 = vld [vmem:[%s9057 + $0x4] sm:$0xf]
      %v9060 = vld [vmem:[%s9057 + $0x8] sm:$0xf]
      %v9061 = vld [vmem:[%s9057 + $0x10] sm:$0x8]
      %v9062 = vld [vmem:[%s9057 + $0x14] sm:$0xf]
      %v9063 = vld [vmem:[%s9057 + $0x18] sm:$0xf]
      %v9064 = vld [vmem:[%s9057 + $0x20] sm:$0x8]
      %v9065 = vld [vmem:[%s9057 + $0x24] sm:$0xf]
      %v9066 = vld [vmem:[%s9057 + $0x28] sm:$0xf]
      %v9067 = vld [vmem:[%s9057 + $0x30] sm:$0x8]
      %v9068 = vld [vmem:[%s9057 + $0x34] sm:$0xf]
      %v9069 = vld [vmem:[%s9057 + $0x38] sm:$0xf]
      %v9070 = vld [vmem:[%s9057 + $0x40] sm:$0x8]
      %v9071 = vld [vmem:[%s9057 + $0x44] sm:$0xf]
      %v9072 = vld [vmem:[%s9057 + $0x48] sm:$0xf]
      %v9073 = vld [vmem:[%s9057 + $0x50] sm:$0x8]
      %v9074 = vld [vmem:[%s9057 + $0x54] sm:$0xf]
      %v9075 = vld [vmem:[%s9057 + $0x58] sm:$0xf]
      %v9076 = vld [vmem:[%s9057 + $0x60] sm:$0x8]
      %v9077 = vld [vmem:[%s9057 + $0x64] sm:$0xf]
      %v9078 = vld [vmem:[%s9057 + $0x68] sm:$0xf]
      %v9079 = vld [vmem:[%s9057 + $0x70] sm:$0x8]
      %v9080 = vld [vmem:[%s9057 + $0x74] sm:$0xf]
      %v9081 = vld [vmem:[%s9057 + $0x78] sm:$0xf]
      %v9083 = vshrl.u32 %v9058, 16
      %v9085 = vrot.slane %v9083, 7
      %v9086 = vrot.slane %v9085, 4
      %v9088 = vshrl.u32 %v9059, 16
      %v9090 = vrot.slane %v9088, 7
      %v9091 = vshll.u32 %v9059, 16
      %v9093 = vor.u32 %v9090, %v9091
      %v9094 = vsel %vm382, %v9086, %v9093
      %v9095 = vrot.slane %v9090, 4
      %v9097 = vshrl.u32 %v9060, 16
      %v9099 = vrot.slane %v9097, 7
      %v9100 = vshll.u32 %v9060, 16
      %v9102 = vor.u32 %v9099, %v9100
      %v9103 = vsel %vm382, %v9095, %v9102
      %v9105 = vshrl.u32 %v9061, 16
      %v9107 = vrot.slane %v9105, 7
      %v9108 = vrot.slane %v9107, 4
      %v9110 = vshrl.u32 %v9062, 16
      %v9112 = vrot.slane %v9110, 7
      %v9113 = vshll.u32 %v9062, 16
      %v9115 = vor.u32 %v9112, %v9113
      %v9116 = vsel %vm382, %v9108, %v9115
      %v9117 = vrot.slane %v9112, 4
      %v9119 = vshrl.u32 %v9063, 16
      %v9121 = vrot.slane %v9119, 7
      %v9122 = vshll.u32 %v9063, 16
      %v9124 = vor.u32 %v9121, %v9122
      %v9125 = vsel %vm382, %v9117, %v9124
      %v9127 = vshrl.u32 %v9064, 16
      %v9129 = vrot.slane %v9127, 7
      %v9130 = vrot.slane %v9129, 4
      %v9132 = vshrl.u32 %v9065, 16
      %v9134 = vrot.slane %v9132, 7
      %v9135 = vshll.u32 %v9065, 16
      %v9137 = vor.u32 %v9134, %v9135
      %v9138 = vsel %vm382, %v9130, %v9137
      %v9139 = vrot.slane %v9134, 4
      %v9141 = vshrl.u32 %v9066, 16
      %v9143 = vrot.slane %v9141, 7
      %v9144 = vshll.u32 %v9066, 16
      %v9146 = vor.u32 %v9143, %v9144
      %v9147 = vsel %vm382, %v9139, %v9146
      %v9149 = vshrl.u32 %v9067, 16
      %v9151 = vrot.slane %v9149, 7
      %v9152 = vrot.slane %v9151, 4
      %v9154 = vshrl.u32 %v9068, 16
      %v9156 = vrot.slane %v9154, 7
      %v9157 = vshll.u32 %v9068, 16
      %v9159 = vor.u32 %v9156, %v9157
      %v9160 = vsel %vm382, %v9152, %v9159
      %v9161 = vrot.slane %v9156, 4
      %v9163 = vshrl.u32 %v9069, 16
      %v9165 = vrot.slane %v9163, 7
      %v9166 = vshll.u32 %v9069, 16
      %v9168 = vor.u32 %v9165, %v9166
      %v9169 = vsel %vm382, %v9161, %v9168
      %v9171 = vshrl.u32 %v9070, 16
      %v9173 = vrot.slane %v9171, 7
      %v9174 = vrot.slane %v9173, 4
      %v9176 = vshrl.u32 %v9071, 16
      %v9178 = vrot.slane %v9176, 7
      %v9179 = vshll.u32 %v9071, 16
      %v9181 = vor.u32 %v9178, %v9179
      %v9182 = vsel %vm382, %v9174, %v9181
      %v9183 = vrot.slane %v9178, 4
      %v9185 = vshrl.u32 %v9072, 16
      %v9187 = vrot.slane %v9185, 7
      %v9188 = vshll.u32 %v9072, 16
      %v9190 = vor.u32 %v9187, %v9188
      %v9191 = vsel %vm382, %v9183, %v9190
      %v9193 = vshrl.u32 %v9073, 16
      %v9195 = vrot.slane %v9193, 7
      %v9196 = vrot.slane %v9195, 4
      %v9198 = vshrl.u32 %v9074, 16
      %v9200 = vrot.slane %v9198, 7
      %v9201 = vshll.u32 %v9074, 16
      %v9203 = vor.u32 %v9200, %v9201
      %v9204 = vsel %vm382, %v9196, %v9203
      %v9205 = vrot.slane %v9200, 4
      %v9207 = vshrl.u32 %v9075, 16
      %v9209 = vrot.slane %v9207, 7
      %v9210 = vshll.u32 %v9075, 16
      %v9212 = vor.u32 %v9209, %v9210
      %v9213 = vsel %vm382, %v9205, %v9212
      %v9215 = vshrl.u32 %v9076, 16
      %v9217 = vrot.slane %v9215, 7
      %v9218 = vrot.slane %v9217, 4
      %v9220 = vshrl.u32 %v9077, 16
      %v9222 = vrot.slane %v9220, 7
      %v9223 = vshll.u32 %v9077, 16
      %v9225 = vor.u32 %v9222, %v9223
      %v9226 = vsel %vm382, %v9218, %v9225
      %v9227 = vrot.slane %v9222, 4
      %v9229 = vshrl.u32 %v9078, 16
      %v9231 = vrot.slane %v9229, 7
      %v9232 = vshll.u32 %v9078, 16
      %v9234 = vor.u32 %v9231, %v9232
      %v9235 = vsel %vm382, %v9227, %v9234
      %v9237 = vshrl.u32 %v9079, 16
      %v9239 = vrot.slane %v9237, 7
      %v9240 = vrot.slane %v9239, 4
      %v9242 = vshrl.u32 %v9080, 16
      %v9244 = vrot.slane %v9242, 7
      %v9245 = vshll.u32 %v9080, 16
      %v9247 = vor.u32 %v9244, %v9245
      %v9248 = vsel %vm382, %v9240, %v9247
      %v9249 = vrot.slane %v9244, 4
      %v9251 = vshrl.u32 %v9081, 16
      %v9253 = vrot.slane %v9251, 7
      %v9254 = vshll.u32 %v9081, 16
      %v9256 = vor.u32 %v9253, %v9254
      %v9257 = vsel %vm382, %v9249, %v9256
      %v9258 = vld [vmem:[%s2] sm:$0xf]
      %v9259 = vld [vmem:[%s6269] sm:$0xf]
      %v9276 = vunpack.c.l.b16 %v9059
      %v9277 = vunpack.c.l.b16 %v9060
      %v9278 = vunpack.c.l.b16 %v9062
      %v9279 = vunpack.c.l.b16 %v9063
      %v9280 = vunpack.c.l.b16 %v9065
      %v9281 = vunpack.c.l.b16 %v9066
      %v9282 = vunpack.c.l.b16 %v9068
      %v9283 = vunpack.c.l.b16 %v9069
      %v9284 = vunpack.c.l.b16 %v9071
      %v9285 = vunpack.c.l.b16 %v9072
      %v9286 = vunpack.c.l.b16 %v9074
      %v9287 = vunpack.c.l.b16 %v9075
      %v9288 = vunpack.c.l.b16 %v9077
      %v9289 = vunpack.c.l.b16 %v9078
      %v9290 = vunpack.c.l.b16 %v9080
      %v9291 = vunpack.c.l.b16 %v9081
      %v9292 = vpack.c.b16 %v9277, %v9276
      %v9293 = vpack.c.b16 %v9279, %v9278
      %v9294 = vpack.c.b16 %v9281, %v9280
      %v9295 = vpack.c.b16 %v9283, %v9282
      %v9296 = vpack.c.b16 %v9285, %v9284
      %v9297 = vpack.c.b16 %v9287, %v9286
      %v9298 = vpack.c.b16 %v9289, %v9288
      %v9299 = vpack.c.b16 %v9291, %v9290
      %v9301 = vsel %vm6311, %v9292, 0
      %v9304 = vsel %vm6311, %v9293, 0
      %v9307 = vsel %vm6311, %v9294, 0
      %v9310 = vsel %vm6311, %v9295, 0
      %v9313 = vsel %vm6311, %v9296, 0
      %v9316 = vsel %vm6311, %v9297, 0
      %v9319 = vsel %vm6311, %v9298, 0
      %v9322 = vsel %vm6311, %v9299, 0
      %v9325 = vsel %vm6336, %v9259, 0
      %9327 = vmatprep.subr.bf16.mxu0 0
      %9328 = vmatpush1.bf16.msra.mxu0 0
      %9329 = vmatprep.subr.bf16.mxu0 0
      %9330 = vmatpush1.bf16.msra.mxu0 0
      %9331 = vmatprep.subr.bf16.mxu0 0
      %9332 = vmatpush1.bf16.msra.mxu0 0
      %9333 = vmatprep.subr.bf16.mxu0 0
      %9334 = vmatpush1.bf16.msra.mxu0 0
      %9335 = vmatprep.subr.bf16.mxu0 0
      %9336 = vmatpush1.bf16.msra.mxu0 0
      %9337 = vmatprep.subr.bf16.mxu0 0
      %9338 = vmatpush1.bf16.msra.mxu0 0
      %9339 = vmatprep.subr.bf16.mxu0 0
      %9340 = vmatpush1.bf16.msra.mxu0 0
      %9341 = vmatprep.subr.bf16.mxu0 0
      %9342 = vmatpush1.bf16.msra.mxu0 %v9325
      %9343 = vmatprep.subr.bf16.mxu0 0
      %9344 = vmatpush2.bf16.msra.mxu0 0
      %9345 = vmatprep.subr.bf16.mxu0 0
      %9346 = vmatpush2.bf16.msra.mxu0 0
      %9347 = vmatprep.subr.bf16.mxu0 0
      %9348 = vmatpush2.bf16.msra.mxu0 0
      %9349 = vmatprep.subr.bf16.mxu0 0
      %9350 = vmatpush2.bf16.msra.mxu0 0
      %9351 = vmatprep.subr.bf16.mxu0 0
      %9352 = vmatpush2.bf16.msra.mxu0 0
      %9353 = vmatprep.subr.bf16.mxu0 0
      %9354 = vmatpush2.bf16.msra.mxu0 0
      %9355 = vmatprep.subr.bf16.mxu0 0
      %9356 = vmatpush2.bf16.msra.mxu0 0
      %9357 = vmatprep.subr.bf16.mxu0 0
      %9358 = vmatpush2.bf16.msra.mxu0 0
      %9359 = vmatprep.mubr.bf16.mxu0 0
      %9360 = vmatmul.mubr.bf16.gmra.mxu0 %v9301
      %v9361 = vpop.f32.mrf.mxu0
      %v9362 = vadd.f32 0.0, %v9361
      %v9363 = vpop.f32.mrf.mxu0
      %v9364 = vpop.f32.mrf.mxu0
      %v9365 = vadd.f32 0.0, %v9364
      %v9366 = vpop.f32.mrf.mxu0
      %9367 = vmatprep.mubr.bf16.mxu0 0
      %9368 = vmatmul.mubr.bf16.gmra.mxu0 %v9304
      %v9369 = vpop.f32.mrf.mxu0
      %v9370 = vadd.f32 0.0, %v9369
      %v9371 = vpop.f32.mrf.mxu0
      %v9372 = vpop.f32.mrf.mxu0
      %v9373 = vadd.f32 0.0, %v9372
      %v9374 = vpop.f32.mrf.mxu0
      %9375 = vmatprep.mubr.bf16.mxu0 0
      %9376 = vmatmul.mubr.bf16.gmra.mxu0 %v9307
      %v9377 = vpop.f32.mrf.mxu0
      %v9378 = vadd.f32 0.0, %v9377
      %v9379 = vpop.f32.mrf.mxu0
      %v9380 = vpop.f32.mrf.mxu0
      %v9381 = vadd.f32 0.0, %v9380
      %v9382 = vpop.f32.mrf.mxu0
      %9383 = vmatprep.mubr.bf16.mxu0 0
      %9384 = vmatmul.mubr.bf16.gmra.mxu0 %v9310
      %v9385 = vpop.f32.mrf.mxu0
      %v9386 = vadd.f32 0.0, %v9385
      %v9387 = vpop.f32.mrf.mxu0
      %v9388 = vpop.f32.mrf.mxu0
      %v9389 = vadd.f32 0.0, %v9388
      %v9390 = vpop.f32.mrf.mxu0
      %9391 = vmatprep.mubr.bf16.mxu0 0
      %9392 = vmatmul.mubr.bf16.gmra.mxu0 %v9313
      %v9393 = vpop.f32.mrf.mxu0
      %v9394 = vadd.f32 0.0, %v9393
      %v9395 = vpop.f32.mrf.mxu0
      %v9396 = vpop.f32.mrf.mxu0
      %v9397 = vadd.f32 0.0, %v9396
      %v9398 = vpop.f32.mrf.mxu0
      %9399 = vmatprep.mubr.bf16.mxu0 0
      %9400 = vmatmul.mubr.bf16.gmra.mxu0 %v9316
      %v9401 = vpop.f32.mrf.mxu0
      %v9402 = vadd.f32 0.0, %v9401
      %v9403 = vpop.f32.mrf.mxu0
      %v9404 = vpop.f32.mrf.mxu0
      %v9405 = vadd.f32 0.0, %v9404
      %v9406 = vpop.f32.mrf.mxu0
      %9407 = vmatprep.mubr.bf16.mxu0 0
      %9408 = vmatmul.mubr.bf16.gmra.mxu0 %v9319
      %v9409 = vpop.f32.mrf.mxu0
      %v9410 = vadd.f32 0.0, %v9409
      %v9411 = vpop.f32.mrf.mxu0
      %v9412 = vpop.f32.mrf.mxu0
      %v9413 = vadd.f32 0.0, %v9412
      %v9414 = vpop.f32.mrf.mxu0
      %9415 = vmatprep.mubr.bf16.mxu0 0
      %9416 = vmatmul.mubr.bf16.gmra.mxu0 %v9322
      %v9417 = vpop.f32.mrf.mxu0
      %v9418 = vadd.f32 0.0, %v9417
      %v9419 = vpop.f32.mrf.mxu0
      %v9420 = vpop.f32.mrf.mxu0
      %v9421 = vadd.f32 0.0, %v9420
      %v9422 = vpop.f32.mrf.mxu0
      %9423 = vdwg.mxu0
      %v9424 = vunpack.c.l.b16 %v9094
      %v9425 = vunpack.c.l.b16 %v9103
      %v9426 = vunpack.c.l.b16 %v9116
      %v9427 = vunpack.c.l.b16 %v9125
      %v9428 = vunpack.c.l.b16 %v9138
      %v9429 = vunpack.c.l.b16 %v9147
      %v9430 = vunpack.c.l.b16 %v9160
      %v9431 = vunpack.c.l.b16 %v9169
      %v9432 = vunpack.c.l.b16 %v9182
      %v9433 = vunpack.c.l.b16 %v9191
      %v9434 = vunpack.c.l.b16 %v9204
      %v9435 = vunpack.c.l.b16 %v9213
      %v9436 = vunpack.c.l.b16 %v9226
      %v9437 = vunpack.c.l.b16 %v9235
      %v9438 = vunpack.c.l.b16 %v9248
      %v9439 = vunpack.c.l.b16 %v9257
      %v9440 = vpack.c.b16 %v9425, %v9424
      %v9441 = vpack.c.b16 %v9427, %v9426
      %v9442 = vpack.c.b16 %v9429, %v9428
      %v9443 = vpack.c.b16 %v9431, %v9430
      %v9444 = vpack.c.b16 %v9433, %v9432
      %v9445 = vpack.c.b16 %v9435, %v9434
      %v9446 = vpack.c.b16 %v9437, %v9436
      %v9447 = vpack.c.b16 %v9439, %v9438
      %v9449 = vsel %vm6311, %v9440, 0
      %v9452 = vsel %vm6311, %v9441, 0
      %v9455 = vsel %vm6311, %v9442, 0
      %v9458 = vsel %vm6311, %v9443, 0
      %v9461 = vsel %vm6311, %v9444, 0
      %v9464 = vsel %vm6311, %v9445, 0
      %v9467 = vsel %vm6311, %v9446, 0
      %v9470 = vsel %vm6311, %v9447, 0
      %v9473 = vsel %vm6336, %v9258, 0
      %9475 = vmatprep.subr.bf16.mxu0 0
      %9476 = vmatpush1.bf16.msra.mxu0 0
      %9477 = vmatprep.subr.bf16.mxu0 0
      %9478 = vmatpush1.bf16.msra.mxu0 0
      %9479 = vmatprep.subr.bf16.mxu0 0
      %9480 = vmatpush1.bf16.msra.mxu0 0
      %9481 = vmatprep.subr.bf16.mxu0 0
      %9482 = vmatpush1.bf16.msra.mxu0 0
      %9483 = vmatprep.subr.bf16.mxu0 0
      %9484 = vmatpush1.bf16.msra.mxu0 0
      %9485 = vmatprep.subr.bf16.mxu0 0
      %9486 = vmatpush1.bf16.msra.mxu0 0
      %9487 = vmatprep.subr.bf16.mxu0 0
      %9488 = vmatpush1.bf16.msra.mxu0 0
      %9489 = vmatprep.subr.bf16.mxu0 0
      %9490 = vmatpush1.bf16.msra.mxu0 %v9473
      %9491 = vmatprep.subr.bf16.mxu0 0
      %9492 = vmatpush2.bf16.msra.mxu0 0
      %9493 = vmatprep.subr.bf16.mxu0 0
      %9494 = vmatpush2.bf16.msra.mxu0 0
      %9495 = vmatprep.subr.bf16.mxu0 0
      %9496 = vmatpush2.bf16.msra.mxu0 0
      %9497 = vmatprep.subr.bf16.mxu0 0
      %9498 = vmatpush2.bf16.msra.mxu0 0
      %9499 = vmatprep.subr.bf16.mxu0 0
      %9500 = vmatpush2.bf16.msra.mxu0 0
      %9501 = vmatprep.subr.bf16.mxu0 0
      %9502 = vmatpush2.bf16.msra.mxu0 0
      %9503 = vmatprep.subr.bf16.mxu0 0
      %9504 = vmatpush2.bf16.msra.mxu0 0
      %9505 = vmatprep.subr.bf16.mxu0 0
      %9506 = vmatpush2.bf16.msra.mxu0 0
      %9507 = vmatprep.mubr.bf16.mxu0 0
      %9508 = vmatmul.mubr.bf16.gmra.mxu0 %v9449
      %v9509 = vpop.f32.mrf.mxu0
      %v9510 = vadd.f32 %v9362, %v9509
      %v9511 = vpop.f32.mrf.mxu0
      %v9512 = vpop.f32.mrf.mxu0
      %v9513 = vadd.f32 %v9365, %v9512
      %v9514 = vpop.f32.mrf.mxu0
      %9515 = vmatprep.mubr.bf16.mxu0 0
      %9516 = vmatmul.mubr.bf16.gmra.mxu0 %v9452
      %v9517 = vpop.f32.mrf.mxu0
      %v9518 = vadd.f32 %v9370, %v9517
      %v9519 = vpop.f32.mrf.mxu0
      %v9520 = vpop.f32.mrf.mxu0
      %v9521 = vadd.f32 %v9373, %v9520
      %v9522 = vpop.f32.mrf.mxu0
      %9523 = vmatprep.mubr.bf16.mxu0 0
      %9524 = vmatmul.mubr.bf16.gmra.mxu0 %v9455
      %v9525 = vpop.f32.mrf.mxu0
      %v9526 = vadd.f32 %v9378, %v9525
      %v9527 = vpop.f32.mrf.mxu0
      %v9528 = vpop.f32.mrf.mxu0
      %v9529 = vadd.f32 %v9381, %v9528
      %v9530 = vpop.f32.mrf.mxu0
      %9531 = vmatprep.mubr.bf16.mxu0 0
      %9532 = vmatmul.mubr.bf16.gmra.mxu0 %v9458
      %v9533 = vpop.f32.mrf.mxu0
      %v9534 = vadd.f32 %v9386, %v9533
      %v9535 = vpop.f32.mrf.mxu0
      %v9536 = vpop.f32.mrf.mxu0
      %v9537 = vadd.f32 %v9389, %v9536
      %v9538 = vpop.f32.mrf.mxu0
      %9539 = vmatprep.mubr.bf16.mxu0 0
      %9540 = vmatmul.mubr.bf16.gmra.mxu0 %v9461
      %v9541 = vpop.f32.mrf.mxu0
      %v9542 = vadd.f32 %v9394, %v9541
      %v9543 = vpop.f32.mrf.mxu0
      %v9544 = vpop.f32.mrf.mxu0
      %v9545 = vadd.f32 %v9397, %v9544
      %v9546 = vpop.f32.mrf.mxu0
      %9547 = vmatprep.mubr.bf16.mxu0 0
      %9548 = vmatmul.mubr.bf16.gmra.mxu0 %v9464
      %v9549 = vpop.f32.mrf.mxu0
      %v9550 = vadd.f32 %v9402, %v9549
      %v9551 = vpop.f32.mrf.mxu0
      %v9552 = vpop.f32.mrf.mxu0
      %v9553 = vadd.f32 %v9405, %v9552
      %v9554 = vpop.f32.mrf.mxu0
      %9555 = vmatprep.mubr.bf16.mxu0 0
      %9556 = vmatmul.mubr.bf16.gmra.mxu0 %v9467
      %v9557 = vpop.f32.mrf.mxu0
      %v9558 = vadd.f32 %v9410, %v9557
      %v9559 = vpop.f32.mrf.mxu0
      %v9560 = vpop.f32.mrf.mxu0
      %v9561 = vadd.f32 %v9413, %v9560
      %v9562 = vpop.f32.mrf.mxu0
      %9563 = vmatprep.mubr.bf16.mxu0 0
      %9564 = vmatmul.mubr.bf16.gmra.mxu0 %v9470
      %v9565 = vpop.f32.mrf.mxu0
      %v9566 = vadd.f32 %v9418, %v9565
      %v9567 = vpop.f32.mrf.mxu0
      %v9568 = vpop.f32.mrf.mxu0
      %v9569 = vadd.f32 %v9421, %v9568
      %v9570 = vpop.f32.mrf.mxu0
      %9571 = vdwg.mxu0
      %v9572 = vld [vmem:[%s9057 + $0x4] sm:$0xf]
      %v9573 = vld [vmem:[%s9057 + $0x8] sm:$0xf]
      %v9574 = vld [vmem:[%s9057 + $0xc] sm:$0x1]
      %v9575 = vld [vmem:[%s9057 + $0x14] sm:$0xf]
      %v9576 = vld [vmem:[%s9057 + $0x18] sm:$0xf]
      %v9577 = vld [vmem:[%s9057 + $0x1c] sm:$0x1]
      %v9578 = vld [vmem:[%s9057 + $0x24] sm:$0xf]
      %v9579 = vld [vmem:[%s9057 + $0x28] sm:$0xf]
      %v9580 = vld [vmem:[%s9057 + $0x2c] sm:$0x1]
      %v9581 = vld [vmem:[%s9057 + $0x34] sm:$0xf]
      %v9582 = vld [vmem:[%s9057 + $0x38] sm:$0xf]
      %v9583 = vld [vmem:[%s9057 + $0x3c] sm:$0x1]
      %v9584 = vld [vmem:[%s9057 + $0x44] sm:$0xf]
      %v9585 = vld [vmem:[%s9057 + $0x48] sm:$0xf]
      %v9586 = vld [vmem:[%s9057 + $0x4c] sm:$0x1]
      %v9587 = vld [vmem:[%s9057 + $0x54] sm:$0xf]
      %v9588 = vld [vmem:[%s9057 + $0x58] sm:$0xf]
      %v9589 = vld [vmem:[%s9057 + $0x5c] sm:$0x1]
      %v9590 = vld [vmem:[%s9057 + $0x64] sm:$0xf]
      %v9591 = vld [vmem:[%s9057 + $0x68] sm:$0xf]
      %v9592 = vld [vmem:[%s9057 + $0x6c] sm:$0x1]
      %v9593 = vld [vmem:[%s9057 + $0x74] sm:$0xf]
      %v9594 = vld [vmem:[%s9057 + $0x78] sm:$0xf]
      %v9595 = vld [vmem:[%s9057 + $0x7c] sm:$0x1]
      %v9597 = vshrl.u32 %v9572, 16
      %v9599 = vrot.slane %v9597, 4
      %v9600 = vshll.u32 %v9572, 16
      %v9602 = vrot.slane %v9600, 5
      %v9603 = vor.u32 %v9599, %v9602
      %v9604 = vrot.slane %v9603, 4
      %v9606 = vshll.u32 %v9573, 16
      %v9608 = vrot.slane %v9606, 5
      %v9609 = vsel %vm902, %v9604, %v9608
      %v9610 = vshrl.u32 %v9573, 16
      %v9612 = vrot.slane %v9610, 4
      %v9613 = vor.u32 %v9612, %v9608
      %v9614 = vrot.slane %v9613, 4
      %v9616 = vshll.u32 %v9574, 16
      %v9618 = vrot.slane %v9616, 5
      %v9619 = vsel %vm902, %v9614, %v9618
      %v9621 = vshrl.u32 %v9575, 16
      %v9623 = vrot.slane %v9621, 4
      %v9624 = vshll.u32 %v9575, 16
      %v9626 = vrot.slane %v9624, 5
      %v9627 = vor.u32 %v9623, %v9626
      %v9628 = vrot.slane %v9627, 4
      %v9630 = vshll.u32 %v9576, 16
      %v9632 = vrot.slane %v9630, 5
      %v9633 = vsel %vm902, %v9628, %v9632
      %v9634 = vshrl.u32 %v9576, 16
      %v9636 = vrot.slane %v9634, 4
      %v9637 = vor.u32 %v9636, %v9632
      %v9638 = vrot.slane %v9637, 4
      %v9640 = vshll.u32 %v9577, 16
      %v9642 = vrot.slane %v9640, 5
      %v9643 = vsel %vm902, %v9638, %v9642
      %v9645 = vshrl.u32 %v9578, 16
      %v9647 = vrot.slane %v9645, 4
      %v9648 = vshll.u32 %v9578, 16
      %v9650 = vrot.slane %v9648, 5
      %v9651 = vor.u32 %v9647, %v9650
      %v9652 = vrot.slane %v9651, 4
      %v9654 = vshll.u32 %v9579, 16
      %v9656 = vrot.slane %v9654, 5
      %v9657 = vsel %vm902, %v9652, %v9656
      %v9658 = vshrl.u32 %v9579, 16
      %v9660 = vrot.slane %v9658, 4
      %v9661 = vor.u32 %v9660, %v9656
      %v9662 = vrot.slane %v9661, 4
      %v9664 = vshll.u32 %v9580, 16
      %v9666 = vrot.slane %v9664, 5
      %v9667 = vsel %vm902, %v9662, %v9666
      %v9669 = vshrl.u32 %v9581, 16
      %v9671 = vrot.slane %v9669, 4
      %v9672 = vshll.u32 %v9581, 16
      %v9674 = vrot.slane %v9672, 5
      %v9675 = vor.u32 %v9671, %v9674
      %v9676 = vrot.slane %v9675, 4
      %v9678 = vshll.u32 %v9582, 16
      %v9680 = vrot.slane %v9678, 5
      %v9681 = vsel %vm902, %v9676, %v9680
      %v9682 = vshrl.u32 %v9582, 16
      %v9684 = vrot.slane %v9682, 4
      %v9685 = vor.u32 %v9684, %v9680
      %v9686 = vrot.slane %v9685, 4
      %v9688 = vshll.u32 %v9583, 16
      %v9690 = vrot.slane %v9688, 5
      %v9691 = vsel %vm902, %v9686, %v9690
      %v9693 = vshrl.u32 %v9584, 16
      %v9695 = vrot.slane %v9693, 4
      %v9696 = vshll.u32 %v9584, 16
      %v9698 = vrot.slane %v9696, 5
      %v9699 = vor.u32 %v9695, %v9698
      %v9700 = vrot.slane %v9699, 4
      %v9702 = vshll.u32 %v9585, 16
      %v9704 = vrot.slane %v9702, 5
      %v9705 = vsel %vm902, %v9700, %v9704
      %v9706 = vshrl.u32 %v9585, 16
      %v9708 = vrot.slane %v9706, 4
      %v9709 = vor.u32 %v9708, %v9704
      %v9710 = vrot.slane %v9709, 4
      %v9712 = vshll.u32 %v9586, 16
      %v9714 = vrot.slane %v9712, 5
      %v9715 = vsel %vm902, %v9710, %v9714
      %v9717 = vshrl.u32 %v9587, 16
      %v9719 = vrot.slane %v9717, 4
      %v9720 = vshll.u32 %v9587, 16
      %v9722 = vrot.slane %v9720, 5
      %v9723 = vor.u32 %v9719, %v9722
      %v9724 = vrot.slane %v9723, 4
      %v9726 = vshll.u32 %v9588, 16
      %v9728 = vrot.slane %v9726, 5
      %v9729 = vsel %vm902, %v9724, %v9728
      %v9730 = vshrl.u32 %v9588, 16
      %v9732 = vrot.slane %v9730, 4
      %v9733 = vor.u32 %v9732, %v9728
      %v9734 = vrot.slane %v9733, 4
      %v9736 = vshll.u32 %v9589, 16
      %v9738 = vrot.slane %v9736, 5
      %v9739 = vsel %vm902, %v9734, %v9738
      %v9741 = vshrl.u32 %v9590, 16
      %v9743 = vrot.slane %v9741, 4
      %v9744 = vshll.u32 %v9590, 16
      %v9746 = vrot.slane %v9744, 5
      %v9747 = vor.u32 %v9743, %v9746
      %v9748 = vrot.slane %v9747, 4
      %v9750 = vshll.u32 %v9591, 16
      %v9752 = vrot.slane %v9750, 5
      %v9753 = vsel %vm902, %v9748, %v9752
      %v9754 = vshrl.u32 %v9591, 16
      %v9756 = vrot.slane %v9754, 4
      %v9757 = vor.u32 %v9756, %v9752
      %v9758 = vrot.slane %v9757, 4
      %v9760 = vshll.u32 %v9592, 16
      %v9762 = vrot.slane %v9760, 5
      %v9763 = vsel %vm902, %v9758, %v9762
      %v9765 = vshrl.u32 %v9593, 16
      %v9767 = vrot.slane %v9765, 4
      %v9768 = vshll.u32 %v9593, 16
      %v9770 = vrot.slane %v9768, 5
      %v9771 = vor.u32 %v9767, %v9770
      %v9772 = vrot.slane %v9771, 4
      %v9774 = vshll.u32 %v9594, 16
      %v9776 = vrot.slane %v9774, 5
      %v9777 = vsel %vm902, %v9772, %v9776
      %v9778 = vshrl.u32 %v9594, 16
      %v9780 = vrot.slane %v9778, 4
      %v9781 = vor.u32 %v9780, %v9776
      %v9782 = vrot.slane %v9781, 4
      %v9784 = vshll.u32 %v9595, 16
      %v9786 = vrot.slane %v9784, 5
      %v9787 = vsel %vm902, %v9782, %v9786
      %v9788 = vld [vmem:[%s6801] sm:$0xf]
      %v9789 = vunpack.c.l.b16 %v9609
      %v9790 = vunpack.c.l.b16 %v9619
      %v9791 = vunpack.c.l.b16 %v9633
      %v9792 = vunpack.c.l.b16 %v9643
      %v9793 = vunpack.c.l.b16 %v9657
      %v9794 = vunpack.c.l.b16 %v9667
      %v9795 = vunpack.c.l.b16 %v9681
      %v9796 = vunpack.c.l.b16 %v9691
      %v9797 = vunpack.c.l.b16 %v9705
      %v9798 = vunpack.c.l.b16 %v9715
      %v9799 = vunpack.c.l.b16 %v9729
      %v9800 = vunpack.c.l.b16 %v9739
      %v9801 = vunpack.c.l.b16 %v9753
      %v9802 = vunpack.c.l.b16 %v9763
      %v9803 = vunpack.c.l.b16 %v9777
      %v9804 = vunpack.c.l.b16 %v9787
      %v9805 = vpack.c.b16 %v9790, %v9789
      %v9806 = vpack.c.b16 %v9792, %v9791
      %v9807 = vpack.c.b16 %v9794, %v9793
      %v9808 = vpack.c.b16 %v9796, %v9795
      %v9809 = vpack.c.b16 %v9798, %v9797
      %v9810 = vpack.c.b16 %v9800, %v9799
      %v9811 = vpack.c.b16 %v9802, %v9801
      %v9812 = vpack.c.b16 %v9804, %v9803
      %v9814 = vsel %vm6311, %v9805, 0
      %v9817 = vsel %vm6311, %v9806, 0
      %v9820 = vsel %vm6311, %v9807, 0
      %v9823 = vsel %vm6311, %v9808, 0
      %v9826 = vsel %vm6311, %v9809, 0
      %v9829 = vsel %vm6311, %v9810, 0
      %v9832 = vsel %vm6311, %v9811, 0
      %v9835 = vsel %vm6311, %v9812, 0
      %v9838 = vsel %vm6336, %v9788, 0
      %9840 = vmatprep.subr.bf16.mxu0 0
      %9841 = vmatpush1.bf16.msra.mxu0 0
      %9842 = vmatprep.subr.bf16.mxu0 0
      %9843 = vmatpush1.bf16.msra.mxu0 0
      %9844 = vmatprep.subr.bf16.mxu0 0
      %9845 = vmatpush1.bf16.msra.mxu0 0
      %9846 = vmatprep.subr.bf16.mxu0 0
      %9847 = vmatpush1.bf16.msra.mxu0 0
      %9848 = vmatprep.subr.bf16.mxu0 0
      %9849 = vmatpush1.bf16.msra.mxu0 0
      %9850 = vmatprep.subr.bf16.mxu0 0
      %9851 = vmatpush1.bf16.msra.mxu0 0
      %9852 = vmatprep.subr.bf16.mxu0 0
      %9853 = vmatpush1.bf16.msra.mxu0 0
      %9854 = vmatprep.subr.bf16.mxu0 0
      %9855 = vmatpush1.bf16.msra.mxu0 %v9838
      %9856 = vmatprep.subr.bf16.mxu0 0
      %9857 = vmatpush2.bf16.msra.mxu0 0
      %9858 = vmatprep.subr.bf16.mxu0 0
      %9859 = vmatpush2.bf16.msra.mxu0 0
      %9860 = vmatprep.subr.bf16.mxu0 0
      %9861 = vmatpush2.bf16.msra.mxu0 0
      %9862 = vmatprep.subr.bf16.mxu0 0
      %9863 = vmatpush2.bf16.msra.mxu0 0
      %9864 = vmatprep.subr.bf16.mxu0 0
      %9865 = vmatpush2.bf16.msra.mxu0 0
      %9866 = vmatprep.subr.bf16.mxu0 0
      %9867 = vmatpush2.bf16.msra.mxu0 0
      %9868 = vmatprep.subr.bf16.mxu0 0
      %9869 = vmatpush2.bf16.msra.mxu0 0
      %9870 = vmatprep.subr.bf16.mxu0 0
      %9871 = vmatpush2.bf16.msra.mxu0 0
      %9872 = vmatprep.mubr.bf16.mxu0 0
      %9873 = vmatmul.mubr.bf16.gmra.mxu0 %v9814
      %v9874 = vpop.f32.mrf.mxu0
      %v9875 = vadd.f32 0.0, %v9874
      %v9876 = vpop.f32.mrf.mxu0
      %v9877 = vpop.f32.mrf.mxu0
      %v9878 = vadd.f32 0.0, %v9877
      %v9879 = vpop.f32.mrf.mxu0
      %9880 = vmatprep.mubr.bf16.mxu0 0
      %9881 = vmatmul.mubr.bf16.gmra.mxu0 %v9817
      %v9882 = vpop.f32.mrf.mxu0
      %v9883 = vadd.f32 0.0, %v9882
      %v9884 = vpop.f32.mrf.mxu0
      %v9885 = vpop.f32.mrf.mxu0
      %v9886 = vadd.f32 0.0, %v9885
      %v9887 = vpop.f32.mrf.mxu0
      %9888 = vmatprep.mubr.bf16.mxu0 0
      %9889 = vmatmul.mubr.bf16.gmra.mxu0 %v9820
      %v9890 = vpop.f32.mrf.mxu0
      %v9891 = vadd.f32 0.0, %v9890
      %v9892 = vpop.f32.mrf.mxu0
      %v9893 = vpop.f32.mrf.mxu0
      %v9894 = vadd.f32 0.0, %v9893
      %v9895 = vpop.f32.mrf.mxu0
      %9896 = vmatprep.mubr.bf16.mxu0 0
      %9897 = vmatmul.mubr.bf16.gmra.mxu0 %v9823
      %v9898 = vpop.f32.mrf.mxu0
      %v9899 = vadd.f32 0.0, %v9898
      %v9900 = vpop.f32.mrf.mxu0
      %v9901 = vpop.f32.mrf.mxu0
      %v9902 = vadd.f32 0.0, %v9901
      %v9903 = vpop.f32.mrf.mxu0
      %9904 = vmatprep.mubr.bf16.mxu0 0
      %9905 = vmatmul.mubr.bf16.gmra.mxu0 %v9826
      %v9906 = vpop.f32.mrf.mxu0
      %v9907 = vadd.f32 0.0, %v9906
      %v9908 = vpop.f32.mrf.mxu0
      %v9909 = vpop.f32.mrf.mxu0
      %v9910 = vadd.f32 0.0, %v9909
      %v9911 = vpop.f32.mrf.mxu0
      %9912 = vmatprep.mubr.bf16.mxu0 0
      %9913 = vmatmul.mubr.bf16.gmra.mxu0 %v9829
      %v9914 = vpop.f32.mrf.mxu0
      %v9915 = vadd.f32 0.0, %v9914
      %v9916 = vpop.f32.mrf.mxu0
      %v9917 = vpop.f32.mrf.mxu0
      %v9918 = vadd.f32 0.0, %v9917
      %v9919 = vpop.f32.mrf.mxu0
      %9920 = vmatprep.mubr.bf16.mxu0 0
      %9921 = vmatmul.mubr.bf16.gmra.mxu0 %v9832
      %v9922 = vpop.f32.mrf.mxu0
      %v9923 = vadd.f32 0.0, %v9922
      %v9924 = vpop.f32.mrf.mxu0
      %v9925 = vpop.f32.mrf.mxu0
      %v9926 = vadd.f32 0.0, %v9925
      %v9927 = vpop.f32.mrf.mxu0
      %9928 = vmatprep.mubr.bf16.mxu0 0
      %9929 = vmatmul.mubr.bf16.gmra.mxu0 %v9835
      %v9930 = vpop.f32.mrf.mxu0
      %v9931 = vadd.f32 0.0, %v9930
      %v9932 = vpop.f32.mrf.mxu0
      %v9933 = vpop.f32.mrf.mxu0
      %v9934 = vadd.f32 0.0, %v9933
      %v9935 = vpop.f32.mrf.mxu0
      %9936 = vdwg.mxu0
      %v9937 = vadd.f32 %v9510, %v9875
      %v9938 = vadd.f32 %v9513, %v9878
      %v9939 = vadd.f32 %v9518, %v9883
      %v9940 = vadd.f32 %v9521, %v9886
      %v9941 = vadd.f32 %v9526, %v9891
      %v9942 = vadd.f32 %v9529, %v9894
      %v9943 = vadd.f32 %v9534, %v9899
      %v9944 = vadd.f32 %v9537, %v9902
      %v9945 = vadd.f32 %v9542, %v9907
      %v9946 = vadd.f32 %v9545, %v9910
      %v9947 = vadd.f32 %v9550, %v9915
      %v9948 = vadd.f32 %v9553, %v9918
      %v9949 = vadd.f32 %v9558, %v9923
      %v9950 = vadd.f32 %v9561, %v9926
      %v9951 = vadd.f32 %v9566, %v9931
      %v9952 = vadd.f32 %v9569, %v9934
      %v9953 = vld [vmem:[%s6051] sm:$0x8]
      %v9954 = vld [vmem:[%s6051 + $0x4] sm:$0xf]
      %v9955 = vld [vmem:[%s6051 + $0x8] sm:$0xf]
      %v9956 = vld [vmem:[%s6051 + $0x10] sm:$0x8]
      %v9957 = vld [vmem:[%s6051 + $0x14] sm:$0xf]
      %v9958 = vld [vmem:[%s6051 + $0x18] sm:$0xf]
      %v9959 = vld [vmem:[%s6051 + $0x20] sm:$0x8]
      %v9960 = vld [vmem:[%s6051 + $0x24] sm:$0xf]
      %v9961 = vld [vmem:[%s6051 + $0x28] sm:$0xf]
      %v9962 = vld [vmem:[%s6051 + $0x30] sm:$0x8]
      %v9963 = vld [vmem:[%s6051 + $0x34] sm:$0xf]
      %v9964 = vld [vmem:[%s6051 + $0x38] sm:$0xf]
      %v9965 = vld [vmem:[%s6051 + $0x40] sm:$0x8]
      %v9966 = vld [vmem:[%s6051 + $0x44] sm:$0xf]
      %v9967 = vld [vmem:[%s6051 + $0x48] sm:$0xf]
      %v9968 = vld [vmem:[%s6051 + $0x50] sm:$0x8]
      %v9969 = vld [vmem:[%s6051 + $0x54] sm:$0xf]
      %v9970 = vld [vmem:[%s6051 + $0x58] sm:$0xf]
      %v9971 = vld [vmem:[%s6051 + $0x60] sm:$0x8]
      %v9972 = vld [vmem:[%s6051 + $0x64] sm:$0xf]
      %v9973 = vld [vmem:[%s6051 + $0x68] sm:$0xf]
      %v9974 = vld [vmem:[%s6051 + $0x70] sm:$0x8]
      %v9975 = vld [vmem:[%s6051 + $0x74] sm:$0xf]
      %v9976 = vld [vmem:[%s6051 + $0x78] sm:$0xf]
      %v9978 = vshrl.u32 %v9953, 16
      %v9980 = vrot.slane %v9978, 7
      %v9981 = vrot.slane %v9980, 4
      %v9983 = vshrl.u32 %v9954, 16
      %v9985 = vrot.slane %v9983, 7
      %v9986 = vshll.u32 %v9954, 16
      %v9988 = vor.u32 %v9985, %v9986
      %v9989 = vsel %vm382, %v9981, %v9988
      %v9990 = vrot.slane %v9985, 4
      %v9992 = vshrl.u32 %v9955, 16
      %v9994 = vrot.slane %v9992, 7
      %v9995 = vshll.u32 %v9955, 16
      %v9997 = vor.u32 %v9994, %v9995
      %v9998 = vsel %vm382, %v9990, %v9997
      %v10000 = vshrl.u32 %v9956, 16
      %v10002 = vrot.slane %v10000, 7
      %v10003 = vrot.slane %v10002, 4
      %v10005 = vshrl.u32 %v9957, 16
      %v10007 = vrot.slane %v10005, 7
      %v10008 = vshll.u32 %v9957, 16
      %v10010 = vor.u32 %v10007, %v10008
      %v10011 = vsel %vm382, %v10003, %v10010
      %v10012 = vrot.slane %v10007, 4
      %v10014 = vshrl.u32 %v9958, 16
      %v10016 = vrot.slane %v10014, 7
      %v10017 = vshll.u32 %v9958, 16
      %v10019 = vor.u32 %v10016, %v10017
      %v10020 = vsel %vm382, %v10012, %v10019
      %v10022 = vshrl.u32 %v9959, 16
      %v10024 = vrot.slane %v10022, 7
      %v10025 = vrot.slane %v10024, 4
      %v10027 = vshrl.u32 %v9960, 16
      %v10029 = vrot.slane %v10027, 7
      %v10030 = vshll.u32 %v9960, 16
      %v10032 = vor.u32 %v10029, %v10030
      %v10033 = vsel %vm382, %v10025, %v10032
      %v10034 = vrot.slane %v10029, 4
      %v10036 = vshrl.u32 %v9961, 16
      %v10038 = vrot.slane %v10036, 7
      %v10039 = vshll.u32 %v9961, 16
      %v10041 = vor.u32 %v10038, %v10039
      %v10042 = vsel %vm382, %v10034, %v10041
      %v10044 = vshrl.u32 %v9962, 16
      %v10046 = vrot.slane %v10044, 7
      %v10047 = vrot.slane %v10046, 4
      %v10049 = vshrl.u32 %v9963, 16
      %v10051 = vrot.slane %v10049, 7
      %v10052 = vshll.u32 %v9963, 16
      %v10054 = vor.u32 %v10051, %v10052
      %v10055 = vsel %vm382, %v10047, %v10054
      %v10056 = vrot.slane %v10051, 4
      %v10058 = vshrl.u32 %v9964, 16
      %v10060 = vrot.slane %v10058, 7
      %v10061 = vshll.u32 %v9964, 16
      %v10063 = vor.u32 %v10060, %v10061
      %v10064 = vsel %vm382, %v10056, %v10063
      %v10066 = vshrl.u32 %v9965, 16
      %v10068 = vrot.slane %v10066, 7
      %v10069 = vrot.slane %v10068, 4
      %v10071 = vshrl.u32 %v9966, 16
      %v10073 = vrot.slane %v10071, 7
      %v10074 = vshll.u32 %v9966, 16
      %v10076 = vor.u32 %v10073, %v10074
      %v10077 = vsel %vm382, %v10069, %v10076
      %v10078 = vrot.slane %v10073, 4
      %v10080 = vshrl.u32 %v9967, 16
      %v10082 = vrot.slane %v10080, 7
      %v10083 = vshll.u32 %v9967, 16
      %v10085 = vor.u32 %v10082, %v10083
      %v10086 = vsel %vm382, %v10078, %v10085
      %v10088 = vshrl.u32 %v9968, 16
      %v10090 = vrot.slane %v10088, 7
      %v10091 = vrot.slane %v10090, 4
      %v10093 = vshrl.u32 %v9969, 16
      %v10095 = vrot.slane %v10093, 7
      %v10096 = vshll.u32 %v9969, 16
      %v10098 = vor.u32 %v10095, %v10096
      %v10099 = vsel %vm382, %v10091, %v10098
      %v10100 = vrot.slane %v10095, 4
      %v10102 = vshrl.u32 %v9970, 16
      %v10104 = vrot.slane %v10102, 7
      %v10105 = vshll.u32 %v9970, 16
      %v10107 = vor.u32 %v10104, %v10105
      %v10108 = vsel %vm382, %v10100, %v10107
      %v10110 = vshrl.u32 %v9971, 16
      %v10112 = vrot.slane %v10110, 7
      %v10113 = vrot.slane %v10112, 4
      %v10115 = vshrl.u32 %v9972, 16
      %v10117 = vrot.slane %v10115, 7
      %v10118 = vshll.u32 %v9972, 16
      %v10120 = vor.u32 %v10117, %v10118
      %v10121 = vsel %vm382, %v10113, %v10120
      %v10122 = vrot.slane %v10117, 4
      %v10124 = vshrl.u32 %v9973, 16
      %v10126 = vrot.slane %v10124, 7
      %v10127 = vshll.u32 %v9973, 16
      %v10129 = vor.u32 %v10126, %v10127
      %v10130 = vsel %vm382, %v10122, %v10129
      %v10132 = vshrl.u32 %v9974, 16
      %v10134 = vrot.slane %v10132, 7
      %v10135 = vrot.slane %v10134, 4
      %v10137 = vshrl.u32 %v9975, 16
      %v10139 = vrot.slane %v10137, 7
      %v10140 = vshll.u32 %v9975, 16
      %v10142 = vor.u32 %v10139, %v10140
      %v10143 = vsel %vm382, %v10135, %v10142
      %v10144 = vrot.slane %v10139, 4
      %v10146 = vshrl.u32 %v9976, 16
      %v10148 = vrot.slane %v10146, 7
      %v10149 = vshll.u32 %v9976, 16
      %v10151 = vor.u32 %v10148, %v10149
      %v10152 = vsel %vm382, %v10144, %v10151
      %v10153 = vld [vmem:[%s7167] sm:$0xf]
      %v10154 = vunpack.c.l.b16 %v9989
      %v10155 = vunpack.c.l.b16 %v9998
      %v10156 = vunpack.c.l.b16 %v10011
      %v10157 = vunpack.c.l.b16 %v10020
      %v10158 = vunpack.c.l.b16 %v10033
      %v10159 = vunpack.c.l.b16 %v10042
      %v10160 = vunpack.c.l.b16 %v10055
      %v10161 = vunpack.c.l.b16 %v10064
      %v10162 = vunpack.c.l.b16 %v10077
      %v10163 = vunpack.c.l.b16 %v10086
      %v10164 = vunpack.c.l.b16 %v10099
      %v10165 = vunpack.c.l.b16 %v10108
      %v10166 = vunpack.c.l.b16 %v10121
      %v10167 = vunpack.c.l.b16 %v10130
      %v10168 = vunpack.c.l.b16 %v10143
      %v10169 = vunpack.c.l.b16 %v10152
      %v10170 = vpack.c.b16 %v10155, %v10154
      %v10171 = vpack.c.b16 %v10157, %v10156
      %v10172 = vpack.c.b16 %v10159, %v10158
      %v10173 = vpack.c.b16 %v10161, %v10160
      %v10174 = vpack.c.b16 %v10163, %v10162
      %v10175 = vpack.c.b16 %v10165, %v10164
      %v10176 = vpack.c.b16 %v10167, %v10166
      %v10177 = vpack.c.b16 %v10169, %v10168
      %v10179 = vsel %vm6311, %v10170, 0
      %v10182 = vsel %vm6311, %v10171, 0
      %v10185 = vsel %vm6311, %v10172, 0
      %v10188 = vsel %vm6311, %v10173, 0
      %v10191 = vsel %vm6311, %v10174, 0
      %v10194 = vsel %vm6311, %v10175, 0
      %v10197 = vsel %vm6311, %v10176, 0
      %v10200 = vsel %vm6311, %v10177, 0
      %v10203 = vsel %vm6336, %v10153, 0
      %10205 = vmatprep.subr.bf16.mxu0 0
      %10206 = vmatpush1.bf16.msra.mxu0 0
      %10207 = vmatprep.subr.bf16.mxu0 0
      %10208 = vmatpush1.bf16.msra.mxu0 0
      %10209 = vmatprep.subr.bf16.mxu0 0
      %10210 = vmatpush1.bf16.msra.mxu0 0
      %10211 = vmatprep.subr.bf16.mxu0 0
      %10212 = vmatpush1.bf16.msra.mxu0 0
      %10213 = vmatprep.subr.bf16.mxu0 0
      %10214 = vmatpush1.bf16.msra.mxu0 0
      %10215 = vmatprep.subr.bf16.mxu0 0
      %10216 = vmatpush1.bf16.msra.mxu0 0
      %10217 = vmatprep.subr.bf16.mxu0 0
      %10218 = vmatpush1.bf16.msra.mxu0 0
      %10219 = vmatprep.subr.bf16.mxu0 0
      %10220 = vmatpush1.bf16.msra.mxu0 %v10203
      %10221 = vmatprep.subr.bf16.mxu0 0
      %10222 = vmatpush2.bf16.msra.mxu0 0
      %10223 = vmatprep.subr.bf16.mxu0 0
      %10224 = vmatpush2.bf16.msra.mxu0 0
      %10225 = vmatprep.subr.bf16.mxu0 0
      %10226 = vmatpush2.bf16.msra.mxu0 0
      %10227 = vmatprep.subr.bf16.mxu0 0
      %10228 = vmatpush2.bf16.msra.mxu0 0
      %10229 = vmatprep.subr.bf16.mxu0 0
      %10230 = vmatpush2.bf16.msra.mxu0 0
      %10231 = vmatprep.subr.bf16.mxu0 0
      %10232 = vmatpush2.bf16.msra.mxu0 0
      %10233 = vmatprep.subr.bf16.mxu0 0
      %10234 = vmatpush2.bf16.msra.mxu0 0
      %10235 = vmatprep.subr.bf16.mxu0 0
      %10236 = vmatpush2.bf16.msra.mxu0 0
      %10237 = vmatprep.mubr.bf16.mxu0 0
      %10238 = vmatmul.mubr.bf16.gmra.mxu0 %v10179
      %v10239 = vpop.f32.mrf.mxu0
      %v10240 = vadd.f32 0.0, %v10239
      %v10241 = vpop.f32.mrf.mxu0
      %v10242 = vpop.f32.mrf.mxu0
      %v10243 = vadd.f32 0.0, %v10242
      %v10244 = vpop.f32.mrf.mxu0
      %10245 = vmatprep.mubr.bf16.mxu0 0
      %10246 = vmatmul.mubr.bf16.gmra.mxu0 %v10182
      %v10247 = vpop.f32.mrf.mxu0
      %v10248 = vadd.f32 0.0, %v10247
      %v10249 = vpop.f32.mrf.mxu0
      %v10250 = vpop.f32.mrf.mxu0
      %v10251 = vadd.f32 0.0, %v10250
      %v10252 = vpop.f32.mrf.mxu0
      %10253 = vmatprep.mubr.bf16.mxu0 0
      %10254 = vmatmul.mubr.bf16.gmra.mxu0 %v10185
      %v10255 = vpop.f32.mrf.mxu0
      %v10256 = vadd.f32 0.0, %v10255
      %v10257 = vpop.f32.mrf.mxu0
      %v10258 = vpop.f32.mrf.mxu0
      %v10259 = vadd.f32 0.0, %v10258
      %v10260 = vpop.f32.mrf.mxu0
      %10261 = vmatprep.mubr.bf16.mxu0 0
      %10262 = vmatmul.mubr.bf16.gmra.mxu0 %v10188
      %v10263 = vpop.f32.mrf.mxu0
      %v10264 = vadd.f32 0.0, %v10263
      %v10265 = vpop.f32.mrf.mxu0
      %v10266 = vpop.f32.mrf.mxu0
      %v10267 = vadd.f32 0.0, %v10266
      %v10268 = vpop.f32.mrf.mxu0
      %10269 = vmatprep.mubr.bf16.mxu0 0
      %10270 = vmatmul.mubr.bf16.gmra.mxu0 %v10191
      %v10271 = vpop.f32.mrf.mxu0
      %v10272 = vadd.f32 0.0, %v10271
      %v10273 = vpop.f32.mrf.mxu0
      %v10274 = vpop.f32.mrf.mxu0
      %v10275 = vadd.f32 0.0, %v10274
      %v10276 = vpop.f32.mrf.mxu0
      %10277 = vmatprep.mubr.bf16.mxu0 0
      %10278 = vmatmul.mubr.bf16.gmra.mxu0 %v10194
      %v10279 = vpop.f32.mrf.mxu0
      %v10280 = vadd.f32 0.0, %v10279
      %v10281 = vpop.f32.mrf.mxu0
      %v10282 = vpop.f32.mrf.mxu0
      %v10283 = vadd.f32 0.0, %v10282
      %v10284 = vpop.f32.mrf.mxu0
      %10285 = vmatprep.mubr.bf16.mxu0 0
      %10286 = vmatmul.mubr.bf16.gmra.mxu0 %v10197
      %v10287 = vpop.f32.mrf.mxu0
      %v10288 = vadd.f32 0.0, %v10287
      %v10289 = vpop.f32.mrf.mxu0
      %v10290 = vpop.f32.mrf.mxu0
      %v10291 = vadd.f32 0.0, %v10290
      %v10292 = vpop.f32.mrf.mxu0
      %10293 = vmatprep.mubr.bf16.mxu0 0
      %10294 = vmatmul.mubr.bf16.gmra.mxu0 %v10200
      %v10295 = vpop.f32.mrf.mxu0
      %v10296 = vadd.f32 0.0, %v10295
      %v10297 = vpop.f32.mrf.mxu0
      %v10298 = vpop.f32.mrf.mxu0
      %v10299 = vadd.f32 0.0, %v10298
      %v10300 = vpop.f32.mrf.mxu0
      %10301 = vdwg.mxu0
      %v10302 = vadd.f32 %v9937, %v10240
      %v10303 = vadd.f32 %v9938, %v10243
      %v10304 = vadd.f32 %v9939, %v10248
      %v10305 = vadd.f32 %v9940, %v10251
      %v10306 = vadd.f32 %v9941, %v10256
      %v10307 = vadd.f32 %v9942, %v10259
      %v10308 = vadd.f32 %v9943, %v10264
      %v10309 = vadd.f32 %v9944, %v10267
      %v10310 = vadd.f32 %v9945, %v10272
      %v10311 = vadd.f32 %v9946, %v10275
      %v10312 = vadd.f32 %v9947, %v10280
      %v10313 = vadd.f32 %v9948, %v10283
      %v10314 = vadd.f32 %v9949, %v10288
      %v10315 = vadd.f32 %v9950, %v10291
      %v10316 = vadd.f32 %v9951, %v10296
      %v10317 = vadd.f32 %v9952, %v10299
      %v10318 = vld [vmem:[%s7333] sm:$0xf]
      %v10335 = vunpack.c.l.b16 %v9954
      %v10336 = vunpack.c.l.b16 %v9955
      %v10337 = vunpack.c.l.b16 %v9957
      %v10338 = vunpack.c.l.b16 %v9958
      %v10339 = vunpack.c.l.b16 %v9960
      %v10340 = vunpack.c.l.b16 %v9961
      %v10341 = vunpack.c.l.b16 %v9963
      %v10342 = vunpack.c.l.b16 %v9964
      %v10343 = vunpack.c.l.b16 %v9966
      %v10344 = vunpack.c.l.b16 %v9967
      %v10345 = vunpack.c.l.b16 %v9969
      %v10346 = vunpack.c.l.b16 %v9970
      %v10347 = vunpack.c.l.b16 %v9972
      %v10348 = vunpack.c.l.b16 %v9973
      %v10349 = vunpack.c.l.b16 %v9975
      %v10350 = vunpack.c.l.b16 %v9976
      %v10351 = vpack.c.b16 %v10336, %v10335
      %v10352 = vpack.c.b16 %v10338, %v10337
      %v10353 = vpack.c.b16 %v10340, %v10339
      %v10354 = vpack.c.b16 %v10342, %v10341
      %v10355 = vpack.c.b16 %v10344, %v10343
      %v10356 = vpack.c.b16 %v10346, %v10345
      %v10357 = vpack.c.b16 %v10348, %v10347
      %v10358 = vpack.c.b16 %v10350, %v10349
      %v10360 = vsel %vm6311, %v10351, 0
      %v10363 = vsel %vm6311, %v10352, 0
      %v10366 = vsel %vm6311, %v10353, 0
      %v10369 = vsel %vm6311, %v10354, 0
      %v10372 = vsel %vm6311, %v10355, 0
      %v10375 = vsel %vm6311, %v10356, 0
      %v10378 = vsel %vm6311, %v10357, 0
      %v10381 = vsel %vm6311, %v10358, 0
      %v10384 = vsel %vm6336, %v10318, 0
      %10386 = vmatprep.subr.bf16.mxu0 0
      %10387 = vmatpush1.bf16.msra.mxu0 0
      %10388 = vmatprep.subr.bf16.mxu0 0
      %10389 = vmatpush1.bf16.msra.mxu0 0
      %10390 = vmatprep.subr.bf16.mxu0 0
      %10391 = vmatpush1.bf16.msra.mxu0 0
      %10392 = vmatprep.subr.bf16.mxu0 0
      %10393 = vmatpush1.bf16.msra.mxu0 0
      %10394 = vmatprep.subr.bf16.mxu0 0
      %10395 = vmatpush1.bf16.msra.mxu0 0
      %10396 = vmatprep.subr.bf16.mxu0 0
      %10397 = vmatpush1.bf16.msra.mxu0 0
      %10398 = vmatprep.subr.bf16.mxu0 0
      %10399 = vmatpush1.bf16.msra.mxu0 0
      %10400 = vmatprep.subr.bf16.mxu0 0
      %10401 = vmatpush1.bf16.msra.mxu0 %v10384
      %10402 = vmatprep.subr.bf16.mxu0 0
      %10403 = vmatpush2.bf16.msra.mxu0 0
      %10404 = vmatprep.subr.bf16.mxu0 0
      %10405 = vmatpush2.bf16.msra.mxu0 0
      %10406 = vmatprep.subr.bf16.mxu0 0
      %10407 = vmatpush2.bf16.msra.mxu0 0
      %10408 = vmatprep.subr.bf16.mxu0 0
      %10409 = vmatpush2.bf16.msra.mxu0 0
      %10410 = vmatprep.subr.bf16.mxu0 0
      %10411 = vmatpush2.bf16.msra.mxu0 0
      %10412 = vmatprep.subr.bf16.mxu0 0
      %10413 = vmatpush2.bf16.msra.mxu0 0
      %10414 = vmatprep.subr.bf16.mxu0 0
      %10415 = vmatpush2.bf16.msra.mxu0 0
      %10416 = vmatprep.subr.bf16.mxu0 0
      %10417 = vmatpush2.bf16.msra.mxu0 0
      %10418 = vmatprep.mubr.bf16.mxu0 0
      %10419 = vmatmul.mubr.bf16.gmra.mxu0 %v10360
      %v10420 = vpop.f32.mrf.mxu0
      %v10421 = vadd.f32 0.0, %v10420
      %v10422 = vpop.f32.mrf.mxu0
      %v10423 = vpop.f32.mrf.mxu0
      %v10424 = vadd.f32 0.0, %v10423
      %v10425 = vpop.f32.mrf.mxu0
      %10426 = vmatprep.mubr.bf16.mxu0 0
      %10427 = vmatmul.mubr.bf16.gmra.mxu0 %v10363
      %v10428 = vpop.f32.mrf.mxu0
      %v10429 = vadd.f32 0.0, %v10428
      %v10430 = vpop.f32.mrf.mxu0
      %v10431 = vpop.f32.mrf.mxu0
      %v10432 = vadd.f32 0.0, %v10431
      %v10433 = vpop.f32.mrf.mxu0
      %10434 = vmatprep.mubr.bf16.mxu0 0
      %10435 = vmatmul.mubr.bf16.gmra.mxu0 %v10366
      %v10436 = vpop.f32.mrf.mxu0
      %v10437 = vadd.f32 0.0, %v10436
      %v10438 = vpop.f32.mrf.mxu0
      %v10439 = vpop.f32.mrf.mxu0
      %v10440 = vadd.f32 0.0, %v10439
      %v10441 = vpop.f32.mrf.mxu0
      %10442 = vmatprep.mubr.bf16.mxu0 0
      %10443 = vmatmul.mubr.bf16.gmra.mxu0 %v10369
      %v10444 = vpop.f32.mrf.mxu0
      %v10445 = vadd.f32 0.0, %v10444
      %v10446 = vpop.f32.mrf.mxu0
      %v10447 = vpop.f32.mrf.mxu0
      %v10448 = vadd.f32 0.0, %v10447
      %v10449 = vpop.f32.mrf.mxu0
      %10450 = vmatprep.mubr.bf16.mxu0 0
      %10451 = vmatmul.mubr.bf16.gmra.mxu0 %v10372
      %v10452 = vpop.f32.mrf.mxu0
      %v10453 = vadd.f32 0.0, %v10452
      %v10454 = vpop.f32.mrf.mxu0
      %v10455 = vpop.f32.mrf.mxu0
      %v10456 = vadd.f32 0.0, %v10455
      %v10457 = vpop.f32.mrf.mxu0
      %10458 = vmatprep.mubr.bf16.mxu0 0
      %10459 = vmatmul.mubr.bf16.gmra.mxu0 %v10375
      %v10460 = vpop.f32.mrf.mxu0
      %v10461 = vadd.f32 0.0, %v10460
      %v10462 = vpop.f32.mrf.mxu0
      %v10463 = vpop.f32.mrf.mxu0
      %v10464 = vadd.f32 0.0, %v10463
      %v10465 = vpop.f32.mrf.mxu0
      %10466 = vmatprep.mubr.bf16.mxu0 0
      %10467 = vmatmul.mubr.bf16.gmra.mxu0 %v10378
      %v10468 = vpop.f32.mrf.mxu0
      %v10469 = vadd.f32 0.0, %v10468
      %v10470 = vpop.f32.mrf.mxu0
      %v10471 = vpop.f32.mrf.mxu0
      %v10472 = vadd.f32 0.0, %v10471
      %v10473 = vpop.f32.mrf.mxu0
      %10474 = vmatprep.mubr.bf16.mxu0 0
      %10475 = vmatmul.mubr.bf16.gmra.mxu0 %v10381
      %v10476 = vpop.f32.mrf.mxu0
      %v10477 = vadd.f32 0.0, %v10476
      %v10478 = vpop.f32.mrf.mxu0
      %v10479 = vpop.f32.mrf.mxu0
      %v10480 = vadd.f32 0.0, %v10479
      %v10481 = vpop.f32.mrf.mxu0
      %10482 = vdwg.mxu0
      %v10483 = vadd.f32 %v10302, %v10421
      %v10484 = vadd.f32 %v10303, %v10424
      %v10485 = vadd.f32 %v10304, %v10429
      %v10486 = vadd.f32 %v10305, %v10432
      %v10487 = vadd.f32 %v10306, %v10437
      %v10488 = vadd.f32 %v10307, %v10440
      %v10489 = vadd.f32 %v10308, %v10445
      %v10490 = vadd.f32 %v10309, %v10448
      %v10491 = vadd.f32 %v10310, %v10453
      %v10492 = vadd.f32 %v10311, %v10456
      %v10493 = vadd.f32 %v10312, %v10461
      %v10494 = vadd.f32 %v10313, %v10464
      %v10495 = vadd.f32 %v10314, %v10469
      %v10496 = vadd.f32 %v10315, %v10472
      %v10497 = vadd.f32 %v10316, %v10477
      %v10498 = vadd.f32 %v10317, %v10480
      %v10499 = vld [vmem:[%s6051 + $0x4] sm:$0xf]
      %v10500 = vld [vmem:[%s6051 + $0x8] sm:$0xf]
      %v10501 = vld [vmem:[%s6051 + $0xc] sm:$0x1]
      %v10502 = vld [vmem:[%s6051 + $0x14] sm:$0xf]
      %v10503 = vld [vmem:[%s6051 + $0x18] sm:$0xf]
      %v10504 = vld [vmem:[%s6051 + $0x1c] sm:$0x1]
      %v10505 = vld [vmem:[%s6051 + $0x24] sm:$0xf]
      %v10506 = vld [vmem:[%s6051 + $0x28] sm:$0xf]
      %v10507 = vld [vmem:[%s6051 + $0x2c] sm:$0x1]
      %v10508 = vld [vmem:[%s6051 + $0x34] sm:$0xf]
      %v10509 = vld [vmem:[%s6051 + $0x38] sm:$0xf]
      %v10510 = vld [vmem:[%s6051 + $0x3c] sm:$0x1]
      %v10511 = vld [vmem:[%s6051 + $0x44] sm:$0xf]
      %v10512 = vld [vmem:[%s6051 + $0x48] sm:$0xf]
      %v10513 = vld [vmem:[%s6051 + $0x4c] sm:$0x1]
      %v10514 = vld [vmem:[%s6051 + $0x54] sm:$0xf]
      %v10515 = vld [vmem:[%s6051 + $0x58] sm:$0xf]
      %v10516 = vld [vmem:[%s6051 + $0x5c] sm:$0x1]
      %v10517 = vld [vmem:[%s6051 + $0x64] sm:$0xf]
      %v10518 = vld [vmem:[%s6051 + $0x68] sm:$0xf]
      %v10519 = vld [vmem:[%s6051 + $0x6c] sm:$0x1]
      %v10520 = vld [vmem:[%s6051 + $0x74] sm:$0xf]
      %v10521 = vld [vmem:[%s6051 + $0x78] sm:$0xf]
      %v10522 = vld [vmem:[%s6051 + $0x7c] sm:$0x1]
      %v10524 = vshrl.u32 %v10499, 16
      %v10526 = vrot.slane %v10524, 4
      %v10527 = vshll.u32 %v10499, 16
      %v10529 = vrot.slane %v10527, 5
      %v10530 = vor.u32 %v10526, %v10529
      %v10531 = vrot.slane %v10530, 4
      %v10533 = vshll.u32 %v10500, 16
      %v10535 = vrot.slane %v10533, 5
      %v10536 = vsel %vm902, %v10531, %v10535
      %v10537 = vshrl.u32 %v10500, 16
      %v10539 = vrot.slane %v10537, 4
      %v10540 = vor.u32 %v10539, %v10535
      %v10541 = vrot.slane %v10540, 4
      %v10543 = vshll.u32 %v10501, 16
      %v10545 = vrot.slane %v10543, 5
      %v10546 = vsel %vm902, %v10541, %v10545
      %v10548 = vshrl.u32 %v10502, 16
      %v10550 = vrot.slane %v10548, 4
      %v10551 = vshll.u32 %v10502, 16
      %v10553 = vrot.slane %v10551, 5
      %v10554 = vor.u32 %v10550, %v10553
      %v10555 = vrot.slane %v10554, 4
      %v10557 = vshll.u32 %v10503, 16
      %v10559 = vrot.slane %v10557, 5
      %v10560 = vsel %vm902, %v10555, %v10559
      %v10561 = vshrl.u32 %v10503, 16
      %v10563 = vrot.slane %v10561, 4
      %v10564 = vor.u32 %v10563, %v10559
      %v10565 = vrot.slane %v10564, 4
      %v10567 = vshll.u32 %v10504, 16
      %v10569 = vrot.slane %v10567, 5
      %v10570 = vsel %vm902, %v10565, %v10569
      %v10572 = vshrl.u32 %v10505, 16
      %v10574 = vrot.slane %v10572, 4
      %v10575 = vshll.u32 %v10505, 16
      %v10577 = vrot.slane %v10575, 5
      %v10578 = vor.u32 %v10574, %v10577
      %v10579 = vrot.slane %v10578, 4
      %v10581 = vshll.u32 %v10506, 16
      %v10583 = vrot.slane %v10581, 5
      %v10584 = vsel %vm902, %v10579, %v10583
      %v10585 = vshrl.u32 %v10506, 16
      %v10587 = vrot.slane %v10585, 4
      %v10588 = vor.u32 %v10587, %v10583
      %v10589 = vrot.slane %v10588, 4
      %v10591 = vshll.u32 %v10507, 16
      %v10593 = vrot.slane %v10591, 5
      %v10594 = vsel %vm902, %v10589, %v10593
      %v10596 = vshrl.u32 %v10508, 16
      %v10598 = vrot.slane %v10596, 4
      %v10599 = vshll.u32 %v10508, 16
      %v10601 = vrot.slane %v10599, 5
      %v10602 = vor.u32 %v10598, %v10601
      %v10603 = vrot.slane %v10602, 4
      %v10605 = vshll.u32 %v10509, 16
      %v10607 = vrot.slane %v10605, 5
      %v10608 = vsel %vm902, %v10603, %v10607
      %v10609 = vshrl.u32 %v10509, 16
      %v10611 = vrot.slane %v10609, 4
      %v10612 = vor.u32 %v10611, %v10607
      %v10613 = vrot.slane %v10612, 4
      %v10615 = vshll.u32 %v10510, 16
      %v10617 = vrot.slane %v10615, 5
      %v10618 = vsel %vm902, %v10613, %v10617
      %v10620 = vshrl.u32 %v10511, 16
      %v10622 = vrot.slane %v10620, 4
      %v10623 = vshll.u32 %v10511, 16
      %v10625 = vrot.slane %v10623, 5
      %v10626 = vor.u32 %v10622, %v10625
      %v10627 = vrot.slane %v10626, 4
      %v10629 = vshll.u32 %v10512, 16
      %v10631 = vrot.slane %v10629, 5
      %v10632 = vsel %vm902, %v10627, %v10631
      %v10633 = vshrl.u32 %v10512, 16
      %v10635 = vrot.slane %v10633, 4
      %v10636 = vor.u32 %v10635, %v10631
      %v10637 = vrot.slane %v10636, 4
      %v10639 = vshll.u32 %v10513, 16
      %v10641 = vrot.slane %v10639, 5
      %v10642 = vsel %vm902, %v10637, %v10641
      %v10644 = vshrl.u32 %v10514, 16
      %v10646 = vrot.slane %v10644, 4
      %v10647 = vshll.u32 %v10514, 16
      %v10649 = vrot.slane %v10647, 5
      %v10650 = vor.u32 %v10646, %v10649
      %v10651 = vrot.slane %v10650, 4
      %v10653 = vshll.u32 %v10515, 16
      %v10655 = vrot.slane %v10653, 5
      %v10656 = vsel %vm902, %v10651, %v10655
      %v10657 = vshrl.u32 %v10515, 16
      %v10659 = vrot.slane %v10657, 4
      %v10660 = vor.u32 %v10659, %v10655
      %v10661 = vrot.slane %v10660, 4
      %v10663 = vshll.u32 %v10516, 16
      %v10665 = vrot.slane %v10663, 5
      %v10666 = vsel %vm902, %v10661, %v10665
      %v10668 = vshrl.u32 %v10517, 16
      %v10670 = vrot.slane %v10668, 4
      %v10671 = vshll.u32 %v10517, 16
      %v10673 = vrot.slane %v10671, 5
      %v10674 = vor.u32 %v10670, %v10673
      %v10675 = vrot.slane %v10674, 4
      %v10677 = vshll.u32 %v10518, 16
      %v10679 = vrot.slane %v10677, 5
      %v10680 = vsel %vm902, %v10675, %v10679
      %v10681 = vshrl.u32 %v10518, 16
      %v10683 = vrot.slane %v10681, 4
      %v10684 = vor.u32 %v10683, %v10679
      %v10685 = vrot.slane %v10684, 4
      %v10687 = vshll.u32 %v10519, 16
      %v10689 = vrot.slane %v10687, 5
      %v10690 = vsel %vm902, %v10685, %v10689
      %v10692 = vshrl.u32 %v10520, 16
      %v10694 = vrot.slane %v10692, 4
      %v10695 = vshll.u32 %v10520, 16
      %v10697 = vrot.slane %v10695, 5
      %v10698 = vor.u32 %v10694, %v10697
      %v10699 = vrot.slane %v10698, 4
      %v10701 = vshll.u32 %v10521, 16
      %v10703 = vrot.slane %v10701, 5
      %v10704 = vsel %vm902, %v10699, %v10703
      %v10705 = vshrl.u32 %v10521, 16
      %v10707 = vrot.slane %v10705, 4
      %v10708 = vor.u32 %v10707, %v10703
      %v10709 = vrot.slane %v10708, 4
      %v10711 = vshll.u32 %v10522, 16
      %v10713 = vrot.slane %v10711, 5
      %v10714 = vsel %vm902, %v10709, %v10713
      %v10715 = vld [vmem:[%s7731] sm:$0xf]
      %v10716 = vunpack.c.l.b16 %v10536
      %v10717 = vunpack.c.l.b16 %v10546
      %v10718 = vunpack.c.l.b16 %v10560
      %v10719 = vunpack.c.l.b16 %v10570
      %v10720 = vunpack.c.l.b16 %v10584
      %v10721 = vunpack.c.l.b16 %v10594
      %v10722 = vunpack.c.l.b16 %v10608
      %v10723 = vunpack.c.l.b16 %v10618
      %v10724 = vunpack.c.l.b16 %v10632
      %v10725 = vunpack.c.l.b16 %v10642
      %v10726 = vunpack.c.l.b16 %v10656
      %v10727 = vunpack.c.l.b16 %v10666
      %v10728 = vunpack.c.l.b16 %v10680
      %v10729 = vunpack.c.l.b16 %v10690
      %v10730 = vunpack.c.l.b16 %v10704
      %v10731 = vunpack.c.l.b16 %v10714
      %v10732 = vpack.c.b16 %v10717, %v10716
      %v10733 = vpack.c.b16 %v10719, %v10718
      %v10734 = vpack.c.b16 %v10721, %v10720
      %v10735 = vpack.c.b16 %v10723, %v10722
      %v10736 = vpack.c.b16 %v10725, %v10724
      %v10737 = vpack.c.b16 %v10727, %v10726
      %v10738 = vpack.c.b16 %v10729, %v10728
      %v10739 = vpack.c.b16 %v10731, %v10730
      %v10741 = vsel %vm6311, %v10732, 0
      %v10744 = vsel %vm6311, %v10733, 0
      %v10747 = vsel %vm6311, %v10734, 0
      %v10750 = vsel %vm6311, %v10735, 0
      %v10753 = vsel %vm6311, %v10736, 0
      %v10756 = vsel %vm6311, %v10737, 0
      %v10759 = vsel %vm6311, %v10738, 0
      %v10762 = vsel %vm6311, %v10739, 0
      %v10765 = vsel %vm6336, %v10715, 0
      %10767 = vmatprep.subr.bf16.mxu0 0
      %10768 = vmatpush1.bf16.msra.mxu0 0
      %10769 = vmatprep.subr.bf16.mxu0 0
      %10770 = vmatpush1.bf16.msra.mxu0 0
      %10771 = vmatprep.subr.bf16.mxu0 0
      %10772 = vmatpush1.bf16.msra.mxu0 0
      %10773 = vmatprep.subr.bf16.mxu0 0
      %10774 = vmatpush1.bf16.msra.mxu0 0
      %10775 = vmatprep.subr.bf16.mxu0 0
      %10776 = vmatpush1.bf16.msra.mxu0 0
      %10777 = vmatprep.subr.bf16.mxu0 0
      %10778 = vmatpush1.bf16.msra.mxu0 0
      %10779 = vmatprep.subr.bf16.mxu0 0
      %10780 = vmatpush1.bf16.msra.mxu0 0
      %10781 = vmatprep.subr.bf16.mxu0 0
      %10782 = vmatpush1.bf16.msra.mxu0 %v10765
      %10783 = vmatprep.subr.bf16.mxu0 0
      %10784 = vmatpush2.bf16.msra.mxu0 0
      %10785 = vmatprep.subr.bf16.mxu0 0
      %10786 = vmatpush2.bf16.msra.mxu0 0
      %10787 = vmatprep.subr.bf16.mxu0 0
      %10788 = vmatpush2.bf16.msra.mxu0 0
      %10789 = vmatprep.subr.bf16.mxu0 0
      %10790 = vmatpush2.bf16.msra.mxu0 0
      %10791 = vmatprep.subr.bf16.mxu0 0
      %10792 = vmatpush2.bf16.msra.mxu0 0
      %10793 = vmatprep.subr.bf16.mxu0 0
      %10794 = vmatpush2.bf16.msra.mxu0 0
      %10795 = vmatprep.subr.bf16.mxu0 0
      %10796 = vmatpush2.bf16.msra.mxu0 0
      %10797 = vmatprep.subr.bf16.mxu0 0
      %10798 = vmatpush2.bf16.msra.mxu0 0
      %10799 = vmatprep.mubr.bf16.mxu0 0
      %10800 = vmatmul.mubr.bf16.gmra.mxu0 %v10741
      %v10801 = vpop.f32.mrf.mxu0
      %v10802 = vadd.f32 0.0, %v10801
      %v10803 = vpop.f32.mrf.mxu0
      %v10804 = vpop.f32.mrf.mxu0
      %v10805 = vadd.f32 0.0, %v10804
      %v10806 = vpop.f32.mrf.mxu0
      %10807 = vmatprep.mubr.bf16.mxu0 0
      %10808 = vmatmul.mubr.bf16.gmra.mxu0 %v10744
      %v10809 = vpop.f32.mrf.mxu0
      %v10810 = vadd.f32 0.0, %v10809
      %v10811 = vpop.f32.mrf.mxu0
      %v10812 = vpop.f32.mrf.mxu0
      %v10813 = vadd.f32 0.0, %v10812
      %v10814 = vpop.f32.mrf.mxu0
      %10815 = vmatprep.mubr.bf16.mxu0 0
      %10816 = vmatmul.mubr.bf16.gmra.mxu0 %v10747
      %v10817 = vpop.f32.mrf.mxu0
      %v10818 = vadd.f32 0.0, %v10817
      %v10819 = vpop.f32.mrf.mxu0
      %v10820 = vpop.f32.mrf.mxu0
      %v10821 = vadd.f32 0.0, %v10820
      %v10822 = vpop.f32.mrf.mxu0
      %10823 = vmatprep.mubr.bf16.mxu0 0
      %10824 = vmatmul.mubr.bf16.gmra.mxu0 %v10750
      %v10825 = vpop.f32.mrf.mxu0
      %v10826 = vadd.f32 0.0, %v10825
      %v10827 = vpop.f32.mrf.mxu0
      %v10828 = vpop.f32.mrf.mxu0
      %v10829 = vadd.f32 0.0, %v10828
      %v10830 = vpop.f32.mrf.mxu0
      %10831 = vmatprep.mubr.bf16.mxu0 0
      %10832 = vmatmul.mubr.bf16.gmra.mxu0 %v10753
      %v10833 = vpop.f32.mrf.mxu0
      %v10834 = vadd.f32 0.0, %v10833
      %v10835 = vpop.f32.mrf.mxu0
      %v10836 = vpop.f32.mrf.mxu0
      %v10837 = vadd.f32 0.0, %v10836
      %v10838 = vpop.f32.mrf.mxu0
      %10839 = vmatprep.mubr.bf16.mxu0 0
      %10840 = vmatmul.mubr.bf16.gmra.mxu0 %v10756
      %v10841 = vpop.f32.mrf.mxu0
      %v10842 = vadd.f32 0.0, %v10841
      %v10843 = vpop.f32.mrf.mxu0
      %v10844 = vpop.f32.mrf.mxu0
      %v10845 = vadd.f32 0.0, %v10844
      %v10846 = vpop.f32.mrf.mxu0
      %10847 = vmatprep.mubr.bf16.mxu0 0
      %10848 = vmatmul.mubr.bf16.gmra.mxu0 %v10759
      %v10849 = vpop.f32.mrf.mxu0
      %v10850 = vadd.f32 0.0, %v10849
      %v10851 = vpop.f32.mrf.mxu0
      %v10852 = vpop.f32.mrf.mxu0
      %v10853 = vadd.f32 0.0, %v10852
      %v10854 = vpop.f32.mrf.mxu0
      %10855 = vmatprep.mubr.bf16.mxu0 0
      %10856 = vmatmul.mubr.bf16.gmra.mxu0 %v10762
      %v10857 = vpop.f32.mrf.mxu0
      %v10858 = vadd.f32 0.0, %v10857
      %v10859 = vpop.f32.mrf.mxu0
      %v10860 = vpop.f32.mrf.mxu0
      %v10861 = vadd.f32 0.0, %v10860
      %v10862 = vpop.f32.mrf.mxu0
      %10863 = vdwg.mxu0
      %v10864 = vadd.f32 %v10483, %v10802
      %v10865 = vadd.f32 %v10484, %v10805
      %v10866 = vadd.f32 %v10485, %v10810
      %v10867 = vadd.f32 %v10486, %v10813
      %v10868 = vadd.f32 %v10487, %v10818
      %v10869 = vadd.f32 %v10488, %v10821
      %v10870 = vadd.f32 %v10489, %v10826
      %v10871 = vadd.f32 %v10490, %v10829
      %v10872 = vadd.f32 %v10491, %v10834
      %v10873 = vadd.f32 %v10492, %v10837
      %v10874 = vadd.f32 %v10493, %v10842
      %v10875 = vadd.f32 %v10494, %v10845
      %v10876 = vadd.f32 %v10495, %v10850
      %v10877 = vadd.f32 %v10496, %v10853
      %v10878 = vadd.f32 %v10497, %v10858
      %v10879 = vadd.f32 %v10498, %v10861
      %s10880 = scalar_lea.vmem [#allocation3], 160
      %v10881 = vld [vmem:[%s10880] sm:$0x8]
      %v10882 = vld [vmem:[%s10880 + $0x4] sm:$0xf]
      %v10883 = vld [vmem:[%s10880 + $0x8] sm:$0xf]
      %v10884 = vld [vmem:[%s10880 + $0x10] sm:$0x8]
      %v10885 = vld [vmem:[%s10880 + $0x14] sm:$0xf]
      %v10886 = vld [vmem:[%s10880 + $0x18] sm:$0xf]
      %v10887 = vld [vmem:[%s10880 + $0x20] sm:$0x8]
      %v10888 = vld [vmem:[%s10880 + $0x24] sm:$0xf]
      %v10889 = vld [vmem:[%s10880 + $0x28] sm:$0xf]
      %v10890 = vld [vmem:[%s10880 + $0x30] sm:$0x8]
      %v10891 = vld [vmem:[%s10880 + $0x34] sm:$0xf]
      %v10892 = vld [vmem:[%s10880 + $0x38] sm:$0xf]
      %v10893 = vld [vmem:[%s10880 + $0x40] sm:$0x8]
      %v10894 = vld [vmem:[%s10880 + $0x44] sm:$0xf]
      %v10895 = vld [vmem:[%s10880 + $0x48] sm:$0xf]
      %v10896 = vld [vmem:[%s10880 + $0x50] sm:$0x8]
      %v10897 = vld [vmem:[%s10880 + $0x54] sm:$0xf]
      %v10898 = vld [vmem:[%s10880 + $0x58] sm:$0xf]
      %v10899 = vld [vmem:[%s10880 + $0x60] sm:$0x8]
      %v10900 = vld [vmem:[%s10880 + $0x64] sm:$0xf]
      %v10901 = vld [vmem:[%s10880 + $0x68] sm:$0xf]
      %v10902 = vld [vmem:[%s10880 + $0x70] sm:$0x8]
      %v10903 = vld [vmem:[%s10880 + $0x74] sm:$0xf]
      %v10904 = vld [vmem:[%s10880 + $0x78] sm:$0xf]
      %v10906 = vshrl.u32 %v10881, 16
      %v10908 = vrot.slane %v10906, 7
      %v10909 = vrot.slane %v10908, 4
      %v10911 = vshrl.u32 %v10882, 16
      %v10913 = vrot.slane %v10911, 7
      %v10914 = vshll.u32 %v10882, 16
      %v10916 = vor.u32 %v10913, %v10914
      %v10917 = vsel %vm382, %v10909, %v10916
      %v10918 = vrot.slane %v10913, 4
      %v10920 = vshrl.u32 %v10883, 16
      %v10922 = vrot.slane %v10920, 7
      %v10923 = vshll.u32 %v10883, 16
      %v10925 = vor.u32 %v10922, %v10923
      %v10926 = vsel %vm382, %v10918, %v10925
      %v10928 = vshrl.u32 %v10884, 16
      %v10930 = vrot.slane %v10928, 7
      %v10931 = vrot.slane %v10930, 4
      %v10933 = vshrl.u32 %v10885, 16
      %v10935 = vrot.slane %v10933, 7
      %v10936 = vshll.u32 %v10885, 16
      %v10938 = vor.u32 %v10935, %v10936
      %v10939 = vsel %vm382, %v10931, %v10938
      %v10940 = vrot.slane %v10935, 4
      %v10942 = vshrl.u32 %v10886, 16
      %v10944 = vrot.slane %v10942, 7
      %v10945 = vshll.u32 %v10886, 16
      %v10947 = vor.u32 %v10944, %v10945
      %v10948 = vsel %vm382, %v10940, %v10947
      %v10950 = vshrl.u32 %v10887, 16
      %v10952 = vrot.slane %v10950, 7
      %v10953 = vrot.slane %v10952, 4
      %v10955 = vshrl.u32 %v10888, 16
      %v10957 = vrot.slane %v10955, 7
      %v10958 = vshll.u32 %v10888, 16
      %v10960 = vor.u32 %v10957, %v10958
      %v10961 = vsel %vm382, %v10953, %v10960
      %v10962 = vrot.slane %v10957, 4
      %v10964 = vshrl.u32 %v10889, 16
      %v10966 = vrot.slane %v10964, 7
      %v10967 = vshll.u32 %v10889, 16
      %v10969 = vor.u32 %v10966, %v10967
      %v10970 = vsel %vm382, %v10962, %v10969
      %v10972 = vshrl.u32 %v10890, 16
      %v10974 = vrot.slane %v10972, 7
      %v10975 = vrot.slane %v10974, 4
      %v10977 = vshrl.u32 %v10891, 16
      %v10979 = vrot.slane %v10977, 7
      %v10980 = vshll.u32 %v10891, 16
      %v10982 = vor.u32 %v10979, %v10980
      %v10983 = vsel %vm382, %v10975, %v10982
      %v10984 = vrot.slane %v10979, 4
      %v10986 = vshrl.u32 %v10892, 16
      %v10988 = vrot.slane %v10986, 7
      %v10989 = vshll.u32 %v10892, 16
      %v10991 = vor.u32 %v10988, %v10989
      %v10992 = vsel %vm382, %v10984, %v10991
      %v10994 = vshrl.u32 %v10893, 16
      %v10996 = vrot.slane %v10994, 7
      %v10997 = vrot.slane %v10996, 4
      %v10999 = vshrl.u32 %v10894, 16
      %v11001 = vrot.slane %v10999, 7
      %v11002 = vshll.u32 %v10894, 16
      %v11004 = vor.u32 %v11001, %v11002
      %v11005 = vsel %vm382, %v10997, %v11004
      %v11006 = vrot.slane %v11001, 4
      %v11008 = vshrl.u32 %v10895, 16
      %v11010 = vrot.slane %v11008, 7
      %v11011 = vshll.u32 %v10895, 16
      %v11013 = vor.u32 %v11010, %v11011
      %v11014 = vsel %vm382, %v11006, %v11013
      %v11016 = vshrl.u32 %v10896, 16
      %v11018 = vrot.slane %v11016, 7
      %v11019 = vrot.slane %v11018, 4
      %v11021 = vshrl.u32 %v10897, 16
      %v11023 = vrot.slane %v11021, 7
      %v11024 = vshll.u32 %v10897, 16
      %v11026 = vor.u32 %v11023, %v11024
      %v11027 = vsel %vm382, %v11019, %v11026
      %v11028 = vrot.slane %v11023, 4
      %v11030 = vshrl.u32 %v10898, 16
      %v11032 = vrot.slane %v11030, 7
      %v11033 = vshll.u32 %v10898, 16
      %v11035 = vor.u32 %v11032, %v11033
      %v11036 = vsel %vm382, %v11028, %v11035
      %v11038 = vshrl.u32 %v10899, 16
      %v11040 = vrot.slane %v11038, 7
      %v11041 = vrot.slane %v11040, 4
      %v11043 = vshrl.u32 %v10900, 16
      %v11045 = vrot.slane %v11043, 7
      %v11046 = vshll.u32 %v10900, 16
      %v11048 = vor.u32 %v11045, %v11046
      %v11049 = vsel %vm382, %v11041, %v11048
      %v11050 = vrot.slane %v11045, 4
      %v11052 = vshrl.u32 %v10901, 16
      %v11054 = vrot.slane %v11052, 7
      %v11055 = vshll.u32 %v10901, 16
      %v11057 = vor.u32 %v11054, %v11055
      %v11058 = vsel %vm382, %v11050, %v11057
      %v11060 = vshrl.u32 %v10902, 16
      %v11062 = vrot.slane %v11060, 7
      %v11063 = vrot.slane %v11062, 4
      %v11065 = vshrl.u32 %v10903, 16
      %v11067 = vrot.slane %v11065, 7
      %v11068 = vshll.u32 %v10903, 16
      %v11070 = vor.u32 %v11067, %v11068
      %v11071 = vsel %vm382, %v11063, %v11070
      %v11072 = vrot.slane %v11067, 4
      %v11074 = vshrl.u32 %v10904, 16
      %v11076 = vrot.slane %v11074, 7
      %v11077 = vshll.u32 %v10904, 16
      %v11079 = vor.u32 %v11076, %v11077
      %v11080 = vsel %vm382, %v11072, %v11079
      %v11081 = vld [vmem:[%s8098] sm:$0xf]
      %v11082 = vunpack.c.l.b16 %v10917
      %v11083 = vunpack.c.l.b16 %v10926
      %v11084 = vunpack.c.l.b16 %v10939
      %v11085 = vunpack.c.l.b16 %v10948
      %v11086 = vunpack.c.l.b16 %v10961
      %v11087 = vunpack.c.l.b16 %v10970
      %v11088 = vunpack.c.l.b16 %v10983
      %v11089 = vunpack.c.l.b16 %v10992
      %v11090 = vunpack.c.l.b16 %v11005
      %v11091 = vunpack.c.l.b16 %v11014
      %v11092 = vunpack.c.l.b16 %v11027
      %v11093 = vunpack.c.l.b16 %v11036
      %v11094 = vunpack.c.l.b16 %v11049
      %v11095 = vunpack.c.l.b16 %v11058
      %v11096 = vunpack.c.l.b16 %v11071
      %v11097 = vunpack.c.l.b16 %v11080
      %v11098 = vpack.c.b16 %v11083, %v11082
      %v11099 = vpack.c.b16 %v11085, %v11084
      %v11100 = vpack.c.b16 %v11087, %v11086
      %v11101 = vpack.c.b16 %v11089, %v11088
      %v11102 = vpack.c.b16 %v11091, %v11090
      %v11103 = vpack.c.b16 %v11093, %v11092
      %v11104 = vpack.c.b16 %v11095, %v11094
      %v11105 = vpack.c.b16 %v11097, %v11096
      %v11107 = vsel %vm6311, %v11098, 0
      %v11110 = vsel %vm6311, %v11099, 0
      %v11113 = vsel %vm6311, %v11100, 0
      %v11116 = vsel %vm6311, %v11101, 0
      %v11119 = vsel %vm6311, %v11102, 0
      %v11122 = vsel %vm6311, %v11103, 0
      %v11125 = vsel %vm6311, %v11104, 0
      %v11128 = vsel %vm6311, %v11105, 0
      %v11131 = vsel %vm6336, %v11081, 0
      %11133 = vmatprep.subr.bf16.mxu0 0
      %11134 = vmatpush1.bf16.msra.mxu0 0
      %11135 = vmatprep.subr.bf16.mxu0 0
      %11136 = vmatpush1.bf16.msra.mxu0 0
      %11137 = vmatprep.subr.bf16.mxu0 0
      %11138 = vmatpush1.bf16.msra.mxu0 0
      %11139 = vmatprep.subr.bf16.mxu0 0
      %11140 = vmatpush1.bf16.msra.mxu0 0
      %11141 = vmatprep.subr.bf16.mxu0 0
      %11142 = vmatpush1.bf16.msra.mxu0 0
      %11143 = vmatprep.subr.bf16.mxu0 0
      %11144 = vmatpush1.bf16.msra.mxu0 0
      %11145 = vmatprep.subr.bf16.mxu0 0
      %11146 = vmatpush1.bf16.msra.mxu0 0
      %11147 = vmatprep.subr.bf16.mxu0 0
      %11148 = vmatpush1.bf16.msra.mxu0 %v11131
      %11149 = vmatprep.subr.bf16.mxu0 0
      %11150 = vmatpush2.bf16.msra.mxu0 0
      %11151 = vmatprep.subr.bf16.mxu0 0
      %11152 = vmatpush2.bf16.msra.mxu0 0
      %11153 = vmatprep.subr.bf16.mxu0 0
      %11154 = vmatpush2.bf16.msra.mxu0 0
      %11155 = vmatprep.subr.bf16.mxu0 0
      %11156 = vmatpush2.bf16.msra.mxu0 0
      %11157 = vmatprep.subr.bf16.mxu0 0
      %11158 = vmatpush2.bf16.msra.mxu0 0
      %11159 = vmatprep.subr.bf16.mxu0 0
      %11160 = vmatpush2.bf16.msra.mxu0 0
      %11161 = vmatprep.subr.bf16.mxu0 0
      %11162 = vmatpush2.bf16.msra.mxu0 0
      %11163 = vmatprep.subr.bf16.mxu0 0
      %11164 = vmatpush2.bf16.msra.mxu0 0
      %11165 = vmatprep.mubr.bf16.mxu0 0
      %11166 = vmatmul.mubr.bf16.gmra.mxu0 %v11107
      %v11167 = vpop.f32.mrf.mxu0
      %v11168 = vadd.f32 0.0, %v11167
      %v11169 = vpop.f32.mrf.mxu0
      %v11170 = vpop.f32.mrf.mxu0
      %v11171 = vadd.f32 0.0, %v11170
      %v11172 = vpop.f32.mrf.mxu0
      %11173 = vmatprep.mubr.bf16.mxu0 0
      %11174 = vmatmul.mubr.bf16.gmra.mxu0 %v11110
      %v11175 = vpop.f32.mrf.mxu0
      %v11176 = vadd.f32 0.0, %v11175
      %v11177 = vpop.f32.mrf.mxu0
      %v11178 = vpop.f32.mrf.mxu0
      %v11179 = vadd.f32 0.0, %v11178
      %v11180 = vpop.f32.mrf.mxu0
      %11181 = vmatprep.mubr.bf16.mxu0 0
      %11182 = vmatmul.mubr.bf16.gmra.mxu0 %v11113
      %v11183 = vpop.f32.mrf.mxu0
      %v11184 = vadd.f32 0.0, %v11183
      %v11185 = vpop.f32.mrf.mxu0
      %v11186 = vpop.f32.mrf.mxu0
      %v11187 = vadd.f32 0.0, %v11186
      %v11188 = vpop.f32.mrf.mxu0
      %11189 = vmatprep.mubr.bf16.mxu0 0
      %11190 = vmatmul.mubr.bf16.gmra.mxu0 %v11116
      %v11191 = vpop.f32.mrf.mxu0
      %v11192 = vadd.f32 0.0, %v11191
      %v11193 = vpop.f32.mrf.mxu0
      %v11194 = vpop.f32.mrf.mxu0
      %v11195 = vadd.f32 0.0, %v11194
      %v11196 = vpop.f32.mrf.mxu0
      %11197 = vmatprep.mubr.bf16.mxu0 0
      %11198 = vmatmul.mubr.bf16.gmra.mxu0 %v11119
      %v11199 = vpop.f32.mrf.mxu0
      %v11200 = vadd.f32 0.0, %v11199
      %v11201 = vpop.f32.mrf.mxu0
      %v11202 = vpop.f32.mrf.mxu0
      %v11203 = vadd.f32 0.0, %v11202
      %v11204 = vpop.f32.mrf.mxu0
      %11205 = vmatprep.mubr.bf16.mxu0 0
      %11206 = vmatmul.mubr.bf16.gmra.mxu0 %v11122
      %v11207 = vpop.f32.mrf.mxu0
      %v11208 = vadd.f32 0.0, %v11207
      %v11209 = vpop.f32.mrf.mxu0
      %v11210 = vpop.f32.mrf.mxu0
      %v11211 = vadd.f32 0.0, %v11210
      %v11212 = vpop.f32.mrf.mxu0
      %11213 = vmatprep.mubr.bf16.mxu0 0
      %11214 = vmatmul.mubr.bf16.gmra.mxu0 %v11125
      %v11215 = vpop.f32.mrf.mxu0
      %v11216 = vadd.f32 0.0, %v11215
      %v11217 = vpop.f32.mrf.mxu0
      %v11218 = vpop.f32.mrf.mxu0
      %v11219 = vadd.f32 0.0, %v11218
      %v11220 = vpop.f32.mrf.mxu0
      %11221 = vmatprep.mubr.bf16.mxu0 0
      %11222 = vmatmul.mubr.bf16.gmra.mxu0 %v11128
      %v11223 = vpop.f32.mrf.mxu0
      %v11224 = vadd.f32 0.0, %v11223
      %v11225 = vpop.f32.mrf.mxu0
      %v11226 = vpop.f32.mrf.mxu0
      %v11227 = vadd.f32 0.0, %v11226
      %v11228 = vpop.f32.mrf.mxu0
      %11229 = vdwg.mxu0
      %v11230 = vadd.f32 %v10864, %v11168
      %v11231 = vadd.f32 %v10865, %v11171
      %v11232 = vadd.f32 %v10866, %v11176
      %v11233 = vadd.f32 %v10867, %v11179
      %v11234 = vadd.f32 %v10868, %v11184
      %v11235 = vadd.f32 %v10869, %v11187
      %v11236 = vadd.f32 %v10870, %v11192
      %v11237 = vadd.f32 %v10871, %v11195
      %v11238 = vadd.f32 %v10872, %v11200
      %v11239 = vadd.f32 %v10873, %v11203
      %v11240 = vadd.f32 %v10874, %v11208
      %v11241 = vadd.f32 %v10875, %v11211
      %v11242 = vadd.f32 %v10876, %v11216
      %v11243 = vadd.f32 %v10877, %v11219
      %v11244 = vadd.f32 %v10878, %v11224
      %v11245 = vadd.f32 %v10879, %v11227
      %v11246 = vld [vmem:[%s8264] sm:$0xf]
      %v11263 = vunpack.c.l.b16 %v10882
      %v11264 = vunpack.c.l.b16 %v10883
      %v11265 = vunpack.c.l.b16 %v10885
      %v11266 = vunpack.c.l.b16 %v10886
      %v11267 = vunpack.c.l.b16 %v10888
      %v11268 = vunpack.c.l.b16 %v10889
      %v11269 = vunpack.c.l.b16 %v10891
      %v11270 = vunpack.c.l.b16 %v10892
      %v11271 = vunpack.c.l.b16 %v10894
      %v11272 = vunpack.c.l.b16 %v10895
      %v11273 = vunpack.c.l.b16 %v10897
      %v11274 = vunpack.c.l.b16 %v10898
      %v11275 = vunpack.c.l.b16 %v10900
      %v11276 = vunpack.c.l.b16 %v10901
      %v11277 = vunpack.c.l.b16 %v10903
      %v11278 = vunpack.c.l.b16 %v10904
      %v11279 = vpack.c.b16 %v11264, %v11263
      %v11280 = vpack.c.b16 %v11266, %v11265
      %v11281 = vpack.c.b16 %v11268, %v11267
      %v11282 = vpack.c.b16 %v11270, %v11269
      %v11283 = vpack.c.b16 %v11272, %v11271
      %v11284 = vpack.c.b16 %v11274, %v11273
      %v11285 = vpack.c.b16 %v11276, %v11275
      %v11286 = vpack.c.b16 %v11278, %v11277
      %v11288 = vsel %vm6311, %v11279, 0
      %v11291 = vsel %vm6311, %v11280, 0
      %v11294 = vsel %vm6311, %v11281, 0
      %v11297 = vsel %vm6311, %v11282, 0
      %v11300 = vsel %vm6311, %v11283, 0
      %v11303 = vsel %vm6311, %v11284, 0
      %v11306 = vsel %vm6311, %v11285, 0
      %v11309 = vsel %vm6311, %v11286, 0
      %v11312 = vsel %vm6336, %v11246, 0
      %11314 = vmatprep.subr.bf16.mxu0 0
      %11315 = vmatpush1.bf16.msra.mxu0 0
      %11316 = vmatprep.subr.bf16.mxu0 0
      %11317 = vmatpush1.bf16.msra.mxu0 0
      %11318 = vmatprep.subr.bf16.mxu0 0
      %11319 = vmatpush1.bf16.msra.mxu0 0
      %11320 = vmatprep.subr.bf16.mxu0 0
      %11321 = vmatpush1.bf16.msra.mxu0 0
      %11322 = vmatprep.subr.bf16.mxu0 0
      %11323 = vmatpush1.bf16.msra.mxu0 0
      %11324 = vmatprep.subr.bf16.mxu0 0
      %11325 = vmatpush1.bf16.msra.mxu0 0
      %11326 = vmatprep.subr.bf16.mxu0 0
      %11327 = vmatpush1.bf16.msra.mxu0 0
      %11328 = vmatprep.subr.bf16.mxu0 0
      %11329 = vmatpush1.bf16.msra.mxu0 %v11312
      %11330 = vmatprep.subr.bf16.mxu0 0
      %11331 = vmatpush2.bf16.msra.mxu0 0
      %11332 = vmatprep.subr.bf16.mxu0 0
      %11333 = vmatpush2.bf16.msra.mxu0 0
      %11334 = vmatprep.subr.bf16.mxu0 0
      %11335 = vmatpush2.bf16.msra.mxu0 0
      %11336 = vmatprep.subr.bf16.mxu0 0
      %11337 = vmatpush2.bf16.msra.mxu0 0
      %11338 = vmatprep.subr.bf16.mxu0 0
      %11339 = vmatpush2.bf16.msra.mxu0 0
      %11340 = vmatprep.subr.bf16.mxu0 0
      %11341 = vmatpush2.bf16.msra.mxu0 0
      %11342 = vmatprep.subr.bf16.mxu0 0
      %11343 = vmatpush2.bf16.msra.mxu0 0
      %11344 = vmatprep.subr.bf16.mxu0 0
      %11345 = vmatpush2.bf16.msra.mxu0 0
      %11346 = vmatprep.mubr.bf16.mxu0 0
      %11347 = vmatmul.mubr.bf16.gmra.mxu0 %v11288
      %v11348 = vpop.f32.mrf.mxu0
      %v11349 = vadd.f32 0.0, %v11348
      %v11350 = vpop.f32.mrf.mxu0
      %v11351 = vpop.f32.mrf.mxu0
      %v11352 = vadd.f32 0.0, %v11351
      %v11353 = vpop.f32.mrf.mxu0
      %11354 = vmatprep.mubr.bf16.mxu0 0
      %11355 = vmatmul.mubr.bf16.gmra.mxu0 %v11291
      %v11356 = vpop.f32.mrf.mxu0
      %v11357 = vadd.f32 0.0, %v11356
      %v11358 = vpop.f32.mrf.mxu0
      %v11359 = vpop.f32.mrf.mxu0
      %v11360 = vadd.f32 0.0, %v11359
      %v11361 = vpop.f32.mrf.mxu0
      %11362 = vmatprep.mubr.bf16.mxu0 0
      %11363 = vmatmul.mubr.bf16.gmra.mxu0 %v11294
      %v11364 = vpop.f32.mrf.mxu0
      %v11365 = vadd.f32 0.0, %v11364
      %v11366 = vpop.f32.mrf.mxu0
      %v11367 = vpop.f32.mrf.mxu0
      %v11368 = vadd.f32 0.0, %v11367
      %v11369 = vpop.f32.mrf.mxu0
      %11370 = vmatprep.mubr.bf16.mxu0 0
      %11371 = vmatmul.mubr.bf16.gmra.mxu0 %v11297
      %v11372 = vpop.f32.mrf.mxu0
      %v11373 = vadd.f32 0.0, %v11372
      %v11374 = vpop.f32.mrf.mxu0
      %v11375 = vpop.f32.mrf.mxu0
      %v11376 = vadd.f32 0.0, %v11375
      %v11377 = vpop.f32.mrf.mxu0
      %11378 = vmatprep.mubr.bf16.mxu0 0
      %11379 = vmatmul.mubr.bf16.gmra.mxu0 %v11300
      %v11380 = vpop.f32.mrf.mxu0
      %v11381 = vadd.f32 0.0, %v11380
      %v11382 = vpop.f32.mrf.mxu0
      %v11383 = vpop.f32.mrf.mxu0
      %v11384 = vadd.f32 0.0, %v11383
      %v11385 = vpop.f32.mrf.mxu0
      %11386 = vmatprep.mubr.bf16.mxu0 0
      %11387 = vmatmul.mubr.bf16.gmra.mxu0 %v11303
      %v11388 = vpop.f32.mrf.mxu0
      %v11389 = vadd.f32 0.0, %v11388
      %v11390 = vpop.f32.mrf.mxu0
      %v11391 = vpop.f32.mrf.mxu0
      %v11392 = vadd.f32 0.0, %v11391
      %v11393 = vpop.f32.mrf.mxu0
      %11394 = vmatprep.mubr.bf16.mxu0 0
      %11395 = vmatmul.mubr.bf16.gmra.mxu0 %v11306
      %v11396 = vpop.f32.mrf.mxu0
      %v11397 = vadd.f32 0.0, %v11396
      %v11398 = vpop.f32.mrf.mxu0
      %v11399 = vpop.f32.mrf.mxu0
      %v11400 = vadd.f32 0.0, %v11399
      %v11401 = vpop.f32.mrf.mxu0
      %11402 = vmatprep.mubr.bf16.mxu0 0
      %11403 = vmatmul.mubr.bf16.gmra.mxu0 %v11309
      %v11404 = vpop.f32.mrf.mxu0
      %v11405 = vadd.f32 0.0, %v11404
      %v11406 = vpop.f32.mrf.mxu0
      %v11407 = vpop.f32.mrf.mxu0
      %v11408 = vadd.f32 0.0, %v11407
      %v11409 = vpop.f32.mrf.mxu0
      %11410 = vdwg.mxu0
      %v11411 = vadd.f32 %v11230, %v11349
      %v11412 = vadd.f32 %v11231, %v11352
      %v11413 = vadd.f32 %v11232, %v11357
      %v11414 = vadd.f32 %v11233, %v11360
      %v11415 = vadd.f32 %v11234, %v11365
      %v11416 = vadd.f32 %v11235, %v11368
      %v11417 = vadd.f32 %v11236, %v11373
      %v11418 = vadd.f32 %v11237, %v11376
      %v11419 = vadd.f32 %v11238, %v11381
      %v11420 = vadd.f32 %v11239, %v11384
      %v11421 = vadd.f32 %v11240, %v11389
      %v11422 = vadd.f32 %v11241, %v11392
      %v11423 = vadd.f32 %v11242, %v11397
      %v11424 = vadd.f32 %v11243, %v11400
      %v11425 = vadd.f32 %v11244, %v11405
      %v11426 = vadd.f32 %v11245, %v11408
      %v11427 = vld [vmem:[%s10880 + $0x4] sm:$0xf]
      %v11428 = vld [vmem:[%s10880 + $0x8] sm:$0xf]
      %v11429 = vld [vmem:[%s10880 + $0xc] sm:$0x1]
      %v11430 = vld [vmem:[%s10880 + $0x14] sm:$0xf]
      %v11431 = vld [vmem:[%s10880 + $0x18] sm:$0xf]
      %v11432 = vld [vmem:[%s10880 + $0x1c] sm:$0x1]
      %v11433 = vld [vmem:[%s10880 + $0x24] sm:$0xf]
      %v11434 = vld [vmem:[%s10880 + $0x28] sm:$0xf]
      %v11435 = vld [vmem:[%s10880 + $0x2c] sm:$0x1]
      %v11436 = vld [vmem:[%s10880 + $0x34] sm:$0xf]
      %v11437 = vld [vmem:[%s10880 + $0x38] sm:$0xf]
      %v11438 = vld [vmem:[%s10880 + $0x3c] sm:$0x1]
      %v11439 = vld [vmem:[%s10880 + $0x44] sm:$0xf]
      %v11440 = vld [vmem:[%s10880 + $0x48] sm:$0xf]
      %v11441 = vld [vmem:[%s10880 + $0x4c] sm:$0x1]
      %v11442 = vld [vmem:[%s10880 + $0x54] sm:$0xf]
      %v11443 = vld [vmem:[%s10880 + $0x58] sm:$0xf]
      %v11444 = vld [vmem:[%s10880 + $0x5c] sm:$0x1]
      %v11445 = vld [vmem:[%s10880 + $0x64] sm:$0xf]
      %v11446 = vld [vmem:[%s10880 + $0x68] sm:$0xf]
      %v11447 = vld [vmem:[%s10880 + $0x6c] sm:$0x1]
      %v11448 = vld [vmem:[%s10880 + $0x74] sm:$0xf]
      %v11449 = vld [vmem:[%s10880 + $0x78] sm:$0xf]
      %v11450 = vld [vmem:[%s10880 + $0x7c] sm:$0x1]
      %v11452 = vshrl.u32 %v11427, 16
      %v11454 = vrot.slane %v11452, 4
      %v11455 = vshll.u32 %v11427, 16
      %v11457 = vrot.slane %v11455, 5
      %v11458 = vor.u32 %v11454, %v11457
      %v11459 = vrot.slane %v11458, 4
      %v11461 = vshll.u32 %v11428, 16
      %v11463 = vrot.slane %v11461, 5
      %v11464 = vsel %vm902, %v11459, %v11463
      %v11465 = vshrl.u32 %v11428, 16
      %v11467 = vrot.slane %v11465, 4
      %v11468 = vor.u32 %v11467, %v11463
      %v11469 = vrot.slane %v11468, 4
      %v11471 = vshll.u32 %v11429, 16
      %v11473 = vrot.slane %v11471, 5
      %v11474 = vsel %vm902, %v11469, %v11473
      %v11476 = vshrl.u32 %v11430, 16
      %v11478 = vrot.slane %v11476, 4
      %v11479 = vshll.u32 %v11430, 16
      %v11481 = vrot.slane %v11479, 5
      %v11482 = vor.u32 %v11478, %v11481
      %v11483 = vrot.slane %v11482, 4
      %v11485 = vshll.u32 %v11431, 16
      %v11487 = vrot.slane %v11485, 5
      %v11488 = vsel %vm902, %v11483, %v11487
      %v11489 = vshrl.u32 %v11431, 16
      %v11491 = vrot.slane %v11489, 4
      %v11492 = vor.u32 %v11491, %v11487
      %v11493 = vrot.slane %v11492, 4
      %v11495 = vshll.u32 %v11432, 16
      %v11497 = vrot.slane %v11495, 5
      %v11498 = vsel %vm902, %v11493, %v11497
      %v11500 = vshrl.u32 %v11433, 16
      %v11502 = vrot.slane %v11500, 4
      %v11503 = vshll.u32 %v11433, 16
      %v11505 = vrot.slane %v11503, 5
      %v11506 = vor.u32 %v11502, %v11505
      %v11507 = vrot.slane %v11506, 4
      %v11509 = vshll.u32 %v11434, 16
      %v11511 = vrot.slane %v11509, 5
      %v11512 = vsel %vm902, %v11507, %v11511
      %v11513 = vshrl.u32 %v11434, 16
      %v11515 = vrot.slane %v11513, 4
      %v11516 = vor.u32 %v11515, %v11511
      %v11517 = vrot.slane %v11516, 4
      %v11519 = vshll.u32 %v11435, 16
      %v11521 = vrot.slane %v11519, 5
      %v11522 = vsel %vm902, %v11517, %v11521
      %v11524 = vshrl.u32 %v11436, 16
      %v11526 = vrot.slane %v11524, 4
      %v11527 = vshll.u32 %v11436, 16
      %v11529 = vrot.slane %v11527, 5
      %v11530 = vor.u32 %v11526, %v11529
      %v11531 = vrot.slane %v11530, 4
      %v11533 = vshll.u32 %v11437, 16
      %v11535 = vrot.slane %v11533, 5
      %v11536 = vsel %vm902, %v11531, %v11535
      %v11537 = vshrl.u32 %v11437, 16
      %v11539 = vrot.slane %v11537, 4
      %v11540 = vor.u32 %v11539, %v11535
      %v11541 = vrot.slane %v11540, 4
      %v11543 = vshll.u32 %v11438, 16
      %v11545 = vrot.slane %v11543, 5
      %v11546 = vsel %vm902, %v11541, %v11545
      %v11548 = vshrl.u32 %v11439, 16
      %v11550 = vrot.slane %v11548, 4
      %v11551 = vshll.u32 %v11439, 16
      %v11553 = vrot.slane %v11551, 5
      %v11554 = vor.u32 %v11550, %v11553
      %v11555 = vrot.slane %v11554, 4
      %v11557 = vshll.u32 %v11440, 16
      %v11559 = vrot.slane %v11557, 5
      %v11560 = vsel %vm902, %v11555, %v11559
      %v11561 = vshrl.u32 %v11440, 16
      %v11563 = vrot.slane %v11561, 4
      %v11564 = vor.u32 %v11563, %v11559
      %v11565 = vrot.slane %v11564, 4
      %v11567 = vshll.u32 %v11441, 16
      %v11569 = vrot.slane %v11567, 5
      %v11570 = vsel %vm902, %v11565, %v11569
      %v11572 = vshrl.u32 %v11442, 16
      %v11574 = vrot.slane %v11572, 4
      %v11575 = vshll.u32 %v11442, 16
      %v11577 = vrot.slane %v11575, 5
      %v11578 = vor.u32 %v11574, %v11577
      %v11579 = vrot.slane %v11578, 4
      %v11581 = vshll.u32 %v11443, 16
      %v11583 = vrot.slane %v11581, 5
      %v11584 = vsel %vm902, %v11579, %v11583
      %v11585 = vshrl.u32 %v11443, 16
      %v11587 = vrot.slane %v11585, 4
      %v11588 = vor.u32 %v11587, %v11583
      %v11589 = vrot.slane %v11588, 4
      %v11591 = vshll.u32 %v11444, 16
      %v11593 = vrot.slane %v11591, 5
      %v11594 = vsel %vm902, %v11589, %v11593
      %v11596 = vshrl.u32 %v11445, 16
      %v11598 = vrot.slane %v11596, 4
      %v11599 = vshll.u32 %v11445, 16
      %v11601 = vrot.slane %v11599, 5
      %v11602 = vor.u32 %v11598, %v11601
      %v11603 = vrot.slane %v11602, 4
      %v11605 = vshll.u32 %v11446, 16
      %v11607 = vrot.slane %v11605, 5
      %v11608 = vsel %vm902, %v11603, %v11607
      %v11609 = vshrl.u32 %v11446, 16
      %v11611 = vrot.slane %v11609, 4
      %v11612 = vor.u32 %v11611, %v11607
      %v11613 = vrot.slane %v11612, 4
      %v11615 = vshll.u32 %v11447, 16
      %v11617 = vrot.slane %v11615, 5
      %v11618 = vsel %vm902, %v11613, %v11617
      %v11620 = vshrl.u32 %v11448, 16
      %v11622 = vrot.slane %v11620, 4
      %v11623 = vshll.u32 %v11448, 16
      %v11625 = vrot.slane %v11623, 5
      %v11626 = vor.u32 %v11622, %v11625
      %v11627 = vrot.slane %v11626, 4
      %v11629 = vshll.u32 %v11449, 16
      %v11631 = vrot.slane %v11629, 5
      %v11632 = vsel %vm902, %v11627, %v11631
      %v11633 = vshrl.u32 %v11449, 16
      %v11635 = vrot.slane %v11633, 4
      %v11636 = vor.u32 %v11635, %v11631
      %v11637 = vrot.slane %v11636, 4
      %v11639 = vshll.u32 %v11450, 16
      %v11641 = vrot.slane %v11639, 5
      %v11642 = vsel %vm902, %v11637, %v11641
      %v11643 = vld [vmem:[%s8662] sm:$0xf]
      %v11644 = vunpack.c.l.b16 %v11464
      %v11645 = vunpack.c.l.b16 %v11474
      %v11646 = vunpack.c.l.b16 %v11488
      %v11647 = vunpack.c.l.b16 %v11498
      %v11648 = vunpack.c.l.b16 %v11512
      %v11649 = vunpack.c.l.b16 %v11522
      %v11650 = vunpack.c.l.b16 %v11536
      %v11651 = vunpack.c.l.b16 %v11546
      %v11652 = vunpack.c.l.b16 %v11560
      %v11653 = vunpack.c.l.b16 %v11570
      %v11654 = vunpack.c.l.b16 %v11584
      %v11655 = vunpack.c.l.b16 %v11594
      %v11656 = vunpack.c.l.b16 %v11608
      %v11657 = vunpack.c.l.b16 %v11618
      %v11658 = vunpack.c.l.b16 %v11632
      %v11659 = vunpack.c.l.b16 %v11642
      %v11660 = vpack.c.b16 %v11645, %v11644
      %v11661 = vpack.c.b16 %v11647, %v11646
      %v11662 = vpack.c.b16 %v11649, %v11648
      %v11663 = vpack.c.b16 %v11651, %v11650
      %v11664 = vpack.c.b16 %v11653, %v11652
      %v11665 = vpack.c.b16 %v11655, %v11654
      %v11666 = vpack.c.b16 %v11657, %v11656
      %v11667 = vpack.c.b16 %v11659, %v11658
      %v11669 = vsel %vm6311, %v11660, 0
      %v11672 = vsel %vm6311, %v11661, 0
      %v11675 = vsel %vm6311, %v11662, 0
      %v11678 = vsel %vm6311, %v11663, 0
      %v11681 = vsel %vm6311, %v11664, 0
      %v11684 = vsel %vm6311, %v11665, 0
      %v11687 = vsel %vm6311, %v11666, 0
      %v11690 = vsel %vm6311, %v11667, 0
      %v11693 = vsel %vm6336, %v11643, 0
      %11695 = vmatprep.subr.bf16.mxu0 0
      %11696 = vmatpush1.bf16.msra.mxu0 0
      %11697 = vmatprep.subr.bf16.mxu0 0
      %11698 = vmatpush1.bf16.msra.mxu0 0
      %11699 = vmatprep.subr.bf16.mxu0 0
      %11700 = vmatpush1.bf16.msra.mxu0 0
      %11701 = vmatprep.subr.bf16.mxu0 0
      %11702 = vmatpush1.bf16.msra.mxu0 0
      %11703 = vmatprep.subr.bf16.mxu0 0
      %11704 = vmatpush1.bf16.msra.mxu0 0
      %11705 = vmatprep.subr.bf16.mxu0 0
      %11706 = vmatpush1.bf16.msra.mxu0 0
      %11707 = vmatprep.subr.bf16.mxu0 0
      %11708 = vmatpush1.bf16.msra.mxu0 0
      %11709 = vmatprep.subr.bf16.mxu0 0
      %11710 = vmatpush1.bf16.msra.mxu0 %v11693
      %11711 = vmatprep.subr.bf16.mxu0 0
      %11712 = vmatpush2.bf16.msra.mxu0 0
      %11713 = vmatprep.subr.bf16.mxu0 0
      %11714 = vmatpush2.bf16.msra.mxu0 0
      %11715 = vmatprep.subr.bf16.mxu0 0
      %11716 = vmatpush2.bf16.msra.mxu0 0
      %11717 = vmatprep.subr.bf16.mxu0 0
      %11718 = vmatpush2.bf16.msra.mxu0 0
      %11719 = vmatprep.subr.bf16.mxu0 0
      %11720 = vmatpush2.bf16.msra.mxu0 0
      %11721 = vmatprep.subr.bf16.mxu0 0
      %11722 = vmatpush2.bf16.msra.mxu0 0
      %11723 = vmatprep.subr.bf16.mxu0 0
      %11724 = vmatpush2.bf16.msra.mxu0 0
      %11725 = vmatprep.subr.bf16.mxu0 0
      %11726 = vmatpush2.bf16.msra.mxu0 0
      %11727 = vmatprep.mubr.bf16.mxu0 0
      %11728 = vmatmul.mubr.bf16.gmra.mxu0 %v11669
      %v11729 = vpop.f32.mrf.mxu0
      %v11730 = vadd.f32 0.0, %v11729
      %v11731 = vpop.f32.mrf.mxu0
      %v11732 = vpop.f32.mrf.mxu0
      %v11733 = vadd.f32 0.0, %v11732
      %v11734 = vpop.f32.mrf.mxu0
      %11735 = vmatprep.mubr.bf16.mxu0 0
      %11736 = vmatmul.mubr.bf16.gmra.mxu0 %v11672
      %v11737 = vpop.f32.mrf.mxu0
      %v11738 = vadd.f32 0.0, %v11737
      %v11739 = vpop.f32.mrf.mxu0
      %v11740 = vpop.f32.mrf.mxu0
      %v11741 = vadd.f32 0.0, %v11740
      %v11742 = vpop.f32.mrf.mxu0
      %11743 = vmatprep.mubr.bf16.mxu0 0
      %11744 = vmatmul.mubr.bf16.gmra.mxu0 %v11675
      %v11745 = vpop.f32.mrf.mxu0
      %v11746 = vadd.f32 0.0, %v11745
      %v11747 = vpop.f32.mrf.mxu0
      %v11748 = vpop.f32.mrf.mxu0
      %v11749 = vadd.f32 0.0, %v11748
      %v11750 = vpop.f32.mrf.mxu0
      %11751 = vmatprep.mubr.bf16.mxu0 0
      %11752 = vmatmul.mubr.bf16.gmra.mxu0 %v11678
      %v11753 = vpop.f32.mrf.mxu0
      %v11754 = vadd.f32 0.0, %v11753
      %v11755 = vpop.f32.mrf.mxu0
      %v11756 = vpop.f32.mrf.mxu0
      %v11757 = vadd.f32 0.0, %v11756
      %v11758 = vpop.f32.mrf.mxu0
      %11759 = vmatprep.mubr.bf16.mxu0 0
      %11760 = vmatmul.mubr.bf16.gmra.mxu0 %v11681
      %v11761 = vpop.f32.mrf.mxu0
      %v11762 = vadd.f32 0.0, %v11761
      %v11763 = vpop.f32.mrf.mxu0
      %v11764 = vpop.f32.mrf.mxu0
      %v11765 = vadd.f32 0.0, %v11764
      %v11766 = vpop.f32.mrf.mxu0
      %11767 = vmatprep.mubr.bf16.mxu0 0
      %11768 = vmatmul.mubr.bf16.gmra.mxu0 %v11684
      %v11769 = vpop.f32.mrf.mxu0
      %v11770 = vadd.f32 0.0, %v11769
      %v11771 = vpop.f32.mrf.mxu0
      %v11772 = vpop.f32.mrf.mxu0
      %v11773 = vadd.f32 0.0, %v11772
      %v11774 = vpop.f32.mrf.mxu0
      %11775 = vmatprep.mubr.bf16.mxu0 0
      %11776 = vmatmul.mubr.bf16.gmra.mxu0 %v11687
      %v11777 = vpop.f32.mrf.mxu0
      %v11778 = vadd.f32 0.0, %v11777
      %v11779 = vpop.f32.mrf.mxu0
      %v11780 = vpop.f32.mrf.mxu0
      %v11781 = vadd.f32 0.0, %v11780
      %v11782 = vpop.f32.mrf.mxu0
      %11783 = vmatprep.mubr.bf16.mxu0 0
      %11784 = vmatmul.mubr.bf16.gmra.mxu0 %v11690
      %v11785 = vpop.f32.mrf.mxu0
      %v11786 = vadd.f32 0.0, %v11785
      %v11787 = vpop.f32.mrf.mxu0
      %v11788 = vpop.f32.mrf.mxu0
      %v11789 = vadd.f32 0.0, %v11788
      %v11790 = vpop.f32.mrf.mxu0
      %11791 = vdwg.mxu0
      %v11792 = vadd.f32 %v11411, %v11730
      %v11793 = vadd.f32 %v11412, %v11733
      %v11794 = vadd.f32 %v11413, %v11738
      %v11795 = vadd.f32 %v11414, %v11741
      %v11796 = vadd.f32 %v11415, %v11746
      %v11797 = vadd.f32 %v11416, %v11749
      %v11798 = vadd.f32 %v11417, %v11754
      %v11799 = vadd.f32 %v11418, %v11757
      %v11800 = vadd.f32 %v11419, %v11762
      %v11801 = vadd.f32 %v11420, %v11765
      %v11802 = vadd.f32 %v11421, %v11770
      %v11803 = vadd.f32 %v11422, %v11773
      %v11804 = vadd.f32 %v11423, %v11778
      %v11805 = vadd.f32 %v11424, %v11781
      %v11806 = vadd.f32 %v11425, %v11786
      %v11807 = vadd.f32 %v11426, %v11789
      %s11808 = scalar_lea.vmem %s192, 64
      %v11809 = vld [vmem:[%s11808] sm:$0xf]
      %v11810 = vld [vmem:[%s11808 + $0x4] sm:$0xf]
      %v11811 = vld [vmem:[%s11808 + $0x8] sm:$0xf]
      %v11812 = vld [vmem:[%s11808 + $0xc] sm:$0xf]
      %v11813 = vld [vmem:[%s11808 + $0x10] sm:$0xf]
      %v11814 = vld [vmem:[%s11808 + $0x14] sm:$0xf]
      %v11815 = vld [vmem:[%s11808 + $0x18] sm:$0xf]
      %v11816 = vld [vmem:[%s11808 + $0x1c] sm:$0xf]
      %v11817 = vld [vmem:[%s11808 + $0x20] sm:$0xf]
      %v11818 = vld [vmem:[%s11808 + $0x24] sm:$0xf]
      %v11819 = vld [vmem:[%s11808 + $0x28] sm:$0xf]
      %v11820 = vld [vmem:[%s11808 + $0x2c] sm:$0xf]
      %v11821 = vld [vmem:[%s11808 + $0x30] sm:$0xf]
      %v11822 = vld [vmem:[%s11808 + $0x34] sm:$0xf]
      %v11823 = vld [vmem:[%s11808 + $0x38] sm:$0xf]
      %v11824 = vld [vmem:[%s11808 + $0x3c] sm:$0xf]
      %v11825 = vld [vmem:[%s3] sm:$0x3]
      %v11842 = vunpack.c.l.b16 %v11809
      %v11843 = vunpack.c.l.b16 %v11810
      %v11844 = vunpack.c.l.b16 %v11811
      %v11845 = vunpack.c.l.b16 %v11812
      %v11846 = vunpack.c.l.b16 %v11813
      %v11847 = vunpack.c.l.b16 %v11814
      %v11848 = vunpack.c.l.b16 %v11815
      %v11849 = vunpack.c.l.b16 %v11816
      %v11850 = vunpack.c.l.b16 %v11817
      %v11851 = vunpack.c.l.b16 %v11818
      %v11852 = vunpack.c.l.b16 %v11819
      %v11853 = vunpack.c.l.b16 %v11820
      %v11854 = vunpack.c.l.b16 %v11821
      %v11855 = vunpack.c.l.b16 %v11822
      %v11856 = vunpack.c.l.b16 %v11823
      %v11857 = vunpack.c.l.b16 %v11824
      %v11858 = vpack.c.b16 %v11843, %v11842
      %v11859 = vpack.c.b16 %v11845, %v11844
      %v11860 = vpack.c.b16 %v11847, %v11846
      %v11861 = vpack.c.b16 %v11849, %v11848
      %v11862 = vpack.c.b16 %v11851, %v11850
      %v11863 = vpack.c.b16 %v11853, %v11852
      %v11864 = vpack.c.b16 %v11855, %v11854
      %v11865 = vpack.c.b16 %v11857, %v11856
      %v11867 = vsel %vm602, %v11858, 0
      %v11870 = vsel %vm602, %v11859, 0
      %v11873 = vsel %vm602, %v11860, 0
      %v11876 = vsel %vm602, %v11861, 0
      %v11879 = vsel %vm602, %v11862, 0
      %v11882 = vsel %vm602, %v11863, 0
      %v11885 = vsel %vm602, %v11864, 0
      %v11888 = vsel %vm602, %v11865, 0
      %v11891 = vsel %vm627, %v11825, 0
      %11893 = vmatprep.subr.bf16.mxu0 0
      %11894 = vmatpush1.bf16.msra.mxu0 0
      %11895 = vmatprep.subr.bf16.mxu0 0
      %11896 = vmatpush1.bf16.msra.mxu0 0
      %11897 = vmatprep.subr.bf16.mxu0 0
      %11898 = vmatpush1.bf16.msra.mxu0 0
      %11899 = vmatprep.subr.bf16.mxu0 0
      %11900 = vmatpush1.bf16.msra.mxu0 0
      %11901 = vmatprep.subr.bf16.mxu0 0
      %11902 = vmatpush1.bf16.msra.mxu0 0
      %11903 = vmatprep.subr.bf16.mxu0 0
      %11904 = vmatpush1.bf16.msra.mxu0 0
      %11905 = vmatprep.subr.bf16.mxu0 0
      %11906 = vmatpush1.bf16.msra.mxu0 0
      %11907 = vmatprep.subr.bf16.mxu0 0
      %11908 = vmatpush1.bf16.msra.mxu0 %v11891
      %11909 = vmatprep.subr.bf16.mxu0 0
      %11910 = vmatpush2.bf16.msra.mxu0 0
      %11911 = vmatprep.subr.bf16.mxu0 0
      %11912 = vmatpush2.bf16.msra.mxu0 0
      %11913 = vmatprep.subr.bf16.mxu0 0
      %11914 = vmatpush2.bf16.msra.mxu0 0
      %11915 = vmatprep.subr.bf16.mxu0 0
      %11916 = vmatpush2.bf16.msra.mxu0 0
      %11917 = vmatprep.subr.bf16.mxu0 0
      %11918 = vmatpush2.bf16.msra.mxu0 0
      %11919 = vmatprep.subr.bf16.mxu0 0
      %11920 = vmatpush2.bf16.msra.mxu0 0
      %11921 = vmatprep.subr.bf16.mxu0 0
      %11922 = vmatpush2.bf16.msra.mxu0 0
      %11923 = vmatprep.subr.bf16.mxu0 0
      %11924 = vmatpush2.bf16.msra.mxu0 0
      %11925 = vmatprep.mubr.bf16.mxu0 0
      %11926 = vmatmul.mubr.bf16.gmra.mxu0 %v11867
      %v11927 = vpop.f32.mrf.mxu0
      %v11928 = vadd.f32 0.0, %v11927
      %v11929 = vpop.f32.mrf.mxu0
      %v11930 = vpop.f32.mrf.mxu0
      %v11931 = vadd.f32 0.0, %v11930
      %v11932 = vpop.f32.mrf.mxu0
      %11933 = vmatprep.mubr.bf16.mxu0 0
      %11934 = vmatmul.mubr.bf16.gmra.mxu0 %v11870
      %v11935 = vpop.f32.mrf.mxu0
      %v11936 = vadd.f32 0.0, %v11935
      %v11937 = vpop.f32.mrf.mxu0
      %v11938 = vpop.f32.mrf.mxu0
      %v11939 = vadd.f32 0.0, %v11938
      %v11940 = vpop.f32.mrf.mxu0
      %11941 = vmatprep.mubr.bf16.mxu0 0
      %11942 = vmatmul.mubr.bf16.gmra.mxu0 %v11873
      %v11943 = vpop.f32.mrf.mxu0
      %v11944 = vadd.f32 0.0, %v11943
      %v11945 = vpop.f32.mrf.mxu0
      %v11946 = vpop.f32.mrf.mxu0
      %v11947 = vadd.f32 0.0, %v11946
      %v11948 = vpop.f32.mrf.mxu0
      %11949 = vmatprep.mubr.bf16.mxu0 0
      %11950 = vmatmul.mubr.bf16.gmra.mxu0 %v11876
      %v11951 = vpop.f32.mrf.mxu0
      %v11952 = vadd.f32 0.0, %v11951
      %v11953 = vpop.f32.mrf.mxu0
      %v11954 = vpop.f32.mrf.mxu0
      %v11955 = vadd.f32 0.0, %v11954
      %v11956 = vpop.f32.mrf.mxu0
      %11957 = vmatprep.mubr.bf16.mxu0 0
      %11958 = vmatmul.mubr.bf16.gmra.mxu0 %v11879
      %v11959 = vpop.f32.mrf.mxu0
      %v11960 = vadd.f32 0.0, %v11959
      %v11961 = vpop.f32.mrf.mxu0
      %v11962 = vpop.f32.mrf.mxu0
      %v11963 = vadd.f32 0.0, %v11962
      %v11964 = vpop.f32.mrf.mxu0
      %11965 = vmatprep.mubr.bf16.mxu0 0
      %11966 = vmatmul.mubr.bf16.gmra.mxu0 %v11882
      %v11967 = vpop.f32.mrf.mxu0
      %v11968 = vadd.f32 0.0, %v11967
      %v11969 = vpop.f32.mrf.mxu0
      %v11970 = vpop.f32.mrf.mxu0
      %v11971 = vadd.f32 0.0, %v11970
      %v11972 = vpop.f32.mrf.mxu0
      %11973 = vmatprep.mubr.bf16.mxu0 0
      %11974 = vmatmul.mubr.bf16.gmra.mxu0 %v11885
      %v11975 = vpop.f32.mrf.mxu0
      %v11976 = vadd.f32 0.0, %v11975
      %v11977 = vpop.f32.mrf.mxu0
      %v11978 = vpop.f32.mrf.mxu0
      %v11979 = vadd.f32 0.0, %v11978
      %v11980 = vpop.f32.mrf.mxu0
      %11981 = vmatprep.mubr.bf16.mxu0 0
      %11982 = vmatmul.mubr.bf16.gmra.mxu0 %v11888
      %v11983 = vpop.f32.mrf.mxu0
      %v11984 = vadd.f32 0.0, %v11983
      %v11985 = vpop.f32.mrf.mxu0
      %v11986 = vpop.f32.mrf.mxu0
      %v11987 = vadd.f32 0.0, %v11986
      %v11988 = vpop.f32.mrf.mxu0
      %11989 = vdwg.mxu0
      %v11990 = vadd.f32 %v11792, %v11928
      %v11991 = vadd.f32 %v11793, %v11931
      %v11992 = vadd.f32 %v11794, %v11936
      %v11993 = vadd.f32 %v11795, %v11939
      %v11994 = vadd.f32 %v11796, %v11944
      %v11995 = vadd.f32 %v11797, %v11947
      %v11996 = vadd.f32 %v11798, %v11952
      %v11997 = vadd.f32 %v11799, %v11955
      %v11998 = vadd.f32 %v11800, %v11960
      %v11999 = vadd.f32 %v11801, %v11963
      %v12000 = vadd.f32 %v11802, %v11968
      %v12001 = vadd.f32 %v11803, %v11971
      %v12002 = vadd.f32 %v11804, %v11976
      %v12003 = vadd.f32 %v11805, %v11979
      %v12004 = vadd.f32 %v11806, %v11984
      %v12005 = vadd.f32 %v11807, %v11987
      %v12006 = vmax.f32 %v11990, 0.0
      %v12007 = vmax.f32 %v11991, 0.0
      %v12008 = vmax.f32 %v11992, 0.0
      %v12009 = vmax.f32 %v11993, 0.0
      %v12010 = vmax.f32 %v11994, 0.0
      %v12011 = vmax.f32 %v11995, 0.0
      %v12012 = vmax.f32 %v11996, 0.0
      %v12013 = vmax.f32 %v11997, 0.0
      %v12014 = vmax.f32 %v11998, 0.0
      %v12015 = vmax.f32 %v11999, 0.0
      %v12016 = vmax.f32 %v12000, 0.0
      %v12017 = vmax.f32 %v12001, 0.0
      %v12018 = vmax.f32 %v12002, 0.0
      %v12019 = vmax.f32 %v12003, 0.0
      %v12020 = vmax.f32 %v12004, 0.0
      %v12021 = vmax.f32 %v12005, 0.0
      %s12022 = scalar_lea.vmem %s197, 128
      %12023 = vst.msk [vmem:[%s12022] sm:$0xff] %vm6311, %v12006
      %12024 = vst.msk [vmem:[%s12022 + $0x8] sm:$0xff] %vm6311, %v12007
      %12025 = vst.msk [vmem:[%s12022 + $0x10] sm:$0xff] %vm6311, %v12008
      %12026 = vst.msk [vmem:[%s12022 + $0x18] sm:$0xff] %vm6311, %v12009
      %12027 = vst.msk [vmem:[%s12022 + $0x20] sm:$0xff] %vm6311, %v12010
      %12028 = vst.msk [vmem:[%s12022 + $0x28] sm:$0xff] %vm6311, %v12011
      %12029 = vst.msk [vmem:[%s12022 + $0x30] sm:$0xff] %vm6311, %v12012
      %12030 = vst.msk [vmem:[%s12022 + $0x38] sm:$0xff] %vm6311, %v12013
      %12031 = vst.msk [vmem:[%s12022 + $0x40] sm:$0xff] %vm6311, %v12014
      %12032 = vst.msk [vmem:[%s12022 + $0x48] sm:$0xff] %vm6311, %v12015
      %12033 = vst.msk [vmem:[%s12022 + $0x50] sm:$0xff] %vm6311, %v12016
      %12034 = vst.msk [vmem:[%s12022 + $0x58] sm:$0xff] %vm6311, %v12017
      %12035 = vst.msk [vmem:[%s12022 + $0x60] sm:$0xff] %vm6311, %v12018
      %12036 = vst.msk [vmem:[%s12022 + $0x68] sm:$0xff] %vm6311, %v12019
      %12037 = vst.msk [vmem:[%s12022 + $0x70] sm:$0xff] %vm6311, %v12020
      %12038 = vst.msk [vmem:[%s12022 + $0x78] sm:$0xff] %vm6311, %v12021
      %p12039 = scmp.lt.s32.totalorder %s15, 1
      %s12040 = scalar_select %p12039, %s15, 1
      %s12041 = smul.addr %s12040, 32
      %s12042 = smul.addr %s12041, 8
      %s12043 = scalar_lea.vmem %s4, %s12042
      // Predicated region
      $region37: #{tpu_custom_call.1} parent=35 // pred_check
        %p12044 = pneg %p122
      $region38: #{tpu_custom_call.1} parent=35 // pred_check_branch
        %12046 = sbr.rel (%p12044) target = $region40
      $region39: #{tpu_custom_call.1} parent=35 // pred_region
        _
      $region40: #{tpu_custom_call.1} parent=35 // pred_fallthru
        _
    $region36: #{tpu_custom_call.1} parent=5 // pred_fallthru
      _
    %p12047 = scmp.le.s32.totalorder 2, %s10
    // Predicated region
    $region41: #{tpu_custom_call.1} parent=5 // pred_check
      %p12048 = pneg %p12047
    $region42: #{tpu_custom_call.1} parent=5 // pred_check_branch
      %12050 = sbr.rel (%p12048) target = $region44
    $region43: #{tpu_custom_call.1} parent=5 // pred_region
      %s12051 = ssub.s32 %s10, 2
      // Predicated region
      $region45: #{tpu_custom_call.1} parent=43 // pred_check
        %p12052 = pneg %p128
      $region46: #{tpu_custom_call.1} parent=43 // pred_check_branch
        %12054 = sbr.rel (%p12052) target = $region48
      $region47: #{tpu_custom_call.1} parent=43 // pred_region
        %p12055 = scmp.lt.s32.totalorder %s16, 1
        %s12056 = scalar_select %p12055, %s16, 1
        %s12057 = smul.addr %s12056, 32
        %s12058 = smul.addr %s12057, 8
        %s12059 = scalar_lea.vmem %s4, %s12058
      $region48: #{tpu_custom_call.1} parent=43 // pred_fallthru
        _
    $region44: #{tpu_custom_call.1} parent=5 // pred_fallthru
      _
  $region6: #{tpu_custom_call.1} parent=0 // loop_footer
    %s14 = sadd.s32 1, %s10
  $region7: #{tpu_custom_call.1} parent=0 // loop_footer_branch
    %9 = sbr.rel target = $region3
  $region8: #{tpu_custom_call.1} parent=0 // loop_exit
    _

</llo_original>
